<compile_context>
chip_gen: v7x
topology: tpu7x:2x2x1
jax: 0.10.0
libtpu: 0.0.40
codegen_flags: <defaults>
</compile_context>

<pallas_src>
import numpy as np
import jax
import jax.numpy as jnp
from jax.experimental import pallas as pl
from jax.experimental.pallas import tpu as pltpu

# ---- model hyper-params (small but consistent with CRNNModel semantics) ----
NUM_CLASSES = 36
MAX_LENGTH = 10
HID = 32                    # rnn_hidden_size (module default 256; small for test)
FEAT = 1280                 # fixed by features.view(B, -1, 1280)
CIN = 3
CMID = 32
KH = KW = 3
NC1 = NUM_CLASSES + 1       # 37
TC = MAX_LENGTH * NC1       # 370

# ---- TPU-friendly padded layout constants ----
KPAD = 32                   # im2col contraction 27 -> 32 (not 128)
CPAD = 128                  # per-position class padding (37 -> 128)
B_PAD = 8                   # batch padded to one full sublane tile
NEG = -1e30                 # bias for padded class lanes (exp -> 0)
N_GATE_SLOTS = 12           # 2x3 GRU + 2x3 LSTM (forget gate dropped: c0 == 0)


# Plain f32 versions (used by the pure-JAX reference).
def _sigmoid(x):
    return 1.0 / (1.0 + jnp.exp(-x))


def _silu(x):
    return x * _sigmoid(x)


# Kernel-side versions: divide goes to the EUP via approximate reciprocal.
def _ksigmoid(x):
    return pl.reciprocal(1.0 + jnp.exp(-x), approx=True)


def _ksilu(x):
    return x * _ksigmoid(x)


# --------------------------------------------------------------------------
# The single fused kernel.
# --------------------------------------------------------------------------
def crnn_kernel(patches_ref, stem_w_ref, stem_b_ref, proj_w_ref, proj_b_ref,
                pool_ref, rnn_b_ref, bhn_ref, fc_b_ref,
                rnn_w_hbm, fc_w_hbm,
                out_ref,
                rnn_w_vmem, fc_w_vmem, dma_sem):
    # Kick off the two big weight DMAs so they stream while the stem computes.
    rnn_cp = pltpu.make_async_copy(rnn_w_hbm, rnn_w_vmem, dma_sem.at[0])
    fc_cp = pltpu.make_async_copy(fc_w_hbm, fc_w_vmem, dma_sem.at[1])
    rnn_cp.start()
    fc_cp.start()

    # ---- CNN stem (3x3 via im2col) + 1x1 projection + global avg pool ----
    p = patches_ref[...]                                        # (B*P, KPAD) bf16
    h = _ksilu(jnp.dot(p, stem_w_ref[...],
                       preferred_element_type=jnp.float32) + stem_b_ref[...])
    f = _ksilu(jnp.dot(h.astype(jnp.bfloat16), proj_w_ref[...],
                       preferred_element_type=jnp.float32) + proj_b_ref[...])
    # segmented mean pool as a matmul: (B_PAD, B*P) @ (B*P, FEAT)
    feat = jnp.dot(pool_ref[...], f,
                   preferred_element_type=jnp.float32)          # (B_PAD, FEAT) f32

    # ---- all 12 RNN gate pre-activations in ONE MXU matmul (K = 1280) ----
    rnn_cp.wait()
    z = jnp.dot(feat.astype(jnp.bfloat16), rnn_w_vmem[...],
                preferred_element_type=jnp.float32) + rnn_b_ref[...]  # (B_PAD, 12*HID)

    def slab(k):                                                # 32-lane gate slice
        return z[:, k * HID:(k + 1) * HID]

    bhn = bhn_ref[...]                                          # (2, HID)
    hs = []
    for d in range(2):                                          # GRU fwd / bwd, h0 == 0
        r = _ksigmoid(slab(3 * d + 0))
        u = _ksigmoid(slab(3 * d + 1))
        n = jnp.tanh(slab(3 * d + 2) + r * bhn[d:d + 1, :])
        hs.append((1.0 - u) * n)                                # h' = (1-z)*n + z*0
    for d in range(2):                                          # LSTM fwd / bwd, h0 == c0 == 0
        i = _ksigmoid(slab(6 + 3 * d + 0))
        g = jnp.tanh(slab(6 + 3 * d + 1))
        o = _ksigmoid(slab(6 + 3 * d + 2))
        hs.append(o * jnp.tanh(i * g))                          # c = i*g (forget term is 0)
    hidden = jnp.concatenate(hs, axis=-1)                       # (B_PAD, 4*HID) = (8, 128)

    # ---- FC head (single K=128 matmul) + fused per-position softmax ----
    fc_cp.wait()
    logits = jnp.dot(hidden.astype(jnp.bfloat16), fc_w_vmem[...],
                     preferred_element_type=jnp.float32) + fc_b_ref[...]  # (B_PAD, 10*CPAD)
    for t in range(MAX_LENGTH):
        lt = logits[:, t * CPAD:(t + 1) * CPAD]                 # (8, 128), lane-aligned
        m = jnp.max(lt, axis=-1, keepdims=True)
        e = jnp.exp(lt - m)                                     # padded lanes -> exactly 0
        s = jnp.sum(e, axis=-1, keepdims=True)
        out_ref[t] = e * pl.reciprocal(s, approx=True)          # unmasked (8,128) tile store


# --------------------------------------------------------------------------
# Wrapper-side layout plumbing.
# --------------------------------------------------------------------------
def im2col(x_nhwc):
    """3x3 valid conv patches: (B, H, W, C) -> (B, (H-2)*(W-2), 9*C)."""
    B, H, W, C = x_nhwc.shape
    Ho, Wo = H - KH + 1, W - KW + 1
    cols = []
    for i in range(KH):
        for j in range(KW):
            cols.append(x_nhwc[:, i:i + Ho, j:j + Wo, :])
    patches = jnp.concatenate(cols, axis=-1)                    # (B, Ho, Wo, 9*C)
    return patches.reshape(B, Ho * Wo, KH * KW * C)


def pack_params(p):
    """Repack natural per-gate parameters into lane-dense kernel operands.

    Called ONCE at init (hoisted out of the forward path).  Matmul weights are
    stored in bf16; biases stay f32.
    """
    def bf16(x):
        return x.astype(jnp.bfloat16)

    stem_w = jnp.pad(p['stem_w'], ((0, KPAD - KH * KW * CIN), (0, 0)))  # (32, 32)

    # Gate slots: 0..2 GRU fwd (r,z,n), 3..5 GRU bwd, 6..8 LSTM fwd (i,g,o),
    # 9..11 LSTM bwd.  Gates packed at TRUE width HID (no 128-lane padding).
    gw, gb = [], []
    for d in range(2):                                # GRU gates r, z, n
        for g in range(3):
            gw.append(p['gru_w'][d, g])
            b = p['gru_bih'][d, g]
            if g < 2:                                 # n-gate hidden bias applied via r*bhn
                b = b + p['gru_bhh'][d, g]
            gb.append(b)
    for d in range(2):                                # LSTM gates i, g, o (forget unused)
        for g in (0, 2, 3):
            gw.append(p['lstm_w'][d, g])
            gb.append(p['lstm_bih'][d, g] + p['lstm_bhh'][d, g])
    rnn_w = jnp.concatenate(gw, axis=1)               # (FEAT, 12*HID) = (1280, 384)
    rnn_b = jnp.concatenate(gb, axis=1)               # (1, 384)
    bhn = jnp.concatenate(
        [p['gru_bhh'][d, 2] for d in range(2)], axis=0)           # (2, HID)

    # FC weight: rows = 4*HID hidden (true width), cols = 10 positions x 128 classes.
    fcw = p['fc_w'].reshape(4 * HID, MAX_LENGTH, NC1)
    fcw = jnp.pad(fcw, ((0, 0), (0, 0), (0, CPAD - NC1)))
    fc_w = fcw.reshape(4 * HID, MAX_LENGTH * CPAD)    # (128, 1280)
    fcb = p['fc_b'].reshape(1, MAX_LENGTH, NC1)
    fcb = jnp.pad(fcb, ((0, 0), (0, 0), (0, CPAD - NC1)), constant_values=NEG)
    fc_b = fcb.reshape(1, MAX_LENGTH * CPAD)          # (1, 1280)

    return dict(stem_w=bf16(stem_w), stem_b=p['stem_b'],
                proj_w=bf16(p['proj_w']), proj_b=p['proj_b'],
                rnn_w=bf16(rnn_w), rnn_b=rnn_b, bhn=bhn,
                fc_w=bf16(fc_w), fc_b=fc_b)


def _pool_matrix(B, P):
    """(B_PAD, B*P) segmented-mean matrix; rows >= B are zero."""
    rows = jnp.arange(B_PAD)[:, None]
    cols = jnp.arange(B * P)[None, :]
    return jnp.where(cols // P == rows, 1.0 / P, 0.0).astype(jnp.float32)


def init_params(key):
    ks = jax.random.split(key, 12)

    def u(k, shape, fan_in):
        b = 1.0 / np.sqrt(fan_in)
        return jax.random.uniform(k, shape, jnp.float32, -b, b)

    return dict(
        stem_w=u(ks[0], (KH * KW * CIN, CMID), KH * KW * CIN),
        stem_b=u(ks[1], (1, CMID), KH * KW * CIN),
        proj_w=u(ks[2], (CMID, FEAT), CMID),
        proj_b=u(ks[3], (1, FEAT), CMID),
        # GRU / LSTM weights, already transposed for x @ W: (dir, gate, FEAT, HID)
        gru_w=u(ks[4], (2, 3, FEAT, HID), HID),
        gru_bih=u(ks[5], (2, 3, 1, HID), HID),
        gru_bhh=u(ks[6], (2, 3, 1, HID), HID),
        lstm_w=u(ks[7], (2, 4, FEAT, HID), HID),
        lstm_bih=u(ks[8], (2, 4, 1, HID), HID),
        lstm_bhh=u(ks[9], (2, 4, 1, HID), HID),
        # fc weight split along the 4H input dim: order [gru_f, gru_b, lstm_f, lstm_b]
        fc_w=u(ks[10], (4, HID, TC), 4 * HID),
        fc_b=u(ks[11], (1, TC), 4 * HID),
    )


@jax.jit
def crnn_forward(x_nchw, packed):
    B = x_nchw.shape[0]
    assert B <= B_PAD
    x = jnp.transpose(x_nchw, (0, 2, 3, 1))                     # NCHW -> NHWC
    patches = im2col(x)                                         # (B, P, 27)
    P = patches.shape[1]
    patches = jnp.pad(patches, ((0, 0), (0, 0), (0, KPAD - patches.shape[2])))
    patches = patches.reshape(B * P, KPAD).astype(jnp.bfloat16) # fold batch into M
    pool = _pool_matrix(B, P)                                   # (B_PAD, B*P)

    vmem = pl.BlockSpec(memory_space=pltpu.MemorySpace.VMEM)
    anyspace = pl.BlockSpec(memory_space=pl.ANY)                # DMA'd manually in-kernel
    out = pl.pallas_call(
        crnn_kernel,
        out_shape=jax.ShapeDtypeStruct((MAX_LENGTH, B_PAD, CPAD), jnp.float32),
        in_specs=[vmem] * 9 + [anyspace] * 2,
        out_specs=vmem,
        scratch_shapes=[
            pltpu.VMEM((FEAT, N_GATE_SLOTS * HID), jnp.bfloat16),   # rnn_w landing buffer
            pltpu.VMEM((4 * HID, MAX_LENGTH * CPAD), jnp.bfloat16), # fc_w landing buffer
            pltpu.SemaphoreType.DMA((2,)),
        ],
        compiler_params=pltpu.CompilerParams(vmem_limit_bytes=24 * 1024 * 1024),
    )(patches, packed['stem_w'], packed['stem_b'], packed['proj_w'],
      packed['proj_b'], pool, packed['rnn_b'], packed['bhn'], packed['fc_b'],
      packed['rnn_w'], packed['fc_w'])

    # (MAX_LENGTH, B_PAD, CPAD) -> (B, MAX_LENGTH, NC1)
    return jnp.transpose(out, (1, 0, 2))[:B, :, :NC1]


# --------------------------------------------------------------------------
# Pure-JAX f32 reference with identical math (natural parameter layout).
# --------------------------------------------------------------------------
def reference_forward(x_nchw, p):
    x = jnp.transpose(x_nchw, (0, 2, 3, 1))
    patches = im2col(x)
    h = _silu(jnp.einsum('bpk,km->bpm', patches, p['stem_w']) + p['stem_b'])
    f = _silu(jnp.einsum('bpm,mf->bpf', h, p['proj_w']) + p['proj_b'])
    feat = jnp.mean(f, axis=1)

    def gru_dir(d):
        g = lambda i: feat @ p['gru_w'][d, i] + p['gru_bih'][d, i]
        r = _sigmoid(g(0) + p['gru_bhh'][d, 0])
        z = _sigmoid(g(1) + p['gru_bhh'][d, 1])
        n = jnp.tanh(g(2) + r * p['gru_bhh'][d, 2])
        return (1.0 - z) * n

    def lstm_dir(d):
        g = lambda i: feat @ p['lstm_w'][d, i] + p['lstm_bih'][d, i] + p['lstm_bhh'][d, i]
        i_g = _sigmoid(g(0))
        c = i_g * jnp.tanh(g(2))
        return _sigmoid(g(3)) * jnp.tanh(c)

    parts = [gru_dir(0), gru_dir(1), lstm_dir(0), lstm_dir(1)]
    logits = sum(part @ p['fc_w'][i] for i, part in enumerate(parts)) + p['fc_b']
    logits = logits.reshape(x.shape[0], MAX_LENGTH, NC1)
    return jax.nn.softmax(logits, axis=-1)


if __name__ == "__main__":
    key = jax.random.PRNGKey(0)
    kx, kp = jax.random.split(key)
    x = jax.random.normal(kx, (2, CIN, 16, 16), jnp.float32)    # PyTorch NCHW input
    params = init_params(kp)
    packed = pack_params(params)    # weights packed ONCE, outside the forward path

    out = crnn_forward(x, packed)
    jax.block_until_ready(out)
    assert out.shape == (2, MAX_LENGTH, NC1)

    ref = reference_forward(x, params)
    # bf16 MXU operands + approx reciprocal -> bf16-level tolerance.
    np.testing.assert_allclose(np.asarray(out), np.asarray(ref), rtol=2e-3, atol=4e-3)

    print("KERNEL_OK")
</pallas_src>

<mosaic_0001>
module attributes {stable_mosaic.version = 11 : i64} {
  func.func @crnn_kernel(%arg0: memref<392x32xbf16, #tpu.memory_space<vmem>>, %arg1: memref<32x32xbf16, #tpu.memory_space<vmem>>, %arg2: memref<1x32xf32, #tpu.memory_space<vmem>>, %arg3: memref<32x1280xbf16, #tpu.memory_space<vmem>>, %arg4: memref<1x1280xf32, #tpu.memory_space<vmem>>, %arg5: memref<8x392xf32, #tpu.memory_space<vmem>>, %arg6: memref<1x384xf32, #tpu.memory_space<vmem>>, %arg7: memref<2x32xf32, #tpu.memory_space<vmem>>, %arg8: memref<1x1280xf32, #tpu.memory_space<vmem>>, %arg9: memref<1280x384xbf16, #tpu.memory_space<any>>, %arg10: memref<128x1280xbf16, #tpu.memory_space<any>>, %arg11: memref<10x8x128xf32, #tpu.memory_space<vmem>>, %arg12: memref<1280x384xbf16, #tpu.memory_space<vmem>>, %arg13: memref<128x1280xbf16, #tpu.memory_space<vmem>>, %arg14: memref<2x!tpu.dma_semaphore, #tpu.memory_space<semaphore_mem>>) attributes {dimension_semantics = [], scalar_prefetch = 0 : i64, scratch_operands = 3 : i64, tpu.core_type = #tpu.core_type<tc>} {
    %c0_i32 = arith.constant 0 : i32
    %0 = tpu.memref_slice %arg14[%c0_i32] : memref<2x!tpu.dma_semaphore, #tpu.memory_space<semaphore_mem>> -> memref<1x!tpu.dma_semaphore, #tpu.memory_space<semaphore_mem>>
    %1 = tpu.memref_squeeze %0 : memref<1x!tpu.dma_semaphore, #tpu.memory_space<semaphore_mem>> -> memref<!tpu.dma_semaphore, #tpu.memory_space<semaphore_mem>>
    tpu.enqueue_dma source(%arg9 : memref<1280x384xbf16, #tpu.memory_space<any>>) target(%arg12 : memref<1280x384xbf16, #tpu.memory_space<vmem>>) target_semaphore(%1 : memref<!tpu.dma_semaphore, #tpu.memory_space<semaphore_mem>>)
    %c1_i32 = arith.constant 1 : i32
    %2 = tpu.memref_slice %arg14[%c1_i32] : memref<2x!tpu.dma_semaphore, #tpu.memory_space<semaphore_mem>> -> memref<1x!tpu.dma_semaphore, #tpu.memory_space<semaphore_mem>>
    %3 = tpu.memref_squeeze %2 : memref<1x!tpu.dma_semaphore, #tpu.memory_space<semaphore_mem>> -> memref<!tpu.dma_semaphore, #tpu.memory_space<semaphore_mem>>
    tpu.enqueue_dma source(%arg10 : memref<128x1280xbf16, #tpu.memory_space<any>>) target(%arg13 : memref<128x1280xbf16, #tpu.memory_space<vmem>>) target_semaphore(%3 : memref<!tpu.dma_semaphore, #tpu.memory_space<semaphore_mem>>)
    %c0 = arith.constant 0 : index
    %c0_0 = arith.constant 0 : index
    %4 = vector.load %arg0[%c0, %c0_0] : memref<392x32xbf16, #tpu.memory_space<vmem>>, vector<392x32xbf16>
    %c0_1 = arith.constant 0 : index
    %c0_2 = arith.constant 0 : index
    %5 = vector.load %arg1[%c0_1, %c0_2] : memref<32x32xbf16, #tpu.memory_space<vmem>>, vector<32x32xbf16>
    %cst = arith.constant dense<0.000000e+00> : vector<392x32xf32>
    %6 = tpu.matmul %4, %5, %cst {dimension_numbers = #tpu.dot_dimension_numbers<[1], [0], [0], [1], [0, 0, 1, 1], [], []>} : vector<392x32xbf16>, vector<32x32xbf16>, vector<392x32xf32> -> vector<392x32xf32>
    %c0_3 = arith.constant 0 : index
    %c0_4 = arith.constant 0 : index
    %7 = vector.load %arg2[%c0_3, %c0_4] : memref<1x32xf32, #tpu.memory_space<vmem>>, vector<1x32xf32>
    %8 = vector.broadcast %7 : vector<1x32xf32> to vector<392x32xf32>
    %9 = arith.addf %6, %8 : vector<392x32xf32>
    %cst_5 = arith.constant 0.000000e+00 : f32
    %10 = vector.broadcast %cst_5 : f32 to vector<392x32xf32>
    %11 = arith.subf %10, %9 : vector<392x32xf32>
    %12 = math.exp %11 : vector<392x32xf32>
    %cst_6 = arith.constant 1.000000e+00 : f32
    %13 = vector.broadcast %cst_6 : f32 to vector<392x32xf32>
    %14 = arith.addf %13, %12 : vector<392x32xf32>
    %15 = tpu.reciprocal %14 {approx = true} : vector<392x32xf32> -> vector<392x32xf32>
    %16 = arith.mulf %9, %15 : vector<392x32xf32>
    %17 = arith.truncf %16 : vector<392x32xf32> to vector<392x32xbf16>
    %c0_7 = arith.constant 0 : index
    %c0_8 = arith.constant 0 : index
    %18 = vector.load %arg3[%c0_7, %c0_8] : memref<32x1280xbf16, #tpu.memory_space<vmem>>, vector<32x1280xbf16>
    %cst_9 = arith.constant dense<0.000000e+00> : vector<392x1280xf32>
    %19 = tpu.matmul %17, %18, %cst_9 {dimension_numbers = #tpu.dot_dimension_numbers<[1], [0], [0], [1], [0, 0, 1, 1], [], []>} : vector<392x32xbf16>, vector<32x1280xbf16>, vector<392x1280xf32> -> vector<392x1280xf32>
    %c0_10 = arith.constant 0 : index
    %c0_11 = arith.constant 0 : index
    %20 = vector.load %arg4[%c0_10, %c0_11] : memref<1x1280xf32, #tpu.memory_space<vmem>>, vector<1x1280xf32>
    %21 = vector.broadcast %20 : vector<1x1280xf32> to vector<392x1280xf32>
    %22 = arith.addf %19, %21 : vector<392x1280xf32>
    %cst_12 = arith.constant 0.000000e+00 : f32
    %23 = vector.broadcast %cst_12 : f32 to vector<392x1280xf32>
    %24 = arith.subf %23, %22 : vector<392x1280xf32>
    %25 = math.exp %24 : vector<392x1280xf32>
    %cst_13 = arith.constant 1.000000e+00 : f32
    %26 = vector.broadcast %cst_13 : f32 to vector<392x1280xf32>
    %27 = arith.addf %26, %25 : vector<392x1280xf32>
    %28 = tpu.reciprocal %27 {approx = true} : vector<392x1280xf32> -> vector<392x1280xf32>
    %29 = arith.mulf %22, %28 : vector<392x1280xf32>
    %c0_14 = arith.constant 0 : index
    %c0_15 = arith.constant 0 : index
    %30 = vector.load %arg5[%c0_14, %c0_15] : memref<8x392xf32, #tpu.memory_space<vmem>>, vector<8x392xf32>
    %cst_16 = arith.constant dense<0.000000e+00> : vector<8x1280xf32>
    %31 = tpu.matmul %30, %29, %cst_16 {dimension_numbers = #tpu.dot_dimension_numbers<[1], [0], [0], [1], [0, 0, 1, 1], [], []>} : vector<8x392xf32>, vector<392x1280xf32>, vector<8x1280xf32> -> vector<8x1280xf32>
    %c0_i32_17 = arith.constant 0 : i32
    %32 = tpu.memref_slice %arg14[%c0_i32_17] : memref<2x!tpu.dma_semaphore, #tpu.memory_space<semaphore_mem>> -> memref<1x!tpu.dma_semaphore, #tpu.memory_space<semaphore_mem>>
    %33 = tpu.memref_squeeze %32 : memref<1x!tpu.dma_semaphore, #tpu.memory_space<semaphore_mem>> -> memref<!tpu.dma_semaphore, #tpu.memory_space<semaphore_mem>>
    tpu.wait_dma2 semaphore(%33 : memref<!tpu.dma_semaphore, #tpu.memory_space<semaphore_mem>>) src(%arg9 : memref<1280x384xbf16, #tpu.memory_space<any>>) dst(%arg12 : memref<1280x384xbf16, #tpu.memory_space<vmem>>)
    %34 = arith.truncf %31 : vector<8x1280xf32> to vector<8x1280xbf16>
    %c0_18 = arith.constant 0 : index
    %c0_19 = arith.constant 0 : index
    %35 = vector.load %arg12[%c0_18, %c0_19] : memref<1280x384xbf16, #tpu.memory_space<vmem>>, vector<1280x384xbf16>
    %cst_20 = arith.constant dense<0.000000e+00> : vector<8x384xf32>
    %36 = tpu.matmul %34, %35, %cst_20 {dimension_numbers = #tpu.dot_dimension_numbers<[1], [0], [0], [1], [0, 0, 1, 1], [], []>} : vector<8x1280xbf16>, vector<1280x384xbf16>, vector<8x384xf32> -> vector<8x384xf32>
    %c0_21 = arith.constant 0 : index
    %c0_22 = arith.constant 0 : index
    %37 = vector.load %arg6[%c0_21, %c0_22] : memref<1x384xf32, #tpu.memory_space<vmem>>, vector<1x384xf32>
    %38 = vector.broadcast %37 : vector<1x384xf32> to vector<8x384xf32>
    %39 = arith.addf %36, %38 : vector<8x384xf32>
    %c0_23 = arith.constant 0 : index
    %c0_24 = arith.constant 0 : index
    %40 = vector.load %arg7[%c0_23, %c0_24] : memref<2x32xf32, #tpu.memory_space<vmem>>, vector<2x32xf32>
    %41 = vector.extract_strided_slice %39 {offsets = [0, 0], sizes = [8, 32], strides = [1, 1]} : vector<8x384xf32> to vector<8x32xf32>
    %cst_25 = arith.constant 0.000000e+00 : f32
    %42 = vector.broadcast %cst_25 : f32 to vector<8x32xf32>
    %43 = arith.subf %42, %41 : vector<8x32xf32>
    %44 = math.exp %43 : vector<8x32xf32>
    %cst_26 = arith.constant 1.000000e+00 : f32
    %45 = vector.broadcast %cst_26 : f32 to vector<8x32xf32>
    %46 = arith.addf %45, %44 : vector<8x32xf32>
    %47 = tpu.reciprocal %46 {approx = true} : vector<8x32xf32> -> vector<8x32xf32>
    %48 = vector.extract_strided_slice %39 {offsets = [0, 32], sizes = [8, 32], strides = [1, 1]} : vector<8x384xf32> to vector<8x32xf32>
    %cst_27 = arith.constant 0.000000e+00 : f32
    %49 = vector.broadcast %cst_27 : f32 to vector<8x32xf32>
    %50 = arith.subf %49, %48 : vector<8x32xf32>
    %51 = math.exp %50 : vector<8x32xf32>
    %cst_28 = arith.constant 1.000000e+00 : f32
    %52 = vector.broadcast %cst_28 : f32 to vector<8x32xf32>
    %53 = arith.addf %52, %51 : vector<8x32xf32>
    %54 = tpu.reciprocal %53 {approx = true} : vector<8x32xf32> -> vector<8x32xf32>
    %55 = vector.extract_strided_slice %39 {offsets = [0, 64], sizes = [8, 32], strides = [1, 1]} : vector<8x384xf32> to vector<8x32xf32>
    %56 = vector.extract_strided_slice %40 {offsets = [0, 0], sizes = [1, 32], strides = [1, 1]} : vector<2x32xf32> to vector<1x32xf32>
    %57 = vector.broadcast %56 : vector<1x32xf32> to vector<8x32xf32>
    %58 = arith.mulf %47, %57 : vector<8x32xf32>
    %59 = arith.addf %55, %58 : vector<8x32xf32>
    %60 = math.tanh %59 : vector<8x32xf32>
    %cst_29 = arith.constant 1.000000e+00 : f32
    %61 = vector.broadcast %cst_29 : f32 to vector<8x32xf32>
    %62 = arith.subf %61, %54 : vector<8x32xf32>
    %63 = arith.mulf %62, %60 : vector<8x32xf32>
    %64 = vector.extract_strided_slice %39 {offsets = [0, 96], sizes = [8, 32], strides = [1, 1]} : vector<8x384xf32> to vector<8x32xf32>
    %cst_30 = arith.constant 0.000000e+00 : f32
    %65 = vector.broadcast %cst_30 : f32 to vector<8x32xf32>
    %66 = arith.subf %65, %64 : vector<8x32xf32>
    %67 = math.exp %66 : vector<8x32xf32>
    %cst_31 = arith.constant 1.000000e+00 : f32
    %68 = vector.broadcast %cst_31 : f32 to vector<8x32xf32>
    %69 = arith.addf %68, %67 : vector<8x32xf32>
    %70 = tpu.reciprocal %69 {approx = true} : vector<8x32xf32> -> vector<8x32xf32>
    %71 = vector.extract_strided_slice %39 {offsets = [0, 128], sizes = [8, 32], strides = [1, 1]} : vector<8x384xf32> to vector<8x32xf32>
    %cst_32 = arith.constant 0.000000e+00 : f32
    %72 = vector.broadcast %cst_32 : f32 to vector<8x32xf32>
    %73 = arith.subf %72, %71 : vector<8x32xf32>
    %74 = math.exp %73 : vector<8x32xf32>
    %cst_33 = arith.constant 1.000000e+00 : f32
    %75 = vector.broadcast %cst_33 : f32 to vector<8x32xf32>
    %76 = arith.addf %75, %74 : vector<8x32xf32>
    %77 = tpu.reciprocal %76 {approx = true} : vector<8x32xf32> -> vector<8x32xf32>
    %78 = vector.extract_strided_slice %39 {offsets = [0, 160], sizes = [8, 32], strides = [1, 1]} : vector<8x384xf32> to vector<8x32xf32>
    %79 = vector.extract_strided_slice %40 {offsets = [1, 0], sizes = [1, 32], strides = [1, 1]} : vector<2x32xf32> to vector<1x32xf32>
    %80 = vector.broadcast %79 : vector<1x32xf32> to vector<8x32xf32>
    %81 = arith.mulf %70, %80 : vector<8x32xf32>
    %82 = arith.addf %78, %81 : vector<8x32xf32>
    %83 = math.tanh %82 : vector<8x32xf32>
    %cst_34 = arith.constant 1.000000e+00 : f32
    %84 = vector.broadcast %cst_34 : f32 to vector<8x32xf32>
    %85 = arith.subf %84, %77 : vector<8x32xf32>
    %86 = arith.mulf %85, %83 : vector<8x32xf32>
    %87 = vector.extract_strided_slice %39 {offsets = [0, 192], sizes = [8, 32], strides = [1, 1]} : vector<8x384xf32> to vector<8x32xf32>
    %cst_35 = arith.constant 0.000000e+00 : f32
    %88 = vector.broadcast %cst_35 : f32 to vector<8x32xf32>
    %89 = arith.subf %88, %87 : vector<8x32xf32>
    %90 = math.exp %89 : vector<8x32xf32>
    %cst_36 = arith.constant 1.000000e+00 : f32
    %91 = vector.broadcast %cst_36 : f32 to vector<8x32xf32>
    %92 = arith.addf %91, %90 : vector<8x32xf32>
    %93 = tpu.reciprocal %92 {approx = true} : vector<8x32xf32> -> vector<8x32xf32>
    %94 = vector.extract_strided_slice %39 {offsets = [0, 224], sizes = [8, 32], strides = [1, 1]} : vector<8x384xf32> to vector<8x32xf32>
    %95 = math.tanh %94 : vector<8x32xf32>
    %96 = vector.extract_strided_slice %39 {offsets = [0, 256], sizes = [8, 32], strides = [1, 1]} : vector<8x384xf32> to vector<8x32xf32>
    %cst_37 = arith.constant 0.000000e+00 : f32
    %97 = vector.broadcast %cst_37 : f32 to vector<8x32xf32>
    %98 = arith.subf %97, %96 : vector<8x32xf32>
    %99 = math.exp %98 : vector<8x32xf32>
    %cst_38 = arith.constant 1.000000e+00 : f32
    %100 = vector.broadcast %cst_38 : f32 to vector<8x32xf32>
    %101 = arith.addf %100, %99 : vector<8x32xf32>
    %102 = tpu.reciprocal %101 {approx = true} : vector<8x32xf32> -> vector<8x32xf32>
    %103 = arith.mulf %93, %95 : vector<8x32xf32>
    %104 = math.tanh %103 : vector<8x32xf32>
    %105 = arith.mulf %102, %104 : vector<8x32xf32>
    %106 = vector.extract_strided_slice %39 {offsets = [0, 288], sizes = [8, 32], strides = [1, 1]} : vector<8x384xf32> to vector<8x32xf32>
    %cst_39 = arith.constant 0.000000e+00 : f32
    %107 = vector.broadcast %cst_39 : f32 to vector<8x32xf32>
    %108 = arith.subf %107, %106 : vector<8x32xf32>
    %109 = math.exp %108 : vector<8x32xf32>
    %cst_40 = arith.constant 1.000000e+00 : f32
    %110 = vector.broadcast %cst_40 : f32 to vector<8x32xf32>
    %111 = arith.addf %110, %109 : vector<8x32xf32>
    %112 = tpu.reciprocal %111 {approx = true} : vector<8x32xf32> -> vector<8x32xf32>
    %113 = vector.extract_strided_slice %39 {offsets = [0, 320], sizes = [8, 32], strides = [1, 1]} : vector<8x384xf32> to vector<8x32xf32>
    %114 = math.tanh %113 : vector<8x32xf32>
    %115 = vector.extract_strided_slice %39 {offsets = [0, 352], sizes = [8, 32], strides = [1, 1]} : vector<8x384xf32> to vector<8x32xf32>
    %cst_41 = arith.constant 0.000000e+00 : f32
    %116 = vector.broadcast %cst_41 : f32 to vector<8x32xf32>
    %117 = arith.subf %116, %115 : vector<8x32xf32>
    %118 = math.exp %117 : vector<8x32xf32>
    %cst_42 = arith.constant 1.000000e+00 : f32
    %119 = vector.broadcast %cst_42 : f32 to vector<8x32xf32>
    %120 = arith.addf %119, %118 : vector<8x32xf32>
    %121 = tpu.reciprocal %120 {approx = true} : vector<8x32xf32> -> vector<8x32xf32>
    %122 = arith.mulf %112, %114 : vector<8x32xf32>
    %123 = math.tanh %122 : vector<8x32xf32>
    %124 = arith.mulf %121, %123 : vector<8x32xf32>
    %125 = tpu.concatenate %63, %86, %105, %124 in 1 : vector<8x32xf32>, vector<8x32xf32>, vector<8x32xf32>, vector<8x32xf32> -> vector<8x128xf32>
    %c1_i32_43 = arith.constant 1 : i32
    %126 = tpu.memref_slice %arg14[%c1_i32_43] : memref<2x!tpu.dma_semaphore, #tpu.memory_space<semaphore_mem>> -> memref<1x!tpu.dma_semaphore, #tpu.memory_space<semaphore_mem>>
    %127 = tpu.memref_squeeze %126 : memref<1x!tpu.dma_semaphore, #tpu.memory_space<semaphore_mem>> -> memref<!tpu.dma_semaphore, #tpu.memory_space<semaphore_mem>>
    tpu.wait_dma2 semaphore(%127 : memref<!tpu.dma_semaphore, #tpu.memory_space<semaphore_mem>>) src(%arg10 : memref<128x1280xbf16, #tpu.memory_space<any>>) dst(%arg13 : memref<128x1280xbf16, #tpu.memory_space<vmem>>)
    %128 = arith.truncf %125 : vector<8x128xf32> to vector<8x128xbf16>
    %c0_44 = arith.constant 0 : index
    %c0_45 = arith.constant 0 : index
    %129 = vector.load %arg13[%c0_44, %c0_45] : memref<128x1280xbf16, #tpu.memory_space<vmem>>, vector<128x1280xbf16>
    %cst_46 = arith.constant dense<0.000000e+00> : vector<8x1280xf32>
    %130 = tpu.matmul %128, %129, %cst_46 {dimension_numbers = #tpu.dot_dimension_numbers<[1], [0], [0], [1], [0, 0, 1, 1], [], []>} : vector<8x128xbf16>, vector<128x1280xbf16>, vector<8x1280xf32> -> vector<8x1280xf32>
    %c0_47 = arith.constant 0 : index
    %c0_48 = arith.constant 0 : index
    %131 = vector.load %arg8[%c0_47, %c0_48] : memref<1x1280xf32, #tpu.memory_space<vmem>>, vector<1x1280xf32>
    %132 = vector.broadcast %131 : vector<1x1280xf32> to vector<8x1280xf32>
    %133 = arith.addf %130, %132 : vector<8x1280xf32>
    %134 = vector.extract_strided_slice %133 {offsets = [0, 0], sizes = [8, 128], strides = [1, 1]} : vector<8x1280xf32> to vector<8x128xf32>
    %cst_49 = arith.constant dense<0xFF800000> : vector<8xf32>
    %135 = vector.multi_reduction <maximumf>, %134, %cst_49 [1] : vector<8x128xf32> to vector<8xf32>
    %136 = vector.shape_cast %135 : vector<8xf32> to vector<8x1xf32>
    %137 = vector.broadcast %136 : vector<8x1xf32> to vector<8x128xf32>
    %138 = arith.subf %134, %137 : vector<8x128xf32>
    %139 = math.exp %138 : vector<8x128xf32>
    %cst_50 = arith.constant dense<0.000000e+00> : vector<8xf32>
    %140 = vector.multi_reduction <add>, %139, %cst_50 [1] : vector<8x128xf32> to vector<8xf32>
    %141 = vector.shape_cast %140 : vector<8xf32> to vector<8x1xf32>
    %142 = tpu.reciprocal %141 {approx = true} : vector<8x1xf32> -> vector<8x1xf32>
    %143 = vector.broadcast %142 : vector<8x1xf32> to vector<8x128xf32>
    %144 = arith.mulf %139, %143 : vector<8x128xf32>
    %c0_51 = arith.constant 0 : index
    %c0_52 = arith.constant 0 : index
    %c0_53 = arith.constant 0 : index
    %145 = vector.load %arg11[%c0_51, %c0_52, %c0_53] : memref<10x8x128xf32, #tpu.memory_space<vmem>>, vector<1x8x128xf32>
    %146 = vector.shape_cast %145 : vector<1x8x128xf32> to vector<8x128xf32>
    %147 = vector.shape_cast %144 : vector<8x128xf32> to vector<1x8x128xf32>
    tpu.vector_store %arg11[%c0_51, %c0_52, %c0_53], %147 {strides = array<i32>} : memref<10x8x128xf32, #tpu.memory_space<vmem>>, vector<1x8x128xf32>,
    %148 = vector.extract_strided_slice %133 {offsets = [0, 128], sizes = [8, 128], strides = [1, 1]} : vector<8x1280xf32> to vector<8x128xf32>
    %cst_54 = arith.constant dense<0xFF800000> : vector<8xf32>
    %149 = vector.multi_reduction <maximumf>, %148, %cst_54 [1] : vector<8x128xf32> to vector<8xf32>
    %150 = vector.shape_cast %149 : vector<8xf32> to vector<8x1xf32>
    %151 = vector.broadcast %150 : vector<8x1xf32> to vector<8x128xf32>
    %152 = arith.subf %148, %151 : vector<8x128xf32>
    %153 = math.exp %152 : vector<8x128xf32>
    %cst_55 = arith.constant dense<0.000000e+00> : vector<8xf32>
    %154 = vector.multi_reduction <add>, %153, %cst_55 [1] : vector<8x128xf32> to vector<8xf32>
    %155 = vector.shape_cast %154 : vector<8xf32> to vector<8x1xf32>
    %156 = tpu.reciprocal %155 {approx = true} : vector<8x1xf32> -> vector<8x1xf32>
    %157 = vector.broadcast %156 : vector<8x1xf32> to vector<8x128xf32>
    %158 = arith.mulf %153, %157 : vector<8x128xf32>
    %c1 = arith.constant 1 : index
    %c0_56 = arith.constant 0 : index
    %c0_57 = arith.constant 0 : index
    %159 = vector.load %arg11[%c1, %c0_56, %c0_57] : memref<10x8x128xf32, #tpu.memory_space<vmem>>, vector<1x8x128xf32>
    %160 = vector.shape_cast %159 : vector<1x8x128xf32> to vector<8x128xf32>
    %161 = vector.shape_cast %158 : vector<8x128xf32> to vector<1x8x128xf32>
    tpu.vector_store %arg11[%c1, %c0_56, %c0_57], %161 {strides = array<i32>} : memref<10x8x128xf32, #tpu.memory_space<vmem>>, vector<1x8x128xf32>,
    %162 = vector.extract_strided_slice %133 {offsets = [0, 256], sizes = [8, 128], strides = [1, 1]} : vector<8x1280xf32> to vector<8x128xf32>
    %cst_58 = arith.constant dense<0xFF800000> : vector<8xf32>
    %163 = vector.multi_reduction <maximumf>, %162, %cst_58 [1] : vector<8x128xf32> to vector<8xf32>
    %164 = vector.shape_cast %163 : vector<8xf32> to vector<8x1xf32>
    %165 = vector.broadcast %164 : vector<8x1xf32> to vector<8x128xf32>
    %166 = arith.subf %162, %165 : vector<8x128xf32>
    %167 = math.exp %166 : vector<8x128xf32>
    %cst_59 = arith.constant dense<0.000000e+00> : vector<8xf32>
    %168 = vector.multi_reduction <add>, %167, %cst_59 [1] : vector<8x128xf32> to vector<8xf32>
    %169 = vector.shape_cast %168 : vector<8xf32> to vector<8x1xf32>
    %170 = tpu.reciprocal %169 {approx = true} : vector<8x1xf32> -> vector<8x1xf32>
    %171 = vector.broadcast %170 : vector<8x1xf32> to vector<8x128xf32>
    %172 = arith.mulf %167, %171 : vector<8x128xf32>
    %c2 = arith.constant 2 : index
    %c0_60 = arith.constant 0 : index
    %c0_61 = arith.constant 0 : index
    %173 = vector.load %arg11[%c2, %c0_60, %c0_61] : memref<10x8x128xf32, #tpu.memory_space<vmem>>, vector<1x8x128xf32>
    %174 = vector.shape_cast %173 : vector<1x8x128xf32> to vector<8x128xf32>
    %175 = vector.shape_cast %172 : vector<8x128xf32> to vector<1x8x128xf32>
    tpu.vector_store %arg11[%c2, %c0_60, %c0_61], %175 {strides = array<i32>} : memref<10x8x128xf32, #tpu.memory_space<vmem>>, vector<1x8x128xf32>,
    %176 = vector.extract_strided_slice %133 {offsets = [0, 384], sizes = [8, 128], strides = [1, 1]} : vector<8x1280xf32> to vector<8x128xf32>
    %cst_62 = arith.constant dense<0xFF800000> : vector<8xf32>
    %177 = vector.multi_reduction <maximumf>, %176, %cst_62 [1] : vector<8x128xf32> to vector<8xf32>
    %178 = vector.shape_cast %177 : vector<8xf32> to vector<8x1xf32>
    %179 = vector.broadcast %178 : vector<8x1xf32> to vector<8x128xf32>
    %180 = arith.subf %176, %179 : vector<8x128xf32>
    %181 = math.exp %180 : vector<8x128xf32>
    %cst_63 = arith.constant dense<0.000000e+00> : vector<8xf32>
    %182 = vector.multi_reduction <add>, %181, %cst_63 [1] : vector<8x128xf32> to vector<8xf32>
    %183 = vector.shape_cast %182 : vector<8xf32> to vector<8x1xf32>
    %184 = tpu.reciprocal %183 {approx = true} : vector<8x1xf32> -> vector<8x1xf32>
    %185 = vector.broadcast %184 : vector<8x1xf32> to vector<8x128xf32>
    %186 = arith.mulf %181, %185 : vector<8x128xf32>
    %c3 = arith.constant 3 : index
    %c0_64 = arith.constant 0 : index
    %c0_65 = arith.constant 0 : index
    %187 = vector.load %arg11[%c3, %c0_64, %c0_65] : memref<10x8x128xf32, #tpu.memory_space<vmem>>, vector<1x8x128xf32>
    %188 = vector.shape_cast %187 : vector<1x8x128xf32> to vector<8x128xf32>
    %189 = vector.shape_cast %186 : vector<8x128xf32> to vector<1x8x128xf32>
    tpu.vector_store %arg11[%c3, %c0_64, %c0_65], %189 {strides = array<i32>} : memref<10x8x128xf32, #tpu.memory_space<vmem>>, vector<1x8x128xf32>,
    %190 = vector.extract_strided_slice %133 {offsets = [0, 512], sizes = [8, 128], strides = [1, 1]} : vector<8x1280xf32> to vector<8x128xf32>
    %cst_66 = arith.constant dense<0xFF800000> : vector<8xf32>
    %191 = vector.multi_reduction <maximumf>, %190, %cst_66 [1] : vector<8x128xf32> to vector<8xf32>
    %192 = vector.shape_cast %191 : vector<8xf32> to vector<8x1xf32>
    %193 = vector.broadcast %192 : vector<8x1xf32> to vector<8x128xf32>
    %194 = arith.subf %190, %193 : vector<8x128xf32>
    %195 = math.exp %194 : vector<8x128xf32>
    %cst_67 = arith.constant dense<0.000000e+00> : vector<8xf32>
    %196 = vector.multi_reduction <add>, %195, %cst_67 [1] : vector<8x128xf32> to vector<8xf32>
    %197 = vector.shape_cast %196 : vector<8xf32> to vector<8x1xf32>
    %198 = tpu.reciprocal %197 {approx = true} : vector<8x1xf32> -> vector<8x1xf32>
    %199 = vector.broadcast %198 : vector<8x1xf32> to vector<8x128xf32>
    %200 = arith.mulf %195, %199 : vector<8x128xf32>
    %c4 = arith.constant 4 : index
    %c0_68 = arith.constant 0 : index
    %c0_69 = arith.constant 0 : index
    %201 = vector.load %arg11[%c4, %c0_68, %c0_69] : memref<10x8x128xf32, #tpu.memory_space<vmem>>, vector<1x8x128xf32>
    %202 = vector.shape_cast %201 : vector<1x8x128xf32> to vector<8x128xf32>
    %203 = vector.shape_cast %200 : vector<8x128xf32> to vector<1x8x128xf32>
    tpu.vector_store %arg11[%c4, %c0_68, %c0_69], %203 {strides = array<i32>} : memref<10x8x128xf32, #tpu.memory_space<vmem>>, vector<1x8x128xf32>,
    %204 = vector.extract_strided_slice %133 {offsets = [0, 640], sizes = [8, 128], strides = [1, 1]} : vector<8x1280xf32> to vector<8x128xf32>
    %cst_70 = arith.constant dense<0xFF800000> : vector<8xf32>
    %205 = vector.multi_reduction <maximumf>, %204, %cst_70 [1] : vector<8x128xf32> to vector<8xf32>
    %206 = vector.shape_cast %205 : vector<8xf32> to vector<8x1xf32>
    %207 = vector.broadcast %206 : vector<8x1xf32> to vector<8x128xf32>
    %208 = arith.subf %204, %207 : vector<8x128xf32>
    %209 = math.exp %208 : vector<8x128xf32>
    %cst_71 = arith.constant dense<0.000000e+00> : vector<8xf32>
    %210 = vector.multi_reduction <add>, %209, %cst_71 [1] : vector<8x128xf32> to vector<8xf32>
    %211 = vector.shape_cast %210 : vector<8xf32> to vector<8x1xf32>
    %212 = tpu.reciprocal %211 {approx = true} : vector<8x1xf32> -> vector<8x1xf32>
    %213 = vector.broadcast %212 : vector<8x1xf32> to vector<8x128xf32>
    %214 = arith.mulf %209, %213 : vector<8x128xf32>
    %c5 = arith.constant 5 : index
    %c0_72 = arith.constant 0 : index
    %c0_73 = arith.constant 0 : index
    %215 = vector.load %arg11[%c5, %c0_72, %c0_73] : memref<10x8x128xf32, #tpu.memory_space<vmem>>, vector<1x8x128xf32>
    %216 = vector.shape_cast %215 : vector<1x8x128xf32> to vector<8x128xf32>
    %217 = vector.shape_cast %214 : vector<8x128xf32> to vector<1x8x128xf32>
    tpu.vector_store %arg11[%c5, %c0_72, %c0_73], %217 {strides = array<i32>} : memref<10x8x128xf32, #tpu.memory_space<vmem>>, vector<1x8x128xf32>,
    %218 = vector.extract_strided_slice %133 {offsets = [0, 768], sizes = [8, 128], strides = [1, 1]} : vector<8x1280xf32> to vector<8x128xf32>
    %cst_74 = arith.constant dense<0xFF800000> : vector<8xf32>
    %219 = vector.multi_reduction <maximumf>, %218, %cst_74 [1] : vector<8x128xf32> to vector<8xf32>
    %220 = vector.shape_cast %219 : vector<8xf32> to vector<8x1xf32>
    %221 = vector.broadcast %220 : vector<8x1xf32> to vector<8x128xf32>
    %222 = arith.subf %218, %221 : vector<8x128xf32>
    %223 = math.exp %222 : vector<8x128xf32>
    %cst_75 = arith.constant dense<0.000000e+00> : vector<8xf32>
    %224 = vector.multi_reduction <add>, %223, %cst_75 [1] : vector<8x128xf32> to vector<8xf32>
    %225 = vector.shape_cast %224 : vector<8xf32> to vector<8x1xf32>
    %226 = tpu.reciprocal %225 {approx = true} : vector<8x1xf32> -> vector<8x1xf32>
    %227 = vector.broadcast %226 : vector<8x1xf32> to vector<8x128xf32>
    %228 = arith.mulf %223, %227 : vector<8x128xf32>
    %c6 = arith.constant 6 : index
    %c0_76 = arith.constant 0 : index
    %c0_77 = arith.constant 0 : index
    %229 = vector.load %arg11[%c6, %c0_76, %c0_77] : memref<10x8x128xf32, #tpu.memory_space<vmem>>, vector<1x8x128xf32>
    %230 = vector.shape_cast %229 : vector<1x8x128xf32> to vector<8x128xf32>
    %231 = vector.shape_cast %228 : vector<8x128xf32> to vector<1x8x128xf32>
    tpu.vector_store %arg11[%c6, %c0_76, %c0_77], %231 {strides = array<i32>} : memref<10x8x128xf32, #tpu.memory_space<vmem>>, vector<1x8x128xf32>,
    %232 = vector.extract_strided_slice %133 {offsets = [0, 896], sizes = [8, 128], strides = [1, 1]} : vector<8x1280xf32> to vector<8x128xf32>
    %cst_78 = arith.constant dense<0xFF800000> : vector<8xf32>
    %233 = vector.multi_reduction <maximumf>, %232, %cst_78 [1] : vector<8x128xf32> to vector<8xf32>
    %234 = vector.shape_cast %233 : vector<8xf32> to vector<8x1xf32>
    %235 = vector.broadcast %234 : vector<8x1xf32> to vector<8x128xf32>
    %236 = arith.subf %232, %235 : vector<8x128xf32>
    %237 = math.exp %236 : vector<8x128xf32>
    %cst_79 = arith.constant dense<0.000000e+00> : vector<8xf32>
    %238 = vector.multi_reduction <add>, %237, %cst_79 [1] : vector<8x128xf32> to vector<8xf32>
    %239 = vector.shape_cast %238 : vector<8xf32> to vector<8x1xf32>
    %240 = tpu.reciprocal %239 {approx = true} : vector<8x1xf32> -> vector<8x1xf32>
    %241 = vector.broadcast %240 : vector<8x1xf32> to vector<8x128xf32>
    %242 = arith.mulf %237, %241 : vector<8x128xf32>
    %c7 = arith.constant 7 : index
    %c0_80 = arith.constant 0 : index
    %c0_81 = arith.constant 0 : index
    %243 = vector.load %arg11[%c7, %c0_80, %c0_81] : memref<10x8x128xf32, #tpu.memory_space<vmem>>, vector<1x8x128xf32>
    %244 = vector.shape_cast %243 : vector<1x8x128xf32> to vector<8x128xf32>
    %245 = vector.shape_cast %242 : vector<8x128xf32> to vector<1x8x128xf32>
    tpu.vector_store %arg11[%c7, %c0_80, %c0_81], %245 {strides = array<i32>} : memref<10x8x128xf32, #tpu.memory_space<vmem>>, vector<1x8x128xf32>,
    %246 = vector.extract_strided_slice %133 {offsets = [0, 1024], sizes = [8, 128], strides = [1, 1]} : vector<8x1280xf32> to vector<8x128xf32>
    %cst_82 = arith.constant dense<0xFF800000> : vector<8xf32>
    %247 = vector.multi_reduction <maximumf>, %246, %cst_82 [1] : vector<8x128xf32> to vector<8xf32>
    %248 = vector.shape_cast %247 : vector<8xf32> to vector<8x1xf32>
    %249 = vector.broadcast %248 : vector<8x1xf32> to vector<8x128xf32>
    %250 = arith.subf %246, %249 : vector<8x128xf32>
    %251 = math.exp %250 : vector<8x128xf32>
    %cst_83 = arith.constant dense<0.000000e+00> : vector<8xf32>
    %252 = vector.multi_reduction <add>, %251, %cst_83 [1] : vector<8x128xf32> to vector<8xf32>
    %253 = vector.shape_cast %252 : vector<8xf32> to vector<8x1xf32>
    %254 = tpu.reciprocal %253 {approx = true} : vector<8x1xf32> -> vector<8x1xf32>
    %255 = vector.broadcast %254 : vector<8x1xf32> to vector<8x128xf32>
    %256 = arith.mulf %251, %255 : vector<8x128xf32>
    %c8 = arith.constant 8 : index
    %c0_84 = arith.constant 0 : index
    %c0_85 = arith.constant 0 : index
    %257 = vector.load %arg11[%c8, %c0_84, %c0_85] : memref<10x8x128xf32, #tpu.memory_space<vmem>>, vector<1x8x128xf32>
    %258 = vector.shape_cast %257 : vector<1x8x128xf32> to vector<8x128xf32>
    %259 = vector.shape_cast %256 : vector<8x128xf32> to vector<1x8x128xf32>
    tpu.vector_store %arg11[%c8, %c0_84, %c0_85], %259 {strides = array<i32>} : memref<10x8x128xf32, #tpu.memory_space<vmem>>, vector<1x8x128xf32>,
    %260 = vector.extract_strided_slice %133 {offsets = [0, 1152], sizes = [8, 128], strides = [1, 1]} : vector<8x1280xf32> to vector<8x128xf32>
    %cst_86 = arith.constant dense<0xFF800000> : vector<8xf32>
    %261 = vector.multi_reduction <maximumf>, %260, %cst_86 [1] : vector<8x128xf32> to vector<8xf32>
    %262 = vector.shape_cast %261 : vector<8xf32> to vector<8x1xf32>
    %263 = vector.broadcast %262 : vector<8x1xf32> to vector<8x128xf32>
    %264 = arith.subf %260, %263 : vector<8x128xf32>
    %265 = math.exp %264 : vector<8x128xf32>
    %cst_87 = arith.constant dense<0.000000e+00> : vector<8xf32>
    %266 = vector.multi_reduction <add>, %265, %cst_87 [1] : vector<8x128xf32> to vector<8xf32>
    %267 = vector.shape_cast %266 : vector<8xf32> to vector<8x1xf32>
    %268 = tpu.reciprocal %267 {approx = true} : vector<8x1xf32> -> vector<8x1xf32>
    %269 = vector.broadcast %268 : vector<8x1xf32> to vector<8x128xf32>
    %270 = arith.mulf %265, %269 : vector<8x128xf32>
    %c9 = arith.constant 9 : index
    %c0_88 = arith.constant 0 : index
    %c0_89 = arith.constant 0 : index
    %271 = vector.load %arg11[%c9, %c0_88, %c0_89] : memref<10x8x128xf32, #tpu.memory_space<vmem>>, vector<1x8x128xf32>
    %272 = vector.shape_cast %271 : vector<1x8x128xf32> to vector<8x128xf32>
    %273 = vector.shape_cast %270 : vector<8x128xf32> to vector<1x8x128xf32>
    tpu.vector_store %arg11[%c9, %c0_88, %c0_89], %273 {strides = array<i32>} : memref<10x8x128xf32, #tpu.memory_space<vmem>>, vector<1x8x128xf32>,
    return
  }
}

</mosaic_0001>

<llo_original>
// kernel: crnn_forward.1
$region0: #{crnn_forward.1}
  #allocation0 [shape = 'u32[]', space=smem, size = 0x4, offset = 0x4, fixed_abs, tag = 'smem constant byte address 0x4 - core index']
  #allocation1 [shape = 'u32[144,128]{1,0:T(1,128)}', space=vmem, size = 0x12000, scoped, tag = 'internal scratch']
  #allocation2 [shape = 'bf16[1280,384]{1,0:T(16,128)(2,1)}', space=vmem, size = 0xf0000, scoped, tag = 'scratch operand']
  #allocation3 [shape = 'bf16[128,1280]{1,0:T(16,128)(2,1)}', space=vmem, size = 0x50000, scoped, tag = 'scratch operand']
  #allocation4 [shape = 's32[2]{0}', space=sflag, size = 0x8, scoped, tag = 'scratch operand']
  #allocation5 [shape = 's32[]', space=sflag, size = 0x4, offset = 0, fixed_abs, tag = 'sflag constant byte address 0x0 - dummy sync flag']
  #allocation6 [shape = 's32[]', space=sflag, size = 0x4, offset = 0, fixed_abs, tag = 'sflag constant byte address 0x0 - dummy sync flag']
  %s0 = inlined_call_operand.vmem [shape: bf16[392,32], index: 0, kind: input, shape index: {}]
  %s1 = inlined_call_operand.vmem [shape: bf16[32,32], index: 1, kind: input, shape index: {}]
  %s2 = inlined_call_operand.vmem [shape: f32[1,32], index: 2, kind: input, shape index: {}]
  %s3 = inlined_call_operand.vmem [shape: bf16[32,1280], index: 3, kind: input, shape index: {}]
  %s4 = inlined_call_operand.vmem [shape: f32[1,1280], index: 4, kind: input, shape index: {}]
  %s5 = inlined_call_operand.vmem [shape: f32[8,392], index: 5, kind: input, shape index: {}]
  %s6 = inlined_call_operand.vmem [shape: f32[1,384], index: 6, kind: input, shape index: {}]
  %s7 = inlined_call_operand.vmem [shape: f32[2,32], index: 7, kind: input, shape index: {}]
  %s8 = inlined_call_operand.vmem [shape: f32[1,1280], index: 8, kind: input, shape index: {}]
  %s9 = inlined_call_operand.vmem [shape: bf16[1280,384], index: 9, kind: input, shape index: {}]
  %s10 = inlined_call_operand.vmem [shape: bf16[128,1280], index: 10, kind: input, shape index: {}]
  %s11 = inlined_call_operand.vmem [shape: f32[10,8,128], index: 11, kind: output, shape index: {}]
  %s12 = sld [smem:[#allocation0]]
  $region120: #{crnn_forward.1} parent=0
    _
  %s14 = ssub.s32 1, %s12
  %s15 = scalar_select 0, %s14, %s12
  // Predicated region
  $region2: #{crnn_forward.1} parent=0 // pred_check
    _
  $region3: #{crnn_forward.1} parent=0 // pred_check_branch
    %17 = sbr.rel (0) target = $region5
  $region4: #{crnn_forward.1} parent=0 // pred_region
    _
  $region5: #{crnn_forward.1} parent=0 // pred_fallthru
    _
  // Predicated region
  $region6: #{crnn_forward.1} parent=0 // pred_check
    _
  $region7: #{crnn_forward.1} parent=0 // pred_check_branch
    %19 = sbr.rel (0) target = $region9
  $region8: #{crnn_forward.1} parent=0 // pred_region
    _
  $region9: #{crnn_forward.1} parent=0 // pred_fallthru
    _
  // Predicated region
  $region10: #{crnn_forward.1} parent=0 // pred_check
    _
  $region11: #{crnn_forward.1} parent=0 // pred_check_branch
    %21 = sbr.rel (0) target = $region13
  $region12: #{crnn_forward.1} parent=0 // pred_region
    _
  $region13: #{crnn_forward.1} parent=0 // pred_fallthru
    _
  // Predicated region
  $region14: #{crnn_forward.1} parent=0 // pred_check
    _
  $region15: #{crnn_forward.1} parent=0 // pred_check_branch
    %23 = sbr.rel (0) target = $region17
  $region16: #{crnn_forward.1} parent=0 // pred_region
    _
  $region17: #{crnn_forward.1} parent=0 // pred_fallthru
    _
  // Predicated region
  $region18: #{crnn_forward.1} parent=0 // pred_check
    _
  $region19: #{crnn_forward.1} parent=0 // pred_check_branch
    %25 = sbr.rel (0) target = $region21
  $region20: #{crnn_forward.1} parent=0 // pred_region
    _
  $region21: #{crnn_forward.1} parent=0 // pred_fallthru
    _
  // Predicated region
  $region22: #{crnn_forward.1} parent=0 // pred_check
    _
  $region23: #{crnn_forward.1} parent=0 // pred_check_branch
    %27 = sbr.rel (0) target = $region25
  $region24: #{crnn_forward.1} parent=0 // pred_region
    _
  $region25: #{crnn_forward.1} parent=0 // pred_fallthru
    _
  // Predicated region
  $region26: #{crnn_forward.1} parent=0 // pred_check
    _
  $region27: #{crnn_forward.1} parent=0 // pred_check_branch
    %29 = sbr.rel (0) target = $region29
  $region28: #{crnn_forward.1} parent=0 // pred_region
    _
  $region29: #{crnn_forward.1} parent=0 // pred_fallthru
    _
  // Predicated region
  $region30: #{crnn_forward.1} parent=0 // pred_check
    _
  $region31: #{crnn_forward.1} parent=0 // pred_check_branch
    %31 = sbr.rel (0) target = $region33
  $region32: #{crnn_forward.1} parent=0 // pred_region
    _
  $region33: #{crnn_forward.1} parent=0 // pred_fallthru
    _
  // Predicated region
  $region34: #{crnn_forward.1} parent=0 // pred_check
    _
  $region35: #{crnn_forward.1} parent=0 // pred_check_branch
    %33 = sbr.rel (0) target = $region37
  $region36: #{crnn_forward.1} parent=0 // pred_region
    _
  $region37: #{crnn_forward.1} parent=0 // pred_fallthru
    _
  %p36 = scmp.lt.u32.totalorder 4, 8
  %p37 = pneg %p36
  // Predicated region
  $region38: #{crnn_forward.1} parent=0 // pred_check
    _
  $region39: #{crnn_forward.1} parent=0 // pred_check_branch
    %39 = sbr.rel (%p36) target = $region41
  $region40: #{crnn_forward.1} parent=0 // pred_region
    %s1012 = sand.u32 4, 7
    %p1013 = scmp.eq.s32.totalorder %s1012, 0
    %p1014 = pneg %p1013
    // Predicated region
    $region53: #{crnn_forward.1} parent=40 // pred_check
      _
    $region54: #{crnn_forward.1} parent=40 // pred_check_branch
      %1016 = sbr.rel (%p1013) target = $region56
    $region55: #{crnn_forward.1} parent=40 // pred_region
      %s1017 = sand.u32 4, 7
      %s1018 = ssub.s32 4, %s1017
      %s1019 = scalar_lea.vmem %s9, %s1018
      %s1020 = ssub.s32 4, %s1017
      %s1021 = scalar_lea.vmem [#allocation2], %s1020
      loop: start=0, step=1, limit=1
      $region57: #{crnn_forward.1} parent=55 // loop_pre_header
        _
      $region58: #{crnn_forward.1} parent=55 // loop_header
        %s1023 = sphi 0, %s1027
        %p1024 = scmp.ge.s32.totalorder %s1023, 1
        %s1028 = sphi %s9, %s9
        %s1029 = sphi [#allocation2], [#allocation2]
      $region59: #{crnn_forward.1} parent=55 // loop_header_branch
        %1026 = sbr.rel (%p1024) target = $region63
      $region60: #{crnn_forward.1} parent=55 // loop_body
        _
      $region61: #{crnn_forward.1} parent=55 // loop_footer
        %s1027 = sadd.s32 1, %s1023
      $region62: #{crnn_forward.1} parent=55 // loop_footer_branch
        %1022 = sbr.rel target = $region58
      $region63: #{crnn_forward.1} parent=55 // loop_exit
        _
      %s1030 = sshllo.u32 0, %s1017
      loop: start=0, step=1, limit=1
      $region64: #{crnn_forward.1} parent=55 // loop_pre_header
        _
      $region65: #{crnn_forward.1} parent=55 // loop_header
        %s1032 = sphi 0, %s1036
        %p1033 = scmp.ge.s32.totalorder %s1032, 1
        %s1037 = sphi %s1019, %s1019
        %s1038 = sphi %s1021, %s1021
      $region66: #{crnn_forward.1} parent=55 // loop_header_branch
        %1035 = sbr.rel (%p1033) target = $region70
      $region67: #{crnn_forward.1} parent=55 // loop_body
        %v1039 = vld [vmem:[%s1037] sm:%s1030]
        %1040 = vst [vmem:[%s1038] sm:%s1030] %v1039
        %v1041 = vld [vmem:[%s1037 + $0xc] sm:%s1030]
        %1042 = vst [vmem:[%s1038 + $0x4] sm:%s1030] %v1041
        %v1043 = vld [vmem:[%s1037 + $0x4] sm:%s1030]
        %1044 = vst [vmem:[%s1038 + $0x8] sm:%s1030] %v1043
        %v1045 = vld [vmem:[%s1037 + $0x10] sm:%s1030]
        %1046 = vst [vmem:[%s1038 + $0xc] sm:%s1030] %v1045
        %v1047 = vld [vmem:[%s1037 + $0x8] sm:%s1030]
        %1048 = vst [vmem:[%s1038 + $0x10] sm:%s1030] %v1047
        %v1049 = vld [vmem:[%s1037 + $0x14] sm:%s1030]
        %1050 = vst [vmem:[%s1038 + $0x14] sm:%s1030] %v1049
        %v1051 = vld [vmem:[%s1037 + $0x18] sm:%s1030]
        %1052 = vst [vmem:[%s1038 + $0x18] sm:%s1030] %v1051
        %v1053 = vld [vmem:[%s1037 + $0x24] sm:%s1030]
        %1054 = vst [vmem:[%s1038 + $0x1c] sm:%s1030] %v1053
        %v1055 = vld [vmem:[%s1037 + $0x1c] sm:%s1030]
        %1056 = vst [vmem:[%s1038 + $0x20] sm:%s1030] %v1055
        %v1057 = vld [vmem:[%s1037 + $0x28] sm:%s1030]
        %1058 = vst [vmem:[%s1038 + $0x24] sm:%s1030] %v1057
        %v1059 = vld [vmem:[%s1037 + $0x20] sm:%s1030]
        %1060 = vst [vmem:[%s1038 + $0x28] sm:%s1030] %v1059
        %v1061 = vld [vmem:[%s1037 + $0x2c] sm:%s1030]
        %1062 = vst [vmem:[%s1038 + $0x2c] sm:%s1030] %v1061
        %v1063 = vld [vmem:[%s1037 + $0x30] sm:%s1030]
        %1064 = vst [vmem:[%s1038 + $0x30] sm:%s1030] %v1063
        %v1065 = vld [vmem:[%s1037 + $0x3c] sm:%s1030]
        %1066 = vst [vmem:[%s1038 + $0x34] sm:%s1030] %v1065
        %v1067 = vld [vmem:[%s1037 + $0x34] sm:%s1030]
        %1068 = vst [vmem:[%s1038 + $0x38] sm:%s1030] %v1067
        %v1069 = vld [vmem:[%s1037 + $0x40] sm:%s1030]
        %1070 = vst [vmem:[%s1038 + $0x3c] sm:%s1030] %v1069
        %v1071 = vld [vmem:[%s1037 + $0x38] sm:%s1030]
        %1072 = vst [vmem:[%s1038 + $0x40] sm:%s1030] %v1071
        %v1073 = vld [vmem:[%s1037 + $0x44] sm:%s1030]
        %1074 = vst [vmem:[%s1038 + $0x44] sm:%s1030] %v1073
        %v1075 = vld [vmem:[%s1037 + $0x48] sm:%s1030]
        %1076 = vst [vmem:[%s1038 + $0x48] sm:%s1030] %v1075
        %v1077 = vld [vmem:[%s1037 + $0x54] sm:%s1030]
        %1078 = vst [vmem:[%s1038 + $0x4c] sm:%s1030] %v1077
        %v1079 = vld [vmem:[%s1037 + $0x4c] sm:%s1030]
        %1080 = vst [vmem:[%s1038 + $0x50] sm:%s1030] %v1079
        %v1081 = vld [vmem:[%s1037 + $0x58] sm:%s1030]
        %1082 = vst [vmem:[%s1038 + $0x54] sm:%s1030] %v1081
        %v1083 = vld [vmem:[%s1037 + $0x50] sm:%s1030]
        %1084 = vst [vmem:[%s1038 + $0x58] sm:%s1030] %v1083
        %v1085 = vld [vmem:[%s1037 + $0x5c] sm:%s1030]
        %1086 = vst [vmem:[%s1038 + $0x5c] sm:%s1030] %v1085
        %v1087 = vld [vmem:[%s1037 + $0x60] sm:%s1030]
        %1088 = vst [vmem:[%s1038 + $0x60] sm:%s1030] %v1087
        %v1089 = vld [vmem:[%s1037 + $0x6c] sm:%s1030]
        %1090 = vst [vmem:[%s1038 + $0x64] sm:%s1030] %v1089
        %v1091 = vld [vmem:[%s1037 + $0x64] sm:%s1030]
        %1092 = vst [vmem:[%s1038 + $0x68] sm:%s1030] %v1091
        %v1093 = vld [vmem:[%s1037 + $0x70] sm:%s1030]
        %1094 = vst [vmem:[%s1038 + $0x6c] sm:%s1030] %v1093
        %v1095 = vld [vmem:[%s1037 + $0x68] sm:%s1030]
        %1096 = vst [vmem:[%s1038 + $0x70] sm:%s1030] %v1095
        %v1097 = vld [vmem:[%s1037 + $0x74] sm:%s1030]
        %1098 = vst [vmem:[%s1038 + $0x74] sm:%s1030] %v1097
        %v1099 = vld [vmem:[%s1037 + $0x78] sm:%s1030]
        %1100 = vst [vmem:[%s1038 + $0x78] sm:%s1030] %v1099
        %v1101 = vld [vmem:[%s1037 + $0x84] sm:%s1030]
        %1102 = vst [vmem:[%s1038 + $0x7c] sm:%s1030] %v1101
        %v1103 = vld [vmem:[%s1037 + $0x7c] sm:%s1030]
        %1104 = vst [vmem:[%s1038 + $0x80] sm:%s1030] %v1103
        %v1105 = vld [vmem:[%s1037 + $0x88] sm:%s1030]
        %1106 = vst [vmem:[%s1038 + $0x84] sm:%s1030] %v1105
        %v1107 = vld [vmem:[%s1037 + $0x80] sm:%s1030]
        %1108 = vst [vmem:[%s1038 + $0x88] sm:%s1030] %v1107
        %v1109 = vld [vmem:[%s1037 + $0x8c] sm:%s1030]
        %1110 = vst [vmem:[%s1038 + $0x8c] sm:%s1030] %v1109
        %v1111 = vld [vmem:[%s1037 + $0x90] sm:%s1030]
        %1112 = vst [vmem:[%s1038 + $0x90] sm:%s1030] %v1111
        %v1113 = vld [vmem:[%s1037 + $0x9c] sm:%s1030]
        %1114 = vst [vmem:[%s1038 + $0x94] sm:%s1030] %v1113
        %v1115 = vld [vmem:[%s1037 + $0x94] sm:%s1030]
        %1116 = vst [vmem:[%s1038 + $0x98] sm:%s1030] %v1115
        %v1117 = vld [vmem:[%s1037 + $0xa0] sm:%s1030]
        %1118 = vst [vmem:[%s1038 + $0x9c] sm:%s1030] %v1117
        %v1119 = vld [vmem:[%s1037 + $0x98] sm:%s1030]
        %1120 = vst [vmem:[%s1038 + $0xa0] sm:%s1030] %v1119
        %v1121 = vld [vmem:[%s1037 + $0xa4] sm:%s1030]
        %1122 = vst [vmem:[%s1038 + $0xa4] sm:%s1030] %v1121
        %v1123 = vld [vmem:[%s1037 + $0xa8] sm:%s1030]
        %1124 = vst [vmem:[%s1038 + $0xa8] sm:%s1030] %v1123
        %v1125 = vld [vmem:[%s1037 + $0xb4] sm:%s1030]
        %1126 = vst [vmem:[%s1038 + $0xac] sm:%s1030] %v1125
        %v1127 = vld [vmem:[%s1037 + $0xac] sm:%s1030]
        %1128 = vst [vmem:[%s1038 + $0xb0] sm:%s1030] %v1127
        %v1129 = vld [vmem:[%s1037 + $0xb8] sm:%s1030]
        %1130 = vst [vmem:[%s1038 + $0xb4] sm:%s1030] %v1129
        %v1131 = vld [vmem:[%s1037 + $0xb0] sm:%s1030]
        %1132 = vst [vmem:[%s1038 + $0xb8] sm:%s1030] %v1131
        %v1133 = vld [vmem:[%s1037 + $0xbc] sm:%s1030]
        %1134 = vst [vmem:[%s1038 + $0xbc] sm:%s1030] %v1133
        %v1135 = vld [vmem:[%s1037 + $0xc0] sm:%s1030]
        %1136 = vst [vmem:[%s1038 + $0xc0] sm:%s1030] %v1135
        %v1137 = vld [vmem:[%s1037 + $0xcc] sm:%s1030]
        %1138 = vst [vmem:[%s1038 + $0xc4] sm:%s1030] %v1137
        %v1139 = vld [vmem:[%s1037 + $0xc4] sm:%s1030]
        %1140 = vst [vmem:[%s1038 + $0xc8] sm:%s1030] %v1139
        %v1141 = vld [vmem:[%s1037 + $0xd0] sm:%s1030]
        %1142 = vst [vmem:[%s1038 + $0xcc] sm:%s1030] %v1141
        %v1143 = vld [vmem:[%s1037 + $0xc8] sm:%s1030]
        %1144 = vst [vmem:[%s1038 + $0xd0] sm:%s1030] %v1143
        %v1145 = vld [vmem:[%s1037 + $0xd4] sm:%s1030]
        %1146 = vst [vmem:[%s1038 + $0xd4] sm:%s1030] %v1145
        %v1147 = vld [vmem:[%s1037 + $0xd8] sm:%s1030]
        %1148 = vst [vmem:[%s1038 + $0xd8] sm:%s1030] %v1147
        %v1149 = vld [vmem:[%s1037 + $0xe4] sm:%s1030]
        %1150 = vst [vmem:[%s1038 + $0xdc] sm:%s1030] %v1149
        %v1151 = vld [vmem:[%s1037 + $0xdc] sm:%s1030]
        %1152 = vst [vmem:[%s1038 + $0xe0] sm:%s1030] %v1151
        %v1153 = vld [vmem:[%s1037 + $0xe8] sm:%s1030]
        %1154 = vst [vmem:[%s1038 + $0xe4] sm:%s1030] %v1153
        %v1155 = vld [vmem:[%s1037 + $0xe0] sm:%s1030]
        %1156 = vst [vmem:[%s1038 + $0xe8] sm:%s1030] %v1155
        %v1157 = vld [vmem:[%s1037 + $0xec] sm:%s1030]
        %1158 = vst [vmem:[%s1038 + $0xec] sm:%s1030] %v1157
        %v1159 = vld [vmem:[%s1037 + $0xf0] sm:%s1030]
        %1160 = vst [vmem:[%s1038 + $0xf0] sm:%s1030] %v1159
        %v1161 = vld [vmem:[%s1037 + $0xfc] sm:%s1030]
        %1162 = vst [vmem:[%s1038 + $0xf4] sm:%s1030] %v1161
        %v1163 = vld [vmem:[%s1037 + $0xf4] sm:%s1030]
        %1164 = vst [vmem:[%s1038 + $0xf8] sm:%s1030] %v1163
        %v1165 = vld [vmem:[%s1037 + $0x100] sm:%s1030]
        %1166 = vst [vmem:[%s1038 + $0xfc] sm:%s1030] %v1165
        %v1167 = vld [vmem:[%s1037 + $0xf8] sm:%s1030]
        %1168 = vst [vmem:[%s1038 + $0x100] sm:%s1030] %v1167
        %v1169 = vld [vmem:[%s1037 + $0x104] sm:%s1030]
        %1170 = vst [vmem:[%s1038 + $0x104] sm:%s1030] %v1169
        %v1171 = vld [vmem:[%s1037 + $0x108] sm:%s1030]
        %1172 = vst [vmem:[%s1038 + $0x108] sm:%s1030] %v1171
        %v1173 = vld [vmem:[%s1037 + $0x114] sm:%s1030]
        %1174 = vst [vmem:[%s1038 + $0x10c] sm:%s1030] %v1173
        %v1175 = vld [vmem:[%s1037 + $0x10c] sm:%s1030]
        %1176 = vst [vmem:[%s1038 + $0x110] sm:%s1030] %v1175
        %v1177 = vld [vmem:[%s1037 + $0x118] sm:%s1030]
        %1178 = vst [vmem:[%s1038 + $0x114] sm:%s1030] %v1177
        %v1179 = vld [vmem:[%s1037 + $0x110] sm:%s1030]
        %1180 = vst [vmem:[%s1038 + $0x118] sm:%s1030] %v1179
        %v1181 = vld [vmem:[%s1037 + $0x11c] sm:%s1030]
        %1182 = vst [vmem:[%s1038 + $0x11c] sm:%s1030] %v1181
        %v1183 = vld [vmem:[%s1037 + $0x120] sm:%s1030]
        %1184 = vst [vmem:[%s1038 + $0x120] sm:%s1030] %v1183
        %v1185 = vld [vmem:[%s1037 + $0x12c] sm:%s1030]
        %1186 = vst [vmem:[%s1038 + $0x124] sm:%s1030] %v1185
        %v1187 = vld [vmem:[%s1037 + $0x124] sm:%s1030]
        %1188 = vst [vmem:[%s1038 + $0x128] sm:%s1030] %v1187
        %v1189 = vld [vmem:[%s1037 + $0x130] sm:%s1030]
        %1190 = vst [vmem:[%s1038 + $0x12c] sm:%s1030] %v1189
        %v1191 = vld [vmem:[%s1037 + $0x128] sm:%s1030]
        %1192 = vst [vmem:[%s1038 + $0x130] sm:%s1030] %v1191
        %v1193 = vld [vmem:[%s1037 + $0x134] sm:%s1030]
        %1194 = vst [vmem:[%s1038 + $0x134] sm:%s1030] %v1193
        %v1195 = vld [vmem:[%s1037 + $0x138] sm:%s1030]
        %1196 = vst [vmem:[%s1038 + $0x138] sm:%s1030] %v1195
        %v1197 = vld [vmem:[%s1037 + $0x144] sm:%s1030]
        %1198 = vst [vmem:[%s1038 + $0x13c] sm:%s1030] %v1197
        %v1199 = vld [vmem:[%s1037 + $0x13c] sm:%s1030]
        %1200 = vst [vmem:[%s1038 + $0x140] sm:%s1030] %v1199
        %v1201 = vld [vmem:[%s1037 + $0x148] sm:%s1030]
        %1202 = vst [vmem:[%s1038 + $0x144] sm:%s1030] %v1201
        %v1203 = vld [vmem:[%s1037 + $0x140] sm:%s1030]
        %1204 = vst [vmem:[%s1038 + $0x148] sm:%s1030] %v1203
        %v1205 = vld [vmem:[%s1037 + $0x14c] sm:%s1030]
        %1206 = vst [vmem:[%s1038 + $0x14c] sm:%s1030] %v1205
        %v1207 = vld [vmem:[%s1037 + $0x150] sm:%s1030]
        %1208 = vst [vmem:[%s1038 + $0x150] sm:%s1030] %v1207
        %v1209 = vld [vmem:[%s1037 + $0x15c] sm:%s1030]
        %1210 = vst [vmem:[%s1038 + $0x154] sm:%s1030] %v1209
        %v1211 = vld [vmem:[%s1037 + $0x154] sm:%s1030]
        %1212 = vst [vmem:[%s1038 + $0x158] sm:%s1030] %v1211
        %v1213 = vld [vmem:[%s1037 + $0x160] sm:%s1030]
        %1214 = vst [vmem:[%s1038 + $0x15c] sm:%s1030] %v1213
        %v1215 = vld [vmem:[%s1037 + $0x158] sm:%s1030]
        %1216 = vst [vmem:[%s1038 + $0x160] sm:%s1030] %v1215
        %v1217 = vld [vmem:[%s1037 + $0x164] sm:%s1030]
        %1218 = vst [vmem:[%s1038 + $0x164] sm:%s1030] %v1217
        %v1219 = vld [vmem:[%s1037 + $0x168] sm:%s1030]
        %1220 = vst [vmem:[%s1038 + $0x168] sm:%s1030] %v1219
        %v1221 = vld [vmem:[%s1037 + $0x174] sm:%s1030]
        %1222 = vst [vmem:[%s1038 + $0x16c] sm:%s1030] %v1221
        %v1223 = vld [vmem:[%s1037 + $0x16c] sm:%s1030]
        %1224 = vst [vmem:[%s1038 + $0x170] sm:%s1030] %v1223
        %v1225 = vld [vmem:[%s1037 + $0x178] sm:%s1030]
        %1226 = vst [vmem:[%s1038 + $0x174] sm:%s1030] %v1225
        %v1227 = vld [vmem:[%s1037 + $0x170] sm:%s1030]
        %1228 = vst [vmem:[%s1038 + $0x178] sm:%s1030] %v1227
        %v1229 = vld [vmem:[%s1037 + $0x17c] sm:%s1030]
        %1230 = vst [vmem:[%s1038 + $0x17c] sm:%s1030] %v1229
        %v1231 = vld [vmem:[%s1037 + $0x180] sm:%s1030]
        %1232 = vst [vmem:[%s1038 + $0x180] sm:%s1030] %v1231
        %v1233 = vld [vmem:[%s1037 + $0x18c] sm:%s1030]
        %1234 = vst [vmem:[%s1038 + $0x184] sm:%s1030] %v1233
        %v1235 = vld [vmem:[%s1037 + $0x184] sm:%s1030]
        %1236 = vst [vmem:[%s1038 + $0x188] sm:%s1030] %v1235
        %v1237 = vld [vmem:[%s1037 + $0x190] sm:%s1030]
        %1238 = vst [vmem:[%s1038 + $0x18c] sm:%s1030] %v1237
        %v1239 = vld [vmem:[%s1037 + $0x188] sm:%s1030]
        %1240 = vst [vmem:[%s1038 + $0x190] sm:%s1030] %v1239
        %v1241 = vld [vmem:[%s1037 + $0x194] sm:%s1030]
        %1242 = vst [vmem:[%s1038 + $0x194] sm:%s1030] %v1241
        %v1243 = vld [vmem:[%s1037 + $0x198] sm:%s1030]
        %1244 = vst [vmem:[%s1038 + $0x198] sm:%s1030] %v1243
        %v1245 = vld [vmem:[%s1037 + $0x1a4] sm:%s1030]
        %1246 = vst [vmem:[%s1038 + $0x19c] sm:%s1030] %v1245
        %v1247 = vld [vmem:[%s1037 + $0x19c] sm:%s1030]
        %1248 = vst [vmem:[%s1038 + $0x1a0] sm:%s1030] %v1247
        %v1249 = vld [vmem:[%s1037 + $0x1a8] sm:%s1030]
        %1250 = vst [vmem:[%s1038 + $0x1a4] sm:%s1030] %v1249
        %v1251 = vld [vmem:[%s1037 + $0x1a0] sm:%s1030]
        %1252 = vst [vmem:[%s1038 + $0x1a8] sm:%s1030] %v1251
        %v1253 = vld [vmem:[%s1037 + $0x1ac] sm:%s1030]
        %1254 = vst [vmem:[%s1038 + $0x1ac] sm:%s1030] %v1253
        %v1255 = vld [vmem:[%s1037 + $0x1b0] sm:%s1030]
        %1256 = vst [vmem:[%s1038 + $0x1b0] sm:%s1030] %v1255
        %v1257 = vld [vmem:[%s1037 + $0x1bc] sm:%s1030]
        %1258 = vst [vmem:[%s1038 + $0x1b4] sm:%s1030] %v1257
        %v1259 = vld [vmem:[%s1037 + $0x1b4] sm:%s1030]
        %1260 = vst [vmem:[%s1038 + $0x1b8] sm:%s1030] %v1259
        %v1261 = vld [vmem:[%s1037 + $0x1c0] sm:%s1030]
        %1262 = vst [vmem:[%s1038 + $0x1bc] sm:%s1030] %v1261
        %v1263 = vld [vmem:[%s1037 + $0x1b8] sm:%s1030]
        %1264 = vst [vmem:[%s1038 + $0x1c0] sm:%s1030] %v1263
        %v1265 = vld [vmem:[%s1037 + $0x1c4] sm:%s1030]
        %1266 = vst [vmem:[%s1038 + $0x1c4] sm:%s1030] %v1265
        %v1267 = vld [vmem:[%s1037 + $0x1c8] sm:%s1030]
        %1268 = vst [vmem:[%s1038 + $0x1c8] sm:%s1030] %v1267
        %v1269 = vld [vmem:[%s1037 + $0x1d4] sm:%s1030]
        %1270 = vst [vmem:[%s1038 + $0x1cc] sm:%s1030] %v1269
        %v1271 = vld [vmem:[%s1037 + $0x1cc] sm:%s1030]
        %1272 = vst [vmem:[%s1038 + $0x1d0] sm:%s1030] %v1271
        %v1273 = vld [vmem:[%s1037 + $0x1d8] sm:%s1030]
        %1274 = vst [vmem:[%s1038 + $0x1d4] sm:%s1030] %v1273
        %v1275 = vld [vmem:[%s1037 + $0x1d0] sm:%s1030]
        %1276 = vst [vmem:[%s1038 + $0x1d8] sm:%s1030] %v1275
        %v1277 = vld [vmem:[%s1037 + $0x1dc] sm:%s1030]
        %1278 = vst [vmem:[%s1038 + $0x1dc] sm:%s1030] %v1277
        %v1279 = vld [vmem:[%s1037 + $0x1e0] sm:%s1030]
        %1280 = vst [vmem:[%s1038 + $0x1e0] sm:%s1030] %v1279
        %v1281 = vld [vmem:[%s1037 + $0x1ec] sm:%s1030]
        %1282 = vst [vmem:[%s1038 + $0x1e4] sm:%s1030] %v1281
        %v1283 = vld [vmem:[%s1037 + $0x1e4] sm:%s1030]
        %1284 = vst [vmem:[%s1038 + $0x1e8] sm:%s1030] %v1283
        %v1285 = vld [vmem:[%s1037 + $0x1f0] sm:%s1030]
        %1286 = vst [vmem:[%s1038 + $0x1ec] sm:%s1030] %v1285
        %v1287 = vld [vmem:[%s1037 + $0x1e8] sm:%s1030]
        %1288 = vst [vmem:[%s1038 + $0x1f0] sm:%s1030] %v1287
        %v1289 = vld [vmem:[%s1037 + $0x1f4] sm:%s1030]
        %1290 = vst [vmem:[%s1038 + $0x1f4] sm:%s1030] %v1289
        %v1291 = vld [vmem:[%s1037 + $0x1f8] sm:%s1030]
        %1292 = vst [vmem:[%s1038 + $0x1f8] sm:%s1030] %v1291
        %v1293 = vld [vmem:[%s1037 + $0x204] sm:%s1030]
        %1294 = vst [vmem:[%s1038 + $0x1fc] sm:%s1030] %v1293
        %v1295 = vld [vmem:[%s1037 + $0x1fc] sm:%s1030]
        %1296 = vst [vmem:[%s1038 + $0x200] sm:%s1030] %v1295
        %v1297 = vld [vmem:[%s1037 + $0x208] sm:%s1030]
        %1298 = vst [vmem:[%s1038 + $0x204] sm:%s1030] %v1297
        %v1299 = vld [vmem:[%s1037 + $0x200] sm:%s1030]
        %1300 = vst [vmem:[%s1038 + $0x208] sm:%s1030] %v1299
        %v1301 = vld [vmem:[%s1037 + $0x20c] sm:%s1030]
        %1302 = vst [vmem:[%s1038 + $0x20c] sm:%s1030] %v1301
        %v1303 = vld [vmem:[%s1037 + $0x210] sm:%s1030]
        %1304 = vst [vmem:[%s1038 + $0x210] sm:%s1030] %v1303
        %v1305 = vld [vmem:[%s1037 + $0x21c] sm:%s1030]
        %1306 = vst [vmem:[%s1038 + $0x214] sm:%s1030] %v1305
        %v1307 = vld [vmem:[%s1037 + $0x214] sm:%s1030]
        %1308 = vst [vmem:[%s1038 + $0x218] sm:%s1030] %v1307
        %v1309 = vld [vmem:[%s1037 + $0x220] sm:%s1030]
        %1310 = vst [vmem:[%s1038 + $0x21c] sm:%s1030] %v1309
        %v1311 = vld [vmem:[%s1037 + $0x218] sm:%s1030]
        %1312 = vst [vmem:[%s1038 + $0x220] sm:%s1030] %v1311
        %v1313 = vld [vmem:[%s1037 + $0x224] sm:%s1030]
        %1314 = vst [vmem:[%s1038 + $0x224] sm:%s1030] %v1313
        %v1315 = vld [vmem:[%s1037 + $0x228] sm:%s1030]
        %1316 = vst [vmem:[%s1038 + $0x228] sm:%s1030] %v1315
        %v1317 = vld [vmem:[%s1037 + $0x234] sm:%s1030]
        %1318 = vst [vmem:[%s1038 + $0x22c] sm:%s1030] %v1317
        %v1319 = vld [vmem:[%s1037 + $0x22c] sm:%s1030]
        %1320 = vst [vmem:[%s1038 + $0x230] sm:%s1030] %v1319
        %v1321 = vld [vmem:[%s1037 + $0x238] sm:%s1030]
        %1322 = vst [vmem:[%s1038 + $0x234] sm:%s1030] %v1321
        %v1323 = vld [vmem:[%s1037 + $0x230] sm:%s1030]
        %1324 = vst [vmem:[%s1038 + $0x238] sm:%s1030] %v1323
        %v1325 = vld [vmem:[%s1037 + $0x23c] sm:%s1030]
        %1326 = vst [vmem:[%s1038 + $0x23c] sm:%s1030] %v1325
        %v1327 = vld [vmem:[%s1037 + $0x240] sm:%s1030]
        %1328 = vst [vmem:[%s1038 + $0x240] sm:%s1030] %v1327
        %v1329 = vld [vmem:[%s1037 + $0x24c] sm:%s1030]
        %1330 = vst [vmem:[%s1038 + $0x244] sm:%s1030] %v1329
        %v1331 = vld [vmem:[%s1037 + $0x244] sm:%s1030]
        %1332 = vst [vmem:[%s1038 + $0x248] sm:%s1030] %v1331
        %v1333 = vld [vmem:[%s1037 + $0x250] sm:%s1030]
        %1334 = vst [vmem:[%s1038 + $0x24c] sm:%s1030] %v1333
        %v1335 = vld [vmem:[%s1037 + $0x248] sm:%s1030]
        %1336 = vst [vmem:[%s1038 + $0x250] sm:%s1030] %v1335
        %v1337 = vld [vmem:[%s1037 + $0x254] sm:%s1030]
        %1338 = vst [vmem:[%s1038 + $0x254] sm:%s1030] %v1337
        %v1339 = vld [vmem:[%s1037 + $0x258] sm:%s1030]
        %1340 = vst [vmem:[%s1038 + $0x258] sm:%s1030] %v1339
        %v1341 = vld [vmem:[%s1037 + $0x264] sm:%s1030]
        %1342 = vst [vmem:[%s1038 + $0x25c] sm:%s1030] %v1341
        %v1343 = vld [vmem:[%s1037 + $0x25c] sm:%s1030]
        %1344 = vst [vmem:[%s1038 + $0x260] sm:%s1030] %v1343
        %v1345 = vld [vmem:[%s1037 + $0x268] sm:%s1030]
        %1346 = vst [vmem:[%s1038 + $0x264] sm:%s1030] %v1345
        %v1347 = vld [vmem:[%s1037 + $0x260] sm:%s1030]
        %1348 = vst [vmem:[%s1038 + $0x268] sm:%s1030] %v1347
        %v1349 = vld [vmem:[%s1037 + $0x26c] sm:%s1030]
        %1350 = vst [vmem:[%s1038 + $0x26c] sm:%s1030] %v1349
        %v1351 = vld [vmem:[%s1037 + $0x270] sm:%s1030]
        %1352 = vst [vmem:[%s1038 + $0x270] sm:%s1030] %v1351
        %v1353 = vld [vmem:[%s1037 + $0x27c] sm:%s1030]
        %1354 = vst [vmem:[%s1038 + $0x274] sm:%s1030] %v1353
        %v1355 = vld [vmem:[%s1037 + $0x274] sm:%s1030]
        %1356 = vst [vmem:[%s1038 + $0x278] sm:%s1030] %v1355
        %v1357 = vld [vmem:[%s1037 + $0x280] sm:%s1030]
        %1358 = vst [vmem:[%s1038 + $0x27c] sm:%s1030] %v1357
        %v1359 = vld [vmem:[%s1037 + $0x278] sm:%s1030]
        %1360 = vst [vmem:[%s1038 + $0x280] sm:%s1030] %v1359
        %v1361 = vld [vmem:[%s1037 + $0x284] sm:%s1030]
        %1362 = vst [vmem:[%s1038 + $0x284] sm:%s1030] %v1361
        %v1363 = vld [vmem:[%s1037 + $0x288] sm:%s1030]
        %1364 = vst [vmem:[%s1038 + $0x288] sm:%s1030] %v1363
        %v1365 = vld [vmem:[%s1037 + $0x294] sm:%s1030]
        %1366 = vst [vmem:[%s1038 + $0x28c] sm:%s1030] %v1365
        %v1367 = vld [vmem:[%s1037 + $0x28c] sm:%s1030]
        %1368 = vst [vmem:[%s1038 + $0x290] sm:%s1030] %v1367
        %v1369 = vld [vmem:[%s1037 + $0x298] sm:%s1030]
        %1370 = vst [vmem:[%s1038 + $0x294] sm:%s1030] %v1369
        %v1371 = vld [vmem:[%s1037 + $0x290] sm:%s1030]
        %1372 = vst [vmem:[%s1038 + $0x298] sm:%s1030] %v1371
        %v1373 = vld [vmem:[%s1037 + $0x29c] sm:%s1030]
        %1374 = vst [vmem:[%s1038 + $0x29c] sm:%s1030] %v1373
        %v1375 = vld [vmem:[%s1037 + $0x2a0] sm:%s1030]
        %1376 = vst [vmem:[%s1038 + $0x2a0] sm:%s1030] %v1375
        %v1377 = vld [vmem:[%s1037 + $0x2ac] sm:%s1030]
        %1378 = vst [vmem:[%s1038 + $0x2a4] sm:%s1030] %v1377
        %v1379 = vld [vmem:[%s1037 + $0x2a4] sm:%s1030]
        %1380 = vst [vmem:[%s1038 + $0x2a8] sm:%s1030] %v1379
        %v1381 = vld [vmem:[%s1037 + $0x2b0] sm:%s1030]
        %1382 = vst [vmem:[%s1038 + $0x2ac] sm:%s1030] %v1381
        %v1383 = vld [vmem:[%s1037 + $0x2a8] sm:%s1030]
        %1384 = vst [vmem:[%s1038 + $0x2b0] sm:%s1030] %v1383
        %v1385 = vld [vmem:[%s1037 + $0x2b4] sm:%s1030]
        %1386 = vst [vmem:[%s1038 + $0x2b4] sm:%s1030] %v1385
        %v1387 = vld [vmem:[%s1037 + $0x2b8] sm:%s1030]
        %1388 = vst [vmem:[%s1038 + $0x2b8] sm:%s1030] %v1387
        %v1389 = vld [vmem:[%s1037 + $0x2c4] sm:%s1030]
        %1390 = vst [vmem:[%s1038 + $0x2bc] sm:%s1030] %v1389
        %v1391 = vld [vmem:[%s1037 + $0x2bc] sm:%s1030]
        %1392 = vst [vmem:[%s1038 + $0x2c0] sm:%s1030] %v1391
        %v1393 = vld [vmem:[%s1037 + $0x2c8] sm:%s1030]
        %1394 = vst [vmem:[%s1038 + $0x2c4] sm:%s1030] %v1393
        %v1395 = vld [vmem:[%s1037 + $0x2c0] sm:%s1030]
        %1396 = vst [vmem:[%s1038 + $0x2c8] sm:%s1030] %v1395
        %v1397 = vld [vmem:[%s1037 + $0x2cc] sm:%s1030]
        %1398 = vst [vmem:[%s1038 + $0x2cc] sm:%s1030] %v1397
        %v1399 = vld [vmem:[%s1037 + $0x2d0] sm:%s1030]
        %1400 = vst [vmem:[%s1038 + $0x2d0] sm:%s1030] %v1399
        %v1401 = vld [vmem:[%s1037 + $0x2dc] sm:%s1030]
        %1402 = vst [vmem:[%s1038 + $0x2d4] sm:%s1030] %v1401
        %v1403 = vld [vmem:[%s1037 + $0x2d4] sm:%s1030]
        %1404 = vst [vmem:[%s1038 + $0x2d8] sm:%s1030] %v1403
        %v1405 = vld [vmem:[%s1037 + $0x2e0] sm:%s1030]
        %1406 = vst [vmem:[%s1038 + $0x2dc] sm:%s1030] %v1405
        %v1407 = vld [vmem:[%s1037 + $0x2d8] sm:%s1030]
        %1408 = vst [vmem:[%s1038 + $0x2e0] sm:%s1030] %v1407
        %v1409 = vld [vmem:[%s1037 + $0x2e4] sm:%s1030]
        %1410 = vst [vmem:[%s1038 + $0x2e4] sm:%s1030] %v1409
        %v1411 = vld [vmem:[%s1037 + $0x2e8] sm:%s1030]
        %1412 = vst [vmem:[%s1038 + $0x2e8] sm:%s1030] %v1411
        %v1413 = vld [vmem:[%s1037 + $0x2f4] sm:%s1030]
        %1414 = vst [vmem:[%s1038 + $0x2ec] sm:%s1030] %v1413
        %v1415 = vld [vmem:[%s1037 + $0x2ec] sm:%s1030]
        %1416 = vst [vmem:[%s1038 + $0x2f0] sm:%s1030] %v1415
        %v1417 = vld [vmem:[%s1037 + $0x2f8] sm:%s1030]
        %1418 = vst [vmem:[%s1038 + $0x2f4] sm:%s1030] %v1417
        %v1419 = vld [vmem:[%s1037 + $0x2f0] sm:%s1030]
        %1420 = vst [vmem:[%s1038 + $0x2f8] sm:%s1030] %v1419
        %v1421 = vld [vmem:[%s1037 + $0x2fc] sm:%s1030]
        %1422 = vst [vmem:[%s1038 + $0x2fc] sm:%s1030] %v1421
        %v1423 = vld [vmem:[%s1037 + $0x300] sm:%s1030]
        %1424 = vst [vmem:[%s1038 + $0x300] sm:%s1030] %v1423
        %v1425 = vld [vmem:[%s1037 + $0x30c] sm:%s1030]
        %1426 = vst [vmem:[%s1038 + $0x304] sm:%s1030] %v1425
        %v1427 = vld [vmem:[%s1037 + $0x304] sm:%s1030]
        %1428 = vst [vmem:[%s1038 + $0x308] sm:%s1030] %v1427
        %v1429 = vld [vmem:[%s1037 + $0x310] sm:%s1030]
        %1430 = vst [vmem:[%s1038 + $0x30c] sm:%s1030] %v1429
        %v1431 = vld [vmem:[%s1037 + $0x308] sm:%s1030]
        %1432 = vst [vmem:[%s1038 + $0x310] sm:%s1030] %v1431
        %v1433 = vld [vmem:[%s1037 + $0x314] sm:%s1030]
        %1434 = vst [vmem:[%s1038 + $0x314] sm:%s1030] %v1433
        %v1435 = vld [vmem:[%s1037 + $0x318] sm:%s1030]
        %1436 = vst [vmem:[%s1038 + $0x318] sm:%s1030] %v1435
        %v1437 = vld [vmem:[%s1037 + $0x324] sm:%s1030]
        %1438 = vst [vmem:[%s1038 + $0x31c] sm:%s1030] %v1437
        %v1439 = vld [vmem:[%s1037 + $0x31c] sm:%s1030]
        %1440 = vst [vmem:[%s1038 + $0x320] sm:%s1030] %v1439
        %v1441 = vld [vmem:[%s1037 + $0x328] sm:%s1030]
        %1442 = vst [vmem:[%s1038 + $0x324] sm:%s1030] %v1441
        %v1443 = vld [vmem:[%s1037 + $0x320] sm:%s1030]
        %1444 = vst [vmem:[%s1038 + $0x328] sm:%s1030] %v1443
        %v1445 = vld [vmem:[%s1037 + $0x32c] sm:%s1030]
        %1446 = vst [vmem:[%s1038 + $0x32c] sm:%s1030] %v1445
        %v1447 = vld [vmem:[%s1037 + $0x330] sm:%s1030]
        %1448 = vst [vmem:[%s1038 + $0x330] sm:%s1030] %v1447
        %v1449 = vld [vmem:[%s1037 + $0x33c] sm:%s1030]
        %1450 = vst [vmem:[%s1038 + $0x334] sm:%s1030] %v1449
        %v1451 = vld [vmem:[%s1037 + $0x334] sm:%s1030]
        %1452 = vst [vmem:[%s1038 + $0x338] sm:%s1030] %v1451
        %v1453 = vld [vmem:[%s1037 + $0x340] sm:%s1030]
        %1454 = vst [vmem:[%s1038 + $0x33c] sm:%s1030] %v1453
        %v1455 = vld [vmem:[%s1037 + $0x338] sm:%s1030]
        %1456 = vst [vmem:[%s1038 + $0x340] sm:%s1030] %v1455
        %v1457 = vld [vmem:[%s1037 + $0x344] sm:%s1030]
        %1458 = vst [vmem:[%s1038 + $0x344] sm:%s1030] %v1457
        %v1459 = vld [vmem:[%s1037 + $0x348] sm:%s1030]
        %1460 = vst [vmem:[%s1038 + $0x348] sm:%s1030] %v1459
        %v1461 = vld [vmem:[%s1037 + $0x354] sm:%s1030]
        %1462 = vst [vmem:[%s1038 + $0x34c] sm:%s1030] %v1461
        %v1463 = vld [vmem:[%s1037 + $0x34c] sm:%s1030]
        %1464 = vst [vmem:[%s1038 + $0x350] sm:%s1030] %v1463
        %v1465 = vld [vmem:[%s1037 + $0x358] sm:%s1030]
        %1466 = vst [vmem:[%s1038 + $0x354] sm:%s1030] %v1465
        %v1467 = vld [vmem:[%s1037 + $0x350] sm:%s1030]
        %1468 = vst [vmem:[%s1038 + $0x358] sm:%s1030] %v1467
        %v1469 = vld [vmem:[%s1037 + $0x35c] sm:%s1030]
        %1470 = vst [vmem:[%s1038 + $0x35c] sm:%s1030] %v1469
        %v1471 = vld [vmem:[%s1037 + $0x360] sm:%s1030]
        %1472 = vst [vmem:[%s1038 + $0x360] sm:%s1030] %v1471
        %v1473 = vld [vmem:[%s1037 + $0x36c] sm:%s1030]
        %1474 = vst [vmem:[%s1038 + $0x364] sm:%s1030] %v1473
        %v1475 = vld [vmem:[%s1037 + $0x364] sm:%s1030]
        %1476 = vst [vmem:[%s1038 + $0x368] sm:%s1030] %v1475
        %v1477 = vld [vmem:[%s1037 + $0x370] sm:%s1030]
        %1478 = vst [vmem:[%s1038 + $0x36c] sm:%s1030] %v1477
        %v1479 = vld [vmem:[%s1037 + $0x368] sm:%s1030]
        %1480 = vst [vmem:[%s1038 + $0x370] sm:%s1030] %v1479
        %v1481 = vld [vmem:[%s1037 + $0x374] sm:%s1030]
        %1482 = vst [vmem:[%s1038 + $0x374] sm:%s1030] %v1481
        %v1483 = vld [vmem:[%s1037 + $0x378] sm:%s1030]
        %1484 = vst [vmem:[%s1038 + $0x378] sm:%s1030] %v1483
        %v1485 = vld [vmem:[%s1037 + $0x384] sm:%s1030]
        %1486 = vst [vmem:[%s1038 + $0x37c] sm:%s1030] %v1485
        %v1487 = vld [vmem:[%s1037 + $0x37c] sm:%s1030]
        %1488 = vst [vmem:[%s1038 + $0x380] sm:%s1030] %v1487
        %v1489 = vld [vmem:[%s1037 + $0x388] sm:%s1030]
        %1490 = vst [vmem:[%s1038 + $0x384] sm:%s1030] %v1489
        %v1491 = vld [vmem:[%s1037 + $0x380] sm:%s1030]
        %1492 = vst [vmem:[%s1038 + $0x388] sm:%s1030] %v1491
        %v1493 = vld [vmem:[%s1037 + $0x38c] sm:%s1030]
        %1494 = vst [vmem:[%s1038 + $0x38c] sm:%s1030] %v1493
        %v1495 = vld [vmem:[%s1037 + $0x390] sm:%s1030]
        %1496 = vst [vmem:[%s1038 + $0x390] sm:%s1030] %v1495
        %v1497 = vld [vmem:[%s1037 + $0x39c] sm:%s1030]
        %1498 = vst [vmem:[%s1038 + $0x394] sm:%s1030] %v1497
        %v1499 = vld [vmem:[%s1037 + $0x394] sm:%s1030]
        %1500 = vst [vmem:[%s1038 + $0x398] sm:%s1030] %v1499
        %v1501 = vld [vmem:[%s1037 + $0x3a0] sm:%s1030]
        %1502 = vst [vmem:[%s1038 + $0x39c] sm:%s1030] %v1501
        %v1503 = vld [vmem:[%s1037 + $0x398] sm:%s1030]
        %1504 = vst [vmem:[%s1038 + $0x3a0] sm:%s1030] %v1503
        %v1505 = vld [vmem:[%s1037 + $0x3a4] sm:%s1030]
        %1506 = vst [vmem:[%s1038 + $0x3a4] sm:%s1030] %v1505
        %v1507 = vld [vmem:[%s1037 + $0x3a8] sm:%s1030]
        %1508 = vst [vmem:[%s1038 + $0x3a8] sm:%s1030] %v1507
        %v1509 = vld [vmem:[%s1037 + $0x3b4] sm:%s1030]
        %1510 = vst [vmem:[%s1038 + $0x3ac] sm:%s1030] %v1509
        %v1511 = vld [vmem:[%s1037 + $0x3ac] sm:%s1030]
        %1512 = vst [vmem:[%s1038 + $0x3b0] sm:%s1030] %v1511
        %v1513 = vld [vmem:[%s1037 + $0x3b8] sm:%s1030]
        %1514 = vst [vmem:[%s1038 + $0x3b4] sm:%s1030] %v1513
        %v1515 = vld [vmem:[%s1037 + $0x3b0] sm:%s1030]
        %1516 = vst [vmem:[%s1038 + $0x3b8] sm:%s1030] %v1515
        %v1517 = vld [vmem:[%s1037 + $0x3bc] sm:%s1030]
        %1518 = vst [vmem:[%s1038 + $0x3bc] sm:%s1030] %v1517
        %v1519 = vld [vmem:[%s1037 + $0x3c0] sm:%s1030]
        %1520 = vst [vmem:[%s1038 + $0x3c0] sm:%s1030] %v1519
        %v1521 = vld [vmem:[%s1037 + $0x3cc] sm:%s1030]
        %1522 = vst [vmem:[%s1038 + $0x3c4] sm:%s1030] %v1521
        %v1523 = vld [vmem:[%s1037 + $0x3c4] sm:%s1030]
        %1524 = vst [vmem:[%s1038 + $0x3c8] sm:%s1030] %v1523
        %v1525 = vld [vmem:[%s1037 + $0x3d0] sm:%s1030]
        %1526 = vst [vmem:[%s1038 + $0x3cc] sm:%s1030] %v1525
        %v1527 = vld [vmem:[%s1037 + $0x3c8] sm:%s1030]
        %1528 = vst [vmem:[%s1038 + $0x3d0] sm:%s1030] %v1527
        %v1529 = vld [vmem:[%s1037 + $0x3d4] sm:%s1030]
        %1530 = vst [vmem:[%s1038 + $0x3d4] sm:%s1030] %v1529
        %v1531 = vld [vmem:[%s1037 + $0x3d8] sm:%s1030]
        %1532 = vst [vmem:[%s1038 + $0x3d8] sm:%s1030] %v1531
        %v1533 = vld [vmem:[%s1037 + $0x3e4] sm:%s1030]
        %1534 = vst [vmem:[%s1038 + $0x3dc] sm:%s1030] %v1533
        %v1535 = vld [vmem:[%s1037 + $0x3dc] sm:%s1030]
        %1536 = vst [vmem:[%s1038 + $0x3e0] sm:%s1030] %v1535
        %v1537 = vld [vmem:[%s1037 + $0x3e8] sm:%s1030]
        %1538 = vst [vmem:[%s1038 + $0x3e4] sm:%s1030] %v1537
        %v1539 = vld [vmem:[%s1037 + $0x3e0] sm:%s1030]
        %1540 = vst [vmem:[%s1038 + $0x3e8] sm:%s1030] %v1539
        %v1541 = vld [vmem:[%s1037 + $0x3ec] sm:%s1030]
        %1542 = vst [vmem:[%s1038 + $0x3ec] sm:%s1030] %v1541
        %v1543 = vld [vmem:[%s1037 + $0x3f0] sm:%s1030]
        %1544 = vst [vmem:[%s1038 + $0x3f0] sm:%s1030] %v1543
        %v1545 = vld [vmem:[%s1037 + $0x3fc] sm:%s1030]
        %1546 = vst [vmem:[%s1038 + $0x3f4] sm:%s1030] %v1545
        %v1547 = vld [vmem:[%s1037 + $0x3f4] sm:%s1030]
        %1548 = vst [vmem:[%s1038 + $0x3f8] sm:%s1030] %v1547
        %v1549 = vld [vmem:[%s1037 + $0x400] sm:%s1030]
        %1550 = vst [vmem:[%s1038 + $0x3fc] sm:%s1030] %v1549
        %v1551 = vld [vmem:[%s1037 + $0x3f8] sm:%s1030]
        %1552 = vst [vmem:[%s1038 + $0x400] sm:%s1030] %v1551
        %v1553 = vld [vmem:[%s1037 + $0x404] sm:%s1030]
        %1554 = vst [vmem:[%s1038 + $0x404] sm:%s1030] %v1553
        %v1555 = vld [vmem:[%s1037 + $0x408] sm:%s1030]
        %1556 = vst [vmem:[%s1038 + $0x408] sm:%s1030] %v1555
        %v1557 = vld [vmem:[%s1037 + $0x414] sm:%s1030]
        %1558 = vst [vmem:[%s1038 + $0x40c] sm:%s1030] %v1557
        %v1559 = vld [vmem:[%s1037 + $0x40c] sm:%s1030]
        %1560 = vst [vmem:[%s1038 + $0x410] sm:%s1030] %v1559
        %v1561 = vld [vmem:[%s1037 + $0x418] sm:%s1030]
        %1562 = vst [vmem:[%s1038 + $0x414] sm:%s1030] %v1561
        %v1563 = vld [vmem:[%s1037 + $0x410] sm:%s1030]
        %1564 = vst [vmem:[%s1038 + $0x418] sm:%s1030] %v1563
        %v1565 = vld [vmem:[%s1037 + $0x41c] sm:%s1030]
        %1566 = vst [vmem:[%s1038 + $0x41c] sm:%s1030] %v1565
        %v1567 = vld [vmem:[%s1037 + $0x420] sm:%s1030]
        %1568 = vst [vmem:[%s1038 + $0x420] sm:%s1030] %v1567
        %v1569 = vld [vmem:[%s1037 + $0x42c] sm:%s1030]
        %1570 = vst [vmem:[%s1038 + $0x424] sm:%s1030] %v1569
        %v1571 = vld [vmem:[%s1037 + $0x424] sm:%s1030]
        %1572 = vst [vmem:[%s1038 + $0x428] sm:%s1030] %v1571
        %v1573 = vld [vmem:[%s1037 + $0x430] sm:%s1030]
        %1574 = vst [vmem:[%s1038 + $0x42c] sm:%s1030] %v1573
        %v1575 = vld [vmem:[%s1037 + $0x428] sm:%s1030]
        %1576 = vst [vmem:[%s1038 + $0x430] sm:%s1030] %v1575
        %v1577 = vld [vmem:[%s1037 + $0x434] sm:%s1030]
        %1578 = vst [vmem:[%s1038 + $0x434] sm:%s1030] %v1577
        %v1579 = vld [vmem:[%s1037 + $0x438] sm:%s1030]
        %1580 = vst [vmem:[%s1038 + $0x438] sm:%s1030] %v1579
        %v1581 = vld [vmem:[%s1037 + $0x444] sm:%s1030]
        %1582 = vst [vmem:[%s1038 + $0x43c] sm:%s1030] %v1581
        %v1583 = vld [vmem:[%s1037 + $0x43c] sm:%s1030]
        %1584 = vst [vmem:[%s1038 + $0x440] sm:%s1030] %v1583
        %v1585 = vld [vmem:[%s1037 + $0x448] sm:%s1030]
        %1586 = vst [vmem:[%s1038 + $0x444] sm:%s1030] %v1585
        %v1587 = vld [vmem:[%s1037 + $0x440] sm:%s1030]
        %1588 = vst [vmem:[%s1038 + $0x448] sm:%s1030] %v1587
        %v1589 = vld [vmem:[%s1037 + $0x44c] sm:%s1030]
        %1590 = vst [vmem:[%s1038 + $0x44c] sm:%s1030] %v1589
        %v1591 = vld [vmem:[%s1037 + $0x450] sm:%s1030]
        %1592 = vst [vmem:[%s1038 + $0x450] sm:%s1030] %v1591
        %v1593 = vld [vmem:[%s1037 + $0x45c] sm:%s1030]
        %1594 = vst [vmem:[%s1038 + $0x454] sm:%s1030] %v1593
        %v1595 = vld [vmem:[%s1037 + $0x454] sm:%s1030]
        %1596 = vst [vmem:[%s1038 + $0x458] sm:%s1030] %v1595
        %v1597 = vld [vmem:[%s1037 + $0x460] sm:%s1030]
        %1598 = vst [vmem:[%s1038 + $0x45c] sm:%s1030] %v1597
        %v1599 = vld [vmem:[%s1037 + $0x458] sm:%s1030]
        %1600 = vst [vmem:[%s1038 + $0x460] sm:%s1030] %v1599
        %v1601 = vld [vmem:[%s1037 + $0x464] sm:%s1030]
        %1602 = vst [vmem:[%s1038 + $0x464] sm:%s1030] %v1601
        %v1603 = vld [vmem:[%s1037 + $0x468] sm:%s1030]
        %1604 = vst [vmem:[%s1038 + $0x468] sm:%s1030] %v1603
        %v1605 = vld [vmem:[%s1037 + $0x474] sm:%s1030]
        %1606 = vst [vmem:[%s1038 + $0x46c] sm:%s1030] %v1605
        %v1607 = vld [vmem:[%s1037 + $0x46c] sm:%s1030]
        %1608 = vst [vmem:[%s1038 + $0x470] sm:%s1030] %v1607
        %v1609 = vld [vmem:[%s1037 + $0x478] sm:%s1030]
        %1610 = vst [vmem:[%s1038 + $0x474] sm:%s1030] %v1609
        %v1611 = vld [vmem:[%s1037 + $0x470] sm:%s1030]
        %1612 = vst [vmem:[%s1038 + $0x478] sm:%s1030] %v1611
        %v1613 = vld [vmem:[%s1037 + $0x47c] sm:%s1030]
        %1614 = vst [vmem:[%s1038 + $0x47c] sm:%s1030] %v1613
        %v1615 = vld [vmem:[%s1037 + $0x480] sm:%s1030]
        %1616 = vst [vmem:[%s1038 + $0x480] sm:%s1030] %v1615
        %v1617 = vld [vmem:[%s1037 + $0x48c] sm:%s1030]
        %1618 = vst [vmem:[%s1038 + $0x484] sm:%s1030] %v1617
        %v1619 = vld [vmem:[%s1037 + $0x484] sm:%s1030]
        %1620 = vst [vmem:[%s1038 + $0x488] sm:%s1030] %v1619
        %v1621 = vld [vmem:[%s1037 + $0x490] sm:%s1030]
        %1622 = vst [vmem:[%s1038 + $0x48c] sm:%s1030] %v1621
        %v1623 = vld [vmem:[%s1037 + $0x488] sm:%s1030]
        %1624 = vst [vmem:[%s1038 + $0x490] sm:%s1030] %v1623
        %v1625 = vld [vmem:[%s1037 + $0x494] sm:%s1030]
        %1626 = vst [vmem:[%s1038 + $0x494] sm:%s1030] %v1625
        %v1627 = vld [vmem:[%s1037 + $0x498] sm:%s1030]
        %1628 = vst [vmem:[%s1038 + $0x498] sm:%s1030] %v1627
        %v1629 = vld [vmem:[%s1037 + $0x4a4] sm:%s1030]
        %1630 = vst [vmem:[%s1038 + $0x49c] sm:%s1030] %v1629
        %v1631 = vld [vmem:[%s1037 + $0x49c] sm:%s1030]
        %1632 = vst [vmem:[%s1038 + $0x4a0] sm:%s1030] %v1631
        %v1633 = vld [vmem:[%s1037 + $0x4a8] sm:%s1030]
        %1634 = vst [vmem:[%s1038 + $0x4a4] sm:%s1030] %v1633
        %v1635 = vld [vmem:[%s1037 + $0x4a0] sm:%s1030]
        %1636 = vst [vmem:[%s1038 + $0x4a8] sm:%s1030] %v1635
        %v1637 = vld [vmem:[%s1037 + $0x4ac] sm:%s1030]
        %1638 = vst [vmem:[%s1038 + $0x4ac] sm:%s1030] %v1637
        %v1639 = vld [vmem:[%s1037 + $0x4b0] sm:%s1030]
        %1640 = vst [vmem:[%s1038 + $0x4b0] sm:%s1030] %v1639
        %v1641 = vld [vmem:[%s1037 + $0x4bc] sm:%s1030]
        %1642 = vst [vmem:[%s1038 + $0x4b4] sm:%s1030] %v1641
        %v1643 = vld [vmem:[%s1037 + $0x4b4] sm:%s1030]
        %1644 = vst [vmem:[%s1038 + $0x4b8] sm:%s1030] %v1643
        %v1645 = vld [vmem:[%s1037 + $0x4c0] sm:%s1030]
        %1646 = vst [vmem:[%s1038 + $0x4bc] sm:%s1030] %v1645
        %v1647 = vld [vmem:[%s1037 + $0x4b8] sm:%s1030]
        %1648 = vst [vmem:[%s1038 + $0x4c0] sm:%s1030] %v1647
        %v1649 = vld [vmem:[%s1037 + $0x4c4] sm:%s1030]
        %1650 = vst [vmem:[%s1038 + $0x4c4] sm:%s1030] %v1649
        %v1651 = vld [vmem:[%s1037 + $0x4c8] sm:%s1030]
        %1652 = vst [vmem:[%s1038 + $0x4c8] sm:%s1030] %v1651
        %v1653 = vld [vmem:[%s1037 + $0x4d4] sm:%s1030]
        %1654 = vst [vmem:[%s1038 + $0x4cc] sm:%s1030] %v1653
        %v1655 = vld [vmem:[%s1037 + $0x4cc] sm:%s1030]
        %1656 = vst [vmem:[%s1038 + $0x4d0] sm:%s1030] %v1655
        %v1657 = vld [vmem:[%s1037 + $0x4d8] sm:%s1030]
        %1658 = vst [vmem:[%s1038 + $0x4d4] sm:%s1030] %v1657
        %v1659 = vld [vmem:[%s1037 + $0x4d0] sm:%s1030]
        %1660 = vst [vmem:[%s1038 + $0x4d8] sm:%s1030] %v1659
        %v1661 = vld [vmem:[%s1037 + $0x4dc] sm:%s1030]
        %1662 = vst [vmem:[%s1038 + $0x4dc] sm:%s1030] %v1661
        %v1663 = vld [vmem:[%s1037 + $0x4e0] sm:%s1030]
        %1664 = vst [vmem:[%s1038 + $0x4e0] sm:%s1030] %v1663
        %v1665 = vld [vmem:[%s1037 + $0x4ec] sm:%s1030]
        %1666 = vst [vmem:[%s1038 + $0x4e4] sm:%s1030] %v1665
        %v1667 = vld [vmem:[%s1037 + $0x4e4] sm:%s1030]
        %1668 = vst [vmem:[%s1038 + $0x4e8] sm:%s1030] %v1667
        %v1669 = vld [vmem:[%s1037 + $0x4f0] sm:%s1030]
        %1670 = vst [vmem:[%s1038 + $0x4ec] sm:%s1030] %v1669
        %v1671 = vld [vmem:[%s1037 + $0x4e8] sm:%s1030]
        %1672 = vst [vmem:[%s1038 + $0x4f0] sm:%s1030] %v1671
        %v1673 = vld [vmem:[%s1037 + $0x4f4] sm:%s1030]
        %1674 = vst [vmem:[%s1038 + $0x4f4] sm:%s1030] %v1673
        %v1675 = vld [vmem:[%s1037 + $0x4f8] sm:%s1030]
        %1676 = vst [vmem:[%s1038 + $0x4f8] sm:%s1030] %v1675
        %v1677 = vld [vmem:[%s1037 + $0x504] sm:%s1030]
        %1678 = vst [vmem:[%s1038 + $0x4fc] sm:%s1030] %v1677
        %v1679 = vld [vmem:[%s1037 + $0x4fc] sm:%s1030]
        %1680 = vst [vmem:[%s1038 + $0x500] sm:%s1030] %v1679
        %v1681 = vld [vmem:[%s1037 + $0x508] sm:%s1030]
        %1682 = vst [vmem:[%s1038 + $0x504] sm:%s1030] %v1681
        %v1683 = vld [vmem:[%s1037 + $0x500] sm:%s1030]
        %1684 = vst [vmem:[%s1038 + $0x508] sm:%s1030] %v1683
        %v1685 = vld [vmem:[%s1037 + $0x50c] sm:%s1030]
        %1686 = vst [vmem:[%s1038 + $0x50c] sm:%s1030] %v1685
        %v1687 = vld [vmem:[%s1037 + $0x510] sm:%s1030]
        %1688 = vst [vmem:[%s1038 + $0x510] sm:%s1030] %v1687
        %v1689 = vld [vmem:[%s1037 + $0x51c] sm:%s1030]
        %1690 = vst [vmem:[%s1038 + $0x514] sm:%s1030] %v1689
        %v1691 = vld [vmem:[%s1037 + $0x514] sm:%s1030]
        %1692 = vst [vmem:[%s1038 + $0x518] sm:%s1030] %v1691
        %v1693 = vld [vmem:[%s1037 + $0x520] sm:%s1030]
        %1694 = vst [vmem:[%s1038 + $0x51c] sm:%s1030] %v1693
        %v1695 = vld [vmem:[%s1037 + $0x518] sm:%s1030]
        %1696 = vst [vmem:[%s1038 + $0x520] sm:%s1030] %v1695
        %v1697 = vld [vmem:[%s1037 + $0x524] sm:%s1030]
        %1698 = vst [vmem:[%s1038 + $0x524] sm:%s1030] %v1697
        %v1699 = vld [vmem:[%s1037 + $0x528] sm:%s1030]
        %1700 = vst [vmem:[%s1038 + $0x528] sm:%s1030] %v1699
        %v1701 = vld [vmem:[%s1037 + $0x534] sm:%s1030]
        %1702 = vst [vmem:[%s1038 + $0x52c] sm:%s1030] %v1701
        %v1703 = vld [vmem:[%s1037 + $0x52c] sm:%s1030]
        %1704 = vst [vmem:[%s1038 + $0x530] sm:%s1030] %v1703
        %v1705 = vld [vmem:[%s1037 + $0x538] sm:%s1030]
        %1706 = vst [vmem:[%s1038 + $0x534] sm:%s1030] %v1705
        %v1707 = vld [vmem:[%s1037 + $0x530] sm:%s1030]
        %1708 = vst [vmem:[%s1038 + $0x538] sm:%s1030] %v1707
        %v1709 = vld [vmem:[%s1037 + $0x53c] sm:%s1030]
        %1710 = vst [vmem:[%s1038 + $0x53c] sm:%s1030] %v1709
        %v1711 = vld [vmem:[%s1037 + $0x540] sm:%s1030]
        %1712 = vst [vmem:[%s1038 + $0x540] sm:%s1030] %v1711
        %v1713 = vld [vmem:[%s1037 + $0x54c] sm:%s1030]
        %1714 = vst [vmem:[%s1038 + $0x544] sm:%s1030] %v1713
        %v1715 = vld [vmem:[%s1037 + $0x544] sm:%s1030]
        %1716 = vst [vmem:[%s1038 + $0x548] sm:%s1030] %v1715
        %v1717 = vld [vmem:[%s1037 + $0x550] sm:%s1030]
        %1718 = vst [vmem:[%s1038 + $0x54c] sm:%s1030] %v1717
        %v1719 = vld [vmem:[%s1037 + $0x548] sm:%s1030]
        %1720 = vst [vmem:[%s1038 + $0x550] sm:%s1030] %v1719
        %v1721 = vld [vmem:[%s1037 + $0x554] sm:%s1030]
        %1722 = vst [vmem:[%s1038 + $0x554] sm:%s1030] %v1721
        %v1723 = vld [vmem:[%s1037 + $0x558] sm:%s1030]
        %1724 = vst [vmem:[%s1038 + $0x558] sm:%s1030] %v1723
        %v1725 = vld [vmem:[%s1037 + $0x564] sm:%s1030]
        %1726 = vst [vmem:[%s1038 + $0x55c] sm:%s1030] %v1725
        %v1727 = vld [vmem:[%s1037 + $0x55c] sm:%s1030]
        %1728 = vst [vmem:[%s1038 + $0x560] sm:%s1030] %v1727
        %v1729 = vld [vmem:[%s1037 + $0x568] sm:%s1030]
        %1730 = vst [vmem:[%s1038 + $0x564] sm:%s1030] %v1729
        %v1731 = vld [vmem:[%s1037 + $0x560] sm:%s1030]
        %1732 = vst [vmem:[%s1038 + $0x568] sm:%s1030] %v1731
        %v1733 = vld [vmem:[%s1037 + $0x56c] sm:%s1030]
        %1734 = vst [vmem:[%s1038 + $0x56c] sm:%s1030] %v1733
        %v1735 = vld [vmem:[%s1037 + $0x570] sm:%s1030]
        %1736 = vst [vmem:[%s1038 + $0x570] sm:%s1030] %v1735
        %v1737 = vld [vmem:[%s1037 + $0x57c] sm:%s1030]
        %1738 = vst [vmem:[%s1038 + $0x574] sm:%s1030] %v1737
        %v1739 = vld [vmem:[%s1037 + $0x574] sm:%s1030]
        %1740 = vst [vmem:[%s1038 + $0x578] sm:%s1030] %v1739
        %v1741 = vld [vmem:[%s1037 + $0x580] sm:%s1030]
        %1742 = vst [vmem:[%s1038 + $0x57c] sm:%s1030] %v1741
        %v1743 = vld [vmem:[%s1037 + $0x578] sm:%s1030]
        %1744 = vst [vmem:[%s1038 + $0x580] sm:%s1030] %v1743
        %v1745 = vld [vmem:[%s1037 + $0x584] sm:%s1030]
        %1746 = vst [vmem:[%s1038 + $0x584] sm:%s1030] %v1745
        %v1747 = vld [vmem:[%s1037 + $0x588] sm:%s1030]
        %1748 = vst [vmem:[%s1038 + $0x588] sm:%s1030] %v1747
        %v1749 = vld [vmem:[%s1037 + $0x594] sm:%s1030]
        %1750 = vst [vmem:[%s1038 + $0x58c] sm:%s1030] %v1749
        %v1751 = vld [vmem:[%s1037 + $0x58c] sm:%s1030]
        %1752 = vst [vmem:[%s1038 + $0x590] sm:%s1030] %v1751
        %v1753 = vld [vmem:[%s1037 + $0x598] sm:%s1030]
        %1754 = vst [vmem:[%s1038 + $0x594] sm:%s1030] %v1753
        %v1755 = vld [vmem:[%s1037 + $0x590] sm:%s1030]
        %1756 = vst [vmem:[%s1038 + $0x598] sm:%s1030] %v1755
        %v1757 = vld [vmem:[%s1037 + $0x59c] sm:%s1030]
        %1758 = vst [vmem:[%s1038 + $0x59c] sm:%s1030] %v1757
        %v1759 = vld [vmem:[%s1037 + $0x5a0] sm:%s1030]
        %1760 = vst [vmem:[%s1038 + $0x5a0] sm:%s1030] %v1759
        %v1761 = vld [vmem:[%s1037 + $0x5ac] sm:%s1030]
        %1762 = vst [vmem:[%s1038 + $0x5a4] sm:%s1030] %v1761
        %v1763 = vld [vmem:[%s1037 + $0x5a4] sm:%s1030]
        %1764 = vst [vmem:[%s1038 + $0x5a8] sm:%s1030] %v1763
        %v1765 = vld [vmem:[%s1037 + $0x5b0] sm:%s1030]
        %1766 = vst [vmem:[%s1038 + $0x5ac] sm:%s1030] %v1765
        %v1767 = vld [vmem:[%s1037 + $0x5a8] sm:%s1030]
        %1768 = vst [vmem:[%s1038 + $0x5b0] sm:%s1030] %v1767
        %v1769 = vld [vmem:[%s1037 + $0x5b4] sm:%s1030]
        %1770 = vst [vmem:[%s1038 + $0x5b4] sm:%s1030] %v1769
        %v1771 = vld [vmem:[%s1037 + $0x5b8] sm:%s1030]
        %1772 = vst [vmem:[%s1038 + $0x5b8] sm:%s1030] %v1771
        %v1773 = vld [vmem:[%s1037 + $0x5c4] sm:%s1030]
        %1774 = vst [vmem:[%s1038 + $0x5bc] sm:%s1030] %v1773
        %v1775 = vld [vmem:[%s1037 + $0x5bc] sm:%s1030]
        %1776 = vst [vmem:[%s1038 + $0x5c0] sm:%s1030] %v1775
        %v1777 = vld [vmem:[%s1037 + $0x5c8] sm:%s1030]
        %1778 = vst [vmem:[%s1038 + $0x5c4] sm:%s1030] %v1777
        %v1779 = vld [vmem:[%s1037 + $0x5c0] sm:%s1030]
        %1780 = vst [vmem:[%s1038 + $0x5c8] sm:%s1030] %v1779
        %v1781 = vld [vmem:[%s1037 + $0x5cc] sm:%s1030]
        %1782 = vst [vmem:[%s1038 + $0x5cc] sm:%s1030] %v1781
        %v1783 = vld [vmem:[%s1037 + $0x5d0] sm:%s1030]
        %1784 = vst [vmem:[%s1038 + $0x5d0] sm:%s1030] %v1783
        %v1785 = vld [vmem:[%s1037 + $0x5dc] sm:%s1030]
        %1786 = vst [vmem:[%s1038 + $0x5d4] sm:%s1030] %v1785
        %v1787 = vld [vmem:[%s1037 + $0x5d4] sm:%s1030]
        %1788 = vst [vmem:[%s1038 + $0x5d8] sm:%s1030] %v1787
        %v1789 = vld [vmem:[%s1037 + $0x5e0] sm:%s1030]
        %1790 = vst [vmem:[%s1038 + $0x5dc] sm:%s1030] %v1789
        %v1791 = vld [vmem:[%s1037 + $0x5d8] sm:%s1030]
        %1792 = vst [vmem:[%s1038 + $0x5e0] sm:%s1030] %v1791
        %v1793 = vld [vmem:[%s1037 + $0x5e4] sm:%s1030]
        %1794 = vst [vmem:[%s1038 + $0x5e4] sm:%s1030] %v1793
        %v1795 = vld [vmem:[%s1037 + $0x5e8] sm:%s1030]
        %1796 = vst [vmem:[%s1038 + $0x5e8] sm:%s1030] %v1795
        %v1797 = vld [vmem:[%s1037 + $0x5f4] sm:%s1030]
        %1798 = vst [vmem:[%s1038 + $0x5ec] sm:%s1030] %v1797
        %v1799 = vld [vmem:[%s1037 + $0x5ec] sm:%s1030]
        %1800 = vst [vmem:[%s1038 + $0x5f0] sm:%s1030] %v1799
        %v1801 = vld [vmem:[%s1037 + $0x5f8] sm:%s1030]
        %1802 = vst [vmem:[%s1038 + $0x5f4] sm:%s1030] %v1801
        %v1803 = vld [vmem:[%s1037 + $0x5f0] sm:%s1030]
        %1804 = vst [vmem:[%s1038 + $0x5f8] sm:%s1030] %v1803
        %v1805 = vld [vmem:[%s1037 + $0x5fc] sm:%s1030]
        %1806 = vst [vmem:[%s1038 + $0x5fc] sm:%s1030] %v1805
        %v1807 = vld [vmem:[%s1037 + $0x600] sm:%s1030]
        %1808 = vst [vmem:[%s1038 + $0x600] sm:%s1030] %v1807
        %v1809 = vld [vmem:[%s1037 + $0x60c] sm:%s1030]
        %1810 = vst [vmem:[%s1038 + $0x604] sm:%s1030] %v1809
        %v1811 = vld [vmem:[%s1037 + $0x604] sm:%s1030]
        %1812 = vst [vmem:[%s1038 + $0x608] sm:%s1030] %v1811
        %v1813 = vld [vmem:[%s1037 + $0x610] sm:%s1030]
        %1814 = vst [vmem:[%s1038 + $0x60c] sm:%s1030] %v1813
        %v1815 = vld [vmem:[%s1037 + $0x608] sm:%s1030]
        %1816 = vst [vmem:[%s1038 + $0x610] sm:%s1030] %v1815
        %v1817 = vld [vmem:[%s1037 + $0x614] sm:%s1030]
        %1818 = vst [vmem:[%s1038 + $0x614] sm:%s1030] %v1817
        %v1819 = vld [vmem:[%s1037 + $0x618] sm:%s1030]
        %1820 = vst [vmem:[%s1038 + $0x618] sm:%s1030] %v1819
        %v1821 = vld [vmem:[%s1037 + $0x624] sm:%s1030]
        %1822 = vst [vmem:[%s1038 + $0x61c] sm:%s1030] %v1821
        %v1823 = vld [vmem:[%s1037 + $0x61c] sm:%s1030]
        %1824 = vst [vmem:[%s1038 + $0x620] sm:%s1030] %v1823
        %v1825 = vld [vmem:[%s1037 + $0x628] sm:%s1030]
        %1826 = vst [vmem:[%s1038 + $0x624] sm:%s1030] %v1825
        %v1827 = vld [vmem:[%s1037 + $0x620] sm:%s1030]
        %1828 = vst [vmem:[%s1038 + $0x628] sm:%s1030] %v1827
        %v1829 = vld [vmem:[%s1037 + $0x62c] sm:%s1030]
        %1830 = vst [vmem:[%s1038 + $0x62c] sm:%s1030] %v1829
        %v1831 = vld [vmem:[%s1037 + $0x630] sm:%s1030]
        %1832 = vst [vmem:[%s1038 + $0x630] sm:%s1030] %v1831
        %v1833 = vld [vmem:[%s1037 + $0x63c] sm:%s1030]
        %1834 = vst [vmem:[%s1038 + $0x634] sm:%s1030] %v1833
        %v1835 = vld [vmem:[%s1037 + $0x634] sm:%s1030]
        %1836 = vst [vmem:[%s1038 + $0x638] sm:%s1030] %v1835
        %v1837 = vld [vmem:[%s1037 + $0x640] sm:%s1030]
        %1838 = vst [vmem:[%s1038 + $0x63c] sm:%s1030] %v1837
        %v1839 = vld [vmem:[%s1037 + $0x638] sm:%s1030]
        %1840 = vst [vmem:[%s1038 + $0x640] sm:%s1030] %v1839
        %v1841 = vld [vmem:[%s1037 + $0x644] sm:%s1030]
        %1842 = vst [vmem:[%s1038 + $0x644] sm:%s1030] %v1841
        %v1843 = vld [vmem:[%s1037 + $0x648] sm:%s1030]
        %1844 = vst [vmem:[%s1038 + $0x648] sm:%s1030] %v1843
        %v1845 = vld [vmem:[%s1037 + $0x654] sm:%s1030]
        %1846 = vst [vmem:[%s1038 + $0x64c] sm:%s1030] %v1845
        %v1847 = vld [vmem:[%s1037 + $0x64c] sm:%s1030]
        %1848 = vst [vmem:[%s1038 + $0x650] sm:%s1030] %v1847
        %v1849 = vld [vmem:[%s1037 + $0x658] sm:%s1030]
        %1850 = vst [vmem:[%s1038 + $0x654] sm:%s1030] %v1849
        %v1851 = vld [vmem:[%s1037 + $0x650] sm:%s1030]
        %1852 = vst [vmem:[%s1038 + $0x658] sm:%s1030] %v1851
        %v1853 = vld [vmem:[%s1037 + $0x65c] sm:%s1030]
        %1854 = vst [vmem:[%s1038 + $0x65c] sm:%s1030] %v1853
        %v1855 = vld [vmem:[%s1037 + $0x660] sm:%s1030]
        %1856 = vst [vmem:[%s1038 + $0x660] sm:%s1030] %v1855
        %v1857 = vld [vmem:[%s1037 + $0x66c] sm:%s1030]
        %1858 = vst [vmem:[%s1038 + $0x664] sm:%s1030] %v1857
        %v1859 = vld [vmem:[%s1037 + $0x664] sm:%s1030]
        %1860 = vst [vmem:[%s1038 + $0x668] sm:%s1030] %v1859
        %v1861 = vld [vmem:[%s1037 + $0x670] sm:%s1030]
        %1862 = vst [vmem:[%s1038 + $0x66c] sm:%s1030] %v1861
        %v1863 = vld [vmem:[%s1037 + $0x668] sm:%s1030]
        %1864 = vst [vmem:[%s1038 + $0x670] sm:%s1030] %v1863
        %v1865 = vld [vmem:[%s1037 + $0x674] sm:%s1030]
        %1866 = vst [vmem:[%s1038 + $0x674] sm:%s1030] %v1865
        %v1867 = vld [vmem:[%s1037 + $0x678] sm:%s1030]
        %1868 = vst [vmem:[%s1038 + $0x678] sm:%s1030] %v1867
        %v1869 = vld [vmem:[%s1037 + $0x684] sm:%s1030]
        %1870 = vst [vmem:[%s1038 + $0x67c] sm:%s1030] %v1869
        %v1871 = vld [vmem:[%s1037 + $0x67c] sm:%s1030]
        %1872 = vst [vmem:[%s1038 + $0x680] sm:%s1030] %v1871
        %v1873 = vld [vmem:[%s1037 + $0x688] sm:%s1030]
        %1874 = vst [vmem:[%s1038 + $0x684] sm:%s1030] %v1873
        %v1875 = vld [vmem:[%s1037 + $0x680] sm:%s1030]
        %1876 = vst [vmem:[%s1038 + $0x688] sm:%s1030] %v1875
        %v1877 = vld [vmem:[%s1037 + $0x68c] sm:%s1030]
        %1878 = vst [vmem:[%s1038 + $0x68c] sm:%s1030] %v1877
        %v1879 = vld [vmem:[%s1037 + $0x690] sm:%s1030]
        %1880 = vst [vmem:[%s1038 + $0x690] sm:%s1030] %v1879
        %v1881 = vld [vmem:[%s1037 + $0x69c] sm:%s1030]
        %1882 = vst [vmem:[%s1038 + $0x694] sm:%s1030] %v1881
        %v1883 = vld [vmem:[%s1037 + $0x694] sm:%s1030]
        %1884 = vst [vmem:[%s1038 + $0x698] sm:%s1030] %v1883
        %v1885 = vld [vmem:[%s1037 + $0x6a0] sm:%s1030]
        %1886 = vst [vmem:[%s1038 + $0x69c] sm:%s1030] %v1885
        %v1887 = vld [vmem:[%s1037 + $0x698] sm:%s1030]
        %1888 = vst [vmem:[%s1038 + $0x6a0] sm:%s1030] %v1887
        %v1889 = vld [vmem:[%s1037 + $0x6a4] sm:%s1030]
        %1890 = vst [vmem:[%s1038 + $0x6a4] sm:%s1030] %v1889
        %v1891 = vld [vmem:[%s1037 + $0x6a8] sm:%s1030]
        %1892 = vst [vmem:[%s1038 + $0x6a8] sm:%s1030] %v1891
        %v1893 = vld [vmem:[%s1037 + $0x6b4] sm:%s1030]
        %1894 = vst [vmem:[%s1038 + $0x6ac] sm:%s1030] %v1893
        %v1895 = vld [vmem:[%s1037 + $0x6ac] sm:%s1030]
        %1896 = vst [vmem:[%s1038 + $0x6b0] sm:%s1030] %v1895
        %v1897 = vld [vmem:[%s1037 + $0x6b8] sm:%s1030]
        %1898 = vst [vmem:[%s1038 + $0x6b4] sm:%s1030] %v1897
        %v1899 = vld [vmem:[%s1037 + $0x6b0] sm:%s1030]
        %1900 = vst [vmem:[%s1038 + $0x6b8] sm:%s1030] %v1899
        %v1901 = vld [vmem:[%s1037 + $0x6bc] sm:%s1030]
        %1902 = vst [vmem:[%s1038 + $0x6bc] sm:%s1030] %v1901
        %v1903 = vld [vmem:[%s1037 + $0x6c0] sm:%s1030]
        %1904 = vst [vmem:[%s1038 + $0x6c0] sm:%s1030] %v1903
        %v1905 = vld [vmem:[%s1037 + $0x6cc] sm:%s1030]
        %1906 = vst [vmem:[%s1038 + $0x6c4] sm:%s1030] %v1905
        %v1907 = vld [vmem:[%s1037 + $0x6c4] sm:%s1030]
        %1908 = vst [vmem:[%s1038 + $0x6c8] sm:%s1030] %v1907
        %v1909 = vld [vmem:[%s1037 + $0x6d0] sm:%s1030]
        %1910 = vst [vmem:[%s1038 + $0x6cc] sm:%s1030] %v1909
        %v1911 = vld [vmem:[%s1037 + $0x6c8] sm:%s1030]
        %1912 = vst [vmem:[%s1038 + $0x6d0] sm:%s1030] %v1911
        %v1913 = vld [vmem:[%s1037 + $0x6d4] sm:%s1030]
        %1914 = vst [vmem:[%s1038 + $0x6d4] sm:%s1030] %v1913
        %v1915 = vld [vmem:[%s1037 + $0x6d8] sm:%s1030]
        %1916 = vst [vmem:[%s1038 + $0x6d8] sm:%s1030] %v1915
        %v1917 = vld [vmem:[%s1037 + $0x6e4] sm:%s1030]
        %1918 = vst [vmem:[%s1038 + $0x6dc] sm:%s1030] %v1917
        %v1919 = vld [vmem:[%s1037 + $0x6dc] sm:%s1030]
        %1920 = vst [vmem:[%s1038 + $0x6e0] sm:%s1030] %v1919
        %v1921 = vld [vmem:[%s1037 + $0x6e8] sm:%s1030]
        %1922 = vst [vmem:[%s1038 + $0x6e4] sm:%s1030] %v1921
        %v1923 = vld [vmem:[%s1037 + $0x6e0] sm:%s1030]
        %1924 = vst [vmem:[%s1038 + $0x6e8] sm:%s1030] %v1923
        %v1925 = vld [vmem:[%s1037 + $0x6ec] sm:%s1030]
        %1926 = vst [vmem:[%s1038 + $0x6ec] sm:%s1030] %v1925
        %v1927 = vld [vmem:[%s1037 + $0x6f0] sm:%s1030]
        %1928 = vst [vmem:[%s1038 + $0x6f0] sm:%s1030] %v1927
        %v1929 = vld [vmem:[%s1037 + $0x6fc] sm:%s1030]
        %1930 = vst [vmem:[%s1038 + $0x6f4] sm:%s1030] %v1929
        %v1931 = vld [vmem:[%s1037 + $0x6f4] sm:%s1030]
        %1932 = vst [vmem:[%s1038 + $0x6f8] sm:%s1030] %v1931
        %v1933 = vld [vmem:[%s1037 + $0x700] sm:%s1030]
        %1934 = vst [vmem:[%s1038 + $0x6fc] sm:%s1030] %v1933
        %v1935 = vld [vmem:[%s1037 + $0x6f8] sm:%s1030]
        %1936 = vst [vmem:[%s1038 + $0x700] sm:%s1030] %v1935
        %v1937 = vld [vmem:[%s1037 + $0x704] sm:%s1030]
        %1938 = vst [vmem:[%s1038 + $0x704] sm:%s1030] %v1937
        %v1939 = vld [vmem:[%s1037 + $0x708] sm:%s1030]
        %1940 = vst [vmem:[%s1038 + $0x708] sm:%s1030] %v1939
        %v1941 = vld [vmem:[%s1037 + $0x714] sm:%s1030]
        %1942 = vst [vmem:[%s1038 + $0x70c] sm:%s1030] %v1941
        %v1943 = vld [vmem:[%s1037 + $0x70c] sm:%s1030]
        %1944 = vst [vmem:[%s1038 + $0x710] sm:%s1030] %v1943
        %v1945 = vld [vmem:[%s1037 + $0x718] sm:%s1030]
        %1946 = vst [vmem:[%s1038 + $0x714] sm:%s1030] %v1945
        %v1947 = vld [vmem:[%s1037 + $0x710] sm:%s1030]
        %1948 = vst [vmem:[%s1038 + $0x718] sm:%s1030] %v1947
        %v1949 = vld [vmem:[%s1037 + $0x71c] sm:%s1030]
        %1950 = vst [vmem:[%s1038 + $0x71c] sm:%s1030] %v1949
        %v1951 = vld [vmem:[%s1037 + $0x720] sm:%s1030]
        %1952 = vst [vmem:[%s1038 + $0x720] sm:%s1030] %v1951
        %v1953 = vld [vmem:[%s1037 + $0x72c] sm:%s1030]
        %1954 = vst [vmem:[%s1038 + $0x724] sm:%s1030] %v1953
        %v1955 = vld [vmem:[%s1037 + $0x724] sm:%s1030]
        %1956 = vst [vmem:[%s1038 + $0x728] sm:%s1030] %v1955
        %v1957 = vld [vmem:[%s1037 + $0x730] sm:%s1030]
        %1958 = vst [vmem:[%s1038 + $0x72c] sm:%s1030] %v1957
        %v1959 = vld [vmem:[%s1037 + $0x728] sm:%s1030]
        %1960 = vst [vmem:[%s1038 + $0x730] sm:%s1030] %v1959
        %v1961 = vld [vmem:[%s1037 + $0x734] sm:%s1030]
        %1962 = vst [vmem:[%s1038 + $0x734] sm:%s1030] %v1961
        %v1963 = vld [vmem:[%s1037 + $0x738] sm:%s1030]
        %1964 = vst [vmem:[%s1038 + $0x738] sm:%s1030] %v1963
        %v1965 = vld [vmem:[%s1037 + $0x744] sm:%s1030]
        %1966 = vst [vmem:[%s1038 + $0x73c] sm:%s1030] %v1965
        %v1967 = vld [vmem:[%s1037 + $0x73c] sm:%s1030]
        %1968 = vst [vmem:[%s1038 + $0x740] sm:%s1030] %v1967
        %v1969 = vld [vmem:[%s1037 + $0x748] sm:%s1030]
        %1970 = vst [vmem:[%s1038 + $0x744] sm:%s1030] %v1969
        %v1971 = vld [vmem:[%s1037 + $0x740] sm:%s1030]
        %1972 = vst [vmem:[%s1038 + $0x748] sm:%s1030] %v1971
        %v1973 = vld [vmem:[%s1037 + $0x74c] sm:%s1030]
        %1974 = vst [vmem:[%s1038 + $0x74c] sm:%s1030] %v1973
        %v1975 = vld [vmem:[%s1037 + $0x750] sm:%s1030]
        %1976 = vst [vmem:[%s1038 + $0x750] sm:%s1030] %v1975
        %v1977 = vld [vmem:[%s1037 + $0x75c] sm:%s1030]
        %1978 = vst [vmem:[%s1038 + $0x754] sm:%s1030] %v1977
        %v1979 = vld [vmem:[%s1037 + $0x754] sm:%s1030]
        %1980 = vst [vmem:[%s1038 + $0x758] sm:%s1030] %v1979
        %v1981 = vld [vmem:[%s1037 + $0x760] sm:%s1030]
        %1982 = vst [vmem:[%s1038 + $0x75c] sm:%s1030] %v1981
        %v1983 = vld [vmem:[%s1037 + $0x758] sm:%s1030]
        %1984 = vst [vmem:[%s1038 + $0x760] sm:%s1030] %v1983
        %v1985 = vld [vmem:[%s1037 + $0x764] sm:%s1030]
        %1986 = vst [vmem:[%s1038 + $0x764] sm:%s1030] %v1985
        %v1987 = vld [vmem:[%s1037 + $0x768] sm:%s1030]
        %1988 = vst [vmem:[%s1038 + $0x768] sm:%s1030] %v1987
        %v1989 = vld [vmem:[%s1037 + $0x774] sm:%s1030]
        %1990 = vst [vmem:[%s1038 + $0x76c] sm:%s1030] %v1989
        %v1991 = vld [vmem:[%s1037 + $0x76c] sm:%s1030]
        %1992 = vst [vmem:[%s1038 + $0x770] sm:%s1030] %v1991
        %v1993 = vld [vmem:[%s1037 + $0x778] sm:%s1030]
        %1994 = vst [vmem:[%s1038 + $0x774] sm:%s1030] %v1993
        %v1995 = vld [vmem:[%s1037 + $0x770] sm:%s1030]
        %1996 = vst [vmem:[%s1038 + $0x778] sm:%s1030] %v1995
        %v1997 = vld [vmem:[%s1037 + $0x77c] sm:%s1030]
        %1998 = vst [vmem:[%s1038 + $0x77c] sm:%s1030] %v1997
      $region68: #{crnn_forward.1} parent=55 // loop_footer
        %s1036 = sadd.s32 1, %s1032
      $region69: #{crnn_forward.1} parent=55 // loop_footer_branch
        %1031 = sbr.rel target = $region65
      $region70: #{crnn_forward.1} parent=55 // loop_exit
        _
    $region56: #{crnn_forward.1} parent=40 // pred_fallthru
      _
  $region41: #{crnn_forward.1} parent=0 // pred_fallthru
    _
  // Predicated region
  $region42: #{crnn_forward.1} parent=0 // pred_check
    %p40 = pneg %p36
  $region43: #{crnn_forward.1} parent=0 // pred_check_branch
    %42 = sbr.rel (%p40) target = $region45
  $region44: #{crnn_forward.1} parent=0 // pred_region
    %s43 = sshllo.u32 0, 4
    loop: start=0, step=1, limit=1
    $region46: #{crnn_forward.1} parent=44 // loop_pre_header
      _
    $region47: #{crnn_forward.1} parent=44 // loop_header
      %s45 = sphi 0, %s49
      %p46 = scmp.ge.s32.totalorder %s45, 1
      %s50 = sphi %s9, %s9
      %s51 = sphi [#allocation2], [#allocation2]
    $region48: #{crnn_forward.1} parent=44 // loop_header_branch
      %48 = sbr.rel (%p46) target = $region52
    $region49: #{crnn_forward.1} parent=44 // loop_body
      %v52 = vld [vmem:[%s50] sm:%s43]
      %53 = vst [vmem:[%s51] sm:%s43] %v52
      %v54 = vld [vmem:[%s50 + $0xc] sm:%s43]
      %55 = vst [vmem:[%s51 + $0x4] sm:%s43] %v54
      %v56 = vld [vmem:[%s50 + $0x4] sm:%s43]
      %57 = vst [vmem:[%s51 + $0x8] sm:%s43] %v56
      %v58 = vld [vmem:[%s50 + $0x10] sm:%s43]
      %59 = vst [vmem:[%s51 + $0xc] sm:%s43] %v58
      %v60 = vld [vmem:[%s50 + $0x8] sm:%s43]
      %61 = vst [vmem:[%s51 + $0x10] sm:%s43] %v60
      %v62 = vld [vmem:[%s50 + $0x14] sm:%s43]
      %63 = vst [vmem:[%s51 + $0x14] sm:%s43] %v62
      %v64 = vld [vmem:[%s50 + $0x18] sm:%s43]
      %65 = vst [vmem:[%s51 + $0x18] sm:%s43] %v64
      %v66 = vld [vmem:[%s50 + $0x24] sm:%s43]
      %67 = vst [vmem:[%s51 + $0x1c] sm:%s43] %v66
      %v68 = vld [vmem:[%s50 + $0x1c] sm:%s43]
      %69 = vst [vmem:[%s51 + $0x20] sm:%s43] %v68
      %v70 = vld [vmem:[%s50 + $0x28] sm:%s43]
      %71 = vst [vmem:[%s51 + $0x24] sm:%s43] %v70
      %v72 = vld [vmem:[%s50 + $0x20] sm:%s43]
      %73 = vst [vmem:[%s51 + $0x28] sm:%s43] %v72
      %v74 = vld [vmem:[%s50 + $0x2c] sm:%s43]
      %75 = vst [vmem:[%s51 + $0x2c] sm:%s43] %v74
      %v76 = vld [vmem:[%s50 + $0x30] sm:%s43]
      %77 = vst [vmem:[%s51 + $0x30] sm:%s43] %v76
      %v78 = vld [vmem:[%s50 + $0x3c] sm:%s43]
      %79 = vst [vmem:[%s51 + $0x34] sm:%s43] %v78
      %v80 = vld [vmem:[%s50 + $0x34] sm:%s43]
      %81 = vst [vmem:[%s51 + $0x38] sm:%s43] %v80
      %v82 = vld [vmem:[%s50 + $0x40] sm:%s43]
      %83 = vst [vmem:[%s51 + $0x3c] sm:%s43] %v82
      %v84 = vld [vmem:[%s50 + $0x38] sm:%s43]
      %85 = vst [vmem:[%s51 + $0x40] sm:%s43] %v84
      %v86 = vld [vmem:[%s50 + $0x44] sm:%s43]
      %87 = vst [vmem:[%s51 + $0x44] sm:%s43] %v86
      %v88 = vld [vmem:[%s50 + $0x48] sm:%s43]
      %89 = vst [vmem:[%s51 + $0x48] sm:%s43] %v88
      %v90 = vld [vmem:[%s50 + $0x54] sm:%s43]
      %91 = vst [vmem:[%s51 + $0x4c] sm:%s43] %v90
      %v92 = vld [vmem:[%s50 + $0x4c] sm:%s43]
      %93 = vst [vmem:[%s51 + $0x50] sm:%s43] %v92
      %v94 = vld [vmem:[%s50 + $0x58] sm:%s43]
      %95 = vst [vmem:[%s51 + $0x54] sm:%s43] %v94
      %v96 = vld [vmem:[%s50 + $0x50] sm:%s43]
      %97 = vst [vmem:[%s51 + $0x58] sm:%s43] %v96
      %v98 = vld [vmem:[%s50 + $0x5c] sm:%s43]
      %99 = vst [vmem:[%s51 + $0x5c] sm:%s43] %v98
      %v100 = vld [vmem:[%s50 + $0x60] sm:%s43]
      %101 = vst [vmem:[%s51 + $0x60] sm:%s43] %v100
      %v102 = vld [vmem:[%s50 + $0x6c] sm:%s43]
      %103 = vst [vmem:[%s51 + $0x64] sm:%s43] %v102
      %v104 = vld [vmem:[%s50 + $0x64] sm:%s43]
      %105 = vst [vmem:[%s51 + $0x68] sm:%s43] %v104
      %v106 = vld [vmem:[%s50 + $0x70] sm:%s43]
      %107 = vst [vmem:[%s51 + $0x6c] sm:%s43] %v106
      %v108 = vld [vmem:[%s50 + $0x68] sm:%s43]
      %109 = vst [vmem:[%s51 + $0x70] sm:%s43] %v108
      %v110 = vld [vmem:[%s50 + $0x74] sm:%s43]
      %111 = vst [vmem:[%s51 + $0x74] sm:%s43] %v110
      %v112 = vld [vmem:[%s50 + $0x78] sm:%s43]
      %113 = vst [vmem:[%s51 + $0x78] sm:%s43] %v112
      %v114 = vld [vmem:[%s50 + $0x84] sm:%s43]
      %115 = vst [vmem:[%s51 + $0x7c] sm:%s43] %v114
      %v116 = vld [vmem:[%s50 + $0x7c] sm:%s43]
      %117 = vst [vmem:[%s51 + $0x80] sm:%s43] %v116
      %v118 = vld [vmem:[%s50 + $0x88] sm:%s43]
      %119 = vst [vmem:[%s51 + $0x84] sm:%s43] %v118
      %v120 = vld [vmem:[%s50 + $0x80] sm:%s43]
      %121 = vst [vmem:[%s51 + $0x88] sm:%s43] %v120
      %v122 = vld [vmem:[%s50 + $0x8c] sm:%s43]
      %123 = vst [vmem:[%s51 + $0x8c] sm:%s43] %v122
      %v124 = vld [vmem:[%s50 + $0x90] sm:%s43]
      %125 = vst [vmem:[%s51 + $0x90] sm:%s43] %v124
      %v126 = vld [vmem:[%s50 + $0x9c] sm:%s43]
      %127 = vst [vmem:[%s51 + $0x94] sm:%s43] %v126
      %v128 = vld [vmem:[%s50 + $0x94] sm:%s43]
      %129 = vst [vmem:[%s51 + $0x98] sm:%s43] %v128
      %v130 = vld [vmem:[%s50 + $0xa0] sm:%s43]
      %131 = vst [vmem:[%s51 + $0x9c] sm:%s43] %v130
      %v132 = vld [vmem:[%s50 + $0x98] sm:%s43]
      %133 = vst [vmem:[%s51 + $0xa0] sm:%s43] %v132
      %v134 = vld [vmem:[%s50 + $0xa4] sm:%s43]
      %135 = vst [vmem:[%s51 + $0xa4] sm:%s43] %v134
      %v136 = vld [vmem:[%s50 + $0xa8] sm:%s43]
      %137 = vst [vmem:[%s51 + $0xa8] sm:%s43] %v136
      %v138 = vld [vmem:[%s50 + $0xb4] sm:%s43]
      %139 = vst [vmem:[%s51 + $0xac] sm:%s43] %v138
      %v140 = vld [vmem:[%s50 + $0xac] sm:%s43]
      %141 = vst [vmem:[%s51 + $0xb0] sm:%s43] %v140
      %v142 = vld [vmem:[%s50 + $0xb8] sm:%s43]
      %143 = vst [vmem:[%s51 + $0xb4] sm:%s43] %v142
      %v144 = vld [vmem:[%s50 + $0xb0] sm:%s43]
      %145 = vst [vmem:[%s51 + $0xb8] sm:%s43] %v144
      %v146 = vld [vmem:[%s50 + $0xbc] sm:%s43]
      %147 = vst [vmem:[%s51 + $0xbc] sm:%s43] %v146
      %v148 = vld [vmem:[%s50 + $0xc0] sm:%s43]
      %149 = vst [vmem:[%s51 + $0xc0] sm:%s43] %v148
      %v150 = vld [vmem:[%s50 + $0xcc] sm:%s43]
      %151 = vst [vmem:[%s51 + $0xc4] sm:%s43] %v150
      %v152 = vld [vmem:[%s50 + $0xc4] sm:%s43]
      %153 = vst [vmem:[%s51 + $0xc8] sm:%s43] %v152
      %v154 = vld [vmem:[%s50 + $0xd0] sm:%s43]
      %155 = vst [vmem:[%s51 + $0xcc] sm:%s43] %v154
      %v156 = vld [vmem:[%s50 + $0xc8] sm:%s43]
      %157 = vst [vmem:[%s51 + $0xd0] sm:%s43] %v156
      %v158 = vld [vmem:[%s50 + $0xd4] sm:%s43]
      %159 = vst [vmem:[%s51 + $0xd4] sm:%s43] %v158
      %v160 = vld [vmem:[%s50 + $0xd8] sm:%s43]
      %161 = vst [vmem:[%s51 + $0xd8] sm:%s43] %v160
      %v162 = vld [vmem:[%s50 + $0xe4] sm:%s43]
      %163 = vst [vmem:[%s51 + $0xdc] sm:%s43] %v162
      %v164 = vld [vmem:[%s50 + $0xdc] sm:%s43]
      %165 = vst [vmem:[%s51 + $0xe0] sm:%s43] %v164
      %v166 = vld [vmem:[%s50 + $0xe8] sm:%s43]
      %167 = vst [vmem:[%s51 + $0xe4] sm:%s43] %v166
      %v168 = vld [vmem:[%s50 + $0xe0] sm:%s43]
      %169 = vst [vmem:[%s51 + $0xe8] sm:%s43] %v168
      %v170 = vld [vmem:[%s50 + $0xec] sm:%s43]
      %171 = vst [vmem:[%s51 + $0xec] sm:%s43] %v170
      %v172 = vld [vmem:[%s50 + $0xf0] sm:%s43]
      %173 = vst [vmem:[%s51 + $0xf0] sm:%s43] %v172
      %v174 = vld [vmem:[%s50 + $0xfc] sm:%s43]
      %175 = vst [vmem:[%s51 + $0xf4] sm:%s43] %v174
      %v176 = vld [vmem:[%s50 + $0xf4] sm:%s43]
      %177 = vst [vmem:[%s51 + $0xf8] sm:%s43] %v176
      %v178 = vld [vmem:[%s50 + $0x100] sm:%s43]
      %179 = vst [vmem:[%s51 + $0xfc] sm:%s43] %v178
      %v180 = vld [vmem:[%s50 + $0xf8] sm:%s43]
      %181 = vst [vmem:[%s51 + $0x100] sm:%s43] %v180
      %v182 = vld [vmem:[%s50 + $0x104] sm:%s43]
      %183 = vst [vmem:[%s51 + $0x104] sm:%s43] %v182
      %v184 = vld [vmem:[%s50 + $0x108] sm:%s43]
      %185 = vst [vmem:[%s51 + $0x108] sm:%s43] %v184
      %v186 = vld [vmem:[%s50 + $0x114] sm:%s43]
      %187 = vst [vmem:[%s51 + $0x10c] sm:%s43] %v186
      %v188 = vld [vmem:[%s50 + $0x10c] sm:%s43]
      %189 = vst [vmem:[%s51 + $0x110] sm:%s43] %v188
      %v190 = vld [vmem:[%s50 + $0x118] sm:%s43]
      %191 = vst [vmem:[%s51 + $0x114] sm:%s43] %v190
      %v192 = vld [vmem:[%s50 + $0x110] sm:%s43]
      %193 = vst [vmem:[%s51 + $0x118] sm:%s43] %v192
      %v194 = vld [vmem:[%s50 + $0x11c] sm:%s43]
      %195 = vst [vmem:[%s51 + $0x11c] sm:%s43] %v194
      %v196 = vld [vmem:[%s50 + $0x120] sm:%s43]
      %197 = vst [vmem:[%s51 + $0x120] sm:%s43] %v196
      %v198 = vld [vmem:[%s50 + $0x12c] sm:%s43]
      %199 = vst [vmem:[%s51 + $0x124] sm:%s43] %v198
      %v200 = vld [vmem:[%s50 + $0x124] sm:%s43]
      %201 = vst [vmem:[%s51 + $0x128] sm:%s43] %v200
      %v202 = vld [vmem:[%s50 + $0x130] sm:%s43]
      %203 = vst [vmem:[%s51 + $0x12c] sm:%s43] %v202
      %v204 = vld [vmem:[%s50 + $0x128] sm:%s43]
      %205 = vst [vmem:[%s51 + $0x130] sm:%s43] %v204
      %v206 = vld [vmem:[%s50 + $0x134] sm:%s43]
      %207 = vst [vmem:[%s51 + $0x134] sm:%s43] %v206
      %v208 = vld [vmem:[%s50 + $0x138] sm:%s43]
      %209 = vst [vmem:[%s51 + $0x138] sm:%s43] %v208
      %v210 = vld [vmem:[%s50 + $0x144] sm:%s43]
      %211 = vst [vmem:[%s51 + $0x13c] sm:%s43] %v210
      %v212 = vld [vmem:[%s50 + $0x13c] sm:%s43]
      %213 = vst [vmem:[%s51 + $0x140] sm:%s43] %v212
      %v214 = vld [vmem:[%s50 + $0x148] sm:%s43]
      %215 = vst [vmem:[%s51 + $0x144] sm:%s43] %v214
      %v216 = vld [vmem:[%s50 + $0x140] sm:%s43]
      %217 = vst [vmem:[%s51 + $0x148] sm:%s43] %v216
      %v218 = vld [vmem:[%s50 + $0x14c] sm:%s43]
      %219 = vst [vmem:[%s51 + $0x14c] sm:%s43] %v218
      %v220 = vld [vmem:[%s50 + $0x150] sm:%s43]
      %221 = vst [vmem:[%s51 + $0x150] sm:%s43] %v220
      %v222 = vld [vmem:[%s50 + $0x15c] sm:%s43]
      %223 = vst [vmem:[%s51 + $0x154] sm:%s43] %v222
      %v224 = vld [vmem:[%s50 + $0x154] sm:%s43]
      %225 = vst [vmem:[%s51 + $0x158] sm:%s43] %v224
      %v226 = vld [vmem:[%s50 + $0x160] sm:%s43]
      %227 = vst [vmem:[%s51 + $0x15c] sm:%s43] %v226
      %v228 = vld [vmem:[%s50 + $0x158] sm:%s43]
      %229 = vst [vmem:[%s51 + $0x160] sm:%s43] %v228
      %v230 = vld [vmem:[%s50 + $0x164] sm:%s43]
      %231 = vst [vmem:[%s51 + $0x164] sm:%s43] %v230
      %v232 = vld [vmem:[%s50 + $0x168] sm:%s43]
      %233 = vst [vmem:[%s51 + $0x168] sm:%s43] %v232
      %v234 = vld [vmem:[%s50 + $0x174] sm:%s43]
      %235 = vst [vmem:[%s51 + $0x16c] sm:%s43] %v234
      %v236 = vld [vmem:[%s50 + $0x16c] sm:%s43]
      %237 = vst [vmem:[%s51 + $0x170] sm:%s43] %v236
      %v238 = vld [vmem:[%s50 + $0x178] sm:%s43]
      %239 = vst [vmem:[%s51 + $0x174] sm:%s43] %v238
      %v240 = vld [vmem:[%s50 + $0x170] sm:%s43]
      %241 = vst [vmem:[%s51 + $0x178] sm:%s43] %v240
      %v242 = vld [vmem:[%s50 + $0x17c] sm:%s43]
      %243 = vst [vmem:[%s51 + $0x17c] sm:%s43] %v242
      %v244 = vld [vmem:[%s50 + $0x180] sm:%s43]
      %245 = vst [vmem:[%s51 + $0x180] sm:%s43] %v244
      %v246 = vld [vmem:[%s50 + $0x18c] sm:%s43]
      %247 = vst [vmem:[%s51 + $0x184] sm:%s43] %v246
      %v248 = vld [vmem:[%s50 + $0x184] sm:%s43]
      %249 = vst [vmem:[%s51 + $0x188] sm:%s43] %v248
      %v250 = vld [vmem:[%s50 + $0x190] sm:%s43]
      %251 = vst [vmem:[%s51 + $0x18c] sm:%s43] %v250
      %v252 = vld [vmem:[%s50 + $0x188] sm:%s43]
      %253 = vst [vmem:[%s51 + $0x190] sm:%s43] %v252
      %v254 = vld [vmem:[%s50 + $0x194] sm:%s43]
      %255 = vst [vmem:[%s51 + $0x194] sm:%s43] %v254
      %v256 = vld [vmem:[%s50 + $0x198] sm:%s43]
      %257 = vst [vmem:[%s51 + $0x198] sm:%s43] %v256
      %v258 = vld [vmem:[%s50 + $0x1a4] sm:%s43]
      %259 = vst [vmem:[%s51 + $0x19c] sm:%s43] %v258
      %v260 = vld [vmem:[%s50 + $0x19c] sm:%s43]
      %261 = vst [vmem:[%s51 + $0x1a0] sm:%s43] %v260
      %v262 = vld [vmem:[%s50 + $0x1a8] sm:%s43]
      %263 = vst [vmem:[%s51 + $0x1a4] sm:%s43] %v262
      %v264 = vld [vmem:[%s50 + $0x1a0] sm:%s43]
      %265 = vst [vmem:[%s51 + $0x1a8] sm:%s43] %v264
      %v266 = vld [vmem:[%s50 + $0x1ac] sm:%s43]
      %267 = vst [vmem:[%s51 + $0x1ac] sm:%s43] %v266
      %v268 = vld [vmem:[%s50 + $0x1b0] sm:%s43]
      %269 = vst [vmem:[%s51 + $0x1b0] sm:%s43] %v268
      %v270 = vld [vmem:[%s50 + $0x1bc] sm:%s43]
      %271 = vst [vmem:[%s51 + $0x1b4] sm:%s43] %v270
      %v272 = vld [vmem:[%s50 + $0x1b4] sm:%s43]
      %273 = vst [vmem:[%s51 + $0x1b8] sm:%s43] %v272
      %v274 = vld [vmem:[%s50 + $0x1c0] sm:%s43]
      %275 = vst [vmem:[%s51 + $0x1bc] sm:%s43] %v274
      %v276 = vld [vmem:[%s50 + $0x1b8] sm:%s43]
      %277 = vst [vmem:[%s51 + $0x1c0] sm:%s43] %v276
      %v278 = vld [vmem:[%s50 + $0x1c4] sm:%s43]
      %279 = vst [vmem:[%s51 + $0x1c4] sm:%s43] %v278
      %v280 = vld [vmem:[%s50 + $0x1c8] sm:%s43]
      %281 = vst [vmem:[%s51 + $0x1c8] sm:%s43] %v280
      %v282 = vld [vmem:[%s50 + $0x1d4] sm:%s43]
      %283 = vst [vmem:[%s51 + $0x1cc] sm:%s43] %v282
      %v284 = vld [vmem:[%s50 + $0x1cc] sm:%s43]
      %285 = vst [vmem:[%s51 + $0x1d0] sm:%s43] %v284
      %v286 = vld [vmem:[%s50 + $0x1d8] sm:%s43]
      %287 = vst [vmem:[%s51 + $0x1d4] sm:%s43] %v286
      %v288 = vld [vmem:[%s50 + $0x1d0] sm:%s43]
      %289 = vst [vmem:[%s51 + $0x1d8] sm:%s43] %v288
      %v290 = vld [vmem:[%s50 + $0x1dc] sm:%s43]
      %291 = vst [vmem:[%s51 + $0x1dc] sm:%s43] %v290
      %v292 = vld [vmem:[%s50 + $0x1e0] sm:%s43]
      %293 = vst [vmem:[%s51 + $0x1e0] sm:%s43] %v292
      %v294 = vld [vmem:[%s50 + $0x1ec] sm:%s43]
      %295 = vst [vmem:[%s51 + $0x1e4] sm:%s43] %v294
      %v296 = vld [vmem:[%s50 + $0x1e4] sm:%s43]
      %297 = vst [vmem:[%s51 + $0x1e8] sm:%s43] %v296
      %v298 = vld [vmem:[%s50 + $0x1f0] sm:%s43]
      %299 = vst [vmem:[%s51 + $0x1ec] sm:%s43] %v298
      %v300 = vld [vmem:[%s50 + $0x1e8] sm:%s43]
      %301 = vst [vmem:[%s51 + $0x1f0] sm:%s43] %v300
      %v302 = vld [vmem:[%s50 + $0x1f4] sm:%s43]
      %303 = vst [vmem:[%s51 + $0x1f4] sm:%s43] %v302
      %v304 = vld [vmem:[%s50 + $0x1f8] sm:%s43]
      %305 = vst [vmem:[%s51 + $0x1f8] sm:%s43] %v304
      %v306 = vld [vmem:[%s50 + $0x204] sm:%s43]
      %307 = vst [vmem:[%s51 + $0x1fc] sm:%s43] %v306
      %v308 = vld [vmem:[%s50 + $0x1fc] sm:%s43]
      %309 = vst [vmem:[%s51 + $0x200] sm:%s43] %v308
      %v310 = vld [vmem:[%s50 + $0x208] sm:%s43]
      %311 = vst [vmem:[%s51 + $0x204] sm:%s43] %v310
      %v312 = vld [vmem:[%s50 + $0x200] sm:%s43]
      %313 = vst [vmem:[%s51 + $0x208] sm:%s43] %v312
      %v314 = vld [vmem:[%s50 + $0x20c] sm:%s43]
      %315 = vst [vmem:[%s51 + $0x20c] sm:%s43] %v314
      %v316 = vld [vmem:[%s50 + $0x210] sm:%s43]
      %317 = vst [vmem:[%s51 + $0x210] sm:%s43] %v316
      %v318 = vld [vmem:[%s50 + $0x21c] sm:%s43]
      %319 = vst [vmem:[%s51 + $0x214] sm:%s43] %v318
      %v320 = vld [vmem:[%s50 + $0x214] sm:%s43]
      %321 = vst [vmem:[%s51 + $0x218] sm:%s43] %v320
      %v322 = vld [vmem:[%s50 + $0x220] sm:%s43]
      %323 = vst [vmem:[%s51 + $0x21c] sm:%s43] %v322
      %v324 = vld [vmem:[%s50 + $0x218] sm:%s43]
      %325 = vst [vmem:[%s51 + $0x220] sm:%s43] %v324
      %v326 = vld [vmem:[%s50 + $0x224] sm:%s43]
      %327 = vst [vmem:[%s51 + $0x224] sm:%s43] %v326
      %v328 = vld [vmem:[%s50 + $0x228] sm:%s43]
      %329 = vst [vmem:[%s51 + $0x228] sm:%s43] %v328
      %v330 = vld [vmem:[%s50 + $0x234] sm:%s43]
      %331 = vst [vmem:[%s51 + $0x22c] sm:%s43] %v330
      %v332 = vld [vmem:[%s50 + $0x22c] sm:%s43]
      %333 = vst [vmem:[%s51 + $0x230] sm:%s43] %v332
      %v334 = vld [vmem:[%s50 + $0x238] sm:%s43]
      %335 = vst [vmem:[%s51 + $0x234] sm:%s43] %v334
      %v336 = vld [vmem:[%s50 + $0x230] sm:%s43]
      %337 = vst [vmem:[%s51 + $0x238] sm:%s43] %v336
      %v338 = vld [vmem:[%s50 + $0x23c] sm:%s43]
      %339 = vst [vmem:[%s51 + $0x23c] sm:%s43] %v338
      %v340 = vld [vmem:[%s50 + $0x240] sm:%s43]
      %341 = vst [vmem:[%s51 + $0x240] sm:%s43] %v340
      %v342 = vld [vmem:[%s50 + $0x24c] sm:%s43]
      %343 = vst [vmem:[%s51 + $0x244] sm:%s43] %v342
      %v344 = vld [vmem:[%s50 + $0x244] sm:%s43]
      %345 = vst [vmem:[%s51 + $0x248] sm:%s43] %v344
      %v346 = vld [vmem:[%s50 + $0x250] sm:%s43]
      %347 = vst [vmem:[%s51 + $0x24c] sm:%s43] %v346
      %v348 = vld [vmem:[%s50 + $0x248] sm:%s43]
      %349 = vst [vmem:[%s51 + $0x250] sm:%s43] %v348
      %v350 = vld [vmem:[%s50 + $0x254] sm:%s43]
      %351 = vst [vmem:[%s51 + $0x254] sm:%s43] %v350
      %v352 = vld [vmem:[%s50 + $0x258] sm:%s43]
      %353 = vst [vmem:[%s51 + $0x258] sm:%s43] %v352
      %v354 = vld [vmem:[%s50 + $0x264] sm:%s43]
      %355 = vst [vmem:[%s51 + $0x25c] sm:%s43] %v354
      %v356 = vld [vmem:[%s50 + $0x25c] sm:%s43]
      %357 = vst [vmem:[%s51 + $0x260] sm:%s43] %v356
      %v358 = vld [vmem:[%s50 + $0x268] sm:%s43]
      %359 = vst [vmem:[%s51 + $0x264] sm:%s43] %v358
      %v360 = vld [vmem:[%s50 + $0x260] sm:%s43]
      %361 = vst [vmem:[%s51 + $0x268] sm:%s43] %v360
      %v362 = vld [vmem:[%s50 + $0x26c] sm:%s43]
      %363 = vst [vmem:[%s51 + $0x26c] sm:%s43] %v362
      %v364 = vld [vmem:[%s50 + $0x270] sm:%s43]
      %365 = vst [vmem:[%s51 + $0x270] sm:%s43] %v364
      %v366 = vld [vmem:[%s50 + $0x27c] sm:%s43]
      %367 = vst [vmem:[%s51 + $0x274] sm:%s43] %v366
      %v368 = vld [vmem:[%s50 + $0x274] sm:%s43]
      %369 = vst [vmem:[%s51 + $0x278] sm:%s43] %v368
      %v370 = vld [vmem:[%s50 + $0x280] sm:%s43]
      %371 = vst [vmem:[%s51 + $0x27c] sm:%s43] %v370
      %v372 = vld [vmem:[%s50 + $0x278] sm:%s43]
      %373 = vst [vmem:[%s51 + $0x280] sm:%s43] %v372
      %v374 = vld [vmem:[%s50 + $0x284] sm:%s43]
      %375 = vst [vmem:[%s51 + $0x284] sm:%s43] %v374
      %v376 = vld [vmem:[%s50 + $0x288] sm:%s43]
      %377 = vst [vmem:[%s51 + $0x288] sm:%s43] %v376
      %v378 = vld [vmem:[%s50 + $0x294] sm:%s43]
      %379 = vst [vmem:[%s51 + $0x28c] sm:%s43] %v378
      %v380 = vld [vmem:[%s50 + $0x28c] sm:%s43]
      %381 = vst [vmem:[%s51 + $0x290] sm:%s43] %v380
      %v382 = vld [vmem:[%s50 + $0x298] sm:%s43]
      %383 = vst [vmem:[%s51 + $0x294] sm:%s43] %v382
      %v384 = vld [vmem:[%s50 + $0x290] sm:%s43]
      %385 = vst [vmem:[%s51 + $0x298] sm:%s43] %v384
      %v386 = vld [vmem:[%s50 + $0x29c] sm:%s43]
      %387 = vst [vmem:[%s51 + $0x29c] sm:%s43] %v386
      %v388 = vld [vmem:[%s50 + $0x2a0] sm:%s43]
      %389 = vst [vmem:[%s51 + $0x2a0] sm:%s43] %v388
      %v390 = vld [vmem:[%s50 + $0x2ac] sm:%s43]
      %391 = vst [vmem:[%s51 + $0x2a4] sm:%s43] %v390
      %v392 = vld [vmem:[%s50 + $0x2a4] sm:%s43]
      %393 = vst [vmem:[%s51 + $0x2a8] sm:%s43] %v392
      %v394 = vld [vmem:[%s50 + $0x2b0] sm:%s43]
      %395 = vst [vmem:[%s51 + $0x2ac] sm:%s43] %v394
      %v396 = vld [vmem:[%s50 + $0x2a8] sm:%s43]
      %397 = vst [vmem:[%s51 + $0x2b0] sm:%s43] %v396
      %v398 = vld [vmem:[%s50 + $0x2b4] sm:%s43]
      %399 = vst [vmem:[%s51 + $0x2b4] sm:%s43] %v398
      %v400 = vld [vmem:[%s50 + $0x2b8] sm:%s43]
      %401 = vst [vmem:[%s51 + $0x2b8] sm:%s43] %v400
      %v402 = vld [vmem:[%s50 + $0x2c4] sm:%s43]
      %403 = vst [vmem:[%s51 + $0x2bc] sm:%s43] %v402
      %v404 = vld [vmem:[%s50 + $0x2bc] sm:%s43]
      %405 = vst [vmem:[%s51 + $0x2c0] sm:%s43] %v404
      %v406 = vld [vmem:[%s50 + $0x2c8] sm:%s43]
      %407 = vst [vmem:[%s51 + $0x2c4] sm:%s43] %v406
      %v408 = vld [vmem:[%s50 + $0x2c0] sm:%s43]
      %409 = vst [vmem:[%s51 + $0x2c8] sm:%s43] %v408
      %v410 = vld [vmem:[%s50 + $0x2cc] sm:%s43]
      %411 = vst [vmem:[%s51 + $0x2cc] sm:%s43] %v410
      %v412 = vld [vmem:[%s50 + $0x2d0] sm:%s43]
      %413 = vst [vmem:[%s51 + $0x2d0] sm:%s43] %v412
      %v414 = vld [vmem:[%s50 + $0x2dc] sm:%s43]
      %415 = vst [vmem:[%s51 + $0x2d4] sm:%s43] %v414
      %v416 = vld [vmem:[%s50 + $0x2d4] sm:%s43]
      %417 = vst [vmem:[%s51 + $0x2d8] sm:%s43] %v416
      %v418 = vld [vmem:[%s50 + $0x2e0] sm:%s43]
      %419 = vst [vmem:[%s51 + $0x2dc] sm:%s43] %v418
      %v420 = vld [vmem:[%s50 + $0x2d8] sm:%s43]
      %421 = vst [vmem:[%s51 + $0x2e0] sm:%s43] %v420
      %v422 = vld [vmem:[%s50 + $0x2e4] sm:%s43]
      %423 = vst [vmem:[%s51 + $0x2e4] sm:%s43] %v422
      %v424 = vld [vmem:[%s50 + $0x2e8] sm:%s43]
      %425 = vst [vmem:[%s51 + $0x2e8] sm:%s43] %v424
      %v426 = vld [vmem:[%s50 + $0x2f4] sm:%s43]
      %427 = vst [vmem:[%s51 + $0x2ec] sm:%s43] %v426
      %v428 = vld [vmem:[%s50 + $0x2ec] sm:%s43]
      %429 = vst [vmem:[%s51 + $0x2f0] sm:%s43] %v428
      %v430 = vld [vmem:[%s50 + $0x2f8] sm:%s43]
      %431 = vst [vmem:[%s51 + $0x2f4] sm:%s43] %v430
      %v432 = vld [vmem:[%s50 + $0x2f0] sm:%s43]
      %433 = vst [vmem:[%s51 + $0x2f8] sm:%s43] %v432
      %v434 = vld [vmem:[%s50 + $0x2fc] sm:%s43]
      %435 = vst [vmem:[%s51 + $0x2fc] sm:%s43] %v434
      %v436 = vld [vmem:[%s50 + $0x300] sm:%s43]
      %437 = vst [vmem:[%s51 + $0x300] sm:%s43] %v436
      %v438 = vld [vmem:[%s50 + $0x30c] sm:%s43]
      %439 = vst [vmem:[%s51 + $0x304] sm:%s43] %v438
      %v440 = vld [vmem:[%s50 + $0x304] sm:%s43]
      %441 = vst [vmem:[%s51 + $0x308] sm:%s43] %v440
      %v442 = vld [vmem:[%s50 + $0x310] sm:%s43]
      %443 = vst [vmem:[%s51 + $0x30c] sm:%s43] %v442
      %v444 = vld [vmem:[%s50 + $0x308] sm:%s43]
      %445 = vst [vmem:[%s51 + $0x310] sm:%s43] %v444
      %v446 = vld [vmem:[%s50 + $0x314] sm:%s43]
      %447 = vst [vmem:[%s51 + $0x314] sm:%s43] %v446
      %v448 = vld [vmem:[%s50 + $0x318] sm:%s43]
      %449 = vst [vmem:[%s51 + $0x318] sm:%s43] %v448
      %v450 = vld [vmem:[%s50 + $0x324] sm:%s43]
      %451 = vst [vmem:[%s51 + $0x31c] sm:%s43] %v450
      %v452 = vld [vmem:[%s50 + $0x31c] sm:%s43]
      %453 = vst [vmem:[%s51 + $0x320] sm:%s43] %v452
      %v454 = vld [vmem:[%s50 + $0x328] sm:%s43]
      %455 = vst [vmem:[%s51 + $0x324] sm:%s43] %v454
      %v456 = vld [vmem:[%s50 + $0x320] sm:%s43]
      %457 = vst [vmem:[%s51 + $0x328] sm:%s43] %v456
      %v458 = vld [vmem:[%s50 + $0x32c] sm:%s43]
      %459 = vst [vmem:[%s51 + $0x32c] sm:%s43] %v458
      %v460 = vld [vmem:[%s50 + $0x330] sm:%s43]
      %461 = vst [vmem:[%s51 + $0x330] sm:%s43] %v460
      %v462 = vld [vmem:[%s50 + $0x33c] sm:%s43]
      %463 = vst [vmem:[%s51 + $0x334] sm:%s43] %v462
      %v464 = vld [vmem:[%s50 + $0x334] sm:%s43]
      %465 = vst [vmem:[%s51 + $0x338] sm:%s43] %v464
      %v466 = vld [vmem:[%s50 + $0x340] sm:%s43]
      %467 = vst [vmem:[%s51 + $0x33c] sm:%s43] %v466
      %v468 = vld [vmem:[%s50 + $0x338] sm:%s43]
      %469 = vst [vmem:[%s51 + $0x340] sm:%s43] %v468
      %v470 = vld [vmem:[%s50 + $0x344] sm:%s43]
      %471 = vst [vmem:[%s51 + $0x344] sm:%s43] %v470
      %v472 = vld [vmem:[%s50 + $0x348] sm:%s43]
      %473 = vst [vmem:[%s51 + $0x348] sm:%s43] %v472
      %v474 = vld [vmem:[%s50 + $0x354] sm:%s43]
      %475 = vst [vmem:[%s51 + $0x34c] sm:%s43] %v474
      %v476 = vld [vmem:[%s50 + $0x34c] sm:%s43]
      %477 = vst [vmem:[%s51 + $0x350] sm:%s43] %v476
      %v478 = vld [vmem:[%s50 + $0x358] sm:%s43]
      %479 = vst [vmem:[%s51 + $0x354] sm:%s43] %v478
      %v480 = vld [vmem:[%s50 + $0x350] sm:%s43]
      %481 = vst [vmem:[%s51 + $0x358] sm:%s43] %v480
      %v482 = vld [vmem:[%s50 + $0x35c] sm:%s43]
      %483 = vst [vmem:[%s51 + $0x35c] sm:%s43] %v482
      %v484 = vld [vmem:[%s50 + $0x360] sm:%s43]
      %485 = vst [vmem:[%s51 + $0x360] sm:%s43] %v484
      %v486 = vld [vmem:[%s50 + $0x36c] sm:%s43]
      %487 = vst [vmem:[%s51 + $0x364] sm:%s43] %v486
      %v488 = vld [vmem:[%s50 + $0x364] sm:%s43]
      %489 = vst [vmem:[%s51 + $0x368] sm:%s43] %v488
      %v490 = vld [vmem:[%s50 + $0x370] sm:%s43]
      %491 = vst [vmem:[%s51 + $0x36c] sm:%s43] %v490
      %v492 = vld [vmem:[%s50 + $0x368] sm:%s43]
      %493 = vst [vmem:[%s51 + $0x370] sm:%s43] %v492
      %v494 = vld [vmem:[%s50 + $0x374] sm:%s43]
      %495 = vst [vmem:[%s51 + $0x374] sm:%s43] %v494
      %v496 = vld [vmem:[%s50 + $0x378] sm:%s43]
      %497 = vst [vmem:[%s51 + $0x378] sm:%s43] %v496
      %v498 = vld [vmem:[%s50 + $0x384] sm:%s43]
      %499 = vst [vmem:[%s51 + $0x37c] sm:%s43] %v498
      %v500 = vld [vmem:[%s50 + $0x37c] sm:%s43]
      %501 = vst [vmem:[%s51 + $0x380] sm:%s43] %v500
      %v502 = vld [vmem:[%s50 + $0x388] sm:%s43]
      %503 = vst [vmem:[%s51 + $0x384] sm:%s43] %v502
      %v504 = vld [vmem:[%s50 + $0x380] sm:%s43]
      %505 = vst [vmem:[%s51 + $0x388] sm:%s43] %v504
      %v506 = vld [vmem:[%s50 + $0x38c] sm:%s43]
      %507 = vst [vmem:[%s51 + $0x38c] sm:%s43] %v506
      %v508 = vld [vmem:[%s50 + $0x390] sm:%s43]
      %509 = vst [vmem:[%s51 + $0x390] sm:%s43] %v508
      %v510 = vld [vmem:[%s50 + $0x39c] sm:%s43]
      %511 = vst [vmem:[%s51 + $0x394] sm:%s43] %v510
      %v512 = vld [vmem:[%s50 + $0x394] sm:%s43]
      %513 = vst [vmem:[%s51 + $0x398] sm:%s43] %v512
      %v514 = vld [vmem:[%s50 + $0x3a0] sm:%s43]
      %515 = vst [vmem:[%s51 + $0x39c] sm:%s43] %v514
      %v516 = vld [vmem:[%s50 + $0x398] sm:%s43]
      %517 = vst [vmem:[%s51 + $0x3a0] sm:%s43] %v516
      %v518 = vld [vmem:[%s50 + $0x3a4] sm:%s43]
      %519 = vst [vmem:[%s51 + $0x3a4] sm:%s43] %v518
      %v520 = vld [vmem:[%s50 + $0x3a8] sm:%s43]
      %521 = vst [vmem:[%s51 + $0x3a8] sm:%s43] %v520
      %v522 = vld [vmem:[%s50 + $0x3b4] sm:%s43]
      %523 = vst [vmem:[%s51 + $0x3ac] sm:%s43] %v522
      %v524 = vld [vmem:[%s50 + $0x3ac] sm:%s43]
      %525 = vst [vmem:[%s51 + $0x3b0] sm:%s43] %v524
      %v526 = vld [vmem:[%s50 + $0x3b8] sm:%s43]
      %527 = vst [vmem:[%s51 + $0x3b4] sm:%s43] %v526
      %v528 = vld [vmem:[%s50 + $0x3b0] sm:%s43]
      %529 = vst [vmem:[%s51 + $0x3b8] sm:%s43] %v528
      %v530 = vld [vmem:[%s50 + $0x3bc] sm:%s43]
      %531 = vst [vmem:[%s51 + $0x3bc] sm:%s43] %v530
      %v532 = vld [vmem:[%s50 + $0x3c0] sm:%s43]
      %533 = vst [vmem:[%s51 + $0x3c0] sm:%s43] %v532
      %v534 = vld [vmem:[%s50 + $0x3cc] sm:%s43]
      %535 = vst [vmem:[%s51 + $0x3c4] sm:%s43] %v534
      %v536 = vld [vmem:[%s50 + $0x3c4] sm:%s43]
      %537 = vst [vmem:[%s51 + $0x3c8] sm:%s43] %v536
      %v538 = vld [vmem:[%s50 + $0x3d0] sm:%s43]
      %539 = vst [vmem:[%s51 + $0x3cc] sm:%s43] %v538
      %v540 = vld [vmem:[%s50 + $0x3c8] sm:%s43]
      %541 = vst [vmem:[%s51 + $0x3d0] sm:%s43] %v540
      %v542 = vld [vmem:[%s50 + $0x3d4] sm:%s43]
      %543 = vst [vmem:[%s51 + $0x3d4] sm:%s43] %v542
      %v544 = vld [vmem:[%s50 + $0x3d8] sm:%s43]
      %545 = vst [vmem:[%s51 + $0x3d8] sm:%s43] %v544
      %v546 = vld [vmem:[%s50 + $0x3e4] sm:%s43]
      %547 = vst [vmem:[%s51 + $0x3dc] sm:%s43] %v546
      %v548 = vld [vmem:[%s50 + $0x3dc] sm:%s43]
      %549 = vst [vmem:[%s51 + $0x3e0] sm:%s43] %v548
      %v550 = vld [vmem:[%s50 + $0x3e8] sm:%s43]
      %551 = vst [vmem:[%s51 + $0x3e4] sm:%s43] %v550
      %v552 = vld [vmem:[%s50 + $0x3e0] sm:%s43]
      %553 = vst [vmem:[%s51 + $0x3e8] sm:%s43] %v552
      %v554 = vld [vmem:[%s50 + $0x3ec] sm:%s43]
      %555 = vst [vmem:[%s51 + $0x3ec] sm:%s43] %v554
      %v556 = vld [vmem:[%s50 + $0x3f0] sm:%s43]
      %557 = vst [vmem:[%s51 + $0x3f0] sm:%s43] %v556
      %v558 = vld [vmem:[%s50 + $0x3fc] sm:%s43]
      %559 = vst [vmem:[%s51 + $0x3f4] sm:%s43] %v558
      %v560 = vld [vmem:[%s50 + $0x3f4] sm:%s43]
      %561 = vst [vmem:[%s51 + $0x3f8] sm:%s43] %v560
      %v562 = vld [vmem:[%s50 + $0x400] sm:%s43]
      %563 = vst [vmem:[%s51 + $0x3fc] sm:%s43] %v562
      %v564 = vld [vmem:[%s50 + $0x3f8] sm:%s43]
      %565 = vst [vmem:[%s51 + $0x400] sm:%s43] %v564
      %v566 = vld [vmem:[%s50 + $0x404] sm:%s43]
      %567 = vst [vmem:[%s51 + $0x404] sm:%s43] %v566
      %v568 = vld [vmem:[%s50 + $0x408] sm:%s43]
      %569 = vst [vmem:[%s51 + $0x408] sm:%s43] %v568
      %v570 = vld [vmem:[%s50 + $0x414] sm:%s43]
      %571 = vst [vmem:[%s51 + $0x40c] sm:%s43] %v570
      %v572 = vld [vmem:[%s50 + $0x40c] sm:%s43]
      %573 = vst [vmem:[%s51 + $0x410] sm:%s43] %v572
      %v574 = vld [vmem:[%s50 + $0x418] sm:%s43]
      %575 = vst [vmem:[%s51 + $0x414] sm:%s43] %v574
      %v576 = vld [vmem:[%s50 + $0x410] sm:%s43]
      %577 = vst [vmem:[%s51 + $0x418] sm:%s43] %v576
      %v578 = vld [vmem:[%s50 + $0x41c] sm:%s43]
      %579 = vst [vmem:[%s51 + $0x41c] sm:%s43] %v578
      %v580 = vld [vmem:[%s50 + $0x420] sm:%s43]
      %581 = vst [vmem:[%s51 + $0x420] sm:%s43] %v580
      %v582 = vld [vmem:[%s50 + $0x42c] sm:%s43]
      %583 = vst [vmem:[%s51 + $0x424] sm:%s43] %v582
      %v584 = vld [vmem:[%s50 + $0x424] sm:%s43]
      %585 = vst [vmem:[%s51 + $0x428] sm:%s43] %v584
      %v586 = vld [vmem:[%s50 + $0x430] sm:%s43]
      %587 = vst [vmem:[%s51 + $0x42c] sm:%s43] %v586
      %v588 = vld [vmem:[%s50 + $0x428] sm:%s43]
      %589 = vst [vmem:[%s51 + $0x430] sm:%s43] %v588
      %v590 = vld [vmem:[%s50 + $0x434] sm:%s43]
      %591 = vst [vmem:[%s51 + $0x434] sm:%s43] %v590
      %v592 = vld [vmem:[%s50 + $0x438] sm:%s43]
      %593 = vst [vmem:[%s51 + $0x438] sm:%s43] %v592
      %v594 = vld [vmem:[%s50 + $0x444] sm:%s43]
      %595 = vst [vmem:[%s51 + $0x43c] sm:%s43] %v594
      %v596 = vld [vmem:[%s50 + $0x43c] sm:%s43]
      %597 = vst [vmem:[%s51 + $0x440] sm:%s43] %v596
      %v598 = vld [vmem:[%s50 + $0x448] sm:%s43]
      %599 = vst [vmem:[%s51 + $0x444] sm:%s43] %v598
      %v600 = vld [vmem:[%s50 + $0x440] sm:%s43]
      %601 = vst [vmem:[%s51 + $0x448] sm:%s43] %v600
      %v602 = vld [vmem:[%s50 + $0x44c] sm:%s43]
      %603 = vst [vmem:[%s51 + $0x44c] sm:%s43] %v602
      %v604 = vld [vmem:[%s50 + $0x450] sm:%s43]
      %605 = vst [vmem:[%s51 + $0x450] sm:%s43] %v604
      %v606 = vld [vmem:[%s50 + $0x45c] sm:%s43]
      %607 = vst [vmem:[%s51 + $0x454] sm:%s43] %v606
      %v608 = vld [vmem:[%s50 + $0x454] sm:%s43]
      %609 = vst [vmem:[%s51 + $0x458] sm:%s43] %v608
      %v610 = vld [vmem:[%s50 + $0x460] sm:%s43]
      %611 = vst [vmem:[%s51 + $0x45c] sm:%s43] %v610
      %v612 = vld [vmem:[%s50 + $0x458] sm:%s43]
      %613 = vst [vmem:[%s51 + $0x460] sm:%s43] %v612
      %v614 = vld [vmem:[%s50 + $0x464] sm:%s43]
      %615 = vst [vmem:[%s51 + $0x464] sm:%s43] %v614
      %v616 = vld [vmem:[%s50 + $0x468] sm:%s43]
      %617 = vst [vmem:[%s51 + $0x468] sm:%s43] %v616
      %v618 = vld [vmem:[%s50 + $0x474] sm:%s43]
      %619 = vst [vmem:[%s51 + $0x46c] sm:%s43] %v618
      %v620 = vld [vmem:[%s50 + $0x46c] sm:%s43]
      %621 = vst [vmem:[%s51 + $0x470] sm:%s43] %v620
      %v622 = vld [vmem:[%s50 + $0x478] sm:%s43]
      %623 = vst [vmem:[%s51 + $0x474] sm:%s43] %v622
      %v624 = vld [vmem:[%s50 + $0x470] sm:%s43]
      %625 = vst [vmem:[%s51 + $0x478] sm:%s43] %v624
      %v626 = vld [vmem:[%s50 + $0x47c] sm:%s43]
      %627 = vst [vmem:[%s51 + $0x47c] sm:%s43] %v626
      %v628 = vld [vmem:[%s50 + $0x480] sm:%s43]
      %629 = vst [vmem:[%s51 + $0x480] sm:%s43] %v628
      %v630 = vld [vmem:[%s50 + $0x48c] sm:%s43]
      %631 = vst [vmem:[%s51 + $0x484] sm:%s43] %v630
      %v632 = vld [vmem:[%s50 + $0x484] sm:%s43]
      %633 = vst [vmem:[%s51 + $0x488] sm:%s43] %v632
      %v634 = vld [vmem:[%s50 + $0x490] sm:%s43]
      %635 = vst [vmem:[%s51 + $0x48c] sm:%s43] %v634
      %v636 = vld [vmem:[%s50 + $0x488] sm:%s43]
      %637 = vst [vmem:[%s51 + $0x490] sm:%s43] %v636
      %v638 = vld [vmem:[%s50 + $0x494] sm:%s43]
      %639 = vst [vmem:[%s51 + $0x494] sm:%s43] %v638
      %v640 = vld [vmem:[%s50 + $0x498] sm:%s43]
      %641 = vst [vmem:[%s51 + $0x498] sm:%s43] %v640
      %v642 = vld [vmem:[%s50 + $0x4a4] sm:%s43]
      %643 = vst [vmem:[%s51 + $0x49c] sm:%s43] %v642
      %v644 = vld [vmem:[%s50 + $0x49c] sm:%s43]
      %645 = vst [vmem:[%s51 + $0x4a0] sm:%s43] %v644
      %v646 = vld [vmem:[%s50 + $0x4a8] sm:%s43]
      %647 = vst [vmem:[%s51 + $0x4a4] sm:%s43] %v646
      %v648 = vld [vmem:[%s50 + $0x4a0] sm:%s43]
      %649 = vst [vmem:[%s51 + $0x4a8] sm:%s43] %v648
      %v650 = vld [vmem:[%s50 + $0x4ac] sm:%s43]
      %651 = vst [vmem:[%s51 + $0x4ac] sm:%s43] %v650
      %v652 = vld [vmem:[%s50 + $0x4b0] sm:%s43]
      %653 = vst [vmem:[%s51 + $0x4b0] sm:%s43] %v652
      %v654 = vld [vmem:[%s50 + $0x4bc] sm:%s43]
      %655 = vst [vmem:[%s51 + $0x4b4] sm:%s43] %v654
      %v656 = vld [vmem:[%s50 + $0x4b4] sm:%s43]
      %657 = vst [vmem:[%s51 + $0x4b8] sm:%s43] %v656
      %v658 = vld [vmem:[%s50 + $0x4c0] sm:%s43]
      %659 = vst [vmem:[%s51 + $0x4bc] sm:%s43] %v658
      %v660 = vld [vmem:[%s50 + $0x4b8] sm:%s43]
      %661 = vst [vmem:[%s51 + $0x4c0] sm:%s43] %v660
      %v662 = vld [vmem:[%s50 + $0x4c4] sm:%s43]
      %663 = vst [vmem:[%s51 + $0x4c4] sm:%s43] %v662
      %v664 = vld [vmem:[%s50 + $0x4c8] sm:%s43]
      %665 = vst [vmem:[%s51 + $0x4c8] sm:%s43] %v664
      %v666 = vld [vmem:[%s50 + $0x4d4] sm:%s43]
      %667 = vst [vmem:[%s51 + $0x4cc] sm:%s43] %v666
      %v668 = vld [vmem:[%s50 + $0x4cc] sm:%s43]
      %669 = vst [vmem:[%s51 + $0x4d0] sm:%s43] %v668
      %v670 = vld [vmem:[%s50 + $0x4d8] sm:%s43]
      %671 = vst [vmem:[%s51 + $0x4d4] sm:%s43] %v670
      %v672 = vld [vmem:[%s50 + $0x4d0] sm:%s43]
      %673 = vst [vmem:[%s51 + $0x4d8] sm:%s43] %v672
      %v674 = vld [vmem:[%s50 + $0x4dc] sm:%s43]
      %675 = vst [vmem:[%s51 + $0x4dc] sm:%s43] %v674
      %v676 = vld [vmem:[%s50 + $0x4e0] sm:%s43]
      %677 = vst [vmem:[%s51 + $0x4e0] sm:%s43] %v676
      %v678 = vld [vmem:[%s50 + $0x4ec] sm:%s43]
      %679 = vst [vmem:[%s51 + $0x4e4] sm:%s43] %v678
      %v680 = vld [vmem:[%s50 + $0x4e4] sm:%s43]
      %681 = vst [vmem:[%s51 + $0x4e8] sm:%s43] %v680
      %v682 = vld [vmem:[%s50 + $0x4f0] sm:%s43]
      %683 = vst [vmem:[%s51 + $0x4ec] sm:%s43] %v682
      %v684 = vld [vmem:[%s50 + $0x4e8] sm:%s43]
      %685 = vst [vmem:[%s51 + $0x4f0] sm:%s43] %v684
      %v686 = vld [vmem:[%s50 + $0x4f4] sm:%s43]
      %687 = vst [vmem:[%s51 + $0x4f4] sm:%s43] %v686
      %v688 = vld [vmem:[%s50 + $0x4f8] sm:%s43]
      %689 = vst [vmem:[%s51 + $0x4f8] sm:%s43] %v688
      %v690 = vld [vmem:[%s50 + $0x504] sm:%s43]
      %691 = vst [vmem:[%s51 + $0x4fc] sm:%s43] %v690
      %v692 = vld [vmem:[%s50 + $0x4fc] sm:%s43]
      %693 = vst [vmem:[%s51 + $0x500] sm:%s43] %v692
      %v694 = vld [vmem:[%s50 + $0x508] sm:%s43]
      %695 = vst [vmem:[%s51 + $0x504] sm:%s43] %v694
      %v696 = vld [vmem:[%s50 + $0x500] sm:%s43]
      %697 = vst [vmem:[%s51 + $0x508] sm:%s43] %v696
      %v698 = vld [vmem:[%s50 + $0x50c] sm:%s43]
      %699 = vst [vmem:[%s51 + $0x50c] sm:%s43] %v698
      %v700 = vld [vmem:[%s50 + $0x510] sm:%s43]
      %701 = vst [vmem:[%s51 + $0x510] sm:%s43] %v700
      %v702 = vld [vmem:[%s50 + $0x51c] sm:%s43]
      %703 = vst [vmem:[%s51 + $0x514] sm:%s43] %v702
      %v704 = vld [vmem:[%s50 + $0x514] sm:%s43]
      %705 = vst [vmem:[%s51 + $0x518] sm:%s43] %v704
      %v706 = vld [vmem:[%s50 + $0x520] sm:%s43]
      %707 = vst [vmem:[%s51 + $0x51c] sm:%s43] %v706
      %v708 = vld [vmem:[%s50 + $0x518] sm:%s43]
      %709 = vst [vmem:[%s51 + $0x520] sm:%s43] %v708
      %v710 = vld [vmem:[%s50 + $0x524] sm:%s43]
      %711 = vst [vmem:[%s51 + $0x524] sm:%s43] %v710
      %v712 = vld [vmem:[%s50 + $0x528] sm:%s43]
      %713 = vst [vmem:[%s51 + $0x528] sm:%s43] %v712
      %v714 = vld [vmem:[%s50 + $0x534] sm:%s43]
      %715 = vst [vmem:[%s51 + $0x52c] sm:%s43] %v714
      %v716 = vld [vmem:[%s50 + $0x52c] sm:%s43]
      %717 = vst [vmem:[%s51 + $0x530] sm:%s43] %v716
      %v718 = vld [vmem:[%s50 + $0x538] sm:%s43]
      %719 = vst [vmem:[%s51 + $0x534] sm:%s43] %v718
      %v720 = vld [vmem:[%s50 + $0x530] sm:%s43]
      %721 = vst [vmem:[%s51 + $0x538] sm:%s43] %v720
      %v722 = vld [vmem:[%s50 + $0x53c] sm:%s43]
      %723 = vst [vmem:[%s51 + $0x53c] sm:%s43] %v722
      %v724 = vld [vmem:[%s50 + $0x540] sm:%s43]
      %725 = vst [vmem:[%s51 + $0x540] sm:%s43] %v724
      %v726 = vld [vmem:[%s50 + $0x54c] sm:%s43]
      %727 = vst [vmem:[%s51 + $0x544] sm:%s43] %v726
      %v728 = vld [vmem:[%s50 + $0x544] sm:%s43]
      %729 = vst [vmem:[%s51 + $0x548] sm:%s43] %v728
      %v730 = vld [vmem:[%s50 + $0x550] sm:%s43]
      %731 = vst [vmem:[%s51 + $0x54c] sm:%s43] %v730
      %v732 = vld [vmem:[%s50 + $0x548] sm:%s43]
      %733 = vst [vmem:[%s51 + $0x550] sm:%s43] %v732
      %v734 = vld [vmem:[%s50 + $0x554] sm:%s43]
      %735 = vst [vmem:[%s51 + $0x554] sm:%s43] %v734
      %v736 = vld [vmem:[%s50 + $0x558] sm:%s43]
      %737 = vst [vmem:[%s51 + $0x558] sm:%s43] %v736
      %v738 = vld [vmem:[%s50 + $0x564] sm:%s43]
      %739 = vst [vmem:[%s51 + $0x55c] sm:%s43] %v738
      %v740 = vld [vmem:[%s50 + $0x55c] sm:%s43]
      %741 = vst [vmem:[%s51 + $0x560] sm:%s43] %v740
      %v742 = vld [vmem:[%s50 + $0x568] sm:%s43]
      %743 = vst [vmem:[%s51 + $0x564] sm:%s43] %v742
      %v744 = vld [vmem:[%s50 + $0x560] sm:%s43]
      %745 = vst [vmem:[%s51 + $0x568] sm:%s43] %v744
      %v746 = vld [vmem:[%s50 + $0x56c] sm:%s43]
      %747 = vst [vmem:[%s51 + $0x56c] sm:%s43] %v746
      %v748 = vld [vmem:[%s50 + $0x570] sm:%s43]
      %749 = vst [vmem:[%s51 + $0x570] sm:%s43] %v748
      %v750 = vld [vmem:[%s50 + $0x57c] sm:%s43]
      %751 = vst [vmem:[%s51 + $0x574] sm:%s43] %v750
      %v752 = vld [vmem:[%s50 + $0x574] sm:%s43]
      %753 = vst [vmem:[%s51 + $0x578] sm:%s43] %v752
      %v754 = vld [vmem:[%s50 + $0x580] sm:%s43]
      %755 = vst [vmem:[%s51 + $0x57c] sm:%s43] %v754
      %v756 = vld [vmem:[%s50 + $0x578] sm:%s43]
      %757 = vst [vmem:[%s51 + $0x580] sm:%s43] %v756
      %v758 = vld [vmem:[%s50 + $0x584] sm:%s43]
      %759 = vst [vmem:[%s51 + $0x584] sm:%s43] %v758
      %v760 = vld [vmem:[%s50 + $0x588] sm:%s43]
      %761 = vst [vmem:[%s51 + $0x588] sm:%s43] %v760
      %v762 = vld [vmem:[%s50 + $0x594] sm:%s43]
      %763 = vst [vmem:[%s51 + $0x58c] sm:%s43] %v762
      %v764 = vld [vmem:[%s50 + $0x58c] sm:%s43]
      %765 = vst [vmem:[%s51 + $0x590] sm:%s43] %v764
      %v766 = vld [vmem:[%s50 + $0x598] sm:%s43]
      %767 = vst [vmem:[%s51 + $0x594] sm:%s43] %v766
      %v768 = vld [vmem:[%s50 + $0x590] sm:%s43]
      %769 = vst [vmem:[%s51 + $0x598] sm:%s43] %v768
      %v770 = vld [vmem:[%s50 + $0x59c] sm:%s43]
      %771 = vst [vmem:[%s51 + $0x59c] sm:%s43] %v770
      %v772 = vld [vmem:[%s50 + $0x5a0] sm:%s43]
      %773 = vst [vmem:[%s51 + $0x5a0] sm:%s43] %v772
      %v774 = vld [vmem:[%s50 + $0x5ac] sm:%s43]
      %775 = vst [vmem:[%s51 + $0x5a4] sm:%s43] %v774
      %v776 = vld [vmem:[%s50 + $0x5a4] sm:%s43]
      %777 = vst [vmem:[%s51 + $0x5a8] sm:%s43] %v776
      %v778 = vld [vmem:[%s50 + $0x5b0] sm:%s43]
      %779 = vst [vmem:[%s51 + $0x5ac] sm:%s43] %v778
      %v780 = vld [vmem:[%s50 + $0x5a8] sm:%s43]
      %781 = vst [vmem:[%s51 + $0x5b0] sm:%s43] %v780
      %v782 = vld [vmem:[%s50 + $0x5b4] sm:%s43]
      %783 = vst [vmem:[%s51 + $0x5b4] sm:%s43] %v782
      %v784 = vld [vmem:[%s50 + $0x5b8] sm:%s43]
      %785 = vst [vmem:[%s51 + $0x5b8] sm:%s43] %v784
      %v786 = vld [vmem:[%s50 + $0x5c4] sm:%s43]
      %787 = vst [vmem:[%s51 + $0x5bc] sm:%s43] %v786
      %v788 = vld [vmem:[%s50 + $0x5bc] sm:%s43]
      %789 = vst [vmem:[%s51 + $0x5c0] sm:%s43] %v788
      %v790 = vld [vmem:[%s50 + $0x5c8] sm:%s43]
      %791 = vst [vmem:[%s51 + $0x5c4] sm:%s43] %v790
      %v792 = vld [vmem:[%s50 + $0x5c0] sm:%s43]
      %793 = vst [vmem:[%s51 + $0x5c8] sm:%s43] %v792
      %v794 = vld [vmem:[%s50 + $0x5cc] sm:%s43]
      %795 = vst [vmem:[%s51 + $0x5cc] sm:%s43] %v794
      %v796 = vld [vmem:[%s50 + $0x5d0] sm:%s43]
      %797 = vst [vmem:[%s51 + $0x5d0] sm:%s43] %v796
      %v798 = vld [vmem:[%s50 + $0x5dc] sm:%s43]
      %799 = vst [vmem:[%s51 + $0x5d4] sm:%s43] %v798
      %v800 = vld [vmem:[%s50 + $0x5d4] sm:%s43]
      %801 = vst [vmem:[%s51 + $0x5d8] sm:%s43] %v800
      %v802 = vld [vmem:[%s50 + $0x5e0] sm:%s43]
      %803 = vst [vmem:[%s51 + $0x5dc] sm:%s43] %v802
      %v804 = vld [vmem:[%s50 + $0x5d8] sm:%s43]
      %805 = vst [vmem:[%s51 + $0x5e0] sm:%s43] %v804
      %v806 = vld [vmem:[%s50 + $0x5e4] sm:%s43]
      %807 = vst [vmem:[%s51 + $0x5e4] sm:%s43] %v806
      %v808 = vld [vmem:[%s50 + $0x5e8] sm:%s43]
      %809 = vst [vmem:[%s51 + $0x5e8] sm:%s43] %v808
      %v810 = vld [vmem:[%s50 + $0x5f4] sm:%s43]
      %811 = vst [vmem:[%s51 + $0x5ec] sm:%s43] %v810
      %v812 = vld [vmem:[%s50 + $0x5ec] sm:%s43]
      %813 = vst [vmem:[%s51 + $0x5f0] sm:%s43] %v812
      %v814 = vld [vmem:[%s50 + $0x5f8] sm:%s43]
      %815 = vst [vmem:[%s51 + $0x5f4] sm:%s43] %v814
      %v816 = vld [vmem:[%s50 + $0x5f0] sm:%s43]
      %817 = vst [vmem:[%s51 + $0x5f8] sm:%s43] %v816
      %v818 = vld [vmem:[%s50 + $0x5fc] sm:%s43]
      %819 = vst [vmem:[%s51 + $0x5fc] sm:%s43] %v818
      %v820 = vld [vmem:[%s50 + $0x600] sm:%s43]
      %821 = vst [vmem:[%s51 + $0x600] sm:%s43] %v820
      %v822 = vld [vmem:[%s50 + $0x60c] sm:%s43]
      %823 = vst [vmem:[%s51 + $0x604] sm:%s43] %v822
      %v824 = vld [vmem:[%s50 + $0x604] sm:%s43]
      %825 = vst [vmem:[%s51 + $0x608] sm:%s43] %v824
      %v826 = vld [vmem:[%s50 + $0x610] sm:%s43]
      %827 = vst [vmem:[%s51 + $0x60c] sm:%s43] %v826
      %v828 = vld [vmem:[%s50 + $0x608] sm:%s43]
      %829 = vst [vmem:[%s51 + $0x610] sm:%s43] %v828
      %v830 = vld [vmem:[%s50 + $0x614] sm:%s43]
      %831 = vst [vmem:[%s51 + $0x614] sm:%s43] %v830
      %v832 = vld [vmem:[%s50 + $0x618] sm:%s43]
      %833 = vst [vmem:[%s51 + $0x618] sm:%s43] %v832
      %v834 = vld [vmem:[%s50 + $0x624] sm:%s43]
      %835 = vst [vmem:[%s51 + $0x61c] sm:%s43] %v834
      %v836 = vld [vmem:[%s50 + $0x61c] sm:%s43]
      %837 = vst [vmem:[%s51 + $0x620] sm:%s43] %v836
      %v838 = vld [vmem:[%s50 + $0x628] sm:%s43]
      %839 = vst [vmem:[%s51 + $0x624] sm:%s43] %v838
      %v840 = vld [vmem:[%s50 + $0x620] sm:%s43]
      %841 = vst [vmem:[%s51 + $0x628] sm:%s43] %v840
      %v842 = vld [vmem:[%s50 + $0x62c] sm:%s43]
      %843 = vst [vmem:[%s51 + $0x62c] sm:%s43] %v842
      %v844 = vld [vmem:[%s50 + $0x630] sm:%s43]
      %845 = vst [vmem:[%s51 + $0x630] sm:%s43] %v844
      %v846 = vld [vmem:[%s50 + $0x63c] sm:%s43]
      %847 = vst [vmem:[%s51 + $0x634] sm:%s43] %v846
      %v848 = vld [vmem:[%s50 + $0x634] sm:%s43]
      %849 = vst [vmem:[%s51 + $0x638] sm:%s43] %v848
      %v850 = vld [vmem:[%s50 + $0x640] sm:%s43]
      %851 = vst [vmem:[%s51 + $0x63c] sm:%s43] %v850
      %v852 = vld [vmem:[%s50 + $0x638] sm:%s43]
      %853 = vst [vmem:[%s51 + $0x640] sm:%s43] %v852
      %v854 = vld [vmem:[%s50 + $0x644] sm:%s43]
      %855 = vst [vmem:[%s51 + $0x644] sm:%s43] %v854
      %v856 = vld [vmem:[%s50 + $0x648] sm:%s43]
      %857 = vst [vmem:[%s51 + $0x648] sm:%s43] %v856
      %v858 = vld [vmem:[%s50 + $0x654] sm:%s43]
      %859 = vst [vmem:[%s51 + $0x64c] sm:%s43] %v858
      %v860 = vld [vmem:[%s50 + $0x64c] sm:%s43]
      %861 = vst [vmem:[%s51 + $0x650] sm:%s43] %v860
      %v862 = vld [vmem:[%s50 + $0x658] sm:%s43]
      %863 = vst [vmem:[%s51 + $0x654] sm:%s43] %v862
      %v864 = vld [vmem:[%s50 + $0x650] sm:%s43]
      %865 = vst [vmem:[%s51 + $0x658] sm:%s43] %v864
      %v866 = vld [vmem:[%s50 + $0x65c] sm:%s43]
      %867 = vst [vmem:[%s51 + $0x65c] sm:%s43] %v866
      %v868 = vld [vmem:[%s50 + $0x660] sm:%s43]
      %869 = vst [vmem:[%s51 + $0x660] sm:%s43] %v868
      %v870 = vld [vmem:[%s50 + $0x66c] sm:%s43]
      %871 = vst [vmem:[%s51 + $0x664] sm:%s43] %v870
      %v872 = vld [vmem:[%s50 + $0x664] sm:%s43]
      %873 = vst [vmem:[%s51 + $0x668] sm:%s43] %v872
      %v874 = vld [vmem:[%s50 + $0x670] sm:%s43]
      %875 = vst [vmem:[%s51 + $0x66c] sm:%s43] %v874
      %v876 = vld [vmem:[%s50 + $0x668] sm:%s43]
      %877 = vst [vmem:[%s51 + $0x670] sm:%s43] %v876
      %v878 = vld [vmem:[%s50 + $0x674] sm:%s43]
      %879 = vst [vmem:[%s51 + $0x674] sm:%s43] %v878
      %v880 = vld [vmem:[%s50 + $0x678] sm:%s43]
      %881 = vst [vmem:[%s51 + $0x678] sm:%s43] %v880
      %v882 = vld [vmem:[%s50 + $0x684] sm:%s43]
      %883 = vst [vmem:[%s51 + $0x67c] sm:%s43] %v882
      %v884 = vld [vmem:[%s50 + $0x67c] sm:%s43]
      %885 = vst [vmem:[%s51 + $0x680] sm:%s43] %v884
      %v886 = vld [vmem:[%s50 + $0x688] sm:%s43]
      %887 = vst [vmem:[%s51 + $0x684] sm:%s43] %v886
      %v888 = vld [vmem:[%s50 + $0x680] sm:%s43]
      %889 = vst [vmem:[%s51 + $0x688] sm:%s43] %v888
      %v890 = vld [vmem:[%s50 + $0x68c] sm:%s43]
      %891 = vst [vmem:[%s51 + $0x68c] sm:%s43] %v890
      %v892 = vld [vmem:[%s50 + $0x690] sm:%s43]
      %893 = vst [vmem:[%s51 + $0x690] sm:%s43] %v892
      %v894 = vld [vmem:[%s50 + $0x69c] sm:%s43]
      %895 = vst [vmem:[%s51 + $0x694] sm:%s43] %v894
      %v896 = vld [vmem:[%s50 + $0x694] sm:%s43]
      %897 = vst [vmem:[%s51 + $0x698] sm:%s43] %v896
      %v898 = vld [vmem:[%s50 + $0x6a0] sm:%s43]
      %899 = vst [vmem:[%s51 + $0x69c] sm:%s43] %v898
      %v900 = vld [vmem:[%s50 + $0x698] sm:%s43]
      %901 = vst [vmem:[%s51 + $0x6a0] sm:%s43] %v900
      %v902 = vld [vmem:[%s50 + $0x6a4] sm:%s43]
      %903 = vst [vmem:[%s51 + $0x6a4] sm:%s43] %v902
      %v904 = vld [vmem:[%s50 + $0x6a8] sm:%s43]
      %905 = vst [vmem:[%s51 + $0x6a8] sm:%s43] %v904
      %v906 = vld [vmem:[%s50 + $0x6b4] sm:%s43]
      %907 = vst [vmem:[%s51 + $0x6ac] sm:%s43] %v906
      %v908 = vld [vmem:[%s50 + $0x6ac] sm:%s43]
      %909 = vst [vmem:[%s51 + $0x6b0] sm:%s43] %v908
      %v910 = vld [vmem:[%s50 + $0x6b8] sm:%s43]
      %911 = vst [vmem:[%s51 + $0x6b4] sm:%s43] %v910
      %v912 = vld [vmem:[%s50 + $0x6b0] sm:%s43]
      %913 = vst [vmem:[%s51 + $0x6b8] sm:%s43] %v912
      %v914 = vld [vmem:[%s50 + $0x6bc] sm:%s43]
      %915 = vst [vmem:[%s51 + $0x6bc] sm:%s43] %v914
      %v916 = vld [vmem:[%s50 + $0x6c0] sm:%s43]
      %917 = vst [vmem:[%s51 + $0x6c0] sm:%s43] %v916
      %v918 = vld [vmem:[%s50 + $0x6cc] sm:%s43]
      %919 = vst [vmem:[%s51 + $0x6c4] sm:%s43] %v918
      %v920 = vld [vmem:[%s50 + $0x6c4] sm:%s43]
      %921 = vst [vmem:[%s51 + $0x6c8] sm:%s43] %v920
      %v922 = vld [vmem:[%s50 + $0x6d0] sm:%s43]
      %923 = vst [vmem:[%s51 + $0x6cc] sm:%s43] %v922
      %v924 = vld [vmem:[%s50 + $0x6c8] sm:%s43]
      %925 = vst [vmem:[%s51 + $0x6d0] sm:%s43] %v924
      %v926 = vld [vmem:[%s50 + $0x6d4] sm:%s43]
      %927 = vst [vmem:[%s51 + $0x6d4] sm:%s43] %v926
      %v928 = vld [vmem:[%s50 + $0x6d8] sm:%s43]
      %929 = vst [vmem:[%s51 + $0x6d8] sm:%s43] %v928
      %v930 = vld [vmem:[%s50 + $0x6e4] sm:%s43]
      %931 = vst [vmem:[%s51 + $0x6dc] sm:%s43] %v930
      %v932 = vld [vmem:[%s50 + $0x6dc] sm:%s43]
      %933 = vst [vmem:[%s51 + $0x6e0] sm:%s43] %v932
      %v934 = vld [vmem:[%s50 + $0x6e8] sm:%s43]
      %935 = vst [vmem:[%s51 + $0x6e4] sm:%s43] %v934
      %v936 = vld [vmem:[%s50 + $0x6e0] sm:%s43]
      %937 = vst [vmem:[%s51 + $0x6e8] sm:%s43] %v936
      %v938 = vld [vmem:[%s50 + $0x6ec] sm:%s43]
      %939 = vst [vmem:[%s51 + $0x6ec] sm:%s43] %v938
      %v940 = vld [vmem:[%s50 + $0x6f0] sm:%s43]
      %941 = vst [vmem:[%s51 + $0x6f0] sm:%s43] %v940
      %v942 = vld [vmem:[%s50 + $0x6fc] sm:%s43]
      %943 = vst [vmem:[%s51 + $0x6f4] sm:%s43] %v942
      %v944 = vld [vmem:[%s50 + $0x6f4] sm:%s43]
      %945 = vst [vmem:[%s51 + $0x6f8] sm:%s43] %v944
      %v946 = vld [vmem:[%s50 + $0x700] sm:%s43]
      %947 = vst [vmem:[%s51 + $0x6fc] sm:%s43] %v946
      %v948 = vld [vmem:[%s50 + $0x6f8] sm:%s43]
      %949 = vst [vmem:[%s51 + $0x700] sm:%s43] %v948
      %v950 = vld [vmem:[%s50 + $0x704] sm:%s43]
      %951 = vst [vmem:[%s51 + $0x704] sm:%s43] %v950
      %v952 = vld [vmem:[%s50 + $0x708] sm:%s43]
      %953 = vst [vmem:[%s51 + $0x708] sm:%s43] %v952
      %v954 = vld [vmem:[%s50 + $0x714] sm:%s43]
      %955 = vst [vmem:[%s51 + $0x70c] sm:%s43] %v954
      %v956 = vld [vmem:[%s50 + $0x70c] sm:%s43]
      %957 = vst [vmem:[%s51 + $0x710] sm:%s43] %v956
      %v958 = vld [vmem:[%s50 + $0x718] sm:%s43]
      %959 = vst [vmem:[%s51 + $0x714] sm:%s43] %v958
      %v960 = vld [vmem:[%s50 + $0x710] sm:%s43]
      %961 = vst [vmem:[%s51 + $0x718] sm:%s43] %v960
      %v962 = vld [vmem:[%s50 + $0x71c] sm:%s43]
      %963 = vst [vmem:[%s51 + $0x71c] sm:%s43] %v962
      %v964 = vld [vmem:[%s50 + $0x720] sm:%s43]
      %965 = vst [vmem:[%s51 + $0x720] sm:%s43] %v964
      %v966 = vld [vmem:[%s50 + $0x72c] sm:%s43]
      %967 = vst [vmem:[%s51 + $0x724] sm:%s43] %v966
      %v968 = vld [vmem:[%s50 + $0x724] sm:%s43]
      %969 = vst [vmem:[%s51 + $0x728] sm:%s43] %v968
      %v970 = vld [vmem:[%s50 + $0x730] sm:%s43]
      %971 = vst [vmem:[%s51 + $0x72c] sm:%s43] %v970
      %v972 = vld [vmem:[%s50 + $0x728] sm:%s43]
      %973 = vst [vmem:[%s51 + $0x730] sm:%s43] %v972
      %v974 = vld [vmem:[%s50 + $0x734] sm:%s43]
      %975 = vst [vmem:[%s51 + $0x734] sm:%s43] %v974
      %v976 = vld [vmem:[%s50 + $0x738] sm:%s43]
      %977 = vst [vmem:[%s51 + $0x738] sm:%s43] %v976
      %v978 = vld [vmem:[%s50 + $0x744] sm:%s43]
      %979 = vst [vmem:[%s51 + $0x73c] sm:%s43] %v978
      %v980 = vld [vmem:[%s50 + $0x73c] sm:%s43]
      %981 = vst [vmem:[%s51 + $0x740] sm:%s43] %v980
      %v982 = vld [vmem:[%s50 + $0x748] sm:%s43]
      %983 = vst [vmem:[%s51 + $0x744] sm:%s43] %v982
      %v984 = vld [vmem:[%s50 + $0x740] sm:%s43]
      %985 = vst [vmem:[%s51 + $0x748] sm:%s43] %v984
      %v986 = vld [vmem:[%s50 + $0x74c] sm:%s43]
      %987 = vst [vmem:[%s51 + $0x74c] sm:%s43] %v986
      %v988 = vld [vmem:[%s50 + $0x750] sm:%s43]
      %989 = vst [vmem:[%s51 + $0x750] sm:%s43] %v988
      %v990 = vld [vmem:[%s50 + $0x75c] sm:%s43]
      %991 = vst [vmem:[%s51 + $0x754] sm:%s43] %v990
      %v992 = vld [vmem:[%s50 + $0x754] sm:%s43]
      %993 = vst [vmem:[%s51 + $0x758] sm:%s43] %v992
      %v994 = vld [vmem:[%s50 + $0x760] sm:%s43]
      %995 = vst [vmem:[%s51 + $0x75c] sm:%s43] %v994
      %v996 = vld [vmem:[%s50 + $0x758] sm:%s43]
      %997 = vst [vmem:[%s51 + $0x760] sm:%s43] %v996
      %v998 = vld [vmem:[%s50 + $0x764] sm:%s43]
      %999 = vst [vmem:[%s51 + $0x764] sm:%s43] %v998
      %v1000 = vld [vmem:[%s50 + $0x768] sm:%s43]
      %1001 = vst [vmem:[%s51 + $0x768] sm:%s43] %v1000
      %v1002 = vld [vmem:[%s50 + $0x774] sm:%s43]
      %1003 = vst [vmem:[%s51 + $0x76c] sm:%s43] %v1002
      %v1004 = vld [vmem:[%s50 + $0x76c] sm:%s43]
      %1005 = vst [vmem:[%s51 + $0x770] sm:%s43] %v1004
      %v1006 = vld [vmem:[%s50 + $0x778] sm:%s43]
      %1007 = vst [vmem:[%s51 + $0x774] sm:%s43] %v1006
      %v1008 = vld [vmem:[%s50 + $0x770] sm:%s43]
      %1009 = vst [vmem:[%s51 + $0x778] sm:%s43] %v1008
      %v1010 = vld [vmem:[%s50 + $0x77c] sm:%s43]
      %1011 = vst [vmem:[%s51 + $0x77c] sm:%s43] %v1010
    $region50: #{crnn_forward.1} parent=44 // loop_footer
      %s49 = sadd.s32 1, %s45
    $region51: #{crnn_forward.1} parent=44 // loop_footer_branch
      %44 = sbr.rel target = $region47
    $region52: #{crnn_forward.1} parent=44 // loop_exit
      _
  $region45: #{crnn_forward.1} parent=0 // pred_fallthru
    _
  // Predicated region
  $region71: #{crnn_forward.1} parent=0 // pred_check
    _
  $region72: #{crnn_forward.1} parent=0 // pred_check_branch
    %2001 = sbr.rel (0) target = $region74
  $region73: #{crnn_forward.1} parent=0 // pred_region
    %2002 = vsyncadd [#allocation4], 30720
  $region74: #{crnn_forward.1} parent=0 // pred_fallthru
    _
  %s2003 = scalar_lea.sflag [#allocation4], 1
  %p2005 = scmp.lt.u32.totalorder 4, 8
  %p2006 = pneg %p2005
  // Predicated region
  $region75: #{crnn_forward.1} parent=0 // pred_check
    _
  $region76: #{crnn_forward.1} parent=0 // pred_check_branch
    %2008 = sbr.rel (%p2005) target = $region78
  $region77: #{crnn_forward.1} parent=0 // pred_region
    %s2341 = sand.u32 4, 7
    %p2342 = scmp.eq.s32.totalorder %s2341, 0
    %p2343 = pneg %p2342
    // Predicated region
    $region90: #{crnn_forward.1} parent=77 // pred_check
      _
    $region91: #{crnn_forward.1} parent=77 // pred_check_branch
      %2345 = sbr.rel (%p2342) target = $region93
    $region92: #{crnn_forward.1} parent=77 // pred_region
      %s2346 = sand.u32 4, 7
      %s2347 = ssub.s32 4, %s2346
      %s2348 = scalar_lea.vmem %s10, %s2347
      %s2349 = ssub.s32 4, %s2346
      %s2350 = scalar_lea.vmem [#allocation3], %s2349
      loop: start=0, step=1, limit=1
      $region94: #{crnn_forward.1} parent=92 // loop_pre_header
        _
      $region95: #{crnn_forward.1} parent=92 // loop_header
        %s2352 = sphi 0, %s2356
        %p2353 = scmp.ge.s32.totalorder %s2352, 1
        %s2357 = sphi %s10, %s10
        %s2358 = sphi [#allocation3], [#allocation3]
      $region96: #{crnn_forward.1} parent=92 // loop_header_branch
        %2355 = sbr.rel (%p2353) target = $region100
      $region97: #{crnn_forward.1} parent=92 // loop_body
        _
      $region98: #{crnn_forward.1} parent=92 // loop_footer
        %s2356 = sadd.s32 1, %s2352
      $region99: #{crnn_forward.1} parent=92 // loop_footer_branch
        %2351 = sbr.rel target = $region95
      $region100: #{crnn_forward.1} parent=92 // loop_exit
        _
      %s2359 = sshllo.u32 0, %s2346
      loop: start=0, step=1, limit=1
      $region101: #{crnn_forward.1} parent=92 // loop_pre_header
        _
      $region102: #{crnn_forward.1} parent=92 // loop_header
        %s2361 = sphi 0, %s2365
        %p2362 = scmp.ge.s32.totalorder %s2361, 1
        %s2366 = sphi %s2348, %s2348
        %s2367 = sphi %s2350, %s2350
      $region103: #{crnn_forward.1} parent=92 // loop_header_branch
        %2364 = sbr.rel (%p2362) target = $region107
      $region104: #{crnn_forward.1} parent=92 // loop_body
        %v2368 = vld [vmem:[%s2366] sm:%s2359]
        %2369 = vst [vmem:[%s2367] sm:%s2359] %v2368
        %v2370 = vld [vmem:[%s2366 + $0x28] sm:%s2359]
        %2371 = vst [vmem:[%s2367 + $0x4] sm:%s2359] %v2370
        %v2372 = vld [vmem:[%s2366 + $0x4] sm:%s2359]
        %2373 = vst [vmem:[%s2367 + $0x8] sm:%s2359] %v2372
        %v2374 = vld [vmem:[%s2366 + $0x2c] sm:%s2359]
        %2375 = vst [vmem:[%s2367 + $0xc] sm:%s2359] %v2374
        %v2376 = vld [vmem:[%s2366 + $0x8] sm:%s2359]
        %2377 = vst [vmem:[%s2367 + $0x10] sm:%s2359] %v2376
        %v2378 = vld [vmem:[%s2366 + $0x30] sm:%s2359]
        %2379 = vst [vmem:[%s2367 + $0x14] sm:%s2359] %v2378
        %v2380 = vld [vmem:[%s2366 + $0xc] sm:%s2359]
        %2381 = vst [vmem:[%s2367 + $0x18] sm:%s2359] %v2380
        %v2382 = vld [vmem:[%s2366 + $0x34] sm:%s2359]
        %2383 = vst [vmem:[%s2367 + $0x1c] sm:%s2359] %v2382
        %v2384 = vld [vmem:[%s2366 + $0x10] sm:%s2359]
        %2385 = vst [vmem:[%s2367 + $0x20] sm:%s2359] %v2384
        %v2386 = vld [vmem:[%s2366 + $0x38] sm:%s2359]
        %2387 = vst [vmem:[%s2367 + $0x24] sm:%s2359] %v2386
        %v2388 = vld [vmem:[%s2366 + $0x14] sm:%s2359]
        %2389 = vst [vmem:[%s2367 + $0x28] sm:%s2359] %v2388
        %v2390 = vld [vmem:[%s2366 + $0x3c] sm:%s2359]
        %2391 = vst [vmem:[%s2367 + $0x2c] sm:%s2359] %v2390
        %v2392 = vld [vmem:[%s2366 + $0x18] sm:%s2359]
        %2393 = vst [vmem:[%s2367 + $0x30] sm:%s2359] %v2392
        %v2394 = vld [vmem:[%s2366 + $0x40] sm:%s2359]
        %2395 = vst [vmem:[%s2367 + $0x34] sm:%s2359] %v2394
        %v2396 = vld [vmem:[%s2366 + $0x1c] sm:%s2359]
        %2397 = vst [vmem:[%s2367 + $0x38] sm:%s2359] %v2396
        %v2398 = vld [vmem:[%s2366 + $0x44] sm:%s2359]
        %2399 = vst [vmem:[%s2367 + $0x3c] sm:%s2359] %v2398
        %v2400 = vld [vmem:[%s2366 + $0x20] sm:%s2359]
        %2401 = vst [vmem:[%s2367 + $0x40] sm:%s2359] %v2400
        %v2402 = vld [vmem:[%s2366 + $0x48] sm:%s2359]
        %2403 = vst [vmem:[%s2367 + $0x44] sm:%s2359] %v2402
        %v2404 = vld [vmem:[%s2366 + $0x24] sm:%s2359]
        %2405 = vst [vmem:[%s2367 + $0x48] sm:%s2359] %v2404
        %v2406 = vld [vmem:[%s2366 + $0x4c] sm:%s2359]
        %2407 = vst [vmem:[%s2367 + $0x4c] sm:%s2359] %v2406
        %v2408 = vld [vmem:[%s2366 + $0x50] sm:%s2359]
        %2409 = vst [vmem:[%s2367 + $0x50] sm:%s2359] %v2408
        %v2410 = vld [vmem:[%s2366 + $0x78] sm:%s2359]
        %2411 = vst [vmem:[%s2367 + $0x54] sm:%s2359] %v2410
        %v2412 = vld [vmem:[%s2366 + $0x54] sm:%s2359]
        %2413 = vst [vmem:[%s2367 + $0x58] sm:%s2359] %v2412
        %v2414 = vld [vmem:[%s2366 + $0x7c] sm:%s2359]
        %2415 = vst [vmem:[%s2367 + $0x5c] sm:%s2359] %v2414
        %v2416 = vld [vmem:[%s2366 + $0x58] sm:%s2359]
        %2417 = vst [vmem:[%s2367 + $0x60] sm:%s2359] %v2416
        %v2418 = vld [vmem:[%s2366 + $0x80] sm:%s2359]
        %2419 = vst [vmem:[%s2367 + $0x64] sm:%s2359] %v2418
        %v2420 = vld [vmem:[%s2366 + $0x5c] sm:%s2359]
        %2421 = vst [vmem:[%s2367 + $0x68] sm:%s2359] %v2420
        %v2422 = vld [vmem:[%s2366 + $0x84] sm:%s2359]
        %2423 = vst [vmem:[%s2367 + $0x6c] sm:%s2359] %v2422
        %v2424 = vld [vmem:[%s2366 + $0x60] sm:%s2359]
        %2425 = vst [vmem:[%s2367 + $0x70] sm:%s2359] %v2424
        %v2426 = vld [vmem:[%s2366 + $0x88] sm:%s2359]
        %2427 = vst [vmem:[%s2367 + $0x74] sm:%s2359] %v2426
        %v2428 = vld [vmem:[%s2366 + $0x64] sm:%s2359]
        %2429 = vst [vmem:[%s2367 + $0x78] sm:%s2359] %v2428
        %v2430 = vld [vmem:[%s2366 + $0x8c] sm:%s2359]
        %2431 = vst [vmem:[%s2367 + $0x7c] sm:%s2359] %v2430
        %v2432 = vld [vmem:[%s2366 + $0x68] sm:%s2359]
        %2433 = vst [vmem:[%s2367 + $0x80] sm:%s2359] %v2432
        %v2434 = vld [vmem:[%s2366 + $0x90] sm:%s2359]
        %2435 = vst [vmem:[%s2367 + $0x84] sm:%s2359] %v2434
        %v2436 = vld [vmem:[%s2366 + $0x6c] sm:%s2359]
        %2437 = vst [vmem:[%s2367 + $0x88] sm:%s2359] %v2436
        %v2438 = vld [vmem:[%s2366 + $0x94] sm:%s2359]
        %2439 = vst [vmem:[%s2367 + $0x8c] sm:%s2359] %v2438
        %v2440 = vld [vmem:[%s2366 + $0x70] sm:%s2359]
        %2441 = vst [vmem:[%s2367 + $0x90] sm:%s2359] %v2440
        %v2442 = vld [vmem:[%s2366 + $0x98] sm:%s2359]
        %2443 = vst [vmem:[%s2367 + $0x94] sm:%s2359] %v2442
        %v2444 = vld [vmem:[%s2366 + $0x74] sm:%s2359]
        %2445 = vst [vmem:[%s2367 + $0x98] sm:%s2359] %v2444
        %v2446 = vld [vmem:[%s2366 + $0x9c] sm:%s2359]
        %2447 = vst [vmem:[%s2367 + $0x9c] sm:%s2359] %v2446
        %v2448 = vld [vmem:[%s2366 + $0xa0] sm:%s2359]
        %2449 = vst [vmem:[%s2367 + $0xa0] sm:%s2359] %v2448
        %v2450 = vld [vmem:[%s2366 + $0xc8] sm:%s2359]
        %2451 = vst [vmem:[%s2367 + $0xa4] sm:%s2359] %v2450
        %v2452 = vld [vmem:[%s2366 + $0xa4] sm:%s2359]
        %2453 = vst [vmem:[%s2367 + $0xa8] sm:%s2359] %v2452
        %v2454 = vld [vmem:[%s2366 + $0xcc] sm:%s2359]
        %2455 = vst [vmem:[%s2367 + $0xac] sm:%s2359] %v2454
        %v2456 = vld [vmem:[%s2366 + $0xa8] sm:%s2359]
        %2457 = vst [vmem:[%s2367 + $0xb0] sm:%s2359] %v2456
        %v2458 = vld [vmem:[%s2366 + $0xd0] sm:%s2359]
        %2459 = vst [vmem:[%s2367 + $0xb4] sm:%s2359] %v2458
        %v2460 = vld [vmem:[%s2366 + $0xac] sm:%s2359]
        %2461 = vst [vmem:[%s2367 + $0xb8] sm:%s2359] %v2460
        %v2462 = vld [vmem:[%s2366 + $0xd4] sm:%s2359]
        %2463 = vst [vmem:[%s2367 + $0xbc] sm:%s2359] %v2462
        %v2464 = vld [vmem:[%s2366 + $0xb0] sm:%s2359]
        %2465 = vst [vmem:[%s2367 + $0xc0] sm:%s2359] %v2464
        %v2466 = vld [vmem:[%s2366 + $0xd8] sm:%s2359]
        %2467 = vst [vmem:[%s2367 + $0xc4] sm:%s2359] %v2466
        %v2468 = vld [vmem:[%s2366 + $0xb4] sm:%s2359]
        %2469 = vst [vmem:[%s2367 + $0xc8] sm:%s2359] %v2468
        %v2470 = vld [vmem:[%s2366 + $0xdc] sm:%s2359]
        %2471 = vst [vmem:[%s2367 + $0xcc] sm:%s2359] %v2470
        %v2472 = vld [vmem:[%s2366 + $0xb8] sm:%s2359]
        %2473 = vst [vmem:[%s2367 + $0xd0] sm:%s2359] %v2472
        %v2474 = vld [vmem:[%s2366 + $0xe0] sm:%s2359]
        %2475 = vst [vmem:[%s2367 + $0xd4] sm:%s2359] %v2474
        %v2476 = vld [vmem:[%s2366 + $0xbc] sm:%s2359]
        %2477 = vst [vmem:[%s2367 + $0xd8] sm:%s2359] %v2476
        %v2478 = vld [vmem:[%s2366 + $0xe4] sm:%s2359]
        %2479 = vst [vmem:[%s2367 + $0xdc] sm:%s2359] %v2478
        %v2480 = vld [vmem:[%s2366 + $0xc0] sm:%s2359]
        %2481 = vst [vmem:[%s2367 + $0xe0] sm:%s2359] %v2480
        %v2482 = vld [vmem:[%s2366 + $0xe8] sm:%s2359]
        %2483 = vst [vmem:[%s2367 + $0xe4] sm:%s2359] %v2482
        %v2484 = vld [vmem:[%s2366 + $0xc4] sm:%s2359]
        %2485 = vst [vmem:[%s2367 + $0xe8] sm:%s2359] %v2484
        %v2486 = vld [vmem:[%s2366 + $0xec] sm:%s2359]
        %2487 = vst [vmem:[%s2367 + $0xec] sm:%s2359] %v2486
        %v2488 = vld [vmem:[%s2366 + $0xf0] sm:%s2359]
        %2489 = vst [vmem:[%s2367 + $0xf0] sm:%s2359] %v2488
        %v2490 = vld [vmem:[%s2366 + $0x118] sm:%s2359]
        %2491 = vst [vmem:[%s2367 + $0xf4] sm:%s2359] %v2490
        %v2492 = vld [vmem:[%s2366 + $0xf4] sm:%s2359]
        %2493 = vst [vmem:[%s2367 + $0xf8] sm:%s2359] %v2492
        %v2494 = vld [vmem:[%s2366 + $0x11c] sm:%s2359]
        %2495 = vst [vmem:[%s2367 + $0xfc] sm:%s2359] %v2494
        %v2496 = vld [vmem:[%s2366 + $0xf8] sm:%s2359]
        %2497 = vst [vmem:[%s2367 + $0x100] sm:%s2359] %v2496
        %v2498 = vld [vmem:[%s2366 + $0x120] sm:%s2359]
        %2499 = vst [vmem:[%s2367 + $0x104] sm:%s2359] %v2498
        %v2500 = vld [vmem:[%s2366 + $0xfc] sm:%s2359]
        %2501 = vst [vmem:[%s2367 + $0x108] sm:%s2359] %v2500
        %v2502 = vld [vmem:[%s2366 + $0x124] sm:%s2359]
        %2503 = vst [vmem:[%s2367 + $0x10c] sm:%s2359] %v2502
        %v2504 = vld [vmem:[%s2366 + $0x100] sm:%s2359]
        %2505 = vst [vmem:[%s2367 + $0x110] sm:%s2359] %v2504
        %v2506 = vld [vmem:[%s2366 + $0x128] sm:%s2359]
        %2507 = vst [vmem:[%s2367 + $0x114] sm:%s2359] %v2506
        %v2508 = vld [vmem:[%s2366 + $0x104] sm:%s2359]
        %2509 = vst [vmem:[%s2367 + $0x118] sm:%s2359] %v2508
        %v2510 = vld [vmem:[%s2366 + $0x12c] sm:%s2359]
        %2511 = vst [vmem:[%s2367 + $0x11c] sm:%s2359] %v2510
        %v2512 = vld [vmem:[%s2366 + $0x108] sm:%s2359]
        %2513 = vst [vmem:[%s2367 + $0x120] sm:%s2359] %v2512
        %v2514 = vld [vmem:[%s2366 + $0x130] sm:%s2359]
        %2515 = vst [vmem:[%s2367 + $0x124] sm:%s2359] %v2514
        %v2516 = vld [vmem:[%s2366 + $0x10c] sm:%s2359]
        %2517 = vst [vmem:[%s2367 + $0x128] sm:%s2359] %v2516
        %v2518 = vld [vmem:[%s2366 + $0x134] sm:%s2359]
        %2519 = vst [vmem:[%s2367 + $0x12c] sm:%s2359] %v2518
        %v2520 = vld [vmem:[%s2366 + $0x110] sm:%s2359]
        %2521 = vst [vmem:[%s2367 + $0x130] sm:%s2359] %v2520
        %v2522 = vld [vmem:[%s2366 + $0x138] sm:%s2359]
        %2523 = vst [vmem:[%s2367 + $0x134] sm:%s2359] %v2522
        %v2524 = vld [vmem:[%s2366 + $0x114] sm:%s2359]
        %2525 = vst [vmem:[%s2367 + $0x138] sm:%s2359] %v2524
        %v2526 = vld [vmem:[%s2366 + $0x13c] sm:%s2359]
        %2527 = vst [vmem:[%s2367 + $0x13c] sm:%s2359] %v2526
        %v2528 = vld [vmem:[%s2366 + $0x140] sm:%s2359]
        %2529 = vst [vmem:[%s2367 + $0x140] sm:%s2359] %v2528
        %v2530 = vld [vmem:[%s2366 + $0x168] sm:%s2359]
        %2531 = vst [vmem:[%s2367 + $0x144] sm:%s2359] %v2530
        %v2532 = vld [vmem:[%s2366 + $0x144] sm:%s2359]
        %2533 = vst [vmem:[%s2367 + $0x148] sm:%s2359] %v2532
        %v2534 = vld [vmem:[%s2366 + $0x16c] sm:%s2359]
        %2535 = vst [vmem:[%s2367 + $0x14c] sm:%s2359] %v2534
        %v2536 = vld [vmem:[%s2366 + $0x148] sm:%s2359]
        %2537 = vst [vmem:[%s2367 + $0x150] sm:%s2359] %v2536
        %v2538 = vld [vmem:[%s2366 + $0x170] sm:%s2359]
        %2539 = vst [vmem:[%s2367 + $0x154] sm:%s2359] %v2538
        %v2540 = vld [vmem:[%s2366 + $0x14c] sm:%s2359]
        %2541 = vst [vmem:[%s2367 + $0x158] sm:%s2359] %v2540
        %v2542 = vld [vmem:[%s2366 + $0x174] sm:%s2359]
        %2543 = vst [vmem:[%s2367 + $0x15c] sm:%s2359] %v2542
        %v2544 = vld [vmem:[%s2366 + $0x150] sm:%s2359]
        %2545 = vst [vmem:[%s2367 + $0x160] sm:%s2359] %v2544
        %v2546 = vld [vmem:[%s2366 + $0x178] sm:%s2359]
        %2547 = vst [vmem:[%s2367 + $0x164] sm:%s2359] %v2546
        %v2548 = vld [vmem:[%s2366 + $0x154] sm:%s2359]
        %2549 = vst [vmem:[%s2367 + $0x168] sm:%s2359] %v2548
        %v2550 = vld [vmem:[%s2366 + $0x17c] sm:%s2359]
        %2551 = vst [vmem:[%s2367 + $0x16c] sm:%s2359] %v2550
        %v2552 = vld [vmem:[%s2366 + $0x158] sm:%s2359]
        %2553 = vst [vmem:[%s2367 + $0x170] sm:%s2359] %v2552
        %v2554 = vld [vmem:[%s2366 + $0x180] sm:%s2359]
        %2555 = vst [vmem:[%s2367 + $0x174] sm:%s2359] %v2554
        %v2556 = vld [vmem:[%s2366 + $0x15c] sm:%s2359]
        %2557 = vst [vmem:[%s2367 + $0x178] sm:%s2359] %v2556
        %v2558 = vld [vmem:[%s2366 + $0x184] sm:%s2359]
        %2559 = vst [vmem:[%s2367 + $0x17c] sm:%s2359] %v2558
        %v2560 = vld [vmem:[%s2366 + $0x160] sm:%s2359]
        %2561 = vst [vmem:[%s2367 + $0x180] sm:%s2359] %v2560
        %v2562 = vld [vmem:[%s2366 + $0x188] sm:%s2359]
        %2563 = vst [vmem:[%s2367 + $0x184] sm:%s2359] %v2562
        %v2564 = vld [vmem:[%s2366 + $0x164] sm:%s2359]
        %2565 = vst [vmem:[%s2367 + $0x188] sm:%s2359] %v2564
        %v2566 = vld [vmem:[%s2366 + $0x18c] sm:%s2359]
        %2567 = vst [vmem:[%s2367 + $0x18c] sm:%s2359] %v2566
        %v2568 = vld [vmem:[%s2366 + $0x190] sm:%s2359]
        %2569 = vst [vmem:[%s2367 + $0x190] sm:%s2359] %v2568
        %v2570 = vld [vmem:[%s2366 + $0x1b8] sm:%s2359]
        %2571 = vst [vmem:[%s2367 + $0x194] sm:%s2359] %v2570
        %v2572 = vld [vmem:[%s2366 + $0x194] sm:%s2359]
        %2573 = vst [vmem:[%s2367 + $0x198] sm:%s2359] %v2572
        %v2574 = vld [vmem:[%s2366 + $0x1bc] sm:%s2359]
        %2575 = vst [vmem:[%s2367 + $0x19c] sm:%s2359] %v2574
        %v2576 = vld [vmem:[%s2366 + $0x198] sm:%s2359]
        %2577 = vst [vmem:[%s2367 + $0x1a0] sm:%s2359] %v2576
        %v2578 = vld [vmem:[%s2366 + $0x1c0] sm:%s2359]
        %2579 = vst [vmem:[%s2367 + $0x1a4] sm:%s2359] %v2578
        %v2580 = vld [vmem:[%s2366 + $0x19c] sm:%s2359]
        %2581 = vst [vmem:[%s2367 + $0x1a8] sm:%s2359] %v2580
        %v2582 = vld [vmem:[%s2366 + $0x1c4] sm:%s2359]
        %2583 = vst [vmem:[%s2367 + $0x1ac] sm:%s2359] %v2582
        %v2584 = vld [vmem:[%s2366 + $0x1a0] sm:%s2359]
        %2585 = vst [vmem:[%s2367 + $0x1b0] sm:%s2359] %v2584
        %v2586 = vld [vmem:[%s2366 + $0x1c8] sm:%s2359]
        %2587 = vst [vmem:[%s2367 + $0x1b4] sm:%s2359] %v2586
        %v2588 = vld [vmem:[%s2366 + $0x1a4] sm:%s2359]
        %2589 = vst [vmem:[%s2367 + $0x1b8] sm:%s2359] %v2588
        %v2590 = vld [vmem:[%s2366 + $0x1cc] sm:%s2359]
        %2591 = vst [vmem:[%s2367 + $0x1bc] sm:%s2359] %v2590
        %v2592 = vld [vmem:[%s2366 + $0x1a8] sm:%s2359]
        %2593 = vst [vmem:[%s2367 + $0x1c0] sm:%s2359] %v2592
        %v2594 = vld [vmem:[%s2366 + $0x1d0] sm:%s2359]
        %2595 = vst [vmem:[%s2367 + $0x1c4] sm:%s2359] %v2594
        %v2596 = vld [vmem:[%s2366 + $0x1ac] sm:%s2359]
        %2597 = vst [vmem:[%s2367 + $0x1c8] sm:%s2359] %v2596
        %v2598 = vld [vmem:[%s2366 + $0x1d4] sm:%s2359]
        %2599 = vst [vmem:[%s2367 + $0x1cc] sm:%s2359] %v2598
        %v2600 = vld [vmem:[%s2366 + $0x1b0] sm:%s2359]
        %2601 = vst [vmem:[%s2367 + $0x1d0] sm:%s2359] %v2600
        %v2602 = vld [vmem:[%s2366 + $0x1d8] sm:%s2359]
        %2603 = vst [vmem:[%s2367 + $0x1d4] sm:%s2359] %v2602
        %v2604 = vld [vmem:[%s2366 + $0x1b4] sm:%s2359]
        %2605 = vst [vmem:[%s2367 + $0x1d8] sm:%s2359] %v2604
        %v2606 = vld [vmem:[%s2366 + $0x1dc] sm:%s2359]
        %2607 = vst [vmem:[%s2367 + $0x1dc] sm:%s2359] %v2606
        %v2608 = vld [vmem:[%s2366 + $0x1e0] sm:%s2359]
        %2609 = vst [vmem:[%s2367 + $0x1e0] sm:%s2359] %v2608
        %v2610 = vld [vmem:[%s2366 + $0x208] sm:%s2359]
        %2611 = vst [vmem:[%s2367 + $0x1e4] sm:%s2359] %v2610
        %v2612 = vld [vmem:[%s2366 + $0x1e4] sm:%s2359]
        %2613 = vst [vmem:[%s2367 + $0x1e8] sm:%s2359] %v2612
        %v2614 = vld [vmem:[%s2366 + $0x20c] sm:%s2359]
        %2615 = vst [vmem:[%s2367 + $0x1ec] sm:%s2359] %v2614
        %v2616 = vld [vmem:[%s2366 + $0x1e8] sm:%s2359]
        %2617 = vst [vmem:[%s2367 + $0x1f0] sm:%s2359] %v2616
        %v2618 = vld [vmem:[%s2366 + $0x210] sm:%s2359]
        %2619 = vst [vmem:[%s2367 + $0x1f4] sm:%s2359] %v2618
        %v2620 = vld [vmem:[%s2366 + $0x1ec] sm:%s2359]
        %2621 = vst [vmem:[%s2367 + $0x1f8] sm:%s2359] %v2620
        %v2622 = vld [vmem:[%s2366 + $0x214] sm:%s2359]
        %2623 = vst [vmem:[%s2367 + $0x1fc] sm:%s2359] %v2622
        %v2624 = vld [vmem:[%s2366 + $0x1f0] sm:%s2359]
        %2625 = vst [vmem:[%s2367 + $0x200] sm:%s2359] %v2624
        %v2626 = vld [vmem:[%s2366 + $0x218] sm:%s2359]
        %2627 = vst [vmem:[%s2367 + $0x204] sm:%s2359] %v2626
        %v2628 = vld [vmem:[%s2366 + $0x1f4] sm:%s2359]
        %2629 = vst [vmem:[%s2367 + $0x208] sm:%s2359] %v2628
        %v2630 = vld [vmem:[%s2366 + $0x21c] sm:%s2359]
        %2631 = vst [vmem:[%s2367 + $0x20c] sm:%s2359] %v2630
        %v2632 = vld [vmem:[%s2366 + $0x1f8] sm:%s2359]
        %2633 = vst [vmem:[%s2367 + $0x210] sm:%s2359] %v2632
        %v2634 = vld [vmem:[%s2366 + $0x220] sm:%s2359]
        %2635 = vst [vmem:[%s2367 + $0x214] sm:%s2359] %v2634
        %v2636 = vld [vmem:[%s2366 + $0x1fc] sm:%s2359]
        %2637 = vst [vmem:[%s2367 + $0x218] sm:%s2359] %v2636
        %v2638 = vld [vmem:[%s2366 + $0x224] sm:%s2359]
        %2639 = vst [vmem:[%s2367 + $0x21c] sm:%s2359] %v2638
        %v2640 = vld [vmem:[%s2366 + $0x200] sm:%s2359]
        %2641 = vst [vmem:[%s2367 + $0x220] sm:%s2359] %v2640
        %v2642 = vld [vmem:[%s2366 + $0x228] sm:%s2359]
        %2643 = vst [vmem:[%s2367 + $0x224] sm:%s2359] %v2642
        %v2644 = vld [vmem:[%s2366 + $0x204] sm:%s2359]
        %2645 = vst [vmem:[%s2367 + $0x228] sm:%s2359] %v2644
        %v2646 = vld [vmem:[%s2366 + $0x22c] sm:%s2359]
        %2647 = vst [vmem:[%s2367 + $0x22c] sm:%s2359] %v2646
        %v2648 = vld [vmem:[%s2366 + $0x230] sm:%s2359]
        %2649 = vst [vmem:[%s2367 + $0x230] sm:%s2359] %v2648
        %v2650 = vld [vmem:[%s2366 + $0x258] sm:%s2359]
        %2651 = vst [vmem:[%s2367 + $0x234] sm:%s2359] %v2650
        %v2652 = vld [vmem:[%s2366 + $0x234] sm:%s2359]
        %2653 = vst [vmem:[%s2367 + $0x238] sm:%s2359] %v2652
        %v2654 = vld [vmem:[%s2366 + $0x25c] sm:%s2359]
        %2655 = vst [vmem:[%s2367 + $0x23c] sm:%s2359] %v2654
        %v2656 = vld [vmem:[%s2366 + $0x238] sm:%s2359]
        %2657 = vst [vmem:[%s2367 + $0x240] sm:%s2359] %v2656
        %v2658 = vld [vmem:[%s2366 + $0x260] sm:%s2359]
        %2659 = vst [vmem:[%s2367 + $0x244] sm:%s2359] %v2658
        %v2660 = vld [vmem:[%s2366 + $0x23c] sm:%s2359]
        %2661 = vst [vmem:[%s2367 + $0x248] sm:%s2359] %v2660
        %v2662 = vld [vmem:[%s2366 + $0x264] sm:%s2359]
        %2663 = vst [vmem:[%s2367 + $0x24c] sm:%s2359] %v2662
        %v2664 = vld [vmem:[%s2366 + $0x240] sm:%s2359]
        %2665 = vst [vmem:[%s2367 + $0x250] sm:%s2359] %v2664
        %v2666 = vld [vmem:[%s2366 + $0x268] sm:%s2359]
        %2667 = vst [vmem:[%s2367 + $0x254] sm:%s2359] %v2666
        %v2668 = vld [vmem:[%s2366 + $0x244] sm:%s2359]
        %2669 = vst [vmem:[%s2367 + $0x258] sm:%s2359] %v2668
        %v2670 = vld [vmem:[%s2366 + $0x26c] sm:%s2359]
        %2671 = vst [vmem:[%s2367 + $0x25c] sm:%s2359] %v2670
        %v2672 = vld [vmem:[%s2366 + $0x248] sm:%s2359]
        %2673 = vst [vmem:[%s2367 + $0x260] sm:%s2359] %v2672
        %v2674 = vld [vmem:[%s2366 + $0x270] sm:%s2359]
        %2675 = vst [vmem:[%s2367 + $0x264] sm:%s2359] %v2674
        %v2676 = vld [vmem:[%s2366 + $0x24c] sm:%s2359]
        %2677 = vst [vmem:[%s2367 + $0x268] sm:%s2359] %v2676
        %v2678 = vld [vmem:[%s2366 + $0x274] sm:%s2359]
        %2679 = vst [vmem:[%s2367 + $0x26c] sm:%s2359] %v2678
        %v2680 = vld [vmem:[%s2366 + $0x250] sm:%s2359]
        %2681 = vst [vmem:[%s2367 + $0x270] sm:%s2359] %v2680
        %v2682 = vld [vmem:[%s2366 + $0x278] sm:%s2359]
        %2683 = vst [vmem:[%s2367 + $0x274] sm:%s2359] %v2682
        %v2684 = vld [vmem:[%s2366 + $0x254] sm:%s2359]
        %2685 = vst [vmem:[%s2367 + $0x278] sm:%s2359] %v2684
        %v2686 = vld [vmem:[%s2366 + $0x27c] sm:%s2359]
        %2687 = vst [vmem:[%s2367 + $0x27c] sm:%s2359] %v2686
      $region105: #{crnn_forward.1} parent=92 // loop_footer
        %s2365 = sadd.s32 1, %s2361
      $region106: #{crnn_forward.1} parent=92 // loop_footer_branch
        %2360 = sbr.rel target = $region102
      $region107: #{crnn_forward.1} parent=92 // loop_exit
        _
    $region93: #{crnn_forward.1} parent=77 // pred_fallthru
      _
  $region78: #{crnn_forward.1} parent=0 // pred_fallthru
    _
  // Predicated region
  $region79: #{crnn_forward.1} parent=0 // pred_check
    %p2009 = pneg %p2005
  $region80: #{crnn_forward.1} parent=0 // pred_check_branch
    %2011 = sbr.rel (%p2009) target = $region82
  $region81: #{crnn_forward.1} parent=0 // pred_region
    %s2012 = sshllo.u32 0, 4
    loop: start=0, step=1, limit=1
    $region83: #{crnn_forward.1} parent=81 // loop_pre_header
      _
    $region84: #{crnn_forward.1} parent=81 // loop_header
      %s2014 = sphi 0, %s2018
      %p2015 = scmp.ge.s32.totalorder %s2014, 1
      %s2019 = sphi %s10, %s10
      %s2020 = sphi [#allocation3], [#allocation3]
    $region85: #{crnn_forward.1} parent=81 // loop_header_branch
      %2017 = sbr.rel (%p2015) target = $region89
    $region86: #{crnn_forward.1} parent=81 // loop_body
      %v2021 = vld [vmem:[%s2019] sm:%s2012]
      %2022 = vst [vmem:[%s2020] sm:%s2012] %v2021
      %v2023 = vld [vmem:[%s2019 + $0x28] sm:%s2012]
      %2024 = vst [vmem:[%s2020 + $0x4] sm:%s2012] %v2023
      %v2025 = vld [vmem:[%s2019 + $0x4] sm:%s2012]
      %2026 = vst [vmem:[%s2020 + $0x8] sm:%s2012] %v2025
      %v2027 = vld [vmem:[%s2019 + $0x2c] sm:%s2012]
      %2028 = vst [vmem:[%s2020 + $0xc] sm:%s2012] %v2027
      %v2029 = vld [vmem:[%s2019 + $0x8] sm:%s2012]
      %2030 = vst [vmem:[%s2020 + $0x10] sm:%s2012] %v2029
      %v2031 = vld [vmem:[%s2019 + $0x30] sm:%s2012]
      %2032 = vst [vmem:[%s2020 + $0x14] sm:%s2012] %v2031
      %v2033 = vld [vmem:[%s2019 + $0xc] sm:%s2012]
      %2034 = vst [vmem:[%s2020 + $0x18] sm:%s2012] %v2033
      %v2035 = vld [vmem:[%s2019 + $0x34] sm:%s2012]
      %2036 = vst [vmem:[%s2020 + $0x1c] sm:%s2012] %v2035
      %v2037 = vld [vmem:[%s2019 + $0x10] sm:%s2012]
      %2038 = vst [vmem:[%s2020 + $0x20] sm:%s2012] %v2037
      %v2039 = vld [vmem:[%s2019 + $0x38] sm:%s2012]
      %2040 = vst [vmem:[%s2020 + $0x24] sm:%s2012] %v2039
      %v2041 = vld [vmem:[%s2019 + $0x14] sm:%s2012]
      %2042 = vst [vmem:[%s2020 + $0x28] sm:%s2012] %v2041
      %v2043 = vld [vmem:[%s2019 + $0x3c] sm:%s2012]
      %2044 = vst [vmem:[%s2020 + $0x2c] sm:%s2012] %v2043
      %v2045 = vld [vmem:[%s2019 + $0x18] sm:%s2012]
      %2046 = vst [vmem:[%s2020 + $0x30] sm:%s2012] %v2045
      %v2047 = vld [vmem:[%s2019 + $0x40] sm:%s2012]
      %2048 = vst [vmem:[%s2020 + $0x34] sm:%s2012] %v2047
      %v2049 = vld [vmem:[%s2019 + $0x1c] sm:%s2012]
      %2050 = vst [vmem:[%s2020 + $0x38] sm:%s2012] %v2049
      %v2051 = vld [vmem:[%s2019 + $0x44] sm:%s2012]
      %2052 = vst [vmem:[%s2020 + $0x3c] sm:%s2012] %v2051
      %v2053 = vld [vmem:[%s2019 + $0x20] sm:%s2012]
      %2054 = vst [vmem:[%s2020 + $0x40] sm:%s2012] %v2053
      %v2055 = vld [vmem:[%s2019 + $0x48] sm:%s2012]
      %2056 = vst [vmem:[%s2020 + $0x44] sm:%s2012] %v2055
      %v2057 = vld [vmem:[%s2019 + $0x24] sm:%s2012]
      %2058 = vst [vmem:[%s2020 + $0x48] sm:%s2012] %v2057
      %v2059 = vld [vmem:[%s2019 + $0x4c] sm:%s2012]
      %2060 = vst [vmem:[%s2020 + $0x4c] sm:%s2012] %v2059
      %v2061 = vld [vmem:[%s2019 + $0x50] sm:%s2012]
      %2062 = vst [vmem:[%s2020 + $0x50] sm:%s2012] %v2061
      %v2063 = vld [vmem:[%s2019 + $0x78] sm:%s2012]
      %2064 = vst [vmem:[%s2020 + $0x54] sm:%s2012] %v2063
      %v2065 = vld [vmem:[%s2019 + $0x54] sm:%s2012]
      %2066 = vst [vmem:[%s2020 + $0x58] sm:%s2012] %v2065
      %v2067 = vld [vmem:[%s2019 + $0x7c] sm:%s2012]
      %2068 = vst [vmem:[%s2020 + $0x5c] sm:%s2012] %v2067
      %v2069 = vld [vmem:[%s2019 + $0x58] sm:%s2012]
      %2070 = vst [vmem:[%s2020 + $0x60] sm:%s2012] %v2069
      %v2071 = vld [vmem:[%s2019 + $0x80] sm:%s2012]
      %2072 = vst [vmem:[%s2020 + $0x64] sm:%s2012] %v2071
      %v2073 = vld [vmem:[%s2019 + $0x5c] sm:%s2012]
      %2074 = vst [vmem:[%s2020 + $0x68] sm:%s2012] %v2073
      %v2075 = vld [vmem:[%s2019 + $0x84] sm:%s2012]
      %2076 = vst [vmem:[%s2020 + $0x6c] sm:%s2012] %v2075
      %v2077 = vld [vmem:[%s2019 + $0x60] sm:%s2012]
      %2078 = vst [vmem:[%s2020 + $0x70] sm:%s2012] %v2077
      %v2079 = vld [vmem:[%s2019 + $0x88] sm:%s2012]
      %2080 = vst [vmem:[%s2020 + $0x74] sm:%s2012] %v2079
      %v2081 = vld [vmem:[%s2019 + $0x64] sm:%s2012]
      %2082 = vst [vmem:[%s2020 + $0x78] sm:%s2012] %v2081
      %v2083 = vld [vmem:[%s2019 + $0x8c] sm:%s2012]
      %2084 = vst [vmem:[%s2020 + $0x7c] sm:%s2012] %v2083
      %v2085 = vld [vmem:[%s2019 + $0x68] sm:%s2012]
      %2086 = vst [vmem:[%s2020 + $0x80] sm:%s2012] %v2085
      %v2087 = vld [vmem:[%s2019 + $0x90] sm:%s2012]
      %2088 = vst [vmem:[%s2020 + $0x84] sm:%s2012] %v2087
      %v2089 = vld [vmem:[%s2019 + $0x6c] sm:%s2012]
      %2090 = vst [vmem:[%s2020 + $0x88] sm:%s2012] %v2089
      %v2091 = vld [vmem:[%s2019 + $0x94] sm:%s2012]
      %2092 = vst [vmem:[%s2020 + $0x8c] sm:%s2012] %v2091
      %v2093 = vld [vmem:[%s2019 + $0x70] sm:%s2012]
      %2094 = vst [vmem:[%s2020 + $0x90] sm:%s2012] %v2093
      %v2095 = vld [vmem:[%s2019 + $0x98] sm:%s2012]
      %2096 = vst [vmem:[%s2020 + $0x94] sm:%s2012] %v2095
      %v2097 = vld [vmem:[%s2019 + $0x74] sm:%s2012]
      %2098 = vst [vmem:[%s2020 + $0x98] sm:%s2012] %v2097
      %v2099 = vld [vmem:[%s2019 + $0x9c] sm:%s2012]
      %2100 = vst [vmem:[%s2020 + $0x9c] sm:%s2012] %v2099
      %v2101 = vld [vmem:[%s2019 + $0xa0] sm:%s2012]
      %2102 = vst [vmem:[%s2020 + $0xa0] sm:%s2012] %v2101
      %v2103 = vld [vmem:[%s2019 + $0xc8] sm:%s2012]
      %2104 = vst [vmem:[%s2020 + $0xa4] sm:%s2012] %v2103
      %v2105 = vld [vmem:[%s2019 + $0xa4] sm:%s2012]
      %2106 = vst [vmem:[%s2020 + $0xa8] sm:%s2012] %v2105
      %v2107 = vld [vmem:[%s2019 + $0xcc] sm:%s2012]
      %2108 = vst [vmem:[%s2020 + $0xac] sm:%s2012] %v2107
      %v2109 = vld [vmem:[%s2019 + $0xa8] sm:%s2012]
      %2110 = vst [vmem:[%s2020 + $0xb0] sm:%s2012] %v2109
      %v2111 = vld [vmem:[%s2019 + $0xd0] sm:%s2012]
      %2112 = vst [vmem:[%s2020 + $0xb4] sm:%s2012] %v2111
      %v2113 = vld [vmem:[%s2019 + $0xac] sm:%s2012]
      %2114 = vst [vmem:[%s2020 + $0xb8] sm:%s2012] %v2113
      %v2115 = vld [vmem:[%s2019 + $0xd4] sm:%s2012]
      %2116 = vst [vmem:[%s2020 + $0xbc] sm:%s2012] %v2115
      %v2117 = vld [vmem:[%s2019 + $0xb0] sm:%s2012]
      %2118 = vst [vmem:[%s2020 + $0xc0] sm:%s2012] %v2117
      %v2119 = vld [vmem:[%s2019 + $0xd8] sm:%s2012]
      %2120 = vst [vmem:[%s2020 + $0xc4] sm:%s2012] %v2119
      %v2121 = vld [vmem:[%s2019 + $0xb4] sm:%s2012]
      %2122 = vst [vmem:[%s2020 + $0xc8] sm:%s2012] %v2121
      %v2123 = vld [vmem:[%s2019 + $0xdc] sm:%s2012]
      %2124 = vst [vmem:[%s2020 + $0xcc] sm:%s2012] %v2123
      %v2125 = vld [vmem:[%s2019 + $0xb8] sm:%s2012]
      %2126 = vst [vmem:[%s2020 + $0xd0] sm:%s2012] %v2125
      %v2127 = vld [vmem:[%s2019 + $0xe0] sm:%s2012]
      %2128 = vst [vmem:[%s2020 + $0xd4] sm:%s2012] %v2127
      %v2129 = vld [vmem:[%s2019 + $0xbc] sm:%s2012]
      %2130 = vst [vmem:[%s2020 + $0xd8] sm:%s2012] %v2129
      %v2131 = vld [vmem:[%s2019 + $0xe4] sm:%s2012]
      %2132 = vst [vmem:[%s2020 + $0xdc] sm:%s2012] %v2131
      %v2133 = vld [vmem:[%s2019 + $0xc0] sm:%s2012]
      %2134 = vst [vmem:[%s2020 + $0xe0] sm:%s2012] %v2133
      %v2135 = vld [vmem:[%s2019 + $0xe8] sm:%s2012]
      %2136 = vst [vmem:[%s2020 + $0xe4] sm:%s2012] %v2135
      %v2137 = vld [vmem:[%s2019 + $0xc4] sm:%s2012]
      %2138 = vst [vmem:[%s2020 + $0xe8] sm:%s2012] %v2137
      %v2139 = vld [vmem:[%s2019 + $0xec] sm:%s2012]
      %2140 = vst [vmem:[%s2020 + $0xec] sm:%s2012] %v2139
      %v2141 = vld [vmem:[%s2019 + $0xf0] sm:%s2012]
      %2142 = vst [vmem:[%s2020 + $0xf0] sm:%s2012] %v2141
      %v2143 = vld [vmem:[%s2019 + $0x118] sm:%s2012]
      %2144 = vst [vmem:[%s2020 + $0xf4] sm:%s2012] %v2143
      %v2145 = vld [vmem:[%s2019 + $0xf4] sm:%s2012]
      %2146 = vst [vmem:[%s2020 + $0xf8] sm:%s2012] %v2145
      %v2147 = vld [vmem:[%s2019 + $0x11c] sm:%s2012]
      %2148 = vst [vmem:[%s2020 + $0xfc] sm:%s2012] %v2147
      %v2149 = vld [vmem:[%s2019 + $0xf8] sm:%s2012]
      %2150 = vst [vmem:[%s2020 + $0x100] sm:%s2012] %v2149
      %v2151 = vld [vmem:[%s2019 + $0x120] sm:%s2012]
      %2152 = vst [vmem:[%s2020 + $0x104] sm:%s2012] %v2151
      %v2153 = vld [vmem:[%s2019 + $0xfc] sm:%s2012]
      %2154 = vst [vmem:[%s2020 + $0x108] sm:%s2012] %v2153
      %v2155 = vld [vmem:[%s2019 + $0x124] sm:%s2012]
      %2156 = vst [vmem:[%s2020 + $0x10c] sm:%s2012] %v2155
      %v2157 = vld [vmem:[%s2019 + $0x100] sm:%s2012]
      %2158 = vst [vmem:[%s2020 + $0x110] sm:%s2012] %v2157
      %v2159 = vld [vmem:[%s2019 + $0x128] sm:%s2012]
      %2160 = vst [vmem:[%s2020 + $0x114] sm:%s2012] %v2159
      %v2161 = vld [vmem:[%s2019 + $0x104] sm:%s2012]
      %2162 = vst [vmem:[%s2020 + $0x118] sm:%s2012] %v2161
      %v2163 = vld [vmem:[%s2019 + $0x12c] sm:%s2012]
      %2164 = vst [vmem:[%s2020 + $0x11c] sm:%s2012] %v2163
      %v2165 = vld [vmem:[%s2019 + $0x108] sm:%s2012]
      %2166 = vst [vmem:[%s2020 + $0x120] sm:%s2012] %v2165
      %v2167 = vld [vmem:[%s2019 + $0x130] sm:%s2012]
      %2168 = vst [vmem:[%s2020 + $0x124] sm:%s2012] %v2167
      %v2169 = vld [vmem:[%s2019 + $0x10c] sm:%s2012]
      %2170 = vst [vmem:[%s2020 + $0x128] sm:%s2012] %v2169
      %v2171 = vld [vmem:[%s2019 + $0x134] sm:%s2012]
      %2172 = vst [vmem:[%s2020 + $0x12c] sm:%s2012] %v2171
      %v2173 = vld [vmem:[%s2019 + $0x110] sm:%s2012]
      %2174 = vst [vmem:[%s2020 + $0x130] sm:%s2012] %v2173
      %v2175 = vld [vmem:[%s2019 + $0x138] sm:%s2012]
      %2176 = vst [vmem:[%s2020 + $0x134] sm:%s2012] %v2175
      %v2177 = vld [vmem:[%s2019 + $0x114] sm:%s2012]
      %2178 = vst [vmem:[%s2020 + $0x138] sm:%s2012] %v2177
      %v2179 = vld [vmem:[%s2019 + $0x13c] sm:%s2012]
      %2180 = vst [vmem:[%s2020 + $0x13c] sm:%s2012] %v2179
      %v2181 = vld [vmem:[%s2019 + $0x140] sm:%s2012]
      %2182 = vst [vmem:[%s2020 + $0x140] sm:%s2012] %v2181
      %v2183 = vld [vmem:[%s2019 + $0x168] sm:%s2012]
      %2184 = vst [vmem:[%s2020 + $0x144] sm:%s2012] %v2183
      %v2185 = vld [vmem:[%s2019 + $0x144] sm:%s2012]
      %2186 = vst [vmem:[%s2020 + $0x148] sm:%s2012] %v2185
      %v2187 = vld [vmem:[%s2019 + $0x16c] sm:%s2012]
      %2188 = vst [vmem:[%s2020 + $0x14c] sm:%s2012] %v2187
      %v2189 = vld [vmem:[%s2019 + $0x148] sm:%s2012]
      %2190 = vst [vmem:[%s2020 + $0x150] sm:%s2012] %v2189
      %v2191 = vld [vmem:[%s2019 + $0x170] sm:%s2012]
      %2192 = vst [vmem:[%s2020 + $0x154] sm:%s2012] %v2191
      %v2193 = vld [vmem:[%s2019 + $0x14c] sm:%s2012]
      %2194 = vst [vmem:[%s2020 + $0x158] sm:%s2012] %v2193
      %v2195 = vld [vmem:[%s2019 + $0x174] sm:%s2012]
      %2196 = vst [vmem:[%s2020 + $0x15c] sm:%s2012] %v2195
      %v2197 = vld [vmem:[%s2019 + $0x150] sm:%s2012]
      %2198 = vst [vmem:[%s2020 + $0x160] sm:%s2012] %v2197
      %v2199 = vld [vmem:[%s2019 + $0x178] sm:%s2012]
      %2200 = vst [vmem:[%s2020 + $0x164] sm:%s2012] %v2199
      %v2201 = vld [vmem:[%s2019 + $0x154] sm:%s2012]
      %2202 = vst [vmem:[%s2020 + $0x168] sm:%s2012] %v2201
      %v2203 = vld [vmem:[%s2019 + $0x17c] sm:%s2012]
      %2204 = vst [vmem:[%s2020 + $0x16c] sm:%s2012] %v2203
      %v2205 = vld [vmem:[%s2019 + $0x158] sm:%s2012]
      %2206 = vst [vmem:[%s2020 + $0x170] sm:%s2012] %v2205
      %v2207 = vld [vmem:[%s2019 + $0x180] sm:%s2012]
      %2208 = vst [vmem:[%s2020 + $0x174] sm:%s2012] %v2207
      %v2209 = vld [vmem:[%s2019 + $0x15c] sm:%s2012]
      %2210 = vst [vmem:[%s2020 + $0x178] sm:%s2012] %v2209
      %v2211 = vld [vmem:[%s2019 + $0x184] sm:%s2012]
      %2212 = vst [vmem:[%s2020 + $0x17c] sm:%s2012] %v2211
      %v2213 = vld [vmem:[%s2019 + $0x160] sm:%s2012]
      %2214 = vst [vmem:[%s2020 + $0x180] sm:%s2012] %v2213
      %v2215 = vld [vmem:[%s2019 + $0x188] sm:%s2012]
      %2216 = vst [vmem:[%s2020 + $0x184] sm:%s2012] %v2215
      %v2217 = vld [vmem:[%s2019 + $0x164] sm:%s2012]
      %2218 = vst [vmem:[%s2020 + $0x188] sm:%s2012] %v2217
      %v2219 = vld [vmem:[%s2019 + $0x18c] sm:%s2012]
      %2220 = vst [vmem:[%s2020 + $0x18c] sm:%s2012] %v2219
      %v2221 = vld [vmem:[%s2019 + $0x190] sm:%s2012]
      %2222 = vst [vmem:[%s2020 + $0x190] sm:%s2012] %v2221
      %v2223 = vld [vmem:[%s2019 + $0x1b8] sm:%s2012]
      %2224 = vst [vmem:[%s2020 + $0x194] sm:%s2012] %v2223
      %v2225 = vld [vmem:[%s2019 + $0x194] sm:%s2012]
      %2226 = vst [vmem:[%s2020 + $0x198] sm:%s2012] %v2225
      %v2227 = vld [vmem:[%s2019 + $0x1bc] sm:%s2012]
      %2228 = vst [vmem:[%s2020 + $0x19c] sm:%s2012] %v2227
      %v2229 = vld [vmem:[%s2019 + $0x198] sm:%s2012]
      %2230 = vst [vmem:[%s2020 + $0x1a0] sm:%s2012] %v2229
      %v2231 = vld [vmem:[%s2019 + $0x1c0] sm:%s2012]
      %2232 = vst [vmem:[%s2020 + $0x1a4] sm:%s2012] %v2231
      %v2233 = vld [vmem:[%s2019 + $0x19c] sm:%s2012]
      %2234 = vst [vmem:[%s2020 + $0x1a8] sm:%s2012] %v2233
      %v2235 = vld [vmem:[%s2019 + $0x1c4] sm:%s2012]
      %2236 = vst [vmem:[%s2020 + $0x1ac] sm:%s2012] %v2235
      %v2237 = vld [vmem:[%s2019 + $0x1a0] sm:%s2012]
      %2238 = vst [vmem:[%s2020 + $0x1b0] sm:%s2012] %v2237
      %v2239 = vld [vmem:[%s2019 + $0x1c8] sm:%s2012]
      %2240 = vst [vmem:[%s2020 + $0x1b4] sm:%s2012] %v2239
      %v2241 = vld [vmem:[%s2019 + $0x1a4] sm:%s2012]
      %2242 = vst [vmem:[%s2020 + $0x1b8] sm:%s2012] %v2241
      %v2243 = vld [vmem:[%s2019 + $0x1cc] sm:%s2012]
      %2244 = vst [vmem:[%s2020 + $0x1bc] sm:%s2012] %v2243
      %v2245 = vld [vmem:[%s2019 + $0x1a8] sm:%s2012]
      %2246 = vst [vmem:[%s2020 + $0x1c0] sm:%s2012] %v2245
      %v2247 = vld [vmem:[%s2019 + $0x1d0] sm:%s2012]
      %2248 = vst [vmem:[%s2020 + $0x1c4] sm:%s2012] %v2247
      %v2249 = vld [vmem:[%s2019 + $0x1ac] sm:%s2012]
      %2250 = vst [vmem:[%s2020 + $0x1c8] sm:%s2012] %v2249
      %v2251 = vld [vmem:[%s2019 + $0x1d4] sm:%s2012]
      %2252 = vst [vmem:[%s2020 + $0x1cc] sm:%s2012] %v2251
      %v2253 = vld [vmem:[%s2019 + $0x1b0] sm:%s2012]
      %2254 = vst [vmem:[%s2020 + $0x1d0] sm:%s2012] %v2253
      %v2255 = vld [vmem:[%s2019 + $0x1d8] sm:%s2012]
      %2256 = vst [vmem:[%s2020 + $0x1d4] sm:%s2012] %v2255
      %v2257 = vld [vmem:[%s2019 + $0x1b4] sm:%s2012]
      %2258 = vst [vmem:[%s2020 + $0x1d8] sm:%s2012] %v2257
      %v2259 = vld [vmem:[%s2019 + $0x1dc] sm:%s2012]
      %2260 = vst [vmem:[%s2020 + $0x1dc] sm:%s2012] %v2259
      %v2261 = vld [vmem:[%s2019 + $0x1e0] sm:%s2012]
      %2262 = vst [vmem:[%s2020 + $0x1e0] sm:%s2012] %v2261
      %v2263 = vld [vmem:[%s2019 + $0x208] sm:%s2012]
      %2264 = vst [vmem:[%s2020 + $0x1e4] sm:%s2012] %v2263
      %v2265 = vld [vmem:[%s2019 + $0x1e4] sm:%s2012]
      %2266 = vst [vmem:[%s2020 + $0x1e8] sm:%s2012] %v2265
      %v2267 = vld [vmem:[%s2019 + $0x20c] sm:%s2012]
      %2268 = vst [vmem:[%s2020 + $0x1ec] sm:%s2012] %v2267
      %v2269 = vld [vmem:[%s2019 + $0x1e8] sm:%s2012]
      %2270 = vst [vmem:[%s2020 + $0x1f0] sm:%s2012] %v2269
      %v2271 = vld [vmem:[%s2019 + $0x210] sm:%s2012]
      %2272 = vst [vmem:[%s2020 + $0x1f4] sm:%s2012] %v2271
      %v2273 = vld [vmem:[%s2019 + $0x1ec] sm:%s2012]
      %2274 = vst [vmem:[%s2020 + $0x1f8] sm:%s2012] %v2273
      %v2275 = vld [vmem:[%s2019 + $0x214] sm:%s2012]
      %2276 = vst [vmem:[%s2020 + $0x1fc] sm:%s2012] %v2275
      %v2277 = vld [vmem:[%s2019 + $0x1f0] sm:%s2012]
      %2278 = vst [vmem:[%s2020 + $0x200] sm:%s2012] %v2277
      %v2279 = vld [vmem:[%s2019 + $0x218] sm:%s2012]
      %2280 = vst [vmem:[%s2020 + $0x204] sm:%s2012] %v2279
      %v2281 = vld [vmem:[%s2019 + $0x1f4] sm:%s2012]
      %2282 = vst [vmem:[%s2020 + $0x208] sm:%s2012] %v2281
      %v2283 = vld [vmem:[%s2019 + $0x21c] sm:%s2012]
      %2284 = vst [vmem:[%s2020 + $0x20c] sm:%s2012] %v2283
      %v2285 = vld [vmem:[%s2019 + $0x1f8] sm:%s2012]
      %2286 = vst [vmem:[%s2020 + $0x210] sm:%s2012] %v2285
      %v2287 = vld [vmem:[%s2019 + $0x220] sm:%s2012]
      %2288 = vst [vmem:[%s2020 + $0x214] sm:%s2012] %v2287
      %v2289 = vld [vmem:[%s2019 + $0x1fc] sm:%s2012]
      %2290 = vst [vmem:[%s2020 + $0x218] sm:%s2012] %v2289
      %v2291 = vld [vmem:[%s2019 + $0x224] sm:%s2012]
      %2292 = vst [vmem:[%s2020 + $0x21c] sm:%s2012] %v2291
      %v2293 = vld [vmem:[%s2019 + $0x200] sm:%s2012]
      %2294 = vst [vmem:[%s2020 + $0x220] sm:%s2012] %v2293
      %v2295 = vld [vmem:[%s2019 + $0x228] sm:%s2012]
      %2296 = vst [vmem:[%s2020 + $0x224] sm:%s2012] %v2295
      %v2297 = vld [vmem:[%s2019 + $0x204] sm:%s2012]
      %2298 = vst [vmem:[%s2020 + $0x228] sm:%s2012] %v2297
      %v2299 = vld [vmem:[%s2019 + $0x22c] sm:%s2012]
      %2300 = vst [vmem:[%s2020 + $0x22c] sm:%s2012] %v2299
      %v2301 = vld [vmem:[%s2019 + $0x230] sm:%s2012]
      %2302 = vst [vmem:[%s2020 + $0x230] sm:%s2012] %v2301
      %v2303 = vld [vmem:[%s2019 + $0x258] sm:%s2012]
      %2304 = vst [vmem:[%s2020 + $0x234] sm:%s2012] %v2303
      %v2305 = vld [vmem:[%s2019 + $0x234] sm:%s2012]
      %2306 = vst [vmem:[%s2020 + $0x238] sm:%s2012] %v2305
      %v2307 = vld [vmem:[%s2019 + $0x25c] sm:%s2012]
      %2308 = vst [vmem:[%s2020 + $0x23c] sm:%s2012] %v2307
      %v2309 = vld [vmem:[%s2019 + $0x238] sm:%s2012]
      %2310 = vst [vmem:[%s2020 + $0x240] sm:%s2012] %v2309
      %v2311 = vld [vmem:[%s2019 + $0x260] sm:%s2012]
      %2312 = vst [vmem:[%s2020 + $0x244] sm:%s2012] %v2311
      %v2313 = vld [vmem:[%s2019 + $0x23c] sm:%s2012]
      %2314 = vst [vmem:[%s2020 + $0x248] sm:%s2012] %v2313
      %v2315 = vld [vmem:[%s2019 + $0x264] sm:%s2012]
      %2316 = vst [vmem:[%s2020 + $0x24c] sm:%s2012] %v2315
      %v2317 = vld [vmem:[%s2019 + $0x240] sm:%s2012]
      %2318 = vst [vmem:[%s2020 + $0x250] sm:%s2012] %v2317
      %v2319 = vld [vmem:[%s2019 + $0x268] sm:%s2012]
      %2320 = vst [vmem:[%s2020 + $0x254] sm:%s2012] %v2319
      %v2321 = vld [vmem:[%s2019 + $0x244] sm:%s2012]
      %2322 = vst [vmem:[%s2020 + $0x258] sm:%s2012] %v2321
      %v2323 = vld [vmem:[%s2019 + $0x26c] sm:%s2012]
      %2324 = vst [vmem:[%s2020 + $0x25c] sm:%s2012] %v2323
      %v2325 = vld [vmem:[%s2019 + $0x248] sm:%s2012]
      %2326 = vst [vmem:[%s2020 + $0x260] sm:%s2012] %v2325
      %v2327 = vld [vmem:[%s2019 + $0x270] sm:%s2012]
      %2328 = vst [vmem:[%s2020 + $0x264] sm:%s2012] %v2327
      %v2329 = vld [vmem:[%s2019 + $0x24c] sm:%s2012]
      %2330 = vst [vmem:[%s2020 + $0x268] sm:%s2012] %v2329
      %v2331 = vld [vmem:[%s2019 + $0x274] sm:%s2012]
      %2332 = vst [vmem:[%s2020 + $0x26c] sm:%s2012] %v2331
      %v2333 = vld [vmem:[%s2019 + $0x250] sm:%s2012]
      %2334 = vst [vmem:[%s2020 + $0x270] sm:%s2012] %v2333
      %v2335 = vld [vmem:[%s2019 + $0x278] sm:%s2012]
      %2336 = vst [vmem:[%s2020 + $0x274] sm:%s2012] %v2335
      %v2337 = vld [vmem:[%s2019 + $0x254] sm:%s2012]
      %2338 = vst [vmem:[%s2020 + $0x278] sm:%s2012] %v2337
      %v2339 = vld [vmem:[%s2019 + $0x27c] sm:%s2012]
      %2340 = vst [vmem:[%s2020 + $0x27c] sm:%s2012] %v2339
    $region87: #{crnn_forward.1} parent=81 // loop_footer
      %s2018 = sadd.s32 1, %s2014
    $region88: #{crnn_forward.1} parent=81 // loop_footer_branch
      %2013 = sbr.rel target = $region84
    $region89: #{crnn_forward.1} parent=81 // loop_exit
      _
  $region82: #{crnn_forward.1} parent=0 // pred_fallthru
    _
  // Predicated region
  $region108: #{crnn_forward.1} parent=0 // pred_check
    _
  $region109: #{crnn_forward.1} parent=0 // pred_check_branch
    %2690 = sbr.rel (0) target = $region111
  $region110: #{crnn_forward.1} parent=0 // pred_region
    %2691 = vsyncadd %s2003, 10240
  $region111: #{crnn_forward.1} parent=0 // pred_fallthru
    _
  %v2692 = vld [vmem:[%s0] sm:$0xf]
  %v2693 = vld [vmem:[%s0 + $0x4] sm:$0xf]
  %v2694 = vld [vmem:[%s0 + $0x8] sm:$0xf]
  %v2695 = vld [vmem:[%s0 + $0xc] sm:$0xf]
  %v2696 = vld [vmem:[%s0 + $0x10] sm:$0xf]
  %v2697 = vld [vmem:[%s0 + $0x14] sm:$0xf]
  %v2698 = vld [vmem:[%s0 + $0x18] sm:$0xf]
  %v2699 = vld [vmem:[%s0 + $0x1c] sm:$0xf]
  %v2700 = vld [vmem:[%s0 + $0x20] sm:$0xf]
  %v2701 = vld [vmem:[%s0 + $0x24] sm:$0xf]
  %v2702 = vld [vmem:[%s0 + $0x28] sm:$0xf]
  %v2703 = vld [vmem:[%s0 + $0x2c] sm:$0xf]
  %v2704 = vld [vmem:[%s0 + $0x30] sm:$0xf]
  %v2705 = vld [vmem:[%s0 + $0x34] sm:$0xf]
  %v2706 = vld [vmem:[%s0 + $0x38] sm:$0xf]
  %v2707 = vld [vmem:[%s0 + $0x3c] sm:$0xf]
  %v2708 = vld [vmem:[%s0 + $0x40] sm:$0xf]
  %v2709 = vld [vmem:[%s0 + $0x44] sm:$0xf]
  %v2710 = vld [vmem:[%s0 + $0x48] sm:$0xf]
  %v2711 = vld [vmem:[%s0 + $0x4c] sm:$0xf]
  %v2712 = vld [vmem:[%s0 + $0x50] sm:$0xf]
  %v2713 = vld [vmem:[%s0 + $0x54] sm:$0xf]
  %v2714 = vld [vmem:[%s0 + $0x58] sm:$0xf]
  %v2715 = vld [vmem:[%s0 + $0x5c] sm:$0xf]
  %v2716 = vld [vmem:[%s0 + $0x60] sm:$0xf]
  %v2717 = vld [vmem:[%s0 + $0x64] sm:$0xf]
  %v2718 = vld [vmem:[%s0 + $0x68] sm:$0xf]
  %v2719 = vld [vmem:[%s0 + $0x6c] sm:$0xf]
  %v2720 = vld [vmem:[%s0 + $0x70] sm:$0xf]
  %v2721 = vld [vmem:[%s0 + $0x74] sm:$0xf]
  %v2722 = vld [vmem:[%s0 + $0x78] sm:$0xf]
  %v2723 = vld [vmem:[%s0 + $0x7c] sm:$0xf]
  %v2724 = vld [vmem:[%s0 + $0x80] sm:$0xf]
  %v2725 = vld [vmem:[%s0 + $0x84] sm:$0xf]
  %v2726 = vld [vmem:[%s0 + $0x88] sm:$0xf]
  %v2727 = vld [vmem:[%s0 + $0x8c] sm:$0xf]
  %v2728 = vld [vmem:[%s0 + $0x90] sm:$0xf]
  %v2729 = vld [vmem:[%s0 + $0x94] sm:$0xf]
  %v2730 = vld [vmem:[%s0 + $0x98] sm:$0xf]
  %v2731 = vld [vmem:[%s0 + $0x9c] sm:$0xf]
  %v2732 = vld [vmem:[%s0 + $0xa0] sm:$0xf]
  %v2733 = vld [vmem:[%s0 + $0xa4] sm:$0xf]
  %v2734 = vld [vmem:[%s0 + $0xa8] sm:$0xf]
  %v2735 = vld [vmem:[%s0 + $0xac] sm:$0xf]
  %v2736 = vld [vmem:[%s0 + $0xb0] sm:$0xf]
  %v2737 = vld [vmem:[%s0 + $0xb4] sm:$0xf]
  %v2738 = vld [vmem:[%s0 + $0xb8] sm:$0xf]
  %v2739 = vld [vmem:[%s0 + $0xbc] sm:$0xf]
  %v2740 = vld [vmem:[%s0 + $0xc0] sm:$0xf]
  %v2741 = vld [vmem:[%s1] sm:$0xf]
  %v2742 = vld [vmem:[%s1 + $0x4] sm:$0xf]
  %v2743 = vld [vmem:[%s1 + $0x8] sm:$0xf]
  %v2744 = vld [vmem:[%s1 + $0xc] sm:$0xf]
  %v2745 = vld [vmem:[%s2] sm:$0x1]
  %v2747 = vlaneseq
  %v2748 = vshrl.u32 %v2747, 7
  %v2749 = vsub.s32 0, %v2748
  %v2750 = vrot.slane %v2745, %v2749
  %v2801 = vunpack.c.l.b16 %v2692
  %v2802 = vunpack.c.l.b16 %v2693
  %v2803 = vunpack.c.l.b16 %v2694
  %v2804 = vunpack.c.l.b16 %v2695
  %v2805 = vunpack.c.l.b16 %v2696
  %v2806 = vunpack.c.l.b16 %v2697
  %v2807 = vunpack.c.l.b16 %v2698
  %v2808 = vunpack.c.l.b16 %v2699
  %v2809 = vunpack.c.l.b16 %v2700
  %v2810 = vunpack.c.l.b16 %v2701
  %v2811 = vunpack.c.l.b16 %v2702
  %v2812 = vunpack.c.l.b16 %v2703
  %v2813 = vunpack.c.l.b16 %v2704
  %v2814 = vunpack.c.l.b16 %v2705
  %v2815 = vunpack.c.l.b16 %v2706
  %v2816 = vunpack.c.l.b16 %v2707
  %v2817 = vunpack.c.l.b16 %v2708
  %v2818 = vunpack.c.l.b16 %v2709
  %v2819 = vunpack.c.l.b16 %v2710
  %v2820 = vunpack.c.l.b16 %v2711
  %v2821 = vunpack.c.l.b16 %v2712
  %v2822 = vunpack.c.l.b16 %v2713
  %v2823 = vunpack.c.l.b16 %v2714
  %v2824 = vunpack.c.l.b16 %v2715
  %v2825 = vunpack.c.l.b16 %v2716
  %v2826 = vunpack.c.l.b16 %v2717
  %v2827 = vunpack.c.l.b16 %v2718
  %v2828 = vunpack.c.l.b16 %v2719
  %v2829 = vunpack.c.l.b16 %v2720
  %v2830 = vunpack.c.l.b16 %v2721
  %v2831 = vunpack.c.l.b16 %v2722
  %v2832 = vunpack.c.l.b16 %v2723
  %v2833 = vunpack.c.l.b16 %v2724
  %v2834 = vunpack.c.l.b16 %v2725
  %v2835 = vunpack.c.l.b16 %v2726
  %v2836 = vunpack.c.l.b16 %v2727
  %v2837 = vunpack.c.l.b16 %v2728
  %v2838 = vunpack.c.l.b16 %v2729
  %v2839 = vunpack.c.l.b16 %v2730
  %v2840 = vunpack.c.l.b16 %v2731
  %v2841 = vunpack.c.l.b16 %v2732
  %v2842 = vunpack.c.l.b16 %v2733
  %v2843 = vunpack.c.l.b16 %v2734
  %v2844 = vunpack.c.l.b16 %v2735
  %v2845 = vunpack.c.l.b16 %v2736
  %v2846 = vunpack.c.l.b16 %v2737
  %v2847 = vunpack.c.l.b16 %v2738
  %v2848 = vunpack.c.l.b16 %v2739
  %v2849 = vunpack.c.l.b16 %v2740
  %v2850 = vpack.c.b16 %v2802, %v2801
  %v2851 = vpack.c.b16 %v2804, %v2803
  %v2852 = vpack.c.b16 %v2806, %v2805
  %v2853 = vpack.c.b16 %v2808, %v2807
  %v2854 = vpack.c.b16 %v2810, %v2809
  %v2855 = vpack.c.b16 %v2812, %v2811
  %v2856 = vpack.c.b16 %v2814, %v2813
  %v2857 = vpack.c.b16 %v2816, %v2815
  %v2858 = vpack.c.b16 %v2818, %v2817
  %v2859 = vpack.c.b16 %v2820, %v2819
  %v2860 = vpack.c.b16 %v2822, %v2821
  %v2861 = vpack.c.b16 %v2824, %v2823
  %v2862 = vpack.c.b16 %v2826, %v2825
  %v2863 = vpack.c.b16 %v2828, %v2827
  %v2864 = vpack.c.b16 %v2830, %v2829
  %v2865 = vpack.c.b16 %v2832, %v2831
  %v2866 = vpack.c.b16 %v2834, %v2833
  %v2867 = vpack.c.b16 %v2836, %v2835
  %v2868 = vpack.c.b16 %v2838, %v2837
  %v2869 = vpack.c.b16 %v2840, %v2839
  %v2870 = vpack.c.b16 %v2842, %v2841
  %v2871 = vpack.c.b16 %v2844, %v2843
  %v2872 = vpack.c.b16 %v2846, %v2845
  %v2873 = vpack.c.b16 %v2848, %v2847
  %v2874 = vpack.c.b16 %v2849, %v2849
  %v2879 = vunpack.c.l.b16 %v2741
  %v2880 = vunpack.c.l.b16 %v2742
  %v2881 = vunpack.c.l.b16 %v2743
  %v2882 = vunpack.c.l.b16 %v2744
  %v2883 = vpack.c.b16 %v2880, %v2879
  %v2884 = vpack.c.b16 %v2882, %v2881
  %vm2887 = vcmask 261120
  %v2889 = vsel %vm2887, %v2850, 0
  %v2892 = vsel %vm2887, %v2851, 0
  %v2895 = vsel %vm2887, %v2852, 0
  %v2898 = vsel %vm2887, %v2853, 0
  %v2901 = vsel %vm2887, %v2854, 0
  %v2904 = vsel %vm2887, %v2855, 0
  %v2907 = vsel %vm2887, %v2856, 0
  %v2910 = vsel %vm2887, %v2857, 0
  %v2913 = vsel %vm2887, %v2858, 0
  %v2916 = vsel %vm2887, %v2859, 0
  %v2919 = vsel %vm2887, %v2860, 0
  %v2922 = vsel %vm2887, %v2861, 0
  %v2925 = vsel %vm2887, %v2862, 0
  %v2928 = vsel %vm2887, %v2863, 0
  %v2931 = vsel %vm2887, %v2864, 0
  %v2934 = vsel %vm2887, %v2865, 0
  %v2937 = vsel %vm2887, %v2866, 0
  %v2940 = vsel %vm2887, %v2867, 0
  %v2943 = vsel %vm2887, %v2868, 0
  %v2946 = vsel %vm2887, %v2869, 0
  %v2949 = vsel %vm2887, %v2870, 0
  %v2952 = vsel %vm2887, %v2871, 0
  %v2955 = vsel %vm2887, %v2872, 0
  %v2958 = vsel %vm2887, %v2873, 0
  %v2961 = vsel %vm2887, %v2874, 0
  %2963 = vmatprep.subr.bf16.mxu0 0
  %2964 = vmatpush1.bf16.msra.mxu0 %v2883
  %2965 = vmatprep.subr.bf16.mxu0 0
  %2966 = vmatpush1.bf16.msra.mxu0 %v2884
  %2967 = vmatprep.subr.bf16.mxu0 0
  %2968 = vmatpush1.bf16.msra.mxu0 0
  %2969 = vmatprep.subr.bf16.mxu0 0
  %2970 = vmatpush1.bf16.msra.mxu0 0
  %2971 = vmatprep.subr.bf16.mxu0 0
  %2972 = vmatpush1.bf16.msra.mxu0 0
  %2973 = vmatprep.subr.bf16.mxu0 0
  %2974 = vmatpush1.bf16.msra.mxu0 0
  %2975 = vmatprep.subr.bf16.mxu0 0
  %2976 = vmatpush1.bf16.msra.mxu0 0
  %2977 = vmatprep.subr.bf16.mxu0 0
  %2978 = vmatpush1.bf16.msra.mxu0 0
  %2979 = vmatprep.subr.bf16.mxu0 0
  %2980 = vmatpush1.bf16.msra.mxu0 0
  %2981 = vmatprep.subr.bf16.mxu0 0
  %2982 = vmatpush1.bf16.msra.mxu0 0
  %2983 = vmatprep.subr.bf16.mxu0 0
  %2984 = vmatpush1.bf16.msra.mxu0 0
  %2985 = vmatprep.subr.bf16.mxu0 0
  %2986 = vmatpush1.bf16.msra.mxu0 0
  %2987 = vmatprep.subr.bf16.mxu0 0
  %2988 = vmatpush1.bf16.msra.mxu0 0
  %2989 = vmatprep.subr.bf16.mxu0 0
  %2990 = vmatpush1.bf16.msra.mxu0 0
  %2991 = vmatprep.subr.bf16.mxu0 0
  %2992 = vmatpush1.bf16.msra.mxu0 0
  %2993 = vmatprep.subr.bf16.mxu0 0
  %2994 = vmatpush1.bf16.msra.mxu0 0
  %2995 = vmatprep.mubr.bf16.mxu0 0
  %2996 = vmatmul.mubr.bf16.gmra.mrb[0].mxu0 %v2889
  %v2997 = vpop.f32.mrb[0].mxu0
  %v2998 = vadd.f32 %v2750, %v2997
  %v2999 = vpop.f32.mrb[0].mxu0
  %v3000 = vpop.f32.mrb[0].mxu0
  %v3001 = vadd.f32 %v2750, %v3000
  %v3002 = vpop.f32.mrb[0].mxu0
  %3003 = vmatprep.mubr.bf16.mxu0 0
  %3004 = vmatmul.mubr.bf16.gmra.mrb[0].mxu0 %v2892
  %v3005 = vpop.f32.mrb[0].mxu0
  %v3006 = vadd.f32 %v2750, %v3005
  %v3007 = vpop.f32.mrb[0].mxu0
  %v3008 = vpop.f32.mrb[0].mxu0
  %v3009 = vadd.f32 %v2750, %v3008
  %v3010 = vpop.f32.mrb[0].mxu0
  %3011 = vmatprep.mubr.bf16.mxu0 0
  %3012 = vmatmul.mubr.bf16.gmra.mrb[0].mxu0 %v2895
  %v3013 = vpop.f32.mrb[0].mxu0
  %v3014 = vadd.f32 %v2750, %v3013
  %v3015 = vpop.f32.mrb[0].mxu0
  %v3016 = vpop.f32.mrb[0].mxu0
  %v3017 = vadd.f32 %v2750, %v3016
  %v3018 = vpop.f32.mrb[0].mxu0
  %3019 = vmatprep.mubr.bf16.mxu0 0
  %3020 = vmatmul.mubr.bf16.gmra.mrb[0].mxu0 %v2898
  %v3021 = vpop.f32.mrb[0].mxu0
  %v3022 = vadd.f32 %v2750, %v3021
  %v3023 = vpop.f32.mrb[0].mxu0
  %v3024 = vpop.f32.mrb[0].mxu0
  %v3025 = vadd.f32 %v2750, %v3024
  %v3026 = vpop.f32.mrb[0].mxu0
  %3027 = vmatprep.mubr.bf16.mxu0 0
  %3028 = vmatmul.mubr.bf16.gmra.mrb[0].mxu0 %v2901
  %v3029 = vpop.f32.mrb[0].mxu0
  %v3030 = vadd.f32 %v2750, %v3029
  %v3031 = vpop.f32.mrb[0].mxu0
  %v3032 = vpop.f32.mrb[0].mxu0
  %v3033 = vadd.f32 %v2750, %v3032
  %v3034 = vpop.f32.mrb[0].mxu0
  %3035 = vmatprep.mubr.bf16.mxu0 0
  %3036 = vmatmul.mubr.bf16.gmra.mrb[0].mxu0 %v2904
  %v3037 = vpop.f32.mrb[0].mxu0
  %v3038 = vadd.f32 %v2750, %v3037
  %v3039 = vpop.f32.mrb[0].mxu0
  %v3040 = vpop.f32.mrb[0].mxu0
  %v3041 = vadd.f32 %v2750, %v3040
  %v3042 = vpop.f32.mrb[0].mxu0
  %3043 = vmatprep.mubr.bf16.mxu0 0
  %3044 = vmatmul.mubr.bf16.gmra.mrb[0].mxu0 %v2907
  %v3045 = vpop.f32.mrb[0].mxu0
  %v3046 = vadd.f32 %v2750, %v3045
  %v3047 = vpop.f32.mrb[0].mxu0
  %v3048 = vpop.f32.mrb[0].mxu0
  %v3049 = vadd.f32 %v2750, %v3048
  %v3050 = vpop.f32.mrb[0].mxu0
  %3051 = vmatprep.mubr.bf16.mxu0 0
  %3052 = vmatmul.mubr.bf16.gmra.mrb[0].mxu0 %v2910
  %v3053 = vpop.f32.mrb[0].mxu0
  %v3054 = vadd.f32 %v2750, %v3053
  %v3055 = vpop.f32.mrb[0].mxu0
  %v3056 = vpop.f32.mrb[0].mxu0
  %v3057 = vadd.f32 %v2750, %v3056
  %v3058 = vpop.f32.mrb[0].mxu0
  %3059 = vmatprep.mubr.bf16.mxu0 0
  %3060 = vmatmul.mubr.bf16.gmra.mrb[0].mxu0 %v2913
  %v3061 = vpop.f32.mrb[0].mxu0
  %v3062 = vadd.f32 %v2750, %v3061
  %v3063 = vpop.f32.mrb[0].mxu0
  %v3064 = vpop.f32.mrb[0].mxu0
  %v3065 = vadd.f32 %v2750, %v3064
  %v3066 = vpop.f32.mrb[0].mxu0
  %3067 = vmatprep.mubr.bf16.mxu0 0
  %3068 = vmatmul.mubr.bf16.gmra.mrb[0].mxu0 %v2916
  %v3069 = vpop.f32.mrb[0].mxu0
  %v3070 = vadd.f32 %v2750, %v3069
  %v3071 = vpop.f32.mrb[0].mxu0
  %v3072 = vpop.f32.mrb[0].mxu0
  %v3073 = vadd.f32 %v2750, %v3072
  %v3074 = vpop.f32.mrb[0].mxu0
  %3075 = vmatprep.mubr.bf16.mxu0 0
  %3076 = vmatmul.mubr.bf16.gmra.mrb[0].mxu0 %v2919
  %v3077 = vpop.f32.mrb[0].mxu0
  %v3078 = vadd.f32 %v2750, %v3077
  %v3079 = vpop.f32.mrb[0].mxu0
  %v3080 = vpop.f32.mrb[0].mxu0
  %v3081 = vadd.f32 %v2750, %v3080
  %v3082 = vpop.f32.mrb[0].mxu0
  %3083 = vmatprep.mubr.bf16.mxu0 0
  %3084 = vmatmul.mubr.bf16.gmra.mrb[0].mxu0 %v2922
  %v3085 = vpop.f32.mrb[0].mxu0
  %v3086 = vadd.f32 %v2750, %v3085
  %v3087 = vpop.f32.mrb[0].mxu0
  %v3088 = vpop.f32.mrb[0].mxu0
  %v3089 = vadd.f32 %v2750, %v3088
  %v3090 = vpop.f32.mrb[0].mxu0
  %3091 = vmatprep.mubr.bf16.mxu0 0
  %3092 = vmatmul.mubr.bf16.gmra.mrb[0].mxu0 %v2925
  %v3093 = vpop.f32.mrb[0].mxu0
  %v3094 = vadd.f32 %v2750, %v3093
  %v3095 = vpop.f32.mrb[0].mxu0
  %v3096 = vpop.f32.mrb[0].mxu0
  %v3097 = vadd.f32 %v2750, %v3096
  %v3098 = vpop.f32.mrb[0].mxu0
  %3099 = vmatprep.mubr.bf16.mxu0 0
  %3100 = vmatmul.mubr.bf16.gmra.mrb[0].mxu0 %v2928
  %v3101 = vpop.f32.mrb[0].mxu0
  %v3102 = vadd.f32 %v2750, %v3101
  %v3103 = vpop.f32.mrb[0].mxu0
  %v3104 = vpop.f32.mrb[0].mxu0
  %v3105 = vadd.f32 %v2750, %v3104
  %v3106 = vpop.f32.mrb[0].mxu0
  %3107 = vmatprep.mubr.bf16.mxu0 0
  %3108 = vmatmul.mubr.bf16.gmra.mrb[0].mxu0 %v2931
  %v3109 = vpop.f32.mrb[0].mxu0
  %v3110 = vadd.f32 %v2750, %v3109
  %v3111 = vpop.f32.mrb[0].mxu0
  %v3112 = vpop.f32.mrb[0].mxu0
  %v3113 = vadd.f32 %v2750, %v3112
  %v3114 = vpop.f32.mrb[0].mxu0
  %3115 = vmatprep.mubr.bf16.mxu0 0
  %3116 = vmatmul.mubr.bf16.gmra.mrb[0].mxu0 %v2934
  %v3117 = vpop.f32.mrb[0].mxu0
  %v3118 = vadd.f32 %v2750, %v3117
  %v3119 = vpop.f32.mrb[0].mxu0
  %v3120 = vpop.f32.mrb[0].mxu0
  %v3121 = vadd.f32 %v2750, %v3120
  %v3122 = vpop.f32.mrb[0].mxu0
  %3123 = vmatprep.mubr.bf16.mxu0 0
  %3124 = vmatmul.mubr.bf16.gmra.mrb[0].mxu0 %v2937
  %v3125 = vpop.f32.mrb[0].mxu0
  %v3126 = vadd.f32 %v2750, %v3125
  %v3127 = vpop.f32.mrb[0].mxu0
  %v3128 = vpop.f32.mrb[0].mxu0
  %v3129 = vadd.f32 %v2750, %v3128
  %v3130 = vpop.f32.mrb[0].mxu0
  %3131 = vmatprep.mubr.bf16.mxu0 0
  %3132 = vmatmul.mubr.bf16.gmra.mrb[0].mxu0 %v2940
  %v3133 = vpop.f32.mrb[0].mxu0
  %v3134 = vadd.f32 %v2750, %v3133
  %v3135 = vpop.f32.mrb[0].mxu0
  %v3136 = vpop.f32.mrb[0].mxu0
  %v3137 = vadd.f32 %v2750, %v3136
  %v3138 = vpop.f32.mrb[0].mxu0
  %3139 = vmatprep.mubr.bf16.mxu0 0
  %3140 = vmatmul.mubr.bf16.gmra.mrb[0].mxu0 %v2943
  %v3141 = vpop.f32.mrb[0].mxu0
  %v3142 = vadd.f32 %v2750, %v3141
  %v3143 = vpop.f32.mrb[0].mxu0
  %v3144 = vpop.f32.mrb[0].mxu0
  %v3145 = vadd.f32 %v2750, %v3144
  %v3146 = vpop.f32.mrb[0].mxu0
  %3147 = vmatprep.mubr.bf16.mxu0 0
  %3148 = vmatmul.mubr.bf16.gmra.mrb[0].mxu0 %v2946
  %v3149 = vpop.f32.mrb[0].mxu0
  %v3150 = vadd.f32 %v2750, %v3149
  %v3151 = vpop.f32.mrb[0].mxu0
  %v3152 = vpop.f32.mrb[0].mxu0
  %v3153 = vadd.f32 %v2750, %v3152
  %v3154 = vpop.f32.mrb[0].mxu0
  %3155 = vmatprep.mubr.bf16.mxu0 0
  %3156 = vmatmul.mubr.bf16.gmra.mrb[0].mxu0 %v2949
  %v3157 = vpop.f32.mrb[0].mxu0
  %v3158 = vadd.f32 %v2750, %v3157
  %v3159 = vpop.f32.mrb[0].mxu0
  %v3160 = vpop.f32.mrb[0].mxu0
  %v3161 = vadd.f32 %v2750, %v3160
  %v3162 = vpop.f32.mrb[0].mxu0
  %3163 = vmatprep.mubr.bf16.mxu0 0
  %3164 = vmatmul.mubr.bf16.gmra.mrb[0].mxu0 %v2952
  %v3165 = vpop.f32.mrb[0].mxu0
  %v3166 = vadd.f32 %v2750, %v3165
  %v3167 = vpop.f32.mrb[0].mxu0
  %v3168 = vpop.f32.mrb[0].mxu0
  %v3169 = vadd.f32 %v2750, %v3168
  %v3170 = vpop.f32.mrb[0].mxu0
  %3171 = vmatprep.mubr.bf16.mxu0 0
  %3172 = vmatmul.mubr.bf16.gmra.mrb[0].mxu0 %v2955
  %v3173 = vpop.f32.mrb[0].mxu0
  %v3174 = vadd.f32 %v2750, %v3173
  %v3175 = vpop.f32.mrb[0].mxu0
  %v3176 = vpop.f32.mrb[0].mxu0
  %v3177 = vadd.f32 %v2750, %v3176
  %v3178 = vpop.f32.mrb[0].mxu0
  %3179 = vmatprep.mubr.bf16.mxu0 0
  %3180 = vmatmul.mubr.bf16.gmra.mrb[0].mxu0 %v2958
  %v3181 = vpop.f32.mrb[0].mxu0
  %v3182 = vadd.f32 %v2750, %v3181
  %v3183 = vpop.f32.mrb[0].mxu0
  %v3184 = vpop.f32.mrb[0].mxu0
  %v3185 = vadd.f32 %v2750, %v3184
  %v3186 = vpop.f32.mrb[0].mxu0
  %3187 = vmatprep.mubr.bf16.mxu0 0
  %3188 = vmatmul.mubr.bf16.gmra.mrb[0].mxu0 %v2961
  %v3189 = vpop.f32.mrb[0].mxu0
  %v3190 = vadd.f32 %v2750, %v3189
  %v3191 = vpop.f32.mrb[0].mxu0
  %v3192 = vpop.f32.mrb[0].mxu0
  %v3193 = vpop.f32.mrb[0].mxu0
  %3194 = vdwg.mxu0
  %v3195 = vsub.f32 0.0, %v2998
  %v3196 = vsub.f32 0.0, %v3001
  %v3197 = vsub.f32 0.0, %v3006
  %v3198 = vsub.f32 0.0, %v3009
  %v3199 = vsub.f32 0.0, %v3014
  %v3200 = vsub.f32 0.0, %v3017
  %v3201 = vsub.f32 0.0, %v3022
  %v3202 = vsub.f32 0.0, %v3025
  %v3203 = vsub.f32 0.0, %v3030
  %v3204 = vsub.f32 0.0, %v3033
  %v3205 = vsub.f32 0.0, %v3038
  %v3206 = vsub.f32 0.0, %v3041
  %v3207 = vsub.f32 0.0, %v3046
  %v3208 = vsub.f32 0.0, %v3049
  %v3209 = vsub.f32 0.0, %v3054
  %v3210 = vsub.f32 0.0, %v3057
  %v3211 = vsub.f32 0.0, %v3062
  %v3212 = vsub.f32 0.0, %v3065
  %v3213 = vsub.f32 0.0, %v3070
  %v3214 = vsub.f32 0.0, %v3073
  %v3215 = vsub.f32 0.0, %v3078
  %v3216 = vsub.f32 0.0, %v3081
  %v3217 = vsub.f32 0.0, %v3086
  %v3218 = vsub.f32 0.0, %v3089
  %v3219 = vsub.f32 0.0, %v3094
  %v3220 = vsub.f32 0.0, %v3097
  %v3221 = vsub.f32 0.0, %v3102
  %v3222 = vsub.f32 0.0, %v3105
  %v3223 = vsub.f32 0.0, %v3110
  %v3224 = vsub.f32 0.0, %v3113
  %v3225 = vsub.f32 0.0, %v3118
  %v3226 = vsub.f32 0.0, %v3121
  %v3227 = vsub.f32 0.0, %v3126
  %v3228 = vsub.f32 0.0, %v3129
  %v3229 = vsub.f32 0.0, %v3134
  %v3230 = vsub.f32 0.0, %v3137
  %v3231 = vsub.f32 0.0, %v3142
  %v3232 = vsub.f32 0.0, %v3145
  %v3233 = vsub.f32 0.0, %v3150
  %v3234 = vsub.f32 0.0, %v3153
  %v3235 = vsub.f32 0.0, %v3158
  %v3236 = vsub.f32 0.0, %v3161
  %v3237 = vsub.f32 0.0, %v3166
  %v3238 = vsub.f32 0.0, %v3169
  %v3239 = vsub.f32 0.0, %v3174
  %v3240 = vsub.f32 0.0, %v3177
  %v3241 = vsub.f32 0.0, %v3182
  %v3242 = vsub.f32 0.0, %v3185
  %v3243 = vsub.f32 0.0, %v3190
  %v3244 = vmul.f32 %v3195, 1.442695
  %v3245 = vpow.pop %v3244
  %v3246 = vmul.f32 %v3196, 1.442695
  %v3247 = vpow.pop %v3246
  %v3248 = vmul.f32 %v3197, 1.442695
  %v3249 = vpow.pop %v3248
  %v3250 = vmul.f32 %v3198, 1.442695
  %v3251 = vpow.pop %v3250
  %v3252 = vmul.f32 %v3199, 1.442695
  %v3253 = vpow.pop %v3252
  %v3254 = vmul.f32 %v3200, 1.442695
  %v3255 = vpow.pop %v3254
  %v3256 = vmul.f32 %v3201, 1.442695
  %v3257 = vpow.pop %v3256
  %v3258 = vmul.f32 %v3202, 1.442695
  %v3259 = vpow.pop %v3258
  %v3260 = vmul.f32 %v3203, 1.442695
  %v3261 = vpow.pop %v3260
  %v3262 = vmul.f32 %v3204, 1.442695
  %v3263 = vpow.pop %v3262
  %v3264 = vmul.f32 %v3205, 1.442695
  %v3265 = vpow.pop %v3264
  %v3266 = vmul.f32 %v3206, 1.442695
  %v3267 = vpow.pop %v3266
  %v3268 = vmul.f32 %v3207, 1.442695
  %v3269 = vpow.pop %v3268
  %v3270 = vmul.f32 %v3208, 1.442695
  %v3271 = vpow.pop %v3270
  %v3272 = vmul.f32 %v3209, 1.442695
  %v3273 = vpow.pop %v3272
  %v3274 = vmul.f32 %v3210, 1.442695
  %v3275 = vpow.pop %v3274
  %v3276 = vmul.f32 %v3211, 1.442695
  %v3277 = vpow.pop %v3276
  %v3278 = vmul.f32 %v3212, 1.442695
  %v3279 = vpow.pop %v3278
  %v3280 = vmul.f32 %v3213, 1.442695
  %v3281 = vpow.pop %v3280
  %v3282 = vmul.f32 %v3214, 1.442695
  %v3283 = vpow.pop %v3282
  %v3284 = vmul.f32 %v3215, 1.442695
  %v3285 = vpow.pop %v3284
  %v3286 = vmul.f32 %v3216, 1.442695
  %v3287 = vpow.pop %v3286
  %v3288 = vmul.f32 %v3217, 1.442695
  %v3289 = vpow.pop %v3288
  %v3290 = vmul.f32 %v3218, 1.442695
  %v3291 = vpow.pop %v3290
  %v3292 = vmul.f32 %v3219, 1.442695
  %v3293 = vpow.pop %v3292
  %v3294 = vmul.f32 %v3220, 1.442695
  %v3295 = vpow.pop %v3294
  %v3296 = vmul.f32 %v3221, 1.442695
  %v3297 = vpow.pop %v3296
  %v3298 = vmul.f32 %v3222, 1.442695
  %v3299 = vpow.pop %v3298
  %v3300 = vmul.f32 %v3223, 1.442695
  %v3301 = vpow.pop %v3300
  %v3302 = vmul.f32 %v3224, 1.442695
  %v3303 = vpow.pop %v3302
  %v3304 = vmul.f32 %v3225, 1.442695
  %v3305 = vpow.pop %v3304
  %v3306 = vmul.f32 %v3226, 1.442695
  %v3307 = vpow.pop %v3306
  %v3308 = vmul.f32 %v3227, 1.442695
  %v3309 = vpow.pop %v3308
  %v3310 = vmul.f32 %v3228, 1.442695
  %v3311 = vpow.pop %v3310
  %v3312 = vmul.f32 %v3229, 1.442695
  %v3313 = vpow.pop %v3312
  %v3314 = vmul.f32 %v3230, 1.442695
  %v3315 = vpow.pop %v3314
  %v3316 = vmul.f32 %v3231, 1.442695
  %v3317 = vpow.pop %v3316
  %v3318 = vmul.f32 %v3232, 1.442695
  %v3319 = vpow.pop %v3318
  %v3320 = vmul.f32 %v3233, 1.442695
  %v3321 = vpow.pop %v3320
  %v3322 = vmul.f32 %v3234, 1.442695
  %v3323 = vpow.pop %v3322
  %v3324 = vmul.f32 %v3235, 1.442695
  %v3325 = vpow.pop %v3324
  %v3326 = vmul.f32 %v3236, 1.442695
  %v3327 = vpow.pop %v3326
  %v3328 = vmul.f32 %v3237, 1.442695
  %v3329 = vpow.pop %v3328
  %v3330 = vmul.f32 %v3238, 1.442695
  %v3331 = vpow.pop %v3330
  %v3332 = vmul.f32 %v3239, 1.442695
  %v3333 = vpow.pop %v3332
  %v3334 = vmul.f32 %v3240, 1.442695
  %v3335 = vpow.pop %v3334
  %v3336 = vmul.f32 %v3241, 1.442695
  %v3337 = vpow.pop %v3336
  %v3338 = vmul.f32 %v3242, 1.442695
  %v3339 = vpow.pop %v3338
  %v3340 = vmul.f32 %v3243, 1.442695
  %v3341 = vpow.pop %v3340
  %v3342 = vadd.f32 %v3245, 1.0
  %v3343 = vadd.f32 %v3247, 1.0
  %v3344 = vadd.f32 %v3249, 1.0
  %v3345 = vadd.f32 %v3251, 1.0
  %v3346 = vadd.f32 %v3253, 1.0
  %v3347 = vadd.f32 %v3255, 1.0
  %v3348 = vadd.f32 %v3257, 1.0
  %v3349 = vadd.f32 %v3259, 1.0
  %v3350 = vadd.f32 %v3261, 1.0
  %v3351 = vadd.f32 %v3263, 1.0
  %v3352 = vadd.f32 %v3265, 1.0
  %v3353 = vadd.f32 %v3267, 1.0
  %v3354 = vadd.f32 %v3269, 1.0
  %v3355 = vadd.f32 %v3271, 1.0
  %v3356 = vadd.f32 %v3273, 1.0
  %v3357 = vadd.f32 %v3275, 1.0
  %v3358 = vadd.f32 %v3277, 1.0
  %v3359 = vadd.f32 %v3279, 1.0
  %v3360 = vadd.f32 %v3281, 1.0
  %v3361 = vadd.f32 %v3283, 1.0
  %v3362 = vadd.f32 %v3285, 1.0
  %v3363 = vadd.f32 %v3287, 1.0
  %v3364 = vadd.f32 %v3289, 1.0
  %v3365 = vadd.f32 %v3291, 1.0
  %v3366 = vadd.f32 %v3293, 1.0
  %v3367 = vadd.f32 %v3295, 1.0
  %v3368 = vadd.f32 %v3297, 1.0
  %v3369 = vadd.f32 %v3299, 1.0
  %v3370 = vadd.f32 %v3301, 1.0
  %v3371 = vadd.f32 %v3303, 1.0
  %v3372 = vadd.f32 %v3305, 1.0
  %v3373 = vadd.f32 %v3307, 1.0
  %v3374 = vadd.f32 %v3309, 1.0
  %v3375 = vadd.f32 %v3311, 1.0
  %v3376 = vadd.f32 %v3313, 1.0
  %v3377 = vadd.f32 %v3315, 1.0
  %v3378 = vadd.f32 %v3317, 1.0
  %v3379 = vadd.f32 %v3319, 1.0
  %v3380 = vadd.f32 %v3321, 1.0
  %v3381 = vadd.f32 %v3323, 1.0
  %v3382 = vadd.f32 %v3325, 1.0
  %v3383 = vadd.f32 %v3327, 1.0
  %v3384 = vadd.f32 %v3329, 1.0
  %v3385 = vadd.f32 %v3331, 1.0
  %v3386 = vadd.f32 %v3333, 1.0
  %v3387 = vadd.f32 %v3335, 1.0
  %v3388 = vadd.f32 %v3337, 1.0
  %v3389 = vadd.f32 %v3339, 1.0
  %v3390 = vadd.f32 %v3341, 1.0
  %v3391 = vrcp.pop %v3342
  %v3392 = vrcp.pop %v3343
  %v3393 = vrcp.pop %v3344
  %v3394 = vrcp.pop %v3345
  %v3395 = vrcp.pop %v3346
  %v3396 = vrcp.pop %v3347
  %v3397 = vrcp.pop %v3348
  %v3398 = vrcp.pop %v3349
  %v3399 = vrcp.pop %v3350
  %v3400 = vrcp.pop %v3351
  %v3401 = vrcp.pop %v3352
  %v3402 = vrcp.pop %v3353
  %v3403 = vrcp.pop %v3354
  %v3404 = vrcp.pop %v3355
  %v3405 = vrcp.pop %v3356
  %v3406 = vrcp.pop %v3357
  %v3407 = vrcp.pop %v3358
  %v3408 = vrcp.pop %v3359
  %v3409 = vrcp.pop %v3360
  %v3410 = vrcp.pop %v3361
  %v3411 = vrcp.pop %v3362
  %v3412 = vrcp.pop %v3363
  %v3413 = vrcp.pop %v3364
  %v3414 = vrcp.pop %v3365
  %v3415 = vrcp.pop %v3366
  %v3416 = vrcp.pop %v3367
  %v3417 = vrcp.pop %v3368
  %v3418 = vrcp.pop %v3369
  %v3419 = vrcp.pop %v3370
  %v3420 = vrcp.pop %v3371
  %v3421 = vrcp.pop %v3372
  %v3422 = vrcp.pop %v3373
  %v3423 = vrcp.pop %v3374
  %v3424 = vrcp.pop %v3375
  %v3425 = vrcp.pop %v3376
  %v3426 = vrcp.pop %v3377
  %v3427 = vrcp.pop %v3378
  %v3428 = vrcp.pop %v3379
  %v3429 = vrcp.pop %v3380
  %v3430 = vrcp.pop %v3381
  %v3431 = vrcp.pop %v3382
  %v3432 = vrcp.pop %v3383
  %v3433 = vrcp.pop %v3384
  %v3434 = vrcp.pop %v3385
  %v3435 = vrcp.pop %v3386
  %v3436 = vrcp.pop %v3387
  %v3437 = vrcp.pop %v3388
  %v3438 = vrcp.pop %v3389
  %v3439 = vrcp.pop %v3390
  %v3440 = vmul.f32 %v2998, %v3391
  %v3441 = vmul.f32 %v3001, %v3392
  %v3442 = vmul.f32 %v3006, %v3393
  %v3443 = vmul.f32 %v3009, %v3394
  %v3444 = vmul.f32 %v3014, %v3395
  %v3445 = vmul.f32 %v3017, %v3396
  %v3446 = vmul.f32 %v3022, %v3397
  %v3447 = vmul.f32 %v3025, %v3398
  %v3448 = vmul.f32 %v3030, %v3399
  %v3449 = vmul.f32 %v3033, %v3400
  %v3450 = vmul.f32 %v3038, %v3401
  %v3451 = vmul.f32 %v3041, %v3402
  %v3452 = vmul.f32 %v3046, %v3403
  %v3453 = vmul.f32 %v3049, %v3404
  %v3454 = vmul.f32 %v3054, %v3405
  %v3455 = vmul.f32 %v3057, %v3406
  %v3456 = vmul.f32 %v3062, %v3407
  %v3457 = vmul.f32 %v3065, %v3408
  %v3458 = vmul.f32 %v3070, %v3409
  %v3459 = vmul.f32 %v3073, %v3410
  %v3460 = vmul.f32 %v3078, %v3411
  %v3461 = vmul.f32 %v3081, %v3412
  %v3462 = vmul.f32 %v3086, %v3413
  %v3463 = vmul.f32 %v3089, %v3414
  %v3464 = vmul.f32 %v3094, %v3415
  %v3465 = vmul.f32 %v3097, %v3416
  %v3466 = vmul.f32 %v3102, %v3417
  %v3467 = vmul.f32 %v3105, %v3418
  %v3468 = vmul.f32 %v3110, %v3419
  %v3469 = vmul.f32 %v3113, %v3420
  %v3470 = vmul.f32 %v3118, %v3421
  %v3471 = vmul.f32 %v3121, %v3422
  %v3472 = vmul.f32 %v3126, %v3423
  %v3473 = vmul.f32 %v3129, %v3424
  %v3474 = vmul.f32 %v3134, %v3425
  %v3475 = vmul.f32 %v3137, %v3426
  %v3476 = vmul.f32 %v3142, %v3427
  %v3477 = vmul.f32 %v3145, %v3428
  %v3478 = vmul.f32 %v3150, %v3429
  %v3479 = vmul.f32 %v3153, %v3430
  %v3480 = vmul.f32 %v3158, %v3431
  %v3481 = vmul.f32 %v3161, %v3432
  %v3482 = vmul.f32 %v3166, %v3433
  %v3483 = vmul.f32 %v3169, %v3434
  %v3484 = vmul.f32 %v3174, %v3435
  %v3485 = vmul.f32 %v3177, %v3436
  %v3486 = vmul.f32 %v3182, %v3437
  %v3487 = vmul.f32 %v3185, %v3438
  %v3488 = vmul.f32 %v3190, %v3439
  %v3489 = vpack.c.bf16 %v3441, %v3440
  %v3490 = vpack.c.bf16 %v3443, %v3442
  %v3491 = vpack.c.bf16 %v3445, %v3444
  %v3492 = vpack.c.bf16 %v3447, %v3446
  %v3493 = vpack.c.bf16 %v3449, %v3448
  %v3494 = vpack.c.bf16 %v3451, %v3450
  %v3495 = vpack.c.bf16 %v3453, %v3452
  %v3496 = vpack.c.bf16 %v3455, %v3454
  %v3497 = vpack.c.bf16 %v3457, %v3456
  %v3498 = vpack.c.bf16 %v3459, %v3458
  %v3499 = vpack.c.bf16 %v3461, %v3460
  %v3500 = vpack.c.bf16 %v3463, %v3462
  %v3501 = vpack.c.bf16 %v3465, %v3464
  %v3502 = vpack.c.bf16 %v3467, %v3466
  %v3503 = vpack.c.bf16 %v3469, %v3468
  %v3504 = vpack.c.bf16 %v3471, %v3470
  %v3505 = vpack.c.bf16 %v3473, %v3472
  %v3506 = vpack.c.bf16 %v3475, %v3474
  %v3507 = vpack.c.bf16 %v3477, %v3476
  %v3508 = vpack.c.bf16 %v3479, %v3478
  %v3509 = vpack.c.bf16 %v3481, %v3480
  %v3510 = vpack.c.bf16 %v3483, %v3482
  %v3511 = vpack.c.bf16 %v3485, %v3484
  %v3512 = vpack.c.bf16 %v3487, %v3486
  %v3513 = vpack.c.bf16 %v3488, %v3488
  %v3514 = vld [vmem:[%s3] sm:$0xff]
  %v3515 = vld [vmem:[%s3 + $0x8] sm:$0xff]
  %v3516 = vld [vmem:[%s3 + $0x10] sm:$0xff]
  %v3517 = vld [vmem:[%s3 + $0x18] sm:$0xff]
  %v3518 = vld [vmem:[%s3 + $0x20] sm:$0xff]
  %v3519 = vld [vmem:[%s3 + $0x28] sm:$0xff]
  %v3520 = vld [vmem:[%s3 + $0x30] sm:$0xff]
  %v3521 = vld [vmem:[%s3 + $0x38] sm:$0xff]
  %v3522 = vld [vmem:[%s3 + $0x40] sm:$0xff]
  %v3523 = vld [vmem:[%s3 + $0x48] sm:$0xff]
  %v3524 = vld [vmem:[%s3 + $0x50] sm:$0xff]
  %v3525 = vld [vmem:[%s3 + $0x58] sm:$0xff]
  %v3526 = vld [vmem:[%s3 + $0x60] sm:$0xff]
  %v3527 = vld [vmem:[%s3 + $0x68] sm:$0xff]
  %v3528 = vld [vmem:[%s3 + $0x70] sm:$0xff]
  %v3529 = vld [vmem:[%s3 + $0x78] sm:$0xff]
  %v3530 = vld [vmem:[%s3 + $0x80] sm:$0xff]
  %v3531 = vld [vmem:[%s3 + $0x88] sm:$0xff]
  %v3532 = vld [vmem:[%s3 + $0x90] sm:$0xff]
  %v3533 = vld [vmem:[%s3 + $0x98] sm:$0xff]
  %v3534 = vld [vmem:[%s4] sm:$0xff]
  %v3535 = vld [vmem:[%s4 + $0x8] sm:$0x3]
  %v3538 = vlaneseq
  %v3539 = vshrl.u32 %v3538, 7
  %v3540 = vsub.s32 0, %v3539
  %v3541 = vrot.slane %v3534, %v3540
  %v3542 = vlaneseq
  %v3543 = vshrl.u32 %v3542, 7
  %v3544 = vsub.s32 1, %v3543
  %v3545 = vrot.slane %v3534, %v3544
  %v3546 = vlaneseq
  %v3547 = vshrl.u32 %v3546, 7
  %v3548 = vsub.s32 2, %v3547
  %v3549 = vrot.slane %v3534, %v3548
  %v3550 = vlaneseq
  %v3551 = vshrl.u32 %v3550, 7
  %v3552 = vsub.s32 3, %v3551
  %v3553 = vrot.slane %v3534, %v3552
  %v3554 = vlaneseq
  %v3555 = vshrl.u32 %v3554, 7
  %v3556 = vsub.s32 4, %v3555
  %v3557 = vrot.slane %v3534, %v3556
  %v3558 = vlaneseq
  %v3559 = vshrl.u32 %v3558, 7
  %v3560 = vsub.s32 5, %v3559
  %v3561 = vrot.slane %v3534, %v3560
  %v3562 = vlaneseq
  %v3563 = vshrl.u32 %v3562, 7
  %v3564 = vsub.s32 6, %v3563
  %v3565 = vrot.slane %v3534, %v3564
  %v3566 = vlaneseq
  %v3567 = vshrl.u32 %v3566, 7
  %v3568 = vsub.s32 7, %v3567
  %v3569 = vrot.slane %v3534, %v3568
  %v3570 = vlaneseq
  %v3571 = vshrl.u32 %v3570, 7
  %v3572 = vsub.s32 0, %v3571
  %v3573 = vrot.slane %v3535, %v3572
  %v3574 = vlaneseq
  %v3575 = vshrl.u32 %v3574, 7
  %v3576 = vsub.s32 1, %v3575
  %v3577 = vrot.slane %v3535, %v3576
  %v3608 = vunpack.c.l.b16 %v3514
  %v3609 = vunpack.c.h.b16 %v3514
  %v3610 = vunpack.c.l.b16 %v3515
  %v3611 = vunpack.c.h.b16 %v3515
  %v3612 = vunpack.c.l.b16 %v3516
  %v3613 = vunpack.c.h.b16 %v3516
  %v3614 = vunpack.c.l.b16 %v3517
  %v3615 = vunpack.c.h.b16 %v3517
  %v3616 = vunpack.c.l.b16 %v3518
  %v3617 = vunpack.c.h.b16 %v3518
  %v3618 = vunpack.c.l.b16 %v3519
  %v3619 = vunpack.c.h.b16 %v3519
  %v3620 = vunpack.c.l.b16 %v3520
  %v3621 = vunpack.c.h.b16 %v3520
  %v3622 = vunpack.c.l.b16 %v3521
  %v3623 = vunpack.c.h.b16 %v3521
  %v3624 = vunpack.c.l.b16 %v3522
  %v3625 = vunpack.c.h.b16 %v3522
  %v3626 = vunpack.c.l.b16 %v3523
  %v3627 = vunpack.c.h.b16 %v3523
  %v3628 = vunpack.c.l.b16 %v3524
  %v3629 = vunpack.c.h.b16 %v3524
  %v3630 = vunpack.c.l.b16 %v3525
  %v3631 = vunpack.c.h.b16 %v3525
  %v3632 = vunpack.c.l.b16 %v3526
  %v3633 = vunpack.c.h.b16 %v3526
  %v3634 = vunpack.c.l.b16 %v3527
  %v3635 = vunpack.c.h.b16 %v3527
  %v3636 = vunpack.c.l.b16 %v3528
  %v3637 = vunpack.c.h.b16 %v3528
  %v3638 = vunpack.c.l.b16 %v3529
  %v3639 = vunpack.c.h.b16 %v3529
  %v3640 = vunpack.c.l.b16 %v3530
  %v3641 = vunpack.c.h.b16 %v3530
  %v3642 = vunpack.c.l.b16 %v3531
  %v3643 = vunpack.c.h.b16 %v3531
  %v3644 = vunpack.c.l.b16 %v3532
  %v3645 = vunpack.c.h.b16 %v3532
  %v3646 = vunpack.c.l.b16 %v3533
  %v3647 = vunpack.c.h.b16 %v3533
  %v3648 = vpack.c.b16 %v3618, %v3608
  %v3649 = vpack.c.b16 %v3619, %v3609
  %v3650 = vpack.c.b16 %v3620, %v3610
  %v3651 = vpack.c.b16 %v3621, %v3611
  %v3652 = vpack.c.b16 %v3622, %v3612
  %v3653 = vpack.c.b16 %v3623, %v3613
  %v3654 = vpack.c.b16 %v3624, %v3614
  %v3655 = vpack.c.b16 %v3625, %v3615
  %v3656 = vpack.c.b16 %v3626, %v3616
  %v3657 = vpack.c.b16 %v3627, %v3617
  %v3658 = vpack.c.b16 %v3638, %v3628
  %v3659 = vpack.c.b16 %v3639, %v3629
  %v3660 = vpack.c.b16 %v3640, %v3630
  %v3661 = vpack.c.b16 %v3641, %v3631
  %v3662 = vpack.c.b16 %v3642, %v3632
  %v3663 = vpack.c.b16 %v3643, %v3633
  %v3664 = vpack.c.b16 %v3644, %v3634
  %v3665 = vpack.c.b16 %v3645, %v3635
  %v3666 = vpack.c.b16 %v3646, %v3636
  %v3667 = vpack.c.b16 %v3647, %v3637
  %v3689 = vsel %vm2887, %v3489, 0
  %v3692 = vsel %vm2887, %v3490, 0
  %v3695 = vsel %vm2887, %v3491, 0
  %v3698 = vsel %vm2887, %v3492, 0
  %v3701 = vsel %vm2887, %v3493, 0
  %v3704 = vsel %vm2887, %v3494, 0
  %v3707 = vsel %vm2887, %v3495, 0
  %v3710 = vsel %vm2887, %v3496, 0
  %v3713 = vsel %vm2887, %v3497, 0
  %v3716 = vsel %vm2887, %v3498, 0
  %v3719 = vsel %vm2887, %v3499, 0
  %v3722 = vsel %vm2887, %v3500, 0
  %v3725 = vsel %vm2887, %v3501, 0
  %v3728 = vsel %vm2887, %v3502, 0
  %v3731 = vsel %vm2887, %v3503, 0
  %v3734 = vsel %vm2887, %v3504, 0
  %v3737 = vsel %vm2887, %v3505, 0
  %v3740 = vsel %vm2887, %v3506, 0
  %v3743 = vsel %vm2887, %v3507, 0
  %v3746 = vsel %vm2887, %v3508, 0
  %v3749 = vsel %vm2887, %v3509, 0
  %v3752 = vsel %vm2887, %v3510, 0
  %v3755 = vsel %vm2887, %v3511, 0
  %v3758 = vsel %vm2887, %v3512, 0
  %v3761 = vsel %vm2887, %v3513, 0
  %3763 = vmatprep.subr.bf16.mxu0 %v3649
  %3764 = vmatpush1.bf16.msra.mxu0 %v3648
  %3765 = vmatprep.subr.bf16.mxu0 %v3659
  %3766 = vmatpush1.bf16.msra.mxu0 %v3658
  %3767 = vmatprep.subr.bf16.mxu0 0
  %3768 = vmatpush1.bf16.msra.mxu0 0
  %3769 = vmatprep.subr.bf16.mxu0 0
  %3770 = vmatpush1.bf16.msra.mxu0 0
  %3771 = vmatprep.subr.bf16.mxu0 0
  %3772 = vmatpush1.bf16.msra.mxu0 0
  %3773 = vmatprep.subr.bf16.mxu0 0
  %3774 = vmatpush1.bf16.msra.mxu0 0
  %3775 = vmatprep.subr.bf16.mxu0 0
  %3776 = vmatpush1.bf16.msra.mxu0 0
  %3777 = vmatprep.subr.bf16.mxu0 0
  %3778 = vmatpush1.bf16.msra.mxu0 0
  %3779 = vmatprep.subr.bf16.mxu0 0
  %3780 = vmatpush1.bf16.msra.mxu0 0
  %3781 = vmatprep.subr.bf16.mxu0 0
  %3782 = vmatpush1.bf16.msra.mxu0 0
  %3783 = vmatprep.subr.bf16.mxu0 0
  %3784 = vmatpush1.bf16.msra.mxu0 0
  %3785 = vmatprep.subr.bf16.mxu0 0
  %3786 = vmatpush1.bf16.msra.mxu0 0
  %3787 = vmatprep.subr.bf16.mxu0 0
  %3788 = vmatpush1.bf16.msra.mxu0 0
  %3789 = vmatprep.subr.bf16.mxu0 0
  %3790 = vmatpush1.bf16.msra.mxu0 0
  %3791 = vmatprep.subr.bf16.mxu0 0
  %3792 = vmatpush1.bf16.msra.mxu0 0
  %3793 = vmatprep.subr.bf16.mxu0 0
  %3794 = vmatpush1.bf16.msra.mxu0 0
  %3795 = vmatprep.mubr.bf16.mxu0 0
  %3796 = vmatmul.mubr.bf16.gmra.mrb[0].mxu0 %v3689
  %v3797 = vpop.f32.mrb[0].mxu0
  %v3798 = vadd.f32 %v3541, %v3797
  %v3799 = vpop.f32.mrb[0].mxu0
  %v3800 = vadd.f32 %v3545, %v3799
  %v3801 = vpop.f32.mrb[0].mxu0
  %v3802 = vadd.f32 %v3541, %v3801
  %v3803 = vpop.f32.mrb[0].mxu0
  %v3804 = vadd.f32 %v3545, %v3803
  %3805 = vmatprep.mubr.bf16.mxu0 0
  %3806 = vmatmul.mubr.bf16.gmra.mrb[0].mxu0 %v3692
  %v3807 = vpop.f32.mrb[0].mxu0
  %v3808 = vadd.f32 %v3541, %v3807
  %v3809 = vpop.f32.mrb[0].mxu0
  %v3810 = vadd.f32 %v3545, %v3809
  %v3811 = vpop.f32.mrb[0].mxu0
  %v3812 = vadd.f32 %v3541, %v3811
  %v3813 = vpop.f32.mrb[0].mxu0
  %v3814 = vadd.f32 %v3545, %v3813
  %3815 = vmatprep.mubr.bf16.mxu0 0
  %3816 = vmatmul.mubr.bf16.gmra.mrb[0].mxu0 %v3695
  %v3817 = vpop.f32.mrb[0].mxu0
  %v3818 = vadd.f32 %v3541, %v3817
  %v3819 = vpop.f32.mrb[0].mxu0
  %v3820 = vadd.f32 %v3545, %v3819
  %v3821 = vpop.f32.mrb[0].mxu0
  %v3822 = vadd.f32 %v3541, %v3821
  %v3823 = vpop.f32.mrb[0].mxu0
  %v3824 = vadd.f32 %v3545, %v3823
  %3825 = vmatprep.mubr.bf16.mxu0 0
  %3826 = vmatmul.mubr.bf16.gmra.mrb[0].mxu0 %v3698
  %v3827 = vpop.f32.mrb[0].mxu0
  %v3828 = vadd.f32 %v3541, %v3827
  %v3829 = vpop.f32.mrb[0].mxu0
  %v3830 = vadd.f32 %v3545, %v3829
  %v3831 = vpop.f32.mrb[0].mxu0
  %v3832 = vadd.f32 %v3541, %v3831
  %v3833 = vpop.f32.mrb[0].mxu0
  %v3834 = vadd.f32 %v3545, %v3833
  %3835 = vmatprep.mubr.bf16.mxu0 0
  %3836 = vmatmul.mubr.bf16.gmra.mrb[0].mxu0 %v3701
  %v3837 = vpop.f32.mrb[0].mxu0
  %v3838 = vadd.f32 %v3541, %v3837
  %v3839 = vpop.f32.mrb[0].mxu0
  %v3840 = vadd.f32 %v3545, %v3839
  %v3841 = vpop.f32.mrb[0].mxu0
  %v3842 = vadd.f32 %v3541, %v3841
  %v3843 = vpop.f32.mrb[0].mxu0
  %v3844 = vadd.f32 %v3545, %v3843
  %3845 = vmatprep.mubr.bf16.mxu0 0
  %3846 = vmatmul.mubr.bf16.gmra.mrb[0].mxu0 %v3704
  %v3847 = vpop.f32.mrb[0].mxu0
  %v3848 = vadd.f32 %v3541, %v3847
  %v3849 = vpop.f32.mrb[0].mxu0
  %v3850 = vadd.f32 %v3545, %v3849
  %v3851 = vpop.f32.mrb[0].mxu0
  %v3852 = vadd.f32 %v3541, %v3851
  %v3853 = vpop.f32.mrb[0].mxu0
  %v3854 = vadd.f32 %v3545, %v3853
  %3855 = vmatprep.mubr.bf16.mxu0 0
  %3856 = vmatmul.mubr.bf16.gmra.mrb[0].mxu0 %v3707
  %v3857 = vpop.f32.mrb[0].mxu0
  %v3858 = vadd.f32 %v3541, %v3857
  %v3859 = vpop.f32.mrb[0].mxu0
  %v3860 = vadd.f32 %v3545, %v3859
  %v3861 = vpop.f32.mrb[0].mxu0
  %v3862 = vadd.f32 %v3541, %v3861
  %v3863 = vpop.f32.mrb[0].mxu0
  %v3864 = vadd.f32 %v3545, %v3863
  %3865 = vmatprep.mubr.bf16.mxu0 0
  %3866 = vmatmul.mubr.bf16.gmra.mrb[0].mxu0 %v3710
  %v3867 = vpop.f32.mrb[0].mxu0
  %v3868 = vadd.f32 %v3541, %v3867
  %v3869 = vpop.f32.mrb[0].mxu0
  %v3870 = vadd.f32 %v3545, %v3869
  %v3871 = vpop.f32.mrb[0].mxu0
  %v3872 = vadd.f32 %v3541, %v3871
  %v3873 = vpop.f32.mrb[0].mxu0
  %v3874 = vadd.f32 %v3545, %v3873
  %3875 = vmatprep.mubr.bf16.mxu0 0
  %3876 = vmatmul.mubr.bf16.gmra.mrb[0].mxu0 %v3713
  %v3877 = vpop.f32.mrb[0].mxu0
  %v3878 = vadd.f32 %v3541, %v3877
  %v3879 = vpop.f32.mrb[0].mxu0
  %v3880 = vadd.f32 %v3545, %v3879
  %v3881 = vpop.f32.mrb[0].mxu0
  %v3882 = vadd.f32 %v3541, %v3881
  %v3883 = vpop.f32.mrb[0].mxu0
  %v3884 = vadd.f32 %v3545, %v3883
  %3885 = vmatprep.mubr.bf16.mxu0 0
  %3886 = vmatmul.mubr.bf16.gmra.mrb[0].mxu0 %v3716
  %v3887 = vpop.f32.mrb[0].mxu0
  %v3888 = vadd.f32 %v3541, %v3887
  %v3889 = vpop.f32.mrb[0].mxu0
  %v3890 = vadd.f32 %v3545, %v3889
  %v3891 = vpop.f32.mrb[0].mxu0
  %v3892 = vadd.f32 %v3541, %v3891
  %v3893 = vpop.f32.mrb[0].mxu0
  %v3894 = vadd.f32 %v3545, %v3893
  %3895 = vmatprep.mubr.bf16.mxu0 0
  %3896 = vmatmul.mubr.bf16.gmra.mrb[0].mxu0 %v3719
  %v3897 = vpop.f32.mrb[0].mxu0
  %v3898 = vadd.f32 %v3541, %v3897
  %v3899 = vpop.f32.mrb[0].mxu0
  %v3900 = vadd.f32 %v3545, %v3899
  %v3901 = vpop.f32.mrb[0].mxu0
  %v3902 = vadd.f32 %v3541, %v3901
  %v3903 = vpop.f32.mrb[0].mxu0
  %v3904 = vadd.f32 %v3545, %v3903
  %3905 = vmatprep.mubr.bf16.mxu0 0
  %3906 = vmatmul.mubr.bf16.gmra.mrb[0].mxu0 %v3722
  %v3907 = vpop.f32.mrb[0].mxu0
  %v3908 = vadd.f32 %v3541, %v3907
  %v3909 = vpop.f32.mrb[0].mxu0
  %v3910 = vadd.f32 %v3545, %v3909
  %v3911 = vpop.f32.mrb[0].mxu0
  %v3912 = vadd.f32 %v3541, %v3911
  %v3913 = vpop.f32.mrb[0].mxu0
  %v3914 = vadd.f32 %v3545, %v3913
  %3915 = vmatprep.mubr.bf16.mxu0 0
  %3916 = vmatmul.mubr.bf16.gmra.mrb[0].mxu0 %v3725
  %v3917 = vpop.f32.mrb[0].mxu0
  %v3918 = vadd.f32 %v3541, %v3917
  %v3919 = vpop.f32.mrb[0].mxu0
  %v3920 = vadd.f32 %v3545, %v3919
  %v3921 = vpop.f32.mrb[0].mxu0
  %v3922 = vadd.f32 %v3541, %v3921
  %v3923 = vpop.f32.mrb[0].mxu0
  %v3924 = vadd.f32 %v3545, %v3923
  %3925 = vmatprep.mubr.bf16.mxu0 0
  %3926 = vmatmul.mubr.bf16.gmra.mrb[0].mxu0 %v3728
  %v3927 = vpop.f32.mrb[0].mxu0
  %v3928 = vadd.f32 %v3541, %v3927
  %v3929 = vpop.f32.mrb[0].mxu0
  %v3930 = vadd.f32 %v3545, %v3929
  %v3931 = vpop.f32.mrb[0].mxu0
  %v3932 = vadd.f32 %v3541, %v3931
  %v3933 = vpop.f32.mrb[0].mxu0
  %v3934 = vadd.f32 %v3545, %v3933
  %3935 = vmatprep.mubr.bf16.mxu0 0
  %3936 = vmatmul.mubr.bf16.gmra.mrb[0].mxu0 %v3731
  %v3937 = vpop.f32.mrb[0].mxu0
  %v3938 = vadd.f32 %v3541, %v3937
  %v3939 = vpop.f32.mrb[0].mxu0
  %v3940 = vadd.f32 %v3545, %v3939
  %v3941 = vpop.f32.mrb[0].mxu0
  %v3942 = vadd.f32 %v3541, %v3941
  %v3943 = vpop.f32.mrb[0].mxu0
  %v3944 = vadd.f32 %v3545, %v3943
  %3945 = vmatprep.mubr.bf16.mxu0 0
  %3946 = vmatmul.mubr.bf16.gmra.mrb[0].mxu0 %v3734
  %v3947 = vpop.f32.mrb[0].mxu0
  %v3948 = vadd.f32 %v3541, %v3947
  %v3949 = vpop.f32.mrb[0].mxu0
  %v3950 = vadd.f32 %v3545, %v3949
  %v3951 = vpop.f32.mrb[0].mxu0
  %v3952 = vadd.f32 %v3541, %v3951
  %v3953 = vpop.f32.mrb[0].mxu0
  %v3954 = vadd.f32 %v3545, %v3953
  %3955 = vmatprep.mubr.bf16.mxu0 0
  %3956 = vmatmul.mubr.bf16.gmra.mrb[0].mxu0 %v3737
  %v3957 = vpop.f32.mrb[0].mxu0
  %v3958 = vadd.f32 %v3541, %v3957
  %v3959 = vpop.f32.mrb[0].mxu0
  %v3960 = vadd.f32 %v3545, %v3959
  %v3961 = vpop.f32.mrb[0].mxu0
  %v3962 = vadd.f32 %v3541, %v3961
  %v3963 = vpop.f32.mrb[0].mxu0
  %v3964 = vadd.f32 %v3545, %v3963
  %3965 = vmatprep.mubr.bf16.mxu0 0
  %3966 = vmatmul.mubr.bf16.gmra.mrb[0].mxu0 %v3740
  %v3967 = vpop.f32.mrb[0].mxu0
  %v3968 = vadd.f32 %v3541, %v3967
  %v3969 = vpop.f32.mrb[0].mxu0
  %v3970 = vadd.f32 %v3545, %v3969
  %v3971 = vpop.f32.mrb[0].mxu0
  %v3972 = vadd.f32 %v3541, %v3971
  %v3973 = vpop.f32.mrb[0].mxu0
  %v3974 = vadd.f32 %v3545, %v3973
  %3975 = vmatprep.mubr.bf16.mxu0 0
  %3976 = vmatmul.mubr.bf16.gmra.mrb[0].mxu0 %v3743
  %v3977 = vpop.f32.mrb[0].mxu0
  %v3978 = vadd.f32 %v3541, %v3977
  %v3979 = vpop.f32.mrb[0].mxu0
  %v3980 = vadd.f32 %v3545, %v3979
  %v3981 = vpop.f32.mrb[0].mxu0
  %v3982 = vadd.f32 %v3541, %v3981
  %v3983 = vpop.f32.mrb[0].mxu0
  %v3984 = vadd.f32 %v3545, %v3983
  %3985 = vmatprep.mubr.bf16.mxu0 0
  %3986 = vmatmul.mubr.bf16.gmra.mrb[0].mxu0 %v3746
  %v3987 = vpop.f32.mrb[0].mxu0
  %v3988 = vadd.f32 %v3541, %v3987
  %v3989 = vpop.f32.mrb[0].mxu0
  %v3990 = vadd.f32 %v3545, %v3989
  %v3991 = vpop.f32.mrb[0].mxu0
  %v3992 = vadd.f32 %v3541, %v3991
  %v3993 = vpop.f32.mrb[0].mxu0
  %v3994 = vadd.f32 %v3545, %v3993
  %3995 = vmatprep.mubr.bf16.mxu0 0
  %3996 = vmatmul.mubr.bf16.gmra.mrb[0].mxu0 %v3749
  %v3997 = vpop.f32.mrb[0].mxu0
  %v3998 = vadd.f32 %v3541, %v3997
  %v3999 = vpop.f32.mrb[0].mxu0
  %v4000 = vadd.f32 %v3545, %v3999
  %v4001 = vpop.f32.mrb[0].mxu0
  %v4002 = vadd.f32 %v3541, %v4001
  %v4003 = vpop.f32.mrb[0].mxu0
  %v4004 = vadd.f32 %v3545, %v4003
  %4005 = vmatprep.mubr.bf16.mxu0 0
  %4006 = vmatmul.mubr.bf16.gmra.mrb[0].mxu0 %v3752
  %v4007 = vpop.f32.mrb[0].mxu0
  %v4008 = vadd.f32 %v3541, %v4007
  %v4009 = vpop.f32.mrb[0].mxu0
  %v4010 = vadd.f32 %v3545, %v4009
  %v4011 = vpop.f32.mrb[0].mxu0
  %v4012 = vadd.f32 %v3541, %v4011
  %v4013 = vpop.f32.mrb[0].mxu0
  %v4014 = vadd.f32 %v3545, %v4013
  %4015 = vmatprep.mubr.bf16.mxu0 0
  %4016 = vmatmul.mubr.bf16.gmra.mrb[0].mxu0 %v3755
  %v4017 = vpop.f32.mrb[0].mxu0
  %v4018 = vadd.f32 %v3541, %v4017
  %v4019 = vpop.f32.mrb[0].mxu0
  %v4020 = vadd.f32 %v3545, %v4019
  %v4021 = vpop.f32.mrb[0].mxu0
  %v4022 = vadd.f32 %v3541, %v4021
  %v4023 = vpop.f32.mrb[0].mxu0
  %v4024 = vadd.f32 %v3545, %v4023
  %4025 = vmatprep.mubr.bf16.mxu0 0
  %4026 = vmatmul.mubr.bf16.gmra.mrb[0].mxu0 %v3758
  %v4027 = vpop.f32.mrb[0].mxu0
  %v4028 = vadd.f32 %v3541, %v4027
  %v4029 = vpop.f32.mrb[0].mxu0
  %v4030 = vadd.f32 %v3545, %v4029
  %v4031 = vpop.f32.mrb[0].mxu0
  %v4032 = vadd.f32 %v3541, %v4031
  %v4033 = vpop.f32.mrb[0].mxu0
  %v4034 = vadd.f32 %v3545, %v4033
  %4035 = vmatprep.mubr.bf16.mxu0 0
  %4036 = vmatmul.mubr.bf16.gmra.mrb[0].mxu0 %v3761
  %v4037 = vpop.f32.mrb[0].mxu0
  %v4038 = vadd.f32 %v3541, %v4037
  %v4039 = vpop.f32.mrb[0].mxu0
  %v4040 = vadd.f32 %v3545, %v4039
  %v4041 = vpop.f32.mrb[0].mxu0
  %v4042 = vpop.f32.mrb[0].mxu0
  %4043 = vdwg.mxu0
  %4044 = vmatprep.subr.bf16.mxu0 %v3651
  %4045 = vmatpush1.bf16.msra.mxu0 %v3650
  %4046 = vmatprep.subr.bf16.mxu0 %v3661
  %4047 = vmatpush1.bf16.msra.mxu0 %v3660
  %4048 = vmatprep.subr.bf16.mxu0 0
  %4049 = vmatpush1.bf16.msra.mxu0 0
  %4050 = vmatprep.subr.bf16.mxu0 0
  %4051 = vmatpush1.bf16.msra.mxu0 0
  %4052 = vmatprep.subr.bf16.mxu0 0
  %4053 = vmatpush1.bf16.msra.mxu0 0
  %4054 = vmatprep.subr.bf16.mxu0 0
  %4055 = vmatpush1.bf16.msra.mxu0 0
  %4056 = vmatprep.subr.bf16.mxu0 0
  %4057 = vmatpush1.bf16.msra.mxu0 0
  %4058 = vmatprep.subr.bf16.mxu0 0
  %4059 = vmatpush1.bf16.msra.mxu0 0
  %4060 = vmatprep.subr.bf16.mxu0 0
  %4061 = vmatpush1.bf16.msra.mxu0 0
  %4062 = vmatprep.subr.bf16.mxu0 0
  %4063 = vmatpush1.bf16.msra.mxu0 0
  %4064 = vmatprep.subr.bf16.mxu0 0
  %4065 = vmatpush1.bf16.msra.mxu0 0
  %4066 = vmatprep.subr.bf16.mxu0 0
  %4067 = vmatpush1.bf16.msra.mxu0 0
  %4068 = vmatprep.subr.bf16.mxu0 0
  %4069 = vmatpush1.bf16.msra.mxu0 0
  %4070 = vmatprep.subr.bf16.mxu0 0
  %4071 = vmatpush1.bf16.msra.mxu0 0
  %4072 = vmatprep.subr.bf16.mxu0 0
  %4073 = vmatpush1.bf16.msra.mxu0 0
  %4074 = vmatprep.subr.bf16.mxu0 0
  %4075 = vmatpush1.bf16.msra.mxu0 0
  %4076 = vmatprep.mubr.bf16.mxu0 0
  %4077 = vmatmul.mubr.bf16.gmra.mrb[0].mxu0 %v3689
  %v4078 = vpop.f32.mrb[0].mxu0
  %v4079 = vadd.f32 %v3549, %v4078
  %v4080 = vpop.f32.mrb[0].mxu0
  %v4081 = vadd.f32 %v3553, %v4080
  %v4082 = vpop.f32.mrb[0].mxu0
  %v4083 = vadd.f32 %v3549, %v4082
  %v4084 = vpop.f32.mrb[0].mxu0
  %v4085 = vadd.f32 %v3553, %v4084
  %4086 = vmatprep.mubr.bf16.mxu0 0
  %4087 = vmatmul.mubr.bf16.gmra.mrb[0].mxu0 %v3692
  %v4088 = vpop.f32.mrb[0].mxu0
  %v4089 = vadd.f32 %v3549, %v4088
  %v4090 = vpop.f32.mrb[0].mxu0
  %v4091 = vadd.f32 %v3553, %v4090
  %v4092 = vpop.f32.mrb[0].mxu0
  %v4093 = vadd.f32 %v3549, %v4092
  %v4094 = vpop.f32.mrb[0].mxu0
  %v4095 = vadd.f32 %v3553, %v4094
  %4096 = vmatprep.mubr.bf16.mxu0 0
  %4097 = vmatmul.mubr.bf16.gmra.mrb[0].mxu0 %v3695
  %v4098 = vpop.f32.mrb[0].mxu0
  %v4099 = vadd.f32 %v3549, %v4098
  %v4100 = vpop.f32.mrb[0].mxu0
  %v4101 = vadd.f32 %v3553, %v4100
  %v4102 = vpop.f32.mrb[0].mxu0
  %v4103 = vadd.f32 %v3549, %v4102
  %v4104 = vpop.f32.mrb[0].mxu0
  %v4105 = vadd.f32 %v3553, %v4104
  %4106 = vmatprep.mubr.bf16.mxu0 0
  %4107 = vmatmul.mubr.bf16.gmra.mrb[0].mxu0 %v3698
  %v4108 = vpop.f32.mrb[0].mxu0
  %v4109 = vadd.f32 %v3549, %v4108
  %v4110 = vpop.f32.mrb[0].mxu0
  %v4111 = vadd.f32 %v3553, %v4110
  %v4112 = vpop.f32.mrb[0].mxu0
  %v4113 = vadd.f32 %v3549, %v4112
  %v4114 = vpop.f32.mrb[0].mxu0
  %v4115 = vadd.f32 %v3553, %v4114
  %4116 = vmatprep.mubr.bf16.mxu0 0
  %4117 = vmatmul.mubr.bf16.gmra.mrb[0].mxu0 %v3701
  %v4118 = vpop.f32.mrb[0].mxu0
  %v4119 = vadd.f32 %v3549, %v4118
  %v4120 = vpop.f32.mrb[0].mxu0
  %v4121 = vadd.f32 %v3553, %v4120
  %v4122 = vpop.f32.mrb[0].mxu0
  %v4123 = vadd.f32 %v3549, %v4122
  %v4124 = vpop.f32.mrb[0].mxu0
  %v4125 = vadd.f32 %v3553, %v4124
  %4126 = vmatprep.mubr.bf16.mxu0 0
  %4127 = vmatmul.mubr.bf16.gmra.mrb[0].mxu0 %v3704
  %v4128 = vpop.f32.mrb[0].mxu0
  %v4129 = vadd.f32 %v3549, %v4128
  %v4130 = vpop.f32.mrb[0].mxu0
  %v4131 = vadd.f32 %v3553, %v4130
  %v4132 = vpop.f32.mrb[0].mxu0
  %v4133 = vadd.f32 %v3549, %v4132
  %v4134 = vpop.f32.mrb[0].mxu0
  %v4135 = vadd.f32 %v3553, %v4134
  %4136 = vmatprep.mubr.bf16.mxu0 0
  %4137 = vmatmul.mubr.bf16.gmra.mrb[0].mxu0 %v3707
  %v4138 = vpop.f32.mrb[0].mxu0
  %v4139 = vadd.f32 %v3549, %v4138
  %v4140 = vpop.f32.mrb[0].mxu0
  %v4141 = vadd.f32 %v3553, %v4140
  %v4142 = vpop.f32.mrb[0].mxu0
  %v4143 = vadd.f32 %v3549, %v4142
  %v4144 = vpop.f32.mrb[0].mxu0
  %v4145 = vadd.f32 %v3553, %v4144
  %4146 = vmatprep.mubr.bf16.mxu0 0
  %4147 = vmatmul.mubr.bf16.gmra.mrb[0].mxu0 %v3710
  %v4148 = vpop.f32.mrb[0].mxu0
  %v4149 = vadd.f32 %v3549, %v4148
  %v4150 = vpop.f32.mrb[0].mxu0
  %v4151 = vadd.f32 %v3553, %v4150
  %v4152 = vpop.f32.mrb[0].mxu0
  %v4153 = vadd.f32 %v3549, %v4152
  %v4154 = vpop.f32.mrb[0].mxu0
  %v4155 = vadd.f32 %v3553, %v4154
  %4156 = vmatprep.mubr.bf16.mxu0 0
  %4157 = vmatmul.mubr.bf16.gmra.mrb[0].mxu0 %v3713
  %v4158 = vpop.f32.mrb[0].mxu0
  %v4159 = vadd.f32 %v3549, %v4158
  %v4160 = vpop.f32.mrb[0].mxu0
  %v4161 = vadd.f32 %v3553, %v4160
  %v4162 = vpop.f32.mrb[0].mxu0
  %v4163 = vadd.f32 %v3549, %v4162
  %v4164 = vpop.f32.mrb[0].mxu0
  %v4165 = vadd.f32 %v3553, %v4164
  %4166 = vmatprep.mubr.bf16.mxu0 0
  %4167 = vmatmul.mubr.bf16.gmra.mrb[0].mxu0 %v3716
  %v4168 = vpop.f32.mrb[0].mxu0
  %v4169 = vadd.f32 %v3549, %v4168
  %v4170 = vpop.f32.mrb[0].mxu0
  %v4171 = vadd.f32 %v3553, %v4170
  %v4172 = vpop.f32.mrb[0].mxu0
  %v4173 = vadd.f32 %v3549, %v4172
  %v4174 = vpop.f32.mrb[0].mxu0
  %v4175 = vadd.f32 %v3553, %v4174
  %4176 = vmatprep.mubr.bf16.mxu0 0
  %4177 = vmatmul.mubr.bf16.gmra.mrb[0].mxu0 %v3719
  %v4178 = vpop.f32.mrb[0].mxu0
  %v4179 = vadd.f32 %v3549, %v4178
  %v4180 = vpop.f32.mrb[0].mxu0
  %v4181 = vadd.f32 %v3553, %v4180
  %v4182 = vpop.f32.mrb[0].mxu0
  %v4183 = vadd.f32 %v3549, %v4182
  %v4184 = vpop.f32.mrb[0].mxu0
  %v4185 = vadd.f32 %v3553, %v4184
  %4186 = vmatprep.mubr.bf16.mxu0 0
  %4187 = vmatmul.mubr.bf16.gmra.mrb[0].mxu0 %v3722
  %v4188 = vpop.f32.mrb[0].mxu0
  %v4189 = vadd.f32 %v3549, %v4188
  %v4190 = vpop.f32.mrb[0].mxu0
  %v4191 = vadd.f32 %v3553, %v4190
  %v4192 = vpop.f32.mrb[0].mxu0
  %v4193 = vadd.f32 %v3549, %v4192
  %v4194 = vpop.f32.mrb[0].mxu0
  %v4195 = vadd.f32 %v3553, %v4194
  %4196 = vmatprep.mubr.bf16.mxu0 0
  %4197 = vmatmul.mubr.bf16.gmra.mrb[0].mxu0 %v3725
  %v4198 = vpop.f32.mrb[0].mxu0
  %v4199 = vadd.f32 %v3549, %v4198
  %v4200 = vpop.f32.mrb[0].mxu0
  %v4201 = vadd.f32 %v3553, %v4200
  %v4202 = vpop.f32.mrb[0].mxu0
  %v4203 = vadd.f32 %v3549, %v4202
  %v4204 = vpop.f32.mrb[0].mxu0
  %v4205 = vadd.f32 %v3553, %v4204
  %4206 = vmatprep.mubr.bf16.mxu0 0
  %4207 = vmatmul.mubr.bf16.gmra.mrb[0].mxu0 %v3728
  %v4208 = vpop.f32.mrb[0].mxu0
  %v4209 = vadd.f32 %v3549, %v4208
  %v4210 = vpop.f32.mrb[0].mxu0
  %v4211 = vadd.f32 %v3553, %v4210
  %v4212 = vpop.f32.mrb[0].mxu0
  %v4213 = vadd.f32 %v3549, %v4212
  %v4214 = vpop.f32.mrb[0].mxu0
  %v4215 = vadd.f32 %v3553, %v4214
  %4216 = vmatprep.mubr.bf16.mxu0 0
  %4217 = vmatmul.mubr.bf16.gmra.mrb[0].mxu0 %v3731
  %v4218 = vpop.f32.mrb[0].mxu0
  %v4219 = vadd.f32 %v3549, %v4218
  %v4220 = vpop.f32.mrb[0].mxu0
  %v4221 = vadd.f32 %v3553, %v4220
  %v4222 = vpop.f32.mrb[0].mxu0
  %v4223 = vadd.f32 %v3549, %v4222
  %v4224 = vpop.f32.mrb[0].mxu0
  %v4225 = vadd.f32 %v3553, %v4224
  %4226 = vmatprep.mubr.bf16.mxu0 0
  %4227 = vmatmul.mubr.bf16.gmra.mrb[0].mxu0 %v3734
  %v4228 = vpop.f32.mrb[0].mxu0
  %v4229 = vadd.f32 %v3549, %v4228
  %v4230 = vpop.f32.mrb[0].mxu0
  %v4231 = vadd.f32 %v3553, %v4230
  %v4232 = vpop.f32.mrb[0].mxu0
  %v4233 = vadd.f32 %v3549, %v4232
  %v4234 = vpop.f32.mrb[0].mxu0
  %v4235 = vadd.f32 %v3553, %v4234
  %4236 = vmatprep.mubr.bf16.mxu0 0
  %4237 = vmatmul.mubr.bf16.gmra.mrb[0].mxu0 %v3737
  %v4238 = vpop.f32.mrb[0].mxu0
  %v4239 = vadd.f32 %v3549, %v4238
  %v4240 = vpop.f32.mrb[0].mxu0
  %v4241 = vadd.f32 %v3553, %v4240
  %v4242 = vpop.f32.mrb[0].mxu0
  %v4243 = vadd.f32 %v3549, %v4242
  %v4244 = vpop.f32.mrb[0].mxu0
  %v4245 = vadd.f32 %v3553, %v4244
  %4246 = vmatprep.mubr.bf16.mxu0 0
  %4247 = vmatmul.mubr.bf16.gmra.mrb[0].mxu0 %v3740
  %v4248 = vpop.f32.mrb[0].mxu0
  %v4249 = vadd.f32 %v3549, %v4248
  %v4250 = vpop.f32.mrb[0].mxu0
  %v4251 = vadd.f32 %v3553, %v4250
  %v4252 = vpop.f32.mrb[0].mxu0
  %v4253 = vadd.f32 %v3549, %v4252
  %v4254 = vpop.f32.mrb[0].mxu0
  %v4255 = vadd.f32 %v3553, %v4254
  %4256 = vmatprep.mubr.bf16.mxu0 0
  %4257 = vmatmul.mubr.bf16.gmra.mrb[0].mxu0 %v3743
  %v4258 = vpop.f32.mrb[0].mxu0
  %v4259 = vadd.f32 %v3549, %v4258
  %v4260 = vpop.f32.mrb[0].mxu0
  %v4261 = vadd.f32 %v3553, %v4260
  %v4262 = vpop.f32.mrb[0].mxu0
  %v4263 = vadd.f32 %v3549, %v4262
  %v4264 = vpop.f32.mrb[0].mxu0
  %v4265 = vadd.f32 %v3553, %v4264
  %4266 = vmatprep.mubr.bf16.mxu0 0
  %4267 = vmatmul.mubr.bf16.gmra.mrb[0].mxu0 %v3746
  %v4268 = vpop.f32.mrb[0].mxu0
  %v4269 = vadd.f32 %v3549, %v4268
  %v4270 = vpop.f32.mrb[0].mxu0
  %v4271 = vadd.f32 %v3553, %v4270
  %v4272 = vpop.f32.mrb[0].mxu0
  %v4273 = vadd.f32 %v3549, %v4272
  %v4274 = vpop.f32.mrb[0].mxu0
  %v4275 = vadd.f32 %v3553, %v4274
  %4276 = vmatprep.mubr.bf16.mxu0 0
  %4277 = vmatmul.mubr.bf16.gmra.mrb[0].mxu0 %v3749
  %v4278 = vpop.f32.mrb[0].mxu0
  %v4279 = vadd.f32 %v3549, %v4278
  %v4280 = vpop.f32.mrb[0].mxu0
  %v4281 = vadd.f32 %v3553, %v4280
  %v4282 = vpop.f32.mrb[0].mxu0
  %v4283 = vadd.f32 %v3549, %v4282
  %v4284 = vpop.f32.mrb[0].mxu0
  %v4285 = vadd.f32 %v3553, %v4284
  %4286 = vmatprep.mubr.bf16.mxu0 0
  %4287 = vmatmul.mubr.bf16.gmra.mrb[0].mxu0 %v3752
  %v4288 = vpop.f32.mrb[0].mxu0
  %v4289 = vadd.f32 %v3549, %v4288
  %v4290 = vpop.f32.mrb[0].mxu0
  %v4291 = vadd.f32 %v3553, %v4290
  %v4292 = vpop.f32.mrb[0].mxu0
  %v4293 = vadd.f32 %v3549, %v4292
  %v4294 = vpop.f32.mrb[0].mxu0
  %v4295 = vadd.f32 %v3553, %v4294
  %4296 = vmatprep.mubr.bf16.mxu0 0
  %4297 = vmatmul.mubr.bf16.gmra.mrb[0].mxu0 %v3755
  %v4298 = vpop.f32.mrb[0].mxu0
  %v4299 = vadd.f32 %v3549, %v4298
  %v4300 = vpop.f32.mrb[0].mxu0
  %v4301 = vadd.f32 %v3553, %v4300
  %v4302 = vpop.f32.mrb[0].mxu0
  %v4303 = vadd.f32 %v3549, %v4302
  %v4304 = vpop.f32.mrb[0].mxu0
  %v4305 = vadd.f32 %v3553, %v4304
  %4306 = vmatprep.mubr.bf16.mxu0 0
  %4307 = vmatmul.mubr.bf16.gmra.mrb[0].mxu0 %v3758
  %v4308 = vpop.f32.mrb[0].mxu0
  %v4309 = vadd.f32 %v3549, %v4308
  %v4310 = vpop.f32.mrb[0].mxu0
  %v4311 = vadd.f32 %v3553, %v4310
  %v4312 = vpop.f32.mrb[0].mxu0
  %v4313 = vadd.f32 %v3549, %v4312
  %v4314 = vpop.f32.mrb[0].mxu0
  %v4315 = vadd.f32 %v3553, %v4314
  %4316 = vmatprep.mubr.bf16.mxu0 0
  %4317 = vmatmul.mubr.bf16.gmra.mrb[0].mxu0 %v3761
  %v4318 = vpop.f32.mrb[0].mxu0
  %v4319 = vadd.f32 %v3549, %v4318
  %v4320 = vpop.f32.mrb[0].mxu0
  %v4321 = vadd.f32 %v3553, %v4320
  %v4322 = vpop.f32.mrb[0].mxu0
  %v4323 = vpop.f32.mrb[0].mxu0
  %4324 = vdwg.mxu0
  %4325 = vmatprep.subr.bf16.mxu0 %v3653
  %4326 = vmatpush1.bf16.msra.mxu0 %v3652
  %4327 = vmatprep.subr.bf16.mxu0 %v3663
  %4328 = vmatpush1.bf16.msra.mxu0 %v3662
  %4329 = vmatprep.subr.bf16.mxu0 0
  %4330 = vmatpush1.bf16.msra.mxu0 0
  %4331 = vmatprep.subr.bf16.mxu0 0
  %4332 = vmatpush1.bf16.msra.mxu0 0
  %4333 = vmatprep.subr.bf16.mxu0 0
  %4334 = vmatpush1.bf16.msra.mxu0 0
  %4335 = vmatprep.subr.bf16.mxu0 0
  %4336 = vmatpush1.bf16.msra.mxu0 0
  %4337 = vmatprep.subr.bf16.mxu0 0
  %4338 = vmatpush1.bf16.msra.mxu0 0
  %4339 = vmatprep.subr.bf16.mxu0 0
  %4340 = vmatpush1.bf16.msra.mxu0 0
  %4341 = vmatprep.subr.bf16.mxu0 0
  %4342 = vmatpush1.bf16.msra.mxu0 0
  %4343 = vmatprep.subr.bf16.mxu0 0
  %4344 = vmatpush1.bf16.msra.mxu0 0
  %4345 = vmatprep.subr.bf16.mxu0 0
  %4346 = vmatpush1.bf16.msra.mxu0 0
  %4347 = vmatprep.subr.bf16.mxu0 0
  %4348 = vmatpush1.bf16.msra.mxu0 0
  %4349 = vmatprep.subr.bf16.mxu0 0
  %4350 = vmatpush1.bf16.msra.mxu0 0
  %4351 = vmatprep.subr.bf16.mxu0 0
  %4352 = vmatpush1.bf16.msra.mxu0 0
  %4353 = vmatprep.subr.bf16.mxu0 0
  %4354 = vmatpush1.bf16.msra.mxu0 0
  %4355 = vmatprep.subr.bf16.mxu0 0
  %4356 = vmatpush1.bf16.msra.mxu0 0
  %4357 = vmatprep.mubr.bf16.mxu0 0
  %4358 = vmatmul.mubr.bf16.gmra.mrb[0].mxu0 %v3689
  %v4359 = vpop.f32.mrb[0].mxu0
  %v4360 = vadd.f32 %v3557, %v4359
  %v4361 = vpop.f32.mrb[0].mxu0
  %v4362 = vadd.f32 %v3561, %v4361
  %v4363 = vpop.f32.mrb[0].mxu0
  %v4364 = vadd.f32 %v3557, %v4363
  %v4365 = vpop.f32.mrb[0].mxu0
  %v4366 = vadd.f32 %v3561, %v4365
  %4367 = vmatprep.mubr.bf16.mxu0 0
  %4368 = vmatmul.mubr.bf16.gmra.mrb[0].mxu0 %v3692
  %v4369 = vpop.f32.mrb[0].mxu0
  %v4370 = vadd.f32 %v3557, %v4369
  %v4371 = vpop.f32.mrb[0].mxu0
  %v4372 = vadd.f32 %v3561, %v4371
  %v4373 = vpop.f32.mrb[0].mxu0
  %v4374 = vadd.f32 %v3557, %v4373
  %v4375 = vpop.f32.mrb[0].mxu0
  %v4376 = vadd.f32 %v3561, %v4375
  %4377 = vmatprep.mubr.bf16.mxu0 0
  %4378 = vmatmul.mubr.bf16.gmra.mrb[0].mxu0 %v3695
  %v4379 = vpop.f32.mrb[0].mxu0
  %v4380 = vadd.f32 %v3557, %v4379
  %v4381 = vpop.f32.mrb[0].mxu0
  %v4382 = vadd.f32 %v3561, %v4381
  %v4383 = vpop.f32.mrb[0].mxu0
  %v4384 = vadd.f32 %v3557, %v4383
  %v4385 = vpop.f32.mrb[0].mxu0
  %v4386 = vadd.f32 %v3561, %v4385
  %4387 = vmatprep.mubr.bf16.mxu0 0
  %4388 = vmatmul.mubr.bf16.gmra.mrb[0].mxu0 %v3698
  %v4389 = vpop.f32.mrb[0].mxu0
  %v4390 = vadd.f32 %v3557, %v4389
  %v4391 = vpop.f32.mrb[0].mxu0
  %v4392 = vadd.f32 %v3561, %v4391
  %v4393 = vpop.f32.mrb[0].mxu0
  %v4394 = vadd.f32 %v3557, %v4393
  %v4395 = vpop.f32.mrb[0].mxu0
  %v4396 = vadd.f32 %v3561, %v4395
  %4397 = vmatprep.mubr.bf16.mxu0 0
  %4398 = vmatmul.mubr.bf16.gmra.mrb[0].mxu0 %v3701
  %v4399 = vpop.f32.mrb[0].mxu0
  %v4400 = vadd.f32 %v3557, %v4399
  %v4401 = vpop.f32.mrb[0].mxu0
  %v4402 = vadd.f32 %v3561, %v4401
  %v4403 = vpop.f32.mrb[0].mxu0
  %v4404 = vadd.f32 %v3557, %v4403
  %v4405 = vpop.f32.mrb[0].mxu0
  %v4406 = vadd.f32 %v3561, %v4405
  %4407 = vmatprep.mubr.bf16.mxu0 0
  %4408 = vmatmul.mubr.bf16.gmra.mrb[0].mxu0 %v3704
  %v4409 = vpop.f32.mrb[0].mxu0
  %v4410 = vadd.f32 %v3557, %v4409
  %v4411 = vpop.f32.mrb[0].mxu0
  %v4412 = vadd.f32 %v3561, %v4411
  %v4413 = vpop.f32.mrb[0].mxu0
  %v4414 = vadd.f32 %v3557, %v4413
  %v4415 = vpop.f32.mrb[0].mxu0
  %v4416 = vadd.f32 %v3561, %v4415
  %4417 = vmatprep.mubr.bf16.mxu0 0
  %4418 = vmatmul.mubr.bf16.gmra.mrb[0].mxu0 %v3707
  %v4419 = vpop.f32.mrb[0].mxu0
  %v4420 = vadd.f32 %v3557, %v4419
  %v4421 = vpop.f32.mrb[0].mxu0
  %v4422 = vadd.f32 %v3561, %v4421
  %v4423 = vpop.f32.mrb[0].mxu0
  %v4424 = vadd.f32 %v3557, %v4423
  %v4425 = vpop.f32.mrb[0].mxu0
  %v4426 = vadd.f32 %v3561, %v4425
  %4427 = vmatprep.mubr.bf16.mxu0 0
  %4428 = vmatmul.mubr.bf16.gmra.mrb[0].mxu0 %v3710
  %v4429 = vpop.f32.mrb[0].mxu0
  %v4430 = vadd.f32 %v3557, %v4429
  %v4431 = vpop.f32.mrb[0].mxu0
  %v4432 = vadd.f32 %v3561, %v4431
  %v4433 = vpop.f32.mrb[0].mxu0
  %v4434 = vadd.f32 %v3557, %v4433
  %v4435 = vpop.f32.mrb[0].mxu0
  %v4436 = vadd.f32 %v3561, %v4435
  %4437 = vmatprep.mubr.bf16.mxu0 0
  %4438 = vmatmul.mubr.bf16.gmra.mrb[0].mxu0 %v3713
  %v4439 = vpop.f32.mrb[0].mxu0
  %v4440 = vadd.f32 %v3557, %v4439
  %v4441 = vpop.f32.mrb[0].mxu0
  %v4442 = vadd.f32 %v3561, %v4441
  %v4443 = vpop.f32.mrb[0].mxu0
  %v4444 = vadd.f32 %v3557, %v4443
  %v4445 = vpop.f32.mrb[0].mxu0
  %v4446 = vadd.f32 %v3561, %v4445
  %4447 = vmatprep.mubr.bf16.mxu0 0
  %4448 = vmatmul.mubr.bf16.gmra.mrb[0].mxu0 %v3716
  %v4449 = vpop.f32.mrb[0].mxu0
  %v4450 = vadd.f32 %v3557, %v4449
  %v4451 = vpop.f32.mrb[0].mxu0
  %v4452 = vadd.f32 %v3561, %v4451
  %v4453 = vpop.f32.mrb[0].mxu0
  %v4454 = vadd.f32 %v3557, %v4453
  %v4455 = vpop.f32.mrb[0].mxu0
  %v4456 = vadd.f32 %v3561, %v4455
  %4457 = vmatprep.mubr.bf16.mxu0 0
  %4458 = vmatmul.mubr.bf16.gmra.mrb[0].mxu0 %v3719
  %v4459 = vpop.f32.mrb[0].mxu0
  %v4460 = vadd.f32 %v3557, %v4459
  %v4461 = vpop.f32.mrb[0].mxu0
  %v4462 = vadd.f32 %v3561, %v4461
  %v4463 = vpop.f32.mrb[0].mxu0
  %v4464 = vadd.f32 %v3557, %v4463
  %v4465 = vpop.f32.mrb[0].mxu0
  %v4466 = vadd.f32 %v3561, %v4465
  %4467 = vmatprep.mubr.bf16.mxu0 0
  %4468 = vmatmul.mubr.bf16.gmra.mrb[0].mxu0 %v3722
  %v4469 = vpop.f32.mrb[0].mxu0
  %v4470 = vadd.f32 %v3557, %v4469
  %v4471 = vpop.f32.mrb[0].mxu0
  %v4472 = vadd.f32 %v3561, %v4471
  %v4473 = vpop.f32.mrb[0].mxu0
  %v4474 = vadd.f32 %v3557, %v4473
  %v4475 = vpop.f32.mrb[0].mxu0
  %v4476 = vadd.f32 %v3561, %v4475
  %4477 = vmatprep.mubr.bf16.mxu0 0
  %4478 = vmatmul.mubr.bf16.gmra.mrb[0].mxu0 %v3725
  %v4479 = vpop.f32.mrb[0].mxu0
  %v4480 = vadd.f32 %v3557, %v4479
  %v4481 = vpop.f32.mrb[0].mxu0
  %v4482 = vadd.f32 %v3561, %v4481
  %v4483 = vpop.f32.mrb[0].mxu0
  %v4484 = vadd.f32 %v3557, %v4483
  %v4485 = vpop.f32.mrb[0].mxu0
  %v4486 = vadd.f32 %v3561, %v4485
  %4487 = vmatprep.mubr.bf16.mxu0 0
  %4488 = vmatmul.mubr.bf16.gmra.mrb[0].mxu0 %v3728
  %v4489 = vpop.f32.mrb[0].mxu0
  %v4490 = vadd.f32 %v3557, %v4489
  %v4491 = vpop.f32.mrb[0].mxu0
  %v4492 = vadd.f32 %v3561, %v4491
  %v4493 = vpop.f32.mrb[0].mxu0
  %v4494 = vadd.f32 %v3557, %v4493
  %v4495 = vpop.f32.mrb[0].mxu0
  %v4496 = vadd.f32 %v3561, %v4495
  %4497 = vmatprep.mubr.bf16.mxu0 0
  %4498 = vmatmul.mubr.bf16.gmra.mrb[0].mxu0 %v3731
  %v4499 = vpop.f32.mrb[0].mxu0
  %v4500 = vadd.f32 %v3557, %v4499
  %v4501 = vpop.f32.mrb[0].mxu0
  %v4502 = vadd.f32 %v3561, %v4501
  %v4503 = vpop.f32.mrb[0].mxu0
  %v4504 = vadd.f32 %v3557, %v4503
  %v4505 = vpop.f32.mrb[0].mxu0
  %v4506 = vadd.f32 %v3561, %v4505
  %4507 = vmatprep.mubr.bf16.mxu0 0
  %4508 = vmatmul.mubr.bf16.gmra.mrb[0].mxu0 %v3734
  %v4509 = vpop.f32.mrb[0].mxu0
  %v4510 = vadd.f32 %v3557, %v4509
  %v4511 = vpop.f32.mrb[0].mxu0
  %v4512 = vadd.f32 %v3561, %v4511
  %v4513 = vpop.f32.mrb[0].mxu0
  %v4514 = vadd.f32 %v3557, %v4513
  %v4515 = vpop.f32.mrb[0].mxu0
  %v4516 = vadd.f32 %v3561, %v4515
  %4517 = vmatprep.mubr.bf16.mxu0 0
  %4518 = vmatmul.mubr.bf16.gmra.mrb[0].mxu0 %v3737
  %v4519 = vpop.f32.mrb[0].mxu0
  %v4520 = vadd.f32 %v3557, %v4519
  %v4521 = vpop.f32.mrb[0].mxu0
  %v4522 = vadd.f32 %v3561, %v4521
  %v4523 = vpop.f32.mrb[0].mxu0
  %v4524 = vadd.f32 %v3557, %v4523
  %v4525 = vpop.f32.mrb[0].mxu0
  %v4526 = vadd.f32 %v3561, %v4525
  %4527 = vmatprep.mubr.bf16.mxu0 0
  %4528 = vmatmul.mubr.bf16.gmra.mrb[0].mxu0 %v3740
  %v4529 = vpop.f32.mrb[0].mxu0
  %v4530 = vadd.f32 %v3557, %v4529
  %v4531 = vpop.f32.mrb[0].mxu0
  %v4532 = vadd.f32 %v3561, %v4531
  %v4533 = vpop.f32.mrb[0].mxu0
  %v4534 = vadd.f32 %v3557, %v4533
  %v4535 = vpop.f32.mrb[0].mxu0
  %v4536 = vadd.f32 %v3561, %v4535
  %4537 = vmatprep.mubr.bf16.mxu0 0
  %4538 = vmatmul.mubr.bf16.gmra.mrb[0].mxu0 %v3743
  %v4539 = vpop.f32.mrb[0].mxu0
  %v4540 = vadd.f32 %v3557, %v4539
  %v4541 = vpop.f32.mrb[0].mxu0
  %v4542 = vadd.f32 %v3561, %v4541
  %v4543 = vpop.f32.mrb[0].mxu0
  %v4544 = vadd.f32 %v3557, %v4543
  %v4545 = vpop.f32.mrb[0].mxu0
  %v4546 = vadd.f32 %v3561, %v4545
  %4547 = vmatprep.mubr.bf16.mxu0 0
  %4548 = vmatmul.mubr.bf16.gmra.mrb[0].mxu0 %v3746
  %v4549 = vpop.f32.mrb[0].mxu0
  %v4550 = vadd.f32 %v3557, %v4549
  %v4551 = vpop.f32.mrb[0].mxu0
  %v4552 = vadd.f32 %v3561, %v4551
  %v4553 = vpop.f32.mrb[0].mxu0
  %v4554 = vadd.f32 %v3557, %v4553
  %v4555 = vpop.f32.mrb[0].mxu0
  %v4556 = vadd.f32 %v3561, %v4555
  %4557 = vmatprep.mubr.bf16.mxu0 0
  %4558 = vmatmul.mubr.bf16.gmra.mrb[0].mxu0 %v3749
  %v4559 = vpop.f32.mrb[0].mxu0
  %v4560 = vadd.f32 %v3557, %v4559
  %v4561 = vpop.f32.mrb[0].mxu0
  %v4562 = vadd.f32 %v3561, %v4561
  %v4563 = vpop.f32.mrb[0].mxu0
  %v4564 = vadd.f32 %v3557, %v4563
  %v4565 = vpop.f32.mrb[0].mxu0
  %v4566 = vadd.f32 %v3561, %v4565
  %4567 = vmatprep.mubr.bf16.mxu0 0
  %4568 = vmatmul.mubr.bf16.gmra.mrb[0].mxu0 %v3752
  %v4569 = vpop.f32.mrb[0].mxu0
  %v4570 = vadd.f32 %v3557, %v4569
  %v4571 = vpop.f32.mrb[0].mxu0
  %v4572 = vadd.f32 %v3561, %v4571
  %v4573 = vpop.f32.mrb[0].mxu0
  %v4574 = vadd.f32 %v3557, %v4573
  %v4575 = vpop.f32.mrb[0].mxu0
  %v4576 = vadd.f32 %v3561, %v4575
  %4577 = vmatprep.mubr.bf16.mxu0 0
  %4578 = vmatmul.mubr.bf16.gmra.mrb[0].mxu0 %v3755
  %v4579 = vpop.f32.mrb[0].mxu0
  %v4580 = vadd.f32 %v3557, %v4579
  %v4581 = vpop.f32.mrb[0].mxu0
  %v4582 = vadd.f32 %v3561, %v4581
  %v4583 = vpop.f32.mrb[0].mxu0
  %v4584 = vadd.f32 %v3557, %v4583
  %v4585 = vpop.f32.mrb[0].mxu0
  %v4586 = vadd.f32 %v3561, %v4585
  %4587 = vmatprep.mubr.bf16.mxu0 0
  %4588 = vmatmul.mubr.bf16.gmra.mrb[0].mxu0 %v3758
  %v4589 = vpop.f32.mrb[0].mxu0
  %v4590 = vadd.f32 %v3557, %v4589
  %v4591 = vpop.f32.mrb[0].mxu0
  %v4592 = vadd.f32 %v3561, %v4591
  %v4593 = vpop.f32.mrb[0].mxu0
  %v4594 = vadd.f32 %v3557, %v4593
  %v4595 = vpop.f32.mrb[0].mxu0
  %v4596 = vadd.f32 %v3561, %v4595
  %4597 = vmatprep.mubr.bf16.mxu0 0
  %4598 = vmatmul.mubr.bf16.gmra.mrb[0].mxu0 %v3761
  %v4599 = vpop.f32.mrb[0].mxu0
  %v4600 = vadd.f32 %v3557, %v4599
  %v4601 = vpop.f32.mrb[0].mxu0
  %v4602 = vadd.f32 %v3561, %v4601
  %v4603 = vpop.f32.mrb[0].mxu0
  %v4604 = vpop.f32.mrb[0].mxu0
  %4605 = vdwg.mxu0
  %4606 = vmatprep.subr.bf16.mxu0 %v3655
  %4607 = vmatpush1.bf16.msra.mxu0 %v3654
  %4608 = vmatprep.subr.bf16.mxu0 %v3665
  %4609 = vmatpush1.bf16.msra.mxu0 %v3664
  %4610 = vmatprep.subr.bf16.mxu0 0
  %4611 = vmatpush1.bf16.msra.mxu0 0
  %4612 = vmatprep.subr.bf16.mxu0 0
  %4613 = vmatpush1.bf16.msra.mxu0 0
  %4614 = vmatprep.subr.bf16.mxu0 0
  %4615 = vmatpush1.bf16.msra.mxu0 0
  %4616 = vmatprep.subr.bf16.mxu0 0
  %4617 = vmatpush1.bf16.msra.mxu0 0
  %4618 = vmatprep.subr.bf16.mxu0 0
  %4619 = vmatpush1.bf16.msra.mxu0 0
  %4620 = vmatprep.subr.bf16.mxu0 0
  %4621 = vmatpush1.bf16.msra.mxu0 0
  %4622 = vmatprep.subr.bf16.mxu0 0
  %4623 = vmatpush1.bf16.msra.mxu0 0
  %4624 = vmatprep.subr.bf16.mxu0 0
  %4625 = vmatpush1.bf16.msra.mxu0 0
  %4626 = vmatprep.subr.bf16.mxu0 0
  %4627 = vmatpush1.bf16.msra.mxu0 0
  %4628 = vmatprep.subr.bf16.mxu0 0
  %4629 = vmatpush1.bf16.msra.mxu0 0
  %4630 = vmatprep.subr.bf16.mxu0 0
  %4631 = vmatpush1.bf16.msra.mxu0 0
  %4632 = vmatprep.subr.bf16.mxu0 0
  %4633 = vmatpush1.bf16.msra.mxu0 0
  %4634 = vmatprep.subr.bf16.mxu0 0
  %4635 = vmatpush1.bf16.msra.mxu0 0
  %4636 = vmatprep.subr.bf16.mxu0 0
  %4637 = vmatpush1.bf16.msra.mxu0 0
  %4638 = vmatprep.mubr.bf16.mxu0 0
  %4639 = vmatmul.mubr.bf16.gmra.mrb[0].mxu0 %v3689
  %v4640 = vpop.f32.mrb[0].mxu0
  %v4641 = vadd.f32 %v3565, %v4640
  %v4642 = vpop.f32.mrb[0].mxu0
  %v4643 = vadd.f32 %v3569, %v4642
  %v4644 = vpop.f32.mrb[0].mxu0
  %v4645 = vadd.f32 %v3565, %v4644
  %v4646 = vpop.f32.mrb[0].mxu0
  %v4647 = vadd.f32 %v3569, %v4646
  %4648 = vmatprep.mubr.bf16.mxu0 0
  %4649 = vmatmul.mubr.bf16.gmra.mrb[0].mxu0 %v3692
  %v4650 = vpop.f32.mrb[0].mxu0
  %v4651 = vadd.f32 %v3565, %v4650
  %v4652 = vpop.f32.mrb[0].mxu0
  %v4653 = vadd.f32 %v3569, %v4652
  %v4654 = vpop.f32.mrb[0].mxu0
  %v4655 = vadd.f32 %v3565, %v4654
  %v4656 = vpop.f32.mrb[0].mxu0
  %v4657 = vadd.f32 %v3569, %v4656
  %4658 = vmatprep.mubr.bf16.mxu0 0
  %4659 = vmatmul.mubr.bf16.gmra.mrb[0].mxu0 %v3695
  %v4660 = vpop.f32.mrb[0].mxu0
  %v4661 = vadd.f32 %v3565, %v4660
  %v4662 = vpop.f32.mrb[0].mxu0
  %v4663 = vadd.f32 %v3569, %v4662
  %v4664 = vpop.f32.mrb[0].mxu0
  %v4665 = vadd.f32 %v3565, %v4664
  %v4666 = vpop.f32.mrb[0].mxu0
  %v4667 = vadd.f32 %v3569, %v4666
  %4668 = vmatprep.mubr.bf16.mxu0 0
  %4669 = vmatmul.mubr.bf16.gmra.mrb[0].mxu0 %v3698
  %v4670 = vpop.f32.mrb[0].mxu0
  %v4671 = vadd.f32 %v3565, %v4670
  %v4672 = vpop.f32.mrb[0].mxu0
  %v4673 = vadd.f32 %v3569, %v4672
  %v4674 = vpop.f32.mrb[0].mxu0
  %v4675 = vadd.f32 %v3565, %v4674
  %v4676 = vpop.f32.mrb[0].mxu0
  %v4677 = vadd.f32 %v3569, %v4676
  %4678 = vmatprep.mubr.bf16.mxu0 0
  %4679 = vmatmul.mubr.bf16.gmra.mrb[0].mxu0 %v3701
  %v4680 = vpop.f32.mrb[0].mxu0
  %v4681 = vadd.f32 %v3565, %v4680
  %v4682 = vpop.f32.mrb[0].mxu0
  %v4683 = vadd.f32 %v3569, %v4682
  %v4684 = vpop.f32.mrb[0].mxu0
  %v4685 = vadd.f32 %v3565, %v4684
  %v4686 = vpop.f32.mrb[0].mxu0
  %v4687 = vadd.f32 %v3569, %v4686
  %4688 = vmatprep.mubr.bf16.mxu0 0
  %4689 = vmatmul.mubr.bf16.gmra.mrb[0].mxu0 %v3704
  %v4690 = vpop.f32.mrb[0].mxu0
  %v4691 = vadd.f32 %v3565, %v4690
  %v4692 = vpop.f32.mrb[0].mxu0
  %v4693 = vadd.f32 %v3569, %v4692
  %v4694 = vpop.f32.mrb[0].mxu0
  %v4695 = vadd.f32 %v3565, %v4694
  %v4696 = vpop.f32.mrb[0].mxu0
  %v4697 = vadd.f32 %v3569, %v4696
  %4698 = vmatprep.mubr.bf16.mxu0 0
  %4699 = vmatmul.mubr.bf16.gmra.mrb[0].mxu0 %v3707
  %v4700 = vpop.f32.mrb[0].mxu0
  %v4701 = vadd.f32 %v3565, %v4700
  %v4702 = vpop.f32.mrb[0].mxu0
  %v4703 = vadd.f32 %v3569, %v4702
  %v4704 = vpop.f32.mrb[0].mxu0
  %v4705 = vadd.f32 %v3565, %v4704
  %v4706 = vpop.f32.mrb[0].mxu0
  %v4707 = vadd.f32 %v3569, %v4706
  %4708 = vmatprep.mubr.bf16.mxu0 0
  %4709 = vmatmul.mubr.bf16.gmra.mrb[0].mxu0 %v3710
  %v4710 = vpop.f32.mrb[0].mxu0
  %v4711 = vadd.f32 %v3565, %v4710
  %v4712 = vpop.f32.mrb[0].mxu0
  %v4713 = vadd.f32 %v3569, %v4712
  %v4714 = vpop.f32.mrb[0].mxu0
  %v4715 = vadd.f32 %v3565, %v4714
  %v4716 = vpop.f32.mrb[0].mxu0
  %v4717 = vadd.f32 %v3569, %v4716
  %4718 = vmatprep.mubr.bf16.mxu0 0
  %4719 = vmatmul.mubr.bf16.gmra.mrb[0].mxu0 %v3713
  %v4720 = vpop.f32.mrb[0].mxu0
  %v4721 = vadd.f32 %v3565, %v4720
  %v4722 = vpop.f32.mrb[0].mxu0
  %v4723 = vadd.f32 %v3569, %v4722
  %v4724 = vpop.f32.mrb[0].mxu0
  %v4725 = vadd.f32 %v3565, %v4724
  %v4726 = vpop.f32.mrb[0].mxu0
  %v4727 = vadd.f32 %v3569, %v4726
  %4728 = vmatprep.mubr.bf16.mxu0 0
  %4729 = vmatmul.mubr.bf16.gmra.mrb[0].mxu0 %v3716
  %v4730 = vpop.f32.mrb[0].mxu0
  %v4731 = vadd.f32 %v3565, %v4730
  %v4732 = vpop.f32.mrb[0].mxu0
  %v4733 = vadd.f32 %v3569, %v4732
  %v4734 = vpop.f32.mrb[0].mxu0
  %v4735 = vadd.f32 %v3565, %v4734
  %v4736 = vpop.f32.mrb[0].mxu0
  %v4737 = vadd.f32 %v3569, %v4736
  %4738 = vmatprep.mubr.bf16.mxu0 0
  %4739 = vmatmul.mubr.bf16.gmra.mrb[0].mxu0 %v3719
  %v4740 = vpop.f32.mrb[0].mxu0
  %v4741 = vadd.f32 %v3565, %v4740
  %v4742 = vpop.f32.mrb[0].mxu0
  %v4743 = vadd.f32 %v3569, %v4742
  %v4744 = vpop.f32.mrb[0].mxu0
  %v4745 = vadd.f32 %v3565, %v4744
  %v4746 = vpop.f32.mrb[0].mxu0
  %v4747 = vadd.f32 %v3569, %v4746
  %4748 = vmatprep.mubr.bf16.mxu0 0
  %4749 = vmatmul.mubr.bf16.gmra.mrb[0].mxu0 %v3722
  %v4750 = vpop.f32.mrb[0].mxu0
  %v4751 = vadd.f32 %v3565, %v4750
  %v4752 = vpop.f32.mrb[0].mxu0
  %v4753 = vadd.f32 %v3569, %v4752
  %v4754 = vpop.f32.mrb[0].mxu0
  %v4755 = vadd.f32 %v3565, %v4754
  %v4756 = vpop.f32.mrb[0].mxu0
  %v4757 = vadd.f32 %v3569, %v4756
  %4758 = vmatprep.mubr.bf16.mxu0 0
  %4759 = vmatmul.mubr.bf16.gmra.mrb[0].mxu0 %v3725
  %v4760 = vpop.f32.mrb[0].mxu0
  %v4761 = vadd.f32 %v3565, %v4760
  %v4762 = vpop.f32.mrb[0].mxu0
  %v4763 = vadd.f32 %v3569, %v4762
  %v4764 = vpop.f32.mrb[0].mxu0
  %v4765 = vadd.f32 %v3565, %v4764
  %v4766 = vpop.f32.mrb[0].mxu0
  %v4767 = vadd.f32 %v3569, %v4766
  %4768 = vmatprep.mubr.bf16.mxu0 0
  %4769 = vmatmul.mubr.bf16.gmra.mrb[0].mxu0 %v3728
  %v4770 = vpop.f32.mrb[0].mxu0
  %v4771 = vadd.f32 %v3565, %v4770
  %v4772 = vpop.f32.mrb[0].mxu0
  %v4773 = vadd.f32 %v3569, %v4772
  %v4774 = vpop.f32.mrb[0].mxu0
  %v4775 = vadd.f32 %v3565, %v4774
  %v4776 = vpop.f32.mrb[0].mxu0
  %v4777 = vadd.f32 %v3569, %v4776
  %4778 = vmatprep.mubr.bf16.mxu0 0
  %4779 = vmatmul.mubr.bf16.gmra.mrb[0].mxu0 %v3731
  %v4780 = vpop.f32.mrb[0].mxu0
  %v4781 = vadd.f32 %v3565, %v4780
  %v4782 = vpop.f32.mrb[0].mxu0
  %v4783 = vadd.f32 %v3569, %v4782
  %v4784 = vpop.f32.mrb[0].mxu0
  %v4785 = vadd.f32 %v3565, %v4784
  %v4786 = vpop.f32.mrb[0].mxu0
  %v4787 = vadd.f32 %v3569, %v4786
  %4788 = vmatprep.mubr.bf16.mxu0 0
  %4789 = vmatmul.mubr.bf16.gmra.mrb[0].mxu0 %v3734
  %v4790 = vpop.f32.mrb[0].mxu0
  %v4791 = vadd.f32 %v3565, %v4790
  %v4792 = vpop.f32.mrb[0].mxu0
  %v4793 = vadd.f32 %v3569, %v4792
  %v4794 = vpop.f32.mrb[0].mxu0
  %v4795 = vadd.f32 %v3565, %v4794
  %v4796 = vpop.f32.mrb[0].mxu0
  %v4797 = vadd.f32 %v3569, %v4796
  %4798 = vmatprep.mubr.bf16.mxu0 0
  %4799 = vmatmul.mubr.bf16.gmra.mrb[0].mxu0 %v3737
  %v4800 = vpop.f32.mrb[0].mxu0
  %v4801 = vadd.f32 %v3565, %v4800
  %v4802 = vpop.f32.mrb[0].mxu0
  %v4803 = vadd.f32 %v3569, %v4802
  %v4804 = vpop.f32.mrb[0].mxu0
  %v4805 = vadd.f32 %v3565, %v4804
  %v4806 = vpop.f32.mrb[0].mxu0
  %v4807 = vadd.f32 %v3569, %v4806
  %4808 = vmatprep.mubr.bf16.mxu0 0
  %4809 = vmatmul.mubr.bf16.gmra.mrb[0].mxu0 %v3740
  %v4810 = vpop.f32.mrb[0].mxu0
  %v4811 = vadd.f32 %v3565, %v4810
  %v4812 = vpop.f32.mrb[0].mxu0
  %v4813 = vadd.f32 %v3569, %v4812
  %v4814 = vpop.f32.mrb[0].mxu0
  %v4815 = vadd.f32 %v3565, %v4814
  %v4816 = vpop.f32.mrb[0].mxu0
  %v4817 = vadd.f32 %v3569, %v4816
  %4818 = vmatprep.mubr.bf16.mxu0 0
  %4819 = vmatmul.mubr.bf16.gmra.mrb[0].mxu0 %v3743
  %v4820 = vpop.f32.mrb[0].mxu0
  %v4821 = vadd.f32 %v3565, %v4820
  %v4822 = vpop.f32.mrb[0].mxu0
  %v4823 = vadd.f32 %v3569, %v4822
  %v4824 = vpop.f32.mrb[0].mxu0
  %v4825 = vadd.f32 %v3565, %v4824
  %v4826 = vpop.f32.mrb[0].mxu0
  %v4827 = vadd.f32 %v3569, %v4826
  %4828 = vmatprep.mubr.bf16.mxu0 0
  %4829 = vmatmul.mubr.bf16.gmra.mrb[0].mxu0 %v3746
  %v4830 = vpop.f32.mrb[0].mxu0
  %v4831 = vadd.f32 %v3565, %v4830
  %v4832 = vpop.f32.mrb[0].mxu0
  %v4833 = vadd.f32 %v3569, %v4832
  %v4834 = vpop.f32.mrb[0].mxu0
  %v4835 = vadd.f32 %v3565, %v4834
  %v4836 = vpop.f32.mrb[0].mxu0
  %v4837 = vadd.f32 %v3569, %v4836
  %4838 = vmatprep.mubr.bf16.mxu0 0
  %4839 = vmatmul.mubr.bf16.gmra.mrb[0].mxu0 %v3749
  %v4840 = vpop.f32.mrb[0].mxu0
  %v4841 = vadd.f32 %v3565, %v4840
  %v4842 = vpop.f32.mrb[0].mxu0
  %v4843 = vadd.f32 %v3569, %v4842
  %v4844 = vpop.f32.mrb[0].mxu0
  %v4845 = vadd.f32 %v3565, %v4844
  %v4846 = vpop.f32.mrb[0].mxu0
  %v4847 = vadd.f32 %v3569, %v4846
  %4848 = vmatprep.mubr.bf16.mxu0 0
  %4849 = vmatmul.mubr.bf16.gmra.mrb[0].mxu0 %v3752
  %v4850 = vpop.f32.mrb[0].mxu0
  %v4851 = vadd.f32 %v3565, %v4850
  %v4852 = vpop.f32.mrb[0].mxu0
  %v4853 = vadd.f32 %v3569, %v4852
  %v4854 = vpop.f32.mrb[0].mxu0
  %v4855 = vadd.f32 %v3565, %v4854
  %v4856 = vpop.f32.mrb[0].mxu0
  %v4857 = vadd.f32 %v3569, %v4856
  %4858 = vmatprep.mubr.bf16.mxu0 0
  %4859 = vmatmul.mubr.bf16.gmra.mrb[0].mxu0 %v3755
  %v4860 = vpop.f32.mrb[0].mxu0
  %v4861 = vadd.f32 %v3565, %v4860
  %v4862 = vpop.f32.mrb[0].mxu0
  %v4863 = vadd.f32 %v3569, %v4862
  %v4864 = vpop.f32.mrb[0].mxu0
  %v4865 = vadd.f32 %v3565, %v4864
  %v4866 = vpop.f32.mrb[0].mxu0
  %v4867 = vadd.f32 %v3569, %v4866
  %4868 = vmatprep.mubr.bf16.mxu0 0
  %4869 = vmatmul.mubr.bf16.gmra.mrb[0].mxu0 %v3758
  %v4870 = vpop.f32.mrb[0].mxu0
  %v4871 = vadd.f32 %v3565, %v4870
  %v4872 = vpop.f32.mrb[0].mxu0
  %v4873 = vadd.f32 %v3569, %v4872
  %v4874 = vpop.f32.mrb[0].mxu0
  %v4875 = vadd.f32 %v3565, %v4874
  %v4876 = vpop.f32.mrb[0].mxu0
  %v4877 = vadd.f32 %v3569, %v4876
  %4878 = vmatprep.mubr.bf16.mxu0 0
  %4879 = vmatmul.mubr.bf16.gmra.mrb[0].mxu0 %v3761
  %v4880 = vpop.f32.mrb[0].mxu0
  %v4881 = vadd.f32 %v3565, %v4880
  %v4882 = vpop.f32.mrb[0].mxu0
  %v4883 = vadd.f32 %v3569, %v4882
  %v4884 = vpop.f32.mrb[0].mxu0
  %v4885 = vpop.f32.mrb[0].mxu0
  %4886 = vdwg.mxu0
  %4887 = vmatprep.subr.bf16.mxu0 %v3657
  %4888 = vmatpush1.bf16.msra.mxu0 %v3656
  %4889 = vmatprep.subr.bf16.mxu0 %v3667
  %4890 = vmatpush1.bf16.msra.mxu0 %v3666
  %4891 = vmatprep.subr.bf16.mxu0 0
  %4892 = vmatpush1.bf16.msra.mxu0 0
  %4893 = vmatprep.subr.bf16.mxu0 0
  %4894 = vmatpush1.bf16.msra.mxu0 0
  %4895 = vmatprep.subr.bf16.mxu0 0
  %4896 = vmatpush1.bf16.msra.mxu0 0
  %4897 = vmatprep.subr.bf16.mxu0 0
  %4898 = vmatpush1.bf16.msra.mxu0 0
  %4899 = vmatprep.subr.bf16.mxu0 0
  %4900 = vmatpush1.bf16.msra.mxu0 0
  %4901 = vmatprep.subr.bf16.mxu0 0
  %4902 = vmatpush1.bf16.msra.mxu0 0
  %4903 = vmatprep.subr.bf16.mxu0 0
  %4904 = vmatpush1.bf16.msra.mxu0 0
  %4905 = vmatprep.subr.bf16.mxu0 0
  %4906 = vmatpush1.bf16.msra.mxu0 0
  %4907 = vmatprep.subr.bf16.mxu0 0
  %4908 = vmatpush1.bf16.msra.mxu0 0
  %4909 = vmatprep.subr.bf16.mxu0 0
  %4910 = vmatpush1.bf16.msra.mxu0 0
  %4911 = vmatprep.subr.bf16.mxu0 0
  %4912 = vmatpush1.bf16.msra.mxu0 0
  %4913 = vmatprep.subr.bf16.mxu0 0
  %4914 = vmatpush1.bf16.msra.mxu0 0
  %4915 = vmatprep.subr.bf16.mxu0 0
  %4916 = vmatpush1.bf16.msra.mxu0 0
  %4917 = vmatprep.subr.bf16.mxu0 0
  %4918 = vmatpush1.bf16.msra.mxu0 0
  %4919 = vmatprep.mubr.bf16.mxu0 0
  %4920 = vmatmul.mubr.bf16.gmra.mrb[0].mxu0 %v3689
  %v4921 = vpop.f32.mrb[0].mxu0
  %v4922 = vadd.f32 %v3573, %v4921
  %v4923 = vpop.f32.mrb[0].mxu0
  %v4924 = vadd.f32 %v3577, %v4923
  %v4925 = vpop.f32.mrb[0].mxu0
  %v4926 = vadd.f32 %v3573, %v4925
  %v4927 = vpop.f32.mrb[0].mxu0
  %v4928 = vadd.f32 %v3577, %v4927
  %4929 = vmatprep.mubr.bf16.mxu0 0
  %4930 = vmatmul.mubr.bf16.gmra.mrb[0].mxu0 %v3692
  %v4931 = vpop.f32.mrb[0].mxu0
  %v4932 = vadd.f32 %v3573, %v4931
  %v4933 = vpop.f32.mrb[0].mxu0
  %v4934 = vadd.f32 %v3577, %v4933
  %v4935 = vpop.f32.mrb[0].mxu0
  %v4936 = vadd.f32 %v3573, %v4935
  %v4937 = vpop.f32.mrb[0].mxu0
  %v4938 = vadd.f32 %v3577, %v4937
  %4939 = vmatprep.mubr.bf16.mxu0 0
  %4940 = vmatmul.mubr.bf16.gmra.mrb[0].mxu0 %v3695
  %v4941 = vpop.f32.mrb[0].mxu0
  %v4942 = vadd.f32 %v3573, %v4941
  %v4943 = vpop.f32.mrb[0].mxu0
  %v4944 = vadd.f32 %v3577, %v4943
  %v4945 = vpop.f32.mrb[0].mxu0
  %v4946 = vadd.f32 %v3573, %v4945
  %v4947 = vpop.f32.mrb[0].mxu0
  %v4948 = vadd.f32 %v3577, %v4947
  %4949 = vmatprep.mubr.bf16.mxu0 0
  %4950 = vmatmul.mubr.bf16.gmra.mrb[0].mxu0 %v3698
  %v4951 = vpop.f32.mrb[0].mxu0
  %v4952 = vadd.f32 %v3573, %v4951
  %v4953 = vpop.f32.mrb[0].mxu0
  %v4954 = vadd.f32 %v3577, %v4953
  %v4955 = vpop.f32.mrb[0].mxu0
  %v4956 = vadd.f32 %v3573, %v4955
  %v4957 = vpop.f32.mrb[0].mxu0
  %v4958 = vadd.f32 %v3577, %v4957
  %4959 = vmatprep.mubr.bf16.mxu0 0
  %4960 = vmatmul.mubr.bf16.gmra.mrb[0].mxu0 %v3701
  %v4961 = vpop.f32.mrb[0].mxu0
  %v4962 = vadd.f32 %v3573, %v4961
  %v4963 = vpop.f32.mrb[0].mxu0
  %v4964 = vadd.f32 %v3577, %v4963
  %v4965 = vpop.f32.mrb[0].mxu0
  %v4966 = vadd.f32 %v3573, %v4965
  %v4967 = vpop.f32.mrb[0].mxu0
  %v4968 = vadd.f32 %v3577, %v4967
  %4969 = vmatprep.mubr.bf16.mxu0 0
  %4970 = vmatmul.mubr.bf16.gmra.mrb[0].mxu0 %v3704
  %v4971 = vpop.f32.mrb[0].mxu0
  %v4972 = vadd.f32 %v3573, %v4971
  %v4973 = vpop.f32.mrb[0].mxu0
  %v4974 = vadd.f32 %v3577, %v4973
  %v4975 = vpop.f32.mrb[0].mxu0
  %v4976 = vadd.f32 %v3573, %v4975
  %v4977 = vpop.f32.mrb[0].mxu0
  %v4978 = vadd.f32 %v3577, %v4977
  %4979 = vmatprep.mubr.bf16.mxu0 0
  %4980 = vmatmul.mubr.bf16.gmra.mrb[0].mxu0 %v3707
  %v4981 = vpop.f32.mrb[0].mxu0
  %v4982 = vadd.f32 %v3573, %v4981
  %v4983 = vpop.f32.mrb[0].mxu0
  %v4984 = vadd.f32 %v3577, %v4983
  %v4985 = vpop.f32.mrb[0].mxu0
  %v4986 = vadd.f32 %v3573, %v4985
  %v4987 = vpop.f32.mrb[0].mxu0
  %v4988 = vadd.f32 %v3577, %v4987
  %4989 = vmatprep.mubr.bf16.mxu0 0
  %4990 = vmatmul.mubr.bf16.gmra.mrb[0].mxu0 %v3710
  %v4991 = vpop.f32.mrb[0].mxu0
  %v4992 = vadd.f32 %v3573, %v4991
  %v4993 = vpop.f32.mrb[0].mxu0
  %v4994 = vadd.f32 %v3577, %v4993
  %v4995 = vpop.f32.mrb[0].mxu0
  %v4996 = vadd.f32 %v3573, %v4995
  %v4997 = vpop.f32.mrb[0].mxu0
  %v4998 = vadd.f32 %v3577, %v4997
  %4999 = vmatprep.mubr.bf16.mxu0 0
  %5000 = vmatmul.mubr.bf16.gmra.mrb[0].mxu0 %v3713
  %v5001 = vpop.f32.mrb[0].mxu0
  %v5002 = vadd.f32 %v3573, %v5001
  %v5003 = vpop.f32.mrb[0].mxu0
  %v5004 = vadd.f32 %v3577, %v5003
  %v5005 = vpop.f32.mrb[0].mxu0
  %v5006 = vadd.f32 %v3573, %v5005
  %v5007 = vpop.f32.mrb[0].mxu0
  %v5008 = vadd.f32 %v3577, %v5007
  %5009 = vmatprep.mubr.bf16.mxu0 0
  %5010 = vmatmul.mubr.bf16.gmra.mrb[0].mxu0 %v3716
  %v5011 = vpop.f32.mrb[0].mxu0
  %v5012 = vadd.f32 %v3573, %v5011
  %v5013 = vpop.f32.mrb[0].mxu0
  %v5014 = vadd.f32 %v3577, %v5013
  %v5015 = vpop.f32.mrb[0].mxu0
  %v5016 = vadd.f32 %v3573, %v5015
  %v5017 = vpop.f32.mrb[0].mxu0
  %v5018 = vadd.f32 %v3577, %v5017
  %5019 = vmatprep.mubr.bf16.mxu0 0
  %5020 = vmatmul.mubr.bf16.gmra.mrb[0].mxu0 %v3719
  %v5021 = vpop.f32.mrb[0].mxu0
  %v5022 = vadd.f32 %v3573, %v5021
  %v5023 = vpop.f32.mrb[0].mxu0
  %v5024 = vadd.f32 %v3577, %v5023
  %v5025 = vpop.f32.mrb[0].mxu0
  %v5026 = vadd.f32 %v3573, %v5025
  %v5027 = vpop.f32.mrb[0].mxu0
  %v5028 = vadd.f32 %v3577, %v5027
  %5029 = vmatprep.mubr.bf16.mxu0 0
  %5030 = vmatmul.mubr.bf16.gmra.mrb[0].mxu0 %v3722
  %v5031 = vpop.f32.mrb[0].mxu0
  %v5032 = vadd.f32 %v3573, %v5031
  %v5033 = vpop.f32.mrb[0].mxu0
  %v5034 = vadd.f32 %v3577, %v5033
  %v5035 = vpop.f32.mrb[0].mxu0
  %v5036 = vadd.f32 %v3573, %v5035
  %v5037 = vpop.f32.mrb[0].mxu0
  %v5038 = vadd.f32 %v3577, %v5037
  %5039 = vmatprep.mubr.bf16.mxu0 0
  %5040 = vmatmul.mubr.bf16.gmra.mrb[0].mxu0 %v3725
  %v5041 = vpop.f32.mrb[0].mxu0
  %v5042 = vadd.f32 %v3573, %v5041
  %v5043 = vpop.f32.mrb[0].mxu0
  %v5044 = vadd.f32 %v3577, %v5043
  %v5045 = vpop.f32.mrb[0].mxu0
  %v5046 = vadd.f32 %v3573, %v5045
  %v5047 = vpop.f32.mrb[0].mxu0
  %v5048 = vadd.f32 %v3577, %v5047
  %5049 = vmatprep.mubr.bf16.mxu0 0
  %5050 = vmatmul.mubr.bf16.gmra.mrb[0].mxu0 %v3728
  %v5051 = vpop.f32.mrb[0].mxu0
  %v5052 = vadd.f32 %v3573, %v5051
  %v5053 = vpop.f32.mrb[0].mxu0
  %v5054 = vadd.f32 %v3577, %v5053
  %v5055 = vpop.f32.mrb[0].mxu0
  %v5056 = vadd.f32 %v3573, %v5055
  %v5057 = vpop.f32.mrb[0].mxu0
  %v5058 = vadd.f32 %v3577, %v5057
  %5059 = vmatprep.mubr.bf16.mxu0 0
  %5060 = vmatmul.mubr.bf16.gmra.mrb[0].mxu0 %v3731
  %v5061 = vpop.f32.mrb[0].mxu0
  %v5062 = vadd.f32 %v3573, %v5061
  %v5063 = vpop.f32.mrb[0].mxu0
  %v5064 = vadd.f32 %v3577, %v5063
  %v5065 = vpop.f32.mrb[0].mxu0
  %v5066 = vadd.f32 %v3573, %v5065
  %v5067 = vpop.f32.mrb[0].mxu0
  %v5068 = vadd.f32 %v3577, %v5067
  %5069 = vmatprep.mubr.bf16.mxu0 0
  %5070 = vmatmul.mubr.bf16.gmra.mrb[0].mxu0 %v3734
  %v5071 = vpop.f32.mrb[0].mxu0
  %v5072 = vadd.f32 %v3573, %v5071
  %v5073 = vpop.f32.mrb[0].mxu0
  %v5074 = vadd.f32 %v3577, %v5073
  %v5075 = vpop.f32.mrb[0].mxu0
  %v5076 = vadd.f32 %v3573, %v5075
  %v5077 = vpop.f32.mrb[0].mxu0
  %v5078 = vadd.f32 %v3577, %v5077
  %5079 = vmatprep.mubr.bf16.mxu0 0
  %5080 = vmatmul.mubr.bf16.gmra.mrb[0].mxu0 %v3737
  %v5081 = vpop.f32.mrb[0].mxu0
  %v5082 = vadd.f32 %v3573, %v5081
  %v5083 = vpop.f32.mrb[0].mxu0
  %v5084 = vadd.f32 %v3577, %v5083
  %v5085 = vpop.f32.mrb[0].mxu0
  %v5086 = vadd.f32 %v3573, %v5085
  %v5087 = vpop.f32.mrb[0].mxu0
  %v5088 = vadd.f32 %v3577, %v5087
  %5089 = vmatprep.mubr.bf16.mxu0 0
  %5090 = vmatmul.mubr.bf16.gmra.mrb[0].mxu0 %v3740
  %v5091 = vpop.f32.mrb[0].mxu0
  %v5092 = vadd.f32 %v3573, %v5091
  %v5093 = vpop.f32.mrb[0].mxu0
  %v5094 = vadd.f32 %v3577, %v5093
  %v5095 = vpop.f32.mrb[0].mxu0
  %v5096 = vadd.f32 %v3573, %v5095
  %v5097 = vpop.f32.mrb[0].mxu0
  %v5098 = vadd.f32 %v3577, %v5097
  %5099 = vmatprep.mubr.bf16.mxu0 0
  %5100 = vmatmul.mubr.bf16.gmra.mrb[0].mxu0 %v3743
  %v5101 = vpop.f32.mrb[0].mxu0
  %v5102 = vadd.f32 %v3573, %v5101
  %v5103 = vpop.f32.mrb[0].mxu0
  %v5104 = vadd.f32 %v3577, %v5103
  %v5105 = vpop.f32.mrb[0].mxu0
  %v5106 = vadd.f32 %v3573, %v5105
  %v5107 = vpop.f32.mrb[0].mxu0
  %v5108 = vadd.f32 %v3577, %v5107
  %5109 = vmatprep.mubr.bf16.mxu0 0
  %5110 = vmatmul.mubr.bf16.gmra.mrb[0].mxu0 %v3746
  %v5111 = vpop.f32.mrb[0].mxu0
  %v5112 = vadd.f32 %v3573, %v5111
  %v5113 = vpop.f32.mrb[0].mxu0
  %v5114 = vadd.f32 %v3577, %v5113
  %v5115 = vpop.f32.mrb[0].mxu0
  %v5116 = vadd.f32 %v3573, %v5115
  %v5117 = vpop.f32.mrb[0].mxu0
  %v5118 = vadd.f32 %v3577, %v5117
  %5119 = vmatprep.mubr.bf16.mxu0 0
  %5120 = vmatmul.mubr.bf16.gmra.mrb[0].mxu0 %v3749
  %v5121 = vpop.f32.mrb[0].mxu0
  %v5122 = vadd.f32 %v3573, %v5121
  %v5123 = vpop.f32.mrb[0].mxu0
  %v5124 = vadd.f32 %v3577, %v5123
  %v5125 = vpop.f32.mrb[0].mxu0
  %v5126 = vadd.f32 %v3573, %v5125
  %v5127 = vpop.f32.mrb[0].mxu0
  %v5128 = vadd.f32 %v3577, %v5127
  %5129 = vmatprep.mubr.bf16.mxu0 0
  %5130 = vmatmul.mubr.bf16.gmra.mrb[0].mxu0 %v3752
  %v5131 = vpop.f32.mrb[0].mxu0
  %v5132 = vadd.f32 %v3573, %v5131
  %v5133 = vpop.f32.mrb[0].mxu0
  %v5134 = vadd.f32 %v3577, %v5133
  %v5135 = vpop.f32.mrb[0].mxu0
  %v5136 = vadd.f32 %v3573, %v5135
  %v5137 = vpop.f32.mrb[0].mxu0
  %v5138 = vadd.f32 %v3577, %v5137
  %5139 = vmatprep.mubr.bf16.mxu0 0
  %5140 = vmatmul.mubr.bf16.gmra.mrb[0].mxu0 %v3755
  %v5141 = vpop.f32.mrb[0].mxu0
  %v5142 = vadd.f32 %v3573, %v5141
  %v5143 = vpop.f32.mrb[0].mxu0
  %v5144 = vadd.f32 %v3577, %v5143
  %v5145 = vpop.f32.mrb[0].mxu0
  %v5146 = vadd.f32 %v3573, %v5145
  %v5147 = vpop.f32.mrb[0].mxu0
  %v5148 = vadd.f32 %v3577, %v5147
  %5149 = vmatprep.mubr.bf16.mxu0 0
  %5150 = vmatmul.mubr.bf16.gmra.mrb[0].mxu0 %v3758
  %v5151 = vpop.f32.mrb[0].mxu0
  %v5152 = vadd.f32 %v3573, %v5151
  %v5153 = vpop.f32.mrb[0].mxu0
  %v5154 = vadd.f32 %v3577, %v5153
  %v5155 = vpop.f32.mrb[0].mxu0
  %v5156 = vadd.f32 %v3573, %v5155
  %v5157 = vpop.f32.mrb[0].mxu0
  %v5158 = vadd.f32 %v3577, %v5157
  %5159 = vmatprep.mubr.bf16.mxu0 0
  %5160 = vmatmul.mubr.bf16.gmra.mrb[0].mxu0 %v3761
  %v5161 = vpop.f32.mrb[0].mxu0
  %v5162 = vadd.f32 %v3573, %v5161
  %v5163 = vpop.f32.mrb[0].mxu0
  %v5164 = vadd.f32 %v3577, %v5163
  %v5165 = vpop.f32.mrb[0].mxu0
  %v5166 = vpop.f32.mrb[0].mxu0
  %5167 = vdwg.mxu0
  %v5168 = vsub.f32 0.0, %v3798
  %v5169 = vsub.f32 0.0, %v3800
  %v5170 = vsub.f32 0.0, %v4079
  %v5171 = vsub.f32 0.0, %v4081
  %v5172 = vsub.f32 0.0, %v4360
  %v5173 = vsub.f32 0.0, %v4362
  %v5174 = vsub.f32 0.0, %v4641
  %v5175 = vsub.f32 0.0, %v4643
  %v5176 = vsub.f32 0.0, %v4922
  %v5177 = vsub.f32 0.0, %v4924
  %v5178 = vsub.f32 0.0, %v3802
  %v5179 = vsub.f32 0.0, %v3804
  %v5180 = vsub.f32 0.0, %v4083
  %v5181 = vsub.f32 0.0, %v4085
  %v5182 = vsub.f32 0.0, %v4364
  %v5183 = vsub.f32 0.0, %v4366
  %v5184 = vsub.f32 0.0, %v4645
  %v5185 = vsub.f32 0.0, %v4647
  %v5186 = vsub.f32 0.0, %v4926
  %v5187 = vsub.f32 0.0, %v4928
  %v5188 = vsub.f32 0.0, %v3808
  %v5189 = vsub.f32 0.0, %v3810
  %v5190 = vsub.f32 0.0, %v4089
  %v5191 = vsub.f32 0.0, %v4091
  %v5192 = vsub.f32 0.0, %v4370
  %v5193 = vsub.f32 0.0, %v4372
  %v5194 = vsub.f32 0.0, %v4651
  %v5195 = vsub.f32 0.0, %v4653
  %v5196 = vsub.f32 0.0, %v4932
  %v5197 = vsub.f32 0.0, %v4934
  %v5198 = vsub.f32 0.0, %v3812
  %v5199 = vsub.f32 0.0, %v3814
  %v5200 = vsub.f32 0.0, %v4093
  %v5201 = vsub.f32 0.0, %v4095
  %v5202 = vsub.f32 0.0, %v4374
  %v5203 = vsub.f32 0.0, %v4376
  %v5204 = vsub.f32 0.0, %v4655
  %v5205 = vsub.f32 0.0, %v4657
  %v5206 = vsub.f32 0.0, %v4936
  %v5207 = vsub.f32 0.0, %v4938
  %v5208 = vsub.f32 0.0, %v3818
  %v5209 = vsub.f32 0.0, %v3820
  %v5210 = vsub.f32 0.0, %v4099
  %v5211 = vsub.f32 0.0, %v4101
  %v5212 = vsub.f32 0.0, %v4380
  %v5213 = vsub.f32 0.0, %v4382
  %v5214 = vsub.f32 0.0, %v4661
  %v5215 = vsub.f32 0.0, %v4663
  %v5216 = vsub.f32 0.0, %v4942
  %v5217 = vsub.f32 0.0, %v4944
  %v5218 = vsub.f32 0.0, %v3822
  %v5219 = vsub.f32 0.0, %v3824
  %v5220 = vsub.f32 0.0, %v4103
  %v5221 = vsub.f32 0.0, %v4105
  %v5222 = vsub.f32 0.0, %v4384
  %v5223 = vsub.f32 0.0, %v4386
  %v5224 = vsub.f32 0.0, %v4665
  %v5225 = vsub.f32 0.0, %v4667
  %v5226 = vsub.f32 0.0, %v4946
  %v5227 = vsub.f32 0.0, %v4948
  %v5228 = vsub.f32 0.0, %v3828
  %v5229 = vsub.f32 0.0, %v3830
  %v5230 = vsub.f32 0.0, %v4109
  %v5231 = vsub.f32 0.0, %v4111
  %v5232 = vsub.f32 0.0, %v4390
  %v5233 = vsub.f32 0.0, %v4392
  %v5234 = vsub.f32 0.0, %v4671
  %v5235 = vsub.f32 0.0, %v4673
  %v5236 = vsub.f32 0.0, %v4952
  %v5237 = vsub.f32 0.0, %v4954
  %v5238 = vsub.f32 0.0, %v3832
  %v5239 = vsub.f32 0.0, %v3834
  %v5240 = vsub.f32 0.0, %v4113
  %v5241 = vsub.f32 0.0, %v4115
  %v5242 = vsub.f32 0.0, %v4394
  %v5243 = vsub.f32 0.0, %v4396
  %v5244 = vsub.f32 0.0, %v4675
  %v5245 = vsub.f32 0.0, %v4677
  %v5246 = vsub.f32 0.0, %v4956
  %v5247 = vsub.f32 0.0, %v4958
  %v5248 = vsub.f32 0.0, %v3838
  %v5249 = vsub.f32 0.0, %v3840
  %v5250 = vsub.f32 0.0, %v4119
  %v5251 = vsub.f32 0.0, %v4121
  %v5252 = vsub.f32 0.0, %v4400
  %v5253 = vsub.f32 0.0, %v4402
  %v5254 = vsub.f32 0.0, %v4681
  %v5255 = vsub.f32 0.0, %v4683
  %v5256 = vsub.f32 0.0, %v4962
  %v5257 = vsub.f32 0.0, %v4964
  %v5258 = vsub.f32 0.0, %v3842
  %v5259 = vsub.f32 0.0, %v3844
  %v5260 = vsub.f32 0.0, %v4123
  %v5261 = vsub.f32 0.0, %v4125
  %v5262 = vsub.f32 0.0, %v4404
  %v5263 = vsub.f32 0.0, %v4406
  %v5264 = vsub.f32 0.0, %v4685
  %v5265 = vsub.f32 0.0, %v4687
  %v5266 = vsub.f32 0.0, %v4966
  %v5267 = vsub.f32 0.0, %v4968
  %v5268 = vsub.f32 0.0, %v3848
  %v5269 = vsub.f32 0.0, %v3850
  %v5270 = vsub.f32 0.0, %v4129
  %v5271 = vsub.f32 0.0, %v4131
  %v5272 = vsub.f32 0.0, %v4410
  %v5273 = vsub.f32 0.0, %v4412
  %v5274 = vsub.f32 0.0, %v4691
  %v5275 = vsub.f32 0.0, %v4693
  %v5276 = vsub.f32 0.0, %v4972
  %v5277 = vsub.f32 0.0, %v4974
  %v5278 = vsub.f32 0.0, %v3852
  %v5279 = vsub.f32 0.0, %v3854
  %v5280 = vsub.f32 0.0, %v4133
  %v5281 = vsub.f32 0.0, %v4135
  %v5282 = vsub.f32 0.0, %v4414
  %v5283 = vsub.f32 0.0, %v4416
  %v5284 = vsub.f32 0.0, %v4695
  %v5285 = vsub.f32 0.0, %v4697
  %v5286 = vsub.f32 0.0, %v4976
  %v5287 = vsub.f32 0.0, %v4978
  %v5288 = vsub.f32 0.0, %v3858
  %v5289 = vsub.f32 0.0, %v3860
  %v5290 = vsub.f32 0.0, %v4139
  %v5291 = vsub.f32 0.0, %v4141
  %v5292 = vsub.f32 0.0, %v4420
  %v5293 = vsub.f32 0.0, %v4422
  %v5294 = vsub.f32 0.0, %v4701
  %v5295 = vsub.f32 0.0, %v4703
  %v5296 = vsub.f32 0.0, %v4982
  %v5297 = vsub.f32 0.0, %v4984
  %v5298 = vsub.f32 0.0, %v3862
  %v5299 = vsub.f32 0.0, %v3864
  %v5300 = vsub.f32 0.0, %v4143
  %v5301 = vsub.f32 0.0, %v4145
  %v5302 = vsub.f32 0.0, %v4424
  %v5303 = vsub.f32 0.0, %v4426
  %v5304 = vsub.f32 0.0, %v4705
  %v5305 = vsub.f32 0.0, %v4707
  %v5306 = vsub.f32 0.0, %v4986
  %v5307 = vsub.f32 0.0, %v4988
  %v5308 = vsub.f32 0.0, %v3868
  %v5309 = vsub.f32 0.0, %v3870
  %v5310 = vsub.f32 0.0, %v4149
  %v5311 = vsub.f32 0.0, %v4151
  %v5312 = vsub.f32 0.0, %v4430
  %v5313 = vsub.f32 0.0, %v4432
  %v5314 = vsub.f32 0.0, %v4711
  %v5315 = vsub.f32 0.0, %v4713
  %v5316 = vsub.f32 0.0, %v4992
  %v5317 = vsub.f32 0.0, %v4994
  %v5318 = vsub.f32 0.0, %v3872
  %v5319 = vsub.f32 0.0, %v3874
  %v5320 = vsub.f32 0.0, %v4153
  %v5321 = vsub.f32 0.0, %v4155
  %v5322 = vsub.f32 0.0, %v4434
  %v5323 = vsub.f32 0.0, %v4436
  %v5324 = vsub.f32 0.0, %v4715
  %v5325 = vsub.f32 0.0, %v4717
  %v5326 = vsub.f32 0.0, %v4996
  %v5327 = vsub.f32 0.0, %v4998
  %v5328 = vsub.f32 0.0, %v3878
  %v5329 = vsub.f32 0.0, %v3880
  %v5330 = vsub.f32 0.0, %v4159
  %v5331 = vsub.f32 0.0, %v4161
  %v5332 = vsub.f32 0.0, %v4440
  %v5333 = vsub.f32 0.0, %v4442
  %v5334 = vsub.f32 0.0, %v4721
  %v5335 = vsub.f32 0.0, %v4723
  %v5336 = vsub.f32 0.0, %v5002
  %v5337 = vsub.f32 0.0, %v5004
  %v5338 = vsub.f32 0.0, %v3882
  %v5339 = vsub.f32 0.0, %v3884
  %v5340 = vsub.f32 0.0, %v4163
  %v5341 = vsub.f32 0.0, %v4165
  %v5342 = vsub.f32 0.0, %v4444
  %v5343 = vsub.f32 0.0, %v4446
  %v5344 = vsub.f32 0.0, %v4725
  %v5345 = vsub.f32 0.0, %v4727
  %v5346 = vsub.f32 0.0, %v5006
  %v5347 = vsub.f32 0.0, %v5008
  %v5348 = vsub.f32 0.0, %v3888
  %v5349 = vsub.f32 0.0, %v3890
  %v5350 = vsub.f32 0.0, %v4169
  %v5351 = vsub.f32 0.0, %v4171
  %v5352 = vsub.f32 0.0, %v4450
  %v5353 = vsub.f32 0.0, %v4452
  %v5354 = vsub.f32 0.0, %v4731
  %v5355 = vsub.f32 0.0, %v4733
  %v5356 = vsub.f32 0.0, %v5012
  %v5357 = vsub.f32 0.0, %v5014
  %v5358 = vsub.f32 0.0, %v3892
  %v5359 = vsub.f32 0.0, %v3894
  %v5360 = vsub.f32 0.0, %v4173
  %v5361 = vsub.f32 0.0, %v4175
  %v5362 = vsub.f32 0.0, %v4454
  %v5363 = vsub.f32 0.0, %v4456
  %v5364 = vsub.f32 0.0, %v4735
  %v5365 = vsub.f32 0.0, %v4737
  %v5366 = vsub.f32 0.0, %v5016
  %v5367 = vsub.f32 0.0, %v5018
  %v5368 = vsub.f32 0.0, %v3898
  %v5369 = vsub.f32 0.0, %v3900
  %v5370 = vsub.f32 0.0, %v4179
  %v5371 = vsub.f32 0.0, %v4181
  %v5372 = vsub.f32 0.0, %v4460
  %v5373 = vsub.f32 0.0, %v4462
  %v5374 = vsub.f32 0.0, %v4741
  %v5375 = vsub.f32 0.0, %v4743
  %v5376 = vsub.f32 0.0, %v5022
  %v5377 = vsub.f32 0.0, %v5024
  %v5378 = vsub.f32 0.0, %v3902
  %v5379 = vsub.f32 0.0, %v3904
  %v5380 = vsub.f32 0.0, %v4183
  %v5381 = vsub.f32 0.0, %v4185
  %v5382 = vsub.f32 0.0, %v4464
  %v5383 = vsub.f32 0.0, %v4466
  %v5384 = vsub.f32 0.0, %v4745
  %v5385 = vsub.f32 0.0, %v4747
  %v5386 = vsub.f32 0.0, %v5026
  %v5387 = vsub.f32 0.0, %v5028
  %v5388 = vsub.f32 0.0, %v3908
  %v5389 = vsub.f32 0.0, %v3910
  %v5390 = vsub.f32 0.0, %v4189
  %v5391 = vsub.f32 0.0, %v4191
  %v5392 = vsub.f32 0.0, %v4470
  %v5393 = vsub.f32 0.0, %v4472
  %v5394 = vsub.f32 0.0, %v4751
  %v5395 = vsub.f32 0.0, %v4753
  %v5396 = vsub.f32 0.0, %v5032
  %v5397 = vsub.f32 0.0, %v5034
  %v5398 = vsub.f32 0.0, %v3912
  %v5399 = vsub.f32 0.0, %v3914
  %v5400 = vsub.f32 0.0, %v4193
  %v5401 = vsub.f32 0.0, %v4195
  %v5402 = vsub.f32 0.0, %v4474
  %v5403 = vsub.f32 0.0, %v4476
  %v5404 = vsub.f32 0.0, %v4755
  %v5405 = vsub.f32 0.0, %v4757
  %v5406 = vsub.f32 0.0, %v5036
  %v5407 = vsub.f32 0.0, %v5038
  %v5408 = vsub.f32 0.0, %v3918
  %v5409 = vsub.f32 0.0, %v3920
  %v5410 = vsub.f32 0.0, %v4199
  %v5411 = vsub.f32 0.0, %v4201
  %v5412 = vsub.f32 0.0, %v4480
  %v5413 = vsub.f32 0.0, %v4482
  %v5414 = vsub.f32 0.0, %v4761
  %v5415 = vsub.f32 0.0, %v4763
  %v5416 = vsub.f32 0.0, %v5042
  %v5417 = vsub.f32 0.0, %v5044
  %v5418 = vsub.f32 0.0, %v3922
  %v5419 = vsub.f32 0.0, %v3924
  %v5420 = vsub.f32 0.0, %v4203
  %v5421 = vsub.f32 0.0, %v4205
  %v5422 = vsub.f32 0.0, %v4484
  %v5423 = vsub.f32 0.0, %v4486
  %v5424 = vsub.f32 0.0, %v4765
  %v5425 = vsub.f32 0.0, %v4767
  %v5426 = vsub.f32 0.0, %v5046
  %v5427 = vsub.f32 0.0, %v5048
  %v5428 = vsub.f32 0.0, %v3928
  %v5429 = vsub.f32 0.0, %v3930
  %v5430 = vsub.f32 0.0, %v4209
  %v5431 = vsub.f32 0.0, %v4211
  %v5432 = vsub.f32 0.0, %v4490
  %v5433 = vsub.f32 0.0, %v4492
  %v5434 = vsub.f32 0.0, %v4771
  %v5435 = vsub.f32 0.0, %v4773
  %v5436 = vsub.f32 0.0, %v5052
  %v5437 = vsub.f32 0.0, %v5054
  %v5438 = vsub.f32 0.0, %v3932
  %v5439 = vsub.f32 0.0, %v3934
  %v5440 = vsub.f32 0.0, %v4213
  %v5441 = vsub.f32 0.0, %v4215
  %v5442 = vsub.f32 0.0, %v4494
  %v5443 = vsub.f32 0.0, %v4496
  %v5444 = vsub.f32 0.0, %v4775
  %v5445 = vsub.f32 0.0, %v4777
  %v5446 = vsub.f32 0.0, %v5056
  %v5447 = vsub.f32 0.0, %v5058
  %v5448 = vsub.f32 0.0, %v3938
  %v5449 = vsub.f32 0.0, %v3940
  %v5450 = vsub.f32 0.0, %v4219
  %v5451 = vsub.f32 0.0, %v4221
  %v5452 = vsub.f32 0.0, %v4500
  %v5453 = vsub.f32 0.0, %v4502
  %v5454 = vsub.f32 0.0, %v4781
  %v5455 = vsub.f32 0.0, %v4783
  %v5456 = vsub.f32 0.0, %v5062
  %v5457 = vsub.f32 0.0, %v5064
  %v5458 = vsub.f32 0.0, %v3942
  %v5459 = vsub.f32 0.0, %v3944
  %v5460 = vsub.f32 0.0, %v4223
  %v5461 = vsub.f32 0.0, %v4225
  %v5462 = vsub.f32 0.0, %v4504
  %v5463 = vsub.f32 0.0, %v4506
  %v5464 = vsub.f32 0.0, %v4785
  %v5465 = vsub.f32 0.0, %v4787
  %v5466 = vsub.f32 0.0, %v5066
  %v5467 = vsub.f32 0.0, %v5068
  %v5468 = vsub.f32 0.0, %v3948
  %v5469 = vsub.f32 0.0, %v3950
  %v5470 = vsub.f32 0.0, %v4229
  %v5471 = vsub.f32 0.0, %v4231
  %v5472 = vsub.f32 0.0, %v4510
  %v5473 = vsub.f32 0.0, %v4512
  %v5474 = vsub.f32 0.0, %v4791
  %v5475 = vsub.f32 0.0, %v4793
  %v5476 = vsub.f32 0.0, %v5072
  %v5477 = vsub.f32 0.0, %v5074
  %v5478 = vsub.f32 0.0, %v3952
  %v5479 = vsub.f32 0.0, %v3954
  %v5480 = vsub.f32 0.0, %v4233
  %v5481 = vsub.f32 0.0, %v4235
  %v5482 = vsub.f32 0.0, %v4514
  %v5483 = vsub.f32 0.0, %v4516
  %v5484 = vsub.f32 0.0, %v4795
  %v5485 = vsub.f32 0.0, %v4797
  %v5486 = vsub.f32 0.0, %v5076
  %v5487 = vsub.f32 0.0, %v5078
  %v5488 = vsub.f32 0.0, %v3958
  %v5489 = vsub.f32 0.0, %v3960
  %v5490 = vsub.f32 0.0, %v4239
  %v5491 = vsub.f32 0.0, %v4241
  %v5492 = vsub.f32 0.0, %v4520
  %v5493 = vsub.f32 0.0, %v4522
  %v5494 = vsub.f32 0.0, %v4801
  %v5495 = vsub.f32 0.0, %v4803
  %v5496 = vsub.f32 0.0, %v5082
  %v5497 = vsub.f32 0.0, %v5084
  %v5498 = vsub.f32 0.0, %v3962
  %v5499 = vsub.f32 0.0, %v3964
  %v5500 = vsub.f32 0.0, %v4243
  %v5501 = vsub.f32 0.0, %v4245
  %v5502 = vsub.f32 0.0, %v4524
  %v5503 = vsub.f32 0.0, %v4526
  %v5504 = vsub.f32 0.0, %v4805
  %v5505 = vsub.f32 0.0, %v4807
  %v5506 = vsub.f32 0.0, %v5086
  %v5507 = vsub.f32 0.0, %v5088
  %v5508 = vsub.f32 0.0, %v3968
  %v5509 = vsub.f32 0.0, %v3970
  %v5510 = vsub.f32 0.0, %v4249
  %v5511 = vsub.f32 0.0, %v4251
  %v5512 = vsub.f32 0.0, %v4530
  %v5513 = vsub.f32 0.0, %v4532
  %v5514 = vsub.f32 0.0, %v4811
  %v5515 = vsub.f32 0.0, %v4813
  %v5516 = vsub.f32 0.0, %v5092
  %v5517 = vsub.f32 0.0, %v5094
  %v5518 = vsub.f32 0.0, %v3972
  %v5519 = vsub.f32 0.0, %v3974
  %v5520 = vsub.f32 0.0, %v4253
  %v5521 = vsub.f32 0.0, %v4255
  %v5522 = vsub.f32 0.0, %v4534
  %v5523 = vsub.f32 0.0, %v4536
  %v5524 = vsub.f32 0.0, %v4815
  %v5525 = vsub.f32 0.0, %v4817
  %v5526 = vsub.f32 0.0, %v5096
  %v5527 = vsub.f32 0.0, %v5098
  %v5528 = vsub.f32 0.0, %v3978
  %v5529 = vsub.f32 0.0, %v3980
  %v5530 = vsub.f32 0.0, %v4259
  %v5531 = vsub.f32 0.0, %v4261
  %v5532 = vsub.f32 0.0, %v4540
  %v5533 = vsub.f32 0.0, %v4542
  %v5534 = vsub.f32 0.0, %v4821
  %v5535 = vsub.f32 0.0, %v4823
  %v5536 = vsub.f32 0.0, %v5102
  %v5537 = vsub.f32 0.0, %v5104
  %v5538 = vsub.f32 0.0, %v3982
  %v5539 = vsub.f32 0.0, %v3984
  %v5540 = vsub.f32 0.0, %v4263
  %v5541 = vsub.f32 0.0, %v4265
  %v5542 = vsub.f32 0.0, %v4544
  %v5543 = vsub.f32 0.0, %v4546
  %v5544 = vsub.f32 0.0, %v4825
  %v5545 = vsub.f32 0.0, %v4827
  %v5546 = vsub.f32 0.0, %v5106
  %v5547 = vsub.f32 0.0, %v5108
  %v5548 = vsub.f32 0.0, %v3988
  %v5549 = vsub.f32 0.0, %v3990
  %v5550 = vsub.f32 0.0, %v4269
  %v5551 = vsub.f32 0.0, %v4271
  %v5552 = vsub.f32 0.0, %v4550
  %v5553 = vsub.f32 0.0, %v4552
  %v5554 = vsub.f32 0.0, %v4831
  %v5555 = vsub.f32 0.0, %v4833
  %v5556 = vsub.f32 0.0, %v5112
  %v5557 = vsub.f32 0.0, %v5114
  %v5558 = vsub.f32 0.0, %v3992
  %v5559 = vsub.f32 0.0, %v3994
  %v5560 = vsub.f32 0.0, %v4273
  %v5561 = vsub.f32 0.0, %v4275
  %v5562 = vsub.f32 0.0, %v4554
  %v5563 = vsub.f32 0.0, %v4556
  %v5564 = vsub.f32 0.0, %v4835
  %v5565 = vsub.f32 0.0, %v4837
  %v5566 = vsub.f32 0.0, %v5116
  %v5567 = vsub.f32 0.0, %v5118
  %v5568 = vsub.f32 0.0, %v3998
  %v5569 = vsub.f32 0.0, %v4000
  %v5570 = vsub.f32 0.0, %v4279
  %v5571 = vsub.f32 0.0, %v4281
  %v5572 = vsub.f32 0.0, %v4560
  %v5573 = vsub.f32 0.0, %v4562
  %v5574 = vsub.f32 0.0, %v4841
  %v5575 = vsub.f32 0.0, %v4843
  %v5576 = vsub.f32 0.0, %v5122
  %v5577 = vsub.f32 0.0, %v5124
  %v5578 = vsub.f32 0.0, %v4002
  %v5579 = vsub.f32 0.0, %v4004
  %v5580 = vsub.f32 0.0, %v4283
  %v5581 = vsub.f32 0.0, %v4285
  %v5582 = vsub.f32 0.0, %v4564
  %v5583 = vsub.f32 0.0, %v4566
  %v5584 = vsub.f32 0.0, %v4845
  %v5585 = vsub.f32 0.0, %v4847
  %v5586 = vsub.f32 0.0, %v5126
  %v5587 = vsub.f32 0.0, %v5128
  %v5588 = vsub.f32 0.0, %v4008
  %v5589 = vsub.f32 0.0, %v4010
  %v5590 = vsub.f32 0.0, %v4289
  %v5591 = vsub.f32 0.0, %v4291
  %v5592 = vsub.f32 0.0, %v4570
  %v5593 = vsub.f32 0.0, %v4572
  %v5594 = vsub.f32 0.0, %v4851
  %v5595 = vsub.f32 0.0, %v4853
  %v5596 = vsub.f32 0.0, %v5132
  %v5597 = vsub.f32 0.0, %v5134
  %v5598 = vsub.f32 0.0, %v4012
  %v5599 = vsub.f32 0.0, %v4014
  %v5600 = vsub.f32 0.0, %v4293
  %v5601 = vsub.f32 0.0, %v4295
  %v5602 = vsub.f32 0.0, %v4574
  %v5603 = vsub.f32 0.0, %v4576
  %v5604 = vsub.f32 0.0, %v4855
  %v5605 = vsub.f32 0.0, %v4857
  %v5606 = vsub.f32 0.0, %v5136
  %v5607 = vsub.f32 0.0, %v5138
  %v5608 = vsub.f32 0.0, %v4018
  %v5609 = vsub.f32 0.0, %v4020
  %v5610 = vsub.f32 0.0, %v4299
  %v5611 = vsub.f32 0.0, %v4301
  %v5612 = vsub.f32 0.0, %v4580
  %v5613 = vsub.f32 0.0, %v4582
  %v5614 = vsub.f32 0.0, %v4861
  %v5615 = vsub.f32 0.0, %v4863
  %v5616 = vsub.f32 0.0, %v5142
  %v5617 = vsub.f32 0.0, %v5144
  %v5618 = vsub.f32 0.0, %v4022
  %v5619 = vsub.f32 0.0, %v4024
  %v5620 = vsub.f32 0.0, %v4303
  %v5621 = vsub.f32 0.0, %v4305
  %v5622 = vsub.f32 0.0, %v4584
  %v5623 = vsub.f32 0.0, %v4586
  %v5624 = vsub.f32 0.0, %v4865
  %v5625 = vsub.f32 0.0, %v4867
  %v5626 = vsub.f32 0.0, %v5146
  %v5627 = vsub.f32 0.0, %v5148
  %v5628 = vsub.f32 0.0, %v4028
  %v5629 = vsub.f32 0.0, %v4030
  %v5630 = vsub.f32 0.0, %v4309
  %v5631 = vsub.f32 0.0, %v4311
  %v5632 = vsub.f32 0.0, %v4590
  %v5633 = vsub.f32 0.0, %v4592
  %v5634 = vsub.f32 0.0, %v4871
  %v5635 = vsub.f32 0.0, %v4873
  %v5636 = vsub.f32 0.0, %v5152
  %v5637 = vsub.f32 0.0, %v5154
  %v5638 = vsub.f32 0.0, %v4032
  %v5639 = vsub.f32 0.0, %v4034
  %v5640 = vsub.f32 0.0, %v4313
  %v5641 = vsub.f32 0.0, %v4315
  %v5642 = vsub.f32 0.0, %v4594
  %v5643 = vsub.f32 0.0, %v4596
  %v5644 = vsub.f32 0.0, %v4875
  %v5645 = vsub.f32 0.0, %v4877
  %v5646 = vsub.f32 0.0, %v5156
  %v5647 = vsub.f32 0.0, %v5158
  %v5648 = vsub.f32 0.0, %v4038
  %v5649 = vsub.f32 0.0, %v4040
  %v5650 = vsub.f32 0.0, %v4319
  %v5651 = vsub.f32 0.0, %v4321
  %v5652 = vsub.f32 0.0, %v4600
  %v5653 = vsub.f32 0.0, %v4602
  %v5654 = vsub.f32 0.0, %v4881
  %v5655 = vsub.f32 0.0, %v4883
  %v5656 = vsub.f32 0.0, %v5162
  %v5657 = vsub.f32 0.0, %v5164
  %v5658 = vmul.f32 %v5168, 1.442695
  %v5659 = vpow.pop %v5658
  %v5660 = vmul.f32 %v5169, 1.442695
  %v5661 = vpow.pop %v5660
  %v5662 = vmul.f32 %v5170, 1.442695
  %v5663 = vpow.pop %v5662
  %v5664 = vmul.f32 %v5171, 1.442695
  %v5665 = vpow.pop %v5664
  %v5666 = vmul.f32 %v5172, 1.442695
  %v5667 = vpow.pop %v5666
  %v5668 = vmul.f32 %v5173, 1.442695
  %v5669 = vpow.pop %v5668
  %v5670 = vmul.f32 %v5174, 1.442695
  %v5671 = vpow.pop %v5670
  %v5672 = vmul.f32 %v5175, 1.442695
  %v5673 = vpow.pop %v5672
  %v5674 = vmul.f32 %v5176, 1.442695
  %v5675 = vpow.pop %v5674
  %v5676 = vmul.f32 %v5177, 1.442695
  %v5677 = vpow.pop %v5676
  %v5678 = vmul.f32 %v5178, 1.442695
  %v5679 = vpow.pop %v5678
  %v5680 = vmul.f32 %v5179, 1.442695
  %v5681 = vpow.pop %v5680
  %v5682 = vmul.f32 %v5180, 1.442695
  %v5683 = vpow.pop %v5682
  %v5684 = vmul.f32 %v5181, 1.442695
  %v5685 = vpow.pop %v5684
  %v5686 = vmul.f32 %v5182, 1.442695
  %v5687 = vpow.pop %v5686
  %v5688 = vmul.f32 %v5183, 1.442695
  %v5689 = vpow.pop %v5688
  %v5690 = vmul.f32 %v5184, 1.442695
  %v5691 = vpow.pop %v5690
  %v5692 = vmul.f32 %v5185, 1.442695
  %v5693 = vpow.pop %v5692
  %v5694 = vmul.f32 %v5186, 1.442695
  %v5695 = vpow.pop %v5694
  %v5696 = vmul.f32 %v5187, 1.442695
  %v5697 = vpow.pop %v5696
  %v5698 = vmul.f32 %v5188, 1.442695
  %v5699 = vpow.pop %v5698
  %v5700 = vmul.f32 %v5189, 1.442695
  %v5701 = vpow.pop %v5700
  %v5702 = vmul.f32 %v5190, 1.442695
  %v5703 = vpow.pop %v5702
  %v5704 = vmul.f32 %v5191, 1.442695
  %v5705 = vpow.pop %v5704
  %v5706 = vmul.f32 %v5192, 1.442695
  %v5707 = vpow.pop %v5706
  %v5708 = vmul.f32 %v5193, 1.442695
  %v5709 = vpow.pop %v5708
  %v5710 = vmul.f32 %v5194, 1.442695
  %v5711 = vpow.pop %v5710
  %v5712 = vmul.f32 %v5195, 1.442695
  %v5713 = vpow.pop %v5712
  %v5714 = vmul.f32 %v5196, 1.442695
  %v5715 = vpow.pop %v5714
  %v5716 = vmul.f32 %v5197, 1.442695
  %v5717 = vpow.pop %v5716
  %v5718 = vmul.f32 %v5198, 1.442695
  %v5719 = vpow.pop %v5718
  %v5720 = vmul.f32 %v5199, 1.442695
  %v5721 = vpow.pop %v5720
  %v5722 = vmul.f32 %v5200, 1.442695
  %v5723 = vpow.pop %v5722
  %v5724 = vmul.f32 %v5201, 1.442695
  %v5725 = vpow.pop %v5724
  %v5726 = vmul.f32 %v5202, 1.442695
  %v5727 = vpow.pop %v5726
  %v5728 = vmul.f32 %v5203, 1.442695
  %v5729 = vpow.pop %v5728
  %v5730 = vmul.f32 %v5204, 1.442695
  %v5731 = vpow.pop %v5730
  %v5732 = vmul.f32 %v5205, 1.442695
  %v5733 = vpow.pop %v5732
  %v5734 = vmul.f32 %v5206, 1.442695
  %v5735 = vpow.pop %v5734
  %v5736 = vmul.f32 %v5207, 1.442695
  %v5737 = vpow.pop %v5736
  %v5738 = vmul.f32 %v5208, 1.442695
  %v5739 = vpow.pop %v5738
  %v5740 = vmul.f32 %v5209, 1.442695
  %v5741 = vpow.pop %v5740
  %v5742 = vmul.f32 %v5210, 1.442695
  %v5743 = vpow.pop %v5742
  %v5744 = vmul.f32 %v5211, 1.442695
  %v5745 = vpow.pop %v5744
  %v5746 = vmul.f32 %v5212, 1.442695
  %v5747 = vpow.pop %v5746
  %v5748 = vmul.f32 %v5213, 1.442695
  %v5749 = vpow.pop %v5748
  %v5750 = vmul.f32 %v5214, 1.442695
  %v5751 = vpow.pop %v5750
  %v5752 = vmul.f32 %v5215, 1.442695
  %v5753 = vpow.pop %v5752
  %v5754 = vmul.f32 %v5216, 1.442695
  %v5755 = vpow.pop %v5754
  %v5756 = vmul.f32 %v5217, 1.442695
  %v5757 = vpow.pop %v5756
  %v5758 = vmul.f32 %v5218, 1.442695
  %v5759 = vpow.pop %v5758
  %v5760 = vmul.f32 %v5219, 1.442695
  %v5761 = vpow.pop %v5760
  %v5762 = vmul.f32 %v5220, 1.442695
  %v5763 = vpow.pop %v5762
  %v5764 = vmul.f32 %v5221, 1.442695
  %v5765 = vpow.pop %v5764
  %v5766 = vmul.f32 %v5222, 1.442695
  %v5767 = vpow.pop %v5766
  %v5768 = vmul.f32 %v5223, 1.442695
  %v5769 = vpow.pop %v5768
  %v5770 = vmul.f32 %v5224, 1.442695
  %v5771 = vpow.pop %v5770
  %v5772 = vmul.f32 %v5225, 1.442695
  %v5773 = vpow.pop %v5772
  %v5774 = vmul.f32 %v5226, 1.442695
  %v5775 = vpow.pop %v5774
  %v5776 = vmul.f32 %v5227, 1.442695
  %v5777 = vpow.pop %v5776
  %v5778 = vmul.f32 %v5228, 1.442695
  %v5779 = vpow.pop %v5778
  %v5780 = vmul.f32 %v5229, 1.442695
  %v5781 = vpow.pop %v5780
  %v5782 = vmul.f32 %v5230, 1.442695
  %v5783 = vpow.pop %v5782
  %v5784 = vmul.f32 %v5231, 1.442695
  %v5785 = vpow.pop %v5784
  %v5786 = vmul.f32 %v5232, 1.442695
  %v5787 = vpow.pop %v5786
  %v5788 = vmul.f32 %v5233, 1.442695
  %v5789 = vpow.pop %v5788
  %v5790 = vmul.f32 %v5234, 1.442695
  %v5791 = vpow.pop %v5790
  %v5792 = vmul.f32 %v5235, 1.442695
  %v5793 = vpow.pop %v5792
  %v5794 = vmul.f32 %v5236, 1.442695
  %v5795 = vpow.pop %v5794
  %v5796 = vmul.f32 %v5237, 1.442695
  %v5797 = vpow.pop %v5796
  %v5798 = vmul.f32 %v5238, 1.442695
  %v5799 = vpow.pop %v5798
  %v5800 = vmul.f32 %v5239, 1.442695
  %v5801 = vpow.pop %v5800
  %v5802 = vmul.f32 %v5240, 1.442695
  %v5803 = vpow.pop %v5802
  %v5804 = vmul.f32 %v5241, 1.442695
  %v5805 = vpow.pop %v5804
  %v5806 = vmul.f32 %v5242, 1.442695
  %v5807 = vpow.pop %v5806
  %v5808 = vmul.f32 %v5243, 1.442695
  %v5809 = vpow.pop %v5808
  %v5810 = vmul.f32 %v5244, 1.442695
  %v5811 = vpow.pop %v5810
  %v5812 = vmul.f32 %v5245, 1.442695
  %v5813 = vpow.pop %v5812
  %v5814 = vmul.f32 %v5246, 1.442695
  %v5815 = vpow.pop %v5814
  %v5816 = vmul.f32 %v5247, 1.442695
  %v5817 = vpow.pop %v5816
  %v5818 = vmul.f32 %v5248, 1.442695
  %v5819 = vpow.pop %v5818
  %v5820 = vmul.f32 %v5249, 1.442695
  %v5821 = vpow.pop %v5820
  %v5822 = vmul.f32 %v5250, 1.442695
  %v5823 = vpow.pop %v5822
  %v5824 = vmul.f32 %v5251, 1.442695
  %v5825 = vpow.pop %v5824
  %v5826 = vmul.f32 %v5252, 1.442695
  %v5827 = vpow.pop %v5826
  %v5828 = vmul.f32 %v5253, 1.442695
  %v5829 = vpow.pop %v5828
  %v5830 = vmul.f32 %v5254, 1.442695
  %v5831 = vpow.pop %v5830
  %v5832 = vmul.f32 %v5255, 1.442695
  %v5833 = vpow.pop %v5832
  %v5834 = vmul.f32 %v5256, 1.442695
  %v5835 = vpow.pop %v5834
  %v5836 = vmul.f32 %v5257, 1.442695
  %v5837 = vpow.pop %v5836
  %v5838 = vmul.f32 %v5258, 1.442695
  %v5839 = vpow.pop %v5838
  %v5840 = vmul.f32 %v5259, 1.442695
  %v5841 = vpow.pop %v5840
  %v5842 = vmul.f32 %v5260, 1.442695
  %v5843 = vpow.pop %v5842
  %v5844 = vmul.f32 %v5261, 1.442695
  %v5845 = vpow.pop %v5844
  %v5846 = vmul.f32 %v5262, 1.442695
  %v5847 = vpow.pop %v5846
  %v5848 = vmul.f32 %v5263, 1.442695
  %v5849 = vpow.pop %v5848
  %v5850 = vmul.f32 %v5264, 1.442695
  %v5851 = vpow.pop %v5850
  %v5852 = vmul.f32 %v5265, 1.442695
  %v5853 = vpow.pop %v5852
  %v5854 = vmul.f32 %v5266, 1.442695
  %v5855 = vpow.pop %v5854
  %v5856 = vmul.f32 %v5267, 1.442695
  %v5857 = vpow.pop %v5856
  %v5858 = vmul.f32 %v5268, 1.442695
  %v5859 = vpow.pop %v5858
  %v5860 = vmul.f32 %v5269, 1.442695
  %v5861 = vpow.pop %v5860
  %v5862 = vmul.f32 %v5270, 1.442695
  %v5863 = vpow.pop %v5862
  %v5864 = vmul.f32 %v5271, 1.442695
  %v5865 = vpow.pop %v5864
  %v5866 = vmul.f32 %v5272, 1.442695
  %v5867 = vpow.pop %v5866
  %v5868 = vmul.f32 %v5273, 1.442695
  %v5869 = vpow.pop %v5868
  %v5870 = vmul.f32 %v5274, 1.442695
  %v5871 = vpow.pop %v5870
  %v5872 = vmul.f32 %v5275, 1.442695
  %v5873 = vpow.pop %v5872
  %v5874 = vmul.f32 %v5276, 1.442695
  %v5875 = vpow.pop %v5874
  %v5876 = vmul.f32 %v5277, 1.442695
  %v5877 = vpow.pop %v5876
  %v5878 = vmul.f32 %v5278, 1.442695
  %v5879 = vpow.pop %v5878
  %v5880 = vmul.f32 %v5279, 1.442695
  %v5881 = vpow.pop %v5880
  %v5882 = vmul.f32 %v5280, 1.442695
  %v5883 = vpow.pop %v5882
  %v5884 = vmul.f32 %v5281, 1.442695
  %v5885 = vpow.pop %v5884
  %v5886 = vmul.f32 %v5282, 1.442695
  %v5887 = vpow.pop %v5886
  %v5888 = vmul.f32 %v5283, 1.442695
  %v5889 = vpow.pop %v5888
  %v5890 = vmul.f32 %v5284, 1.442695
  %v5891 = vpow.pop %v5890
  %v5892 = vmul.f32 %v5285, 1.442695
  %v5893 = vpow.pop %v5892
  %v5894 = vmul.f32 %v5286, 1.442695
  %v5895 = vpow.pop %v5894
  %v5896 = vmul.f32 %v5287, 1.442695
  %v5897 = vpow.pop %v5896
  %v5898 = vmul.f32 %v5288, 1.442695
  %v5899 = vpow.pop %v5898
  %v5900 = vmul.f32 %v5289, 1.442695
  %v5901 = vpow.pop %v5900
  %v5902 = vmul.f32 %v5290, 1.442695
  %v5903 = vpow.pop %v5902
  %v5904 = vmul.f32 %v5291, 1.442695
  %v5905 = vpow.pop %v5904
  %v5906 = vmul.f32 %v5292, 1.442695
  %v5907 = vpow.pop %v5906
  %v5908 = vmul.f32 %v5293, 1.442695
  %v5909 = vpow.pop %v5908
  %v5910 = vmul.f32 %v5294, 1.442695
  %v5911 = vpow.pop %v5910
  %v5912 = vmul.f32 %v5295, 1.442695
  %v5913 = vpow.pop %v5912
  %v5914 = vmul.f32 %v5296, 1.442695
  %v5915 = vpow.pop %v5914
  %v5916 = vmul.f32 %v5297, 1.442695
  %v5917 = vpow.pop %v5916
  %v5918 = vmul.f32 %v5298, 1.442695
  %v5919 = vpow.pop %v5918
  %v5920 = vmul.f32 %v5299, 1.442695
  %v5921 = vpow.pop %v5920
  %v5922 = vmul.f32 %v5300, 1.442695
  %v5923 = vpow.pop %v5922
  %v5924 = vmul.f32 %v5301, 1.442695
  %v5925 = vpow.pop %v5924
  %v5926 = vmul.f32 %v5302, 1.442695
  %v5927 = vpow.pop %v5926
  %v5928 = vmul.f32 %v5303, 1.442695
  %v5929 = vpow.pop %v5928
  %v5930 = vmul.f32 %v5304, 1.442695
  %v5931 = vpow.pop %v5930
  %v5932 = vmul.f32 %v5305, 1.442695
  %v5933 = vpow.pop %v5932
  %v5934 = vmul.f32 %v5306, 1.442695
  %v5935 = vpow.pop %v5934
  %v5936 = vmul.f32 %v5307, 1.442695
  %v5937 = vpow.pop %v5936
  %v5938 = vmul.f32 %v5308, 1.442695
  %v5939 = vpow.pop %v5938
  %v5940 = vmul.f32 %v5309, 1.442695
  %v5941 = vpow.pop %v5940
  %v5942 = vmul.f32 %v5310, 1.442695
  %v5943 = vpow.pop %v5942
  %v5944 = vmul.f32 %v5311, 1.442695
  %v5945 = vpow.pop %v5944
  %v5946 = vmul.f32 %v5312, 1.442695
  %v5947 = vpow.pop %v5946
  %v5948 = vmul.f32 %v5313, 1.442695
  %v5949 = vpow.pop %v5948
  %v5950 = vmul.f32 %v5314, 1.442695
  %v5951 = vpow.pop %v5950
  %v5952 = vmul.f32 %v5315, 1.442695
  %v5953 = vpow.pop %v5952
  %v5954 = vmul.f32 %v5316, 1.442695
  %v5955 = vpow.pop %v5954
  %v5956 = vmul.f32 %v5317, 1.442695
  %v5957 = vpow.pop %v5956
  %v5958 = vmul.f32 %v5318, 1.442695
  %v5959 = vpow.pop %v5958
  %v5960 = vmul.f32 %v5319, 1.442695
  %v5961 = vpow.pop %v5960
  %v5962 = vmul.f32 %v5320, 1.442695
  %v5963 = vpow.pop %v5962
  %v5964 = vmul.f32 %v5321, 1.442695
  %v5965 = vpow.pop %v5964
  %v5966 = vmul.f32 %v5322, 1.442695
  %v5967 = vpow.pop %v5966
  %v5968 = vmul.f32 %v5323, 1.442695
  %v5969 = vpow.pop %v5968
  %v5970 = vmul.f32 %v5324, 1.442695
  %v5971 = vpow.pop %v5970
  %v5972 = vmul.f32 %v5325, 1.442695
  %v5973 = vpow.pop %v5972
  %v5974 = vmul.f32 %v5326, 1.442695
  %v5975 = vpow.pop %v5974
  %v5976 = vmul.f32 %v5327, 1.442695
  %v5977 = vpow.pop %v5976
  %v5978 = vmul.f32 %v5328, 1.442695
  %v5979 = vpow.pop %v5978
  %v5980 = vmul.f32 %v5329, 1.442695
  %v5981 = vpow.pop %v5980
  %v5982 = vmul.f32 %v5330, 1.442695
  %v5983 = vpow.pop %v5982
  %v5984 = vmul.f32 %v5331, 1.442695
  %v5985 = vpow.pop %v5984
  %v5986 = vmul.f32 %v5332, 1.442695
  %v5987 = vpow.pop %v5986
  %v5988 = vmul.f32 %v5333, 1.442695
  %v5989 = vpow.pop %v5988
  %v5990 = vmul.f32 %v5334, 1.442695
  %v5991 = vpow.pop %v5990
  %v5992 = vmul.f32 %v5335, 1.442695
  %v5993 = vpow.pop %v5992
  %v5994 = vmul.f32 %v5336, 1.442695
  %v5995 = vpow.pop %v5994
  %v5996 = vmul.f32 %v5337, 1.442695
  %v5997 = vpow.pop %v5996
  %v5998 = vmul.f32 %v5338, 1.442695
  %v5999 = vpow.pop %v5998
  %v6000 = vmul.f32 %v5339, 1.442695
  %v6001 = vpow.pop %v6000
  %v6002 = vmul.f32 %v5340, 1.442695
  %v6003 = vpow.pop %v6002
  %v6004 = vmul.f32 %v5341, 1.442695
  %v6005 = vpow.pop %v6004
  %v6006 = vmul.f32 %v5342, 1.442695
  %v6007 = vpow.pop %v6006
  %v6008 = vmul.f32 %v5343, 1.442695
  %v6009 = vpow.pop %v6008
  %v6010 = vmul.f32 %v5344, 1.442695
  %v6011 = vpow.pop %v6010
  %v6012 = vmul.f32 %v5345, 1.442695
  %v6013 = vpow.pop %v6012
  %v6014 = vmul.f32 %v5346, 1.442695
  %v6015 = vpow.pop %v6014
  %v6016 = vmul.f32 %v5347, 1.442695
  %v6017 = vpow.pop %v6016
  %v6018 = vmul.f32 %v5348, 1.442695
  %v6019 = vpow.pop %v6018
  %v6020 = vmul.f32 %v5349, 1.442695
  %v6021 = vpow.pop %v6020
  %v6022 = vmul.f32 %v5350, 1.442695
  %v6023 = vpow.pop %v6022
  %v6024 = vmul.f32 %v5351, 1.442695
  %v6025 = vpow.pop %v6024
  %v6026 = vmul.f32 %v5352, 1.442695
  %v6027 = vpow.pop %v6026
  %v6028 = vmul.f32 %v5353, 1.442695
  %v6029 = vpow.pop %v6028
  %v6030 = vmul.f32 %v5354, 1.442695
  %v6031 = vpow.pop %v6030
  %v6032 = vmul.f32 %v5355, 1.442695
  %v6033 = vpow.pop %v6032
  %v6034 = vmul.f32 %v5356, 1.442695
  %v6035 = vpow.pop %v6034
  %v6036 = vmul.f32 %v5357, 1.442695
  %v6037 = vpow.pop %v6036
  %v6038 = vmul.f32 %v5358, 1.442695
  %v6039 = vpow.pop %v6038
  %v6040 = vmul.f32 %v5359, 1.442695
  %v6041 = vpow.pop %v6040
  %v6042 = vmul.f32 %v5360, 1.442695
  %v6043 = vpow.pop %v6042
  %v6044 = vmul.f32 %v5361, 1.442695
  %v6045 = vpow.pop %v6044
  %v6046 = vmul.f32 %v5362, 1.442695
  %v6047 = vpow.pop %v6046
  %v6048 = vmul.f32 %v5363, 1.442695
  %v6049 = vpow.pop %v6048
  %v6050 = vmul.f32 %v5364, 1.442695
  %v6051 = vpow.pop %v6050
  %v6052 = vmul.f32 %v5365, 1.442695
  %v6053 = vpow.pop %v6052
  %v6054 = vmul.f32 %v5366, 1.442695
  %v6055 = vpow.pop %v6054
  %v6056 = vmul.f32 %v5367, 1.442695
  %v6057 = vpow.pop %v6056
  %v6058 = vmul.f32 %v5368, 1.442695
  %v6059 = vpow.pop %v6058
  %v6060 = vmul.f32 %v5369, 1.442695
  %v6061 = vpow.pop %v6060
  %v6062 = vmul.f32 %v5370, 1.442695
  %v6063 = vpow.pop %v6062
  %v6064 = vmul.f32 %v5371, 1.442695
  %v6065 = vpow.pop %v6064
  %v6066 = vmul.f32 %v5372, 1.442695
  %v6067 = vpow.pop %v6066
  %v6068 = vmul.f32 %v5373, 1.442695
  %v6069 = vpow.pop %v6068
  %v6070 = vmul.f32 %v5374, 1.442695
  %v6071 = vpow.pop %v6070
  %v6072 = vmul.f32 %v5375, 1.442695
  %v6073 = vpow.pop %v6072
  %v6074 = vmul.f32 %v5376, 1.442695
  %v6075 = vpow.pop %v6074
  %v6076 = vmul.f32 %v5377, 1.442695
  %v6077 = vpow.pop %v6076
  %v6078 = vmul.f32 %v5378, 1.442695
  %v6079 = vpow.pop %v6078
  %v6080 = vmul.f32 %v5379, 1.442695
  %v6081 = vpow.pop %v6080
  %v6082 = vmul.f32 %v5380, 1.442695
  %v6083 = vpow.pop %v6082
  %v6084 = vmul.f32 %v5381, 1.442695
  %v6085 = vpow.pop %v6084
  %v6086 = vmul.f32 %v5382, 1.442695
  %v6087 = vpow.pop %v6086
  %v6088 = vmul.f32 %v5383, 1.442695
  %v6089 = vpow.pop %v6088
  %v6090 = vmul.f32 %v5384, 1.442695
  %v6091 = vpow.pop %v6090
  %v6092 = vmul.f32 %v5385, 1.442695
  %v6093 = vpow.pop %v6092
  %v6094 = vmul.f32 %v5386, 1.442695
  %v6095 = vpow.pop %v6094
  %v6096 = vmul.f32 %v5387, 1.442695
  %v6097 = vpow.pop %v6096
  %v6098 = vmul.f32 %v5388, 1.442695
  %v6099 = vpow.pop %v6098
  %v6100 = vmul.f32 %v5389, 1.442695
  %v6101 = vpow.pop %v6100
  %v6102 = vmul.f32 %v5390, 1.442695
  %v6103 = vpow.pop %v6102
  %v6104 = vmul.f32 %v5391, 1.442695
  %v6105 = vpow.pop %v6104
  %v6106 = vmul.f32 %v5392, 1.442695
  %v6107 = vpow.pop %v6106
  %v6108 = vmul.f32 %v5393, 1.442695
  %v6109 = vpow.pop %v6108
  %v6110 = vmul.f32 %v5394, 1.442695
  %v6111 = vpow.pop %v6110
  %v6112 = vmul.f32 %v5395, 1.442695
  %v6113 = vpow.pop %v6112
  %v6114 = vmul.f32 %v5396, 1.442695
  %v6115 = vpow.pop %v6114
  %v6116 = vmul.f32 %v5397, 1.442695
  %v6117 = vpow.pop %v6116
  %v6118 = vmul.f32 %v5398, 1.442695
  %v6119 = vpow.pop %v6118
  %v6120 = vmul.f32 %v5399, 1.442695
  %v6121 = vpow.pop %v6120
  %v6122 = vmul.f32 %v5400, 1.442695
  %v6123 = vpow.pop %v6122
  %v6124 = vmul.f32 %v5401, 1.442695
  %v6125 = vpow.pop %v6124
  %v6126 = vmul.f32 %v5402, 1.442695
  %v6127 = vpow.pop %v6126
  %v6128 = vmul.f32 %v5403, 1.442695
  %v6129 = vpow.pop %v6128
  %v6130 = vmul.f32 %v5404, 1.442695
  %v6131 = vpow.pop %v6130
  %v6132 = vmul.f32 %v5405, 1.442695
  %v6133 = vpow.pop %v6132
  %v6134 = vmul.f32 %v5406, 1.442695
  %v6135 = vpow.pop %v6134
  %v6136 = vmul.f32 %v5407, 1.442695
  %v6137 = vpow.pop %v6136
  %v6138 = vmul.f32 %v5408, 1.442695
  %v6139 = vpow.pop %v6138
  %v6140 = vmul.f32 %v5409, 1.442695
  %v6141 = vpow.pop %v6140
  %v6142 = vmul.f32 %v5410, 1.442695
  %v6143 = vpow.pop %v6142
  %v6144 = vmul.f32 %v5411, 1.442695
  %v6145 = vpow.pop %v6144
  %v6146 = vmul.f32 %v5412, 1.442695
  %v6147 = vpow.pop %v6146
  %v6148 = vmul.f32 %v5413, 1.442695
  %v6149 = vpow.pop %v6148
  %v6150 = vmul.f32 %v5414, 1.442695
  %v6151 = vpow.pop %v6150
  %v6152 = vmul.f32 %v5415, 1.442695
  %v6153 = vpow.pop %v6152
  %v6154 = vmul.f32 %v5416, 1.442695
  %v6155 = vpow.pop %v6154
  %v6156 = vmul.f32 %v5417, 1.442695
  %v6157 = vpow.pop %v6156
  %v6158 = vmul.f32 %v5418, 1.442695
  %v6159 = vpow.pop %v6158
  %v6160 = vmul.f32 %v5419, 1.442695
  %v6161 = vpow.pop %v6160
  %v6162 = vmul.f32 %v5420, 1.442695
  %v6163 = vpow.pop %v6162
  %v6164 = vmul.f32 %v5421, 1.442695
  %v6165 = vpow.pop %v6164
  %v6166 = vmul.f32 %v5422, 1.442695
  %v6167 = vpow.pop %v6166
  %v6168 = vmul.f32 %v5423, 1.442695
  %v6169 = vpow.pop %v6168
  %v6170 = vmul.f32 %v5424, 1.442695
  %v6171 = vpow.pop %v6170
  %v6172 = vmul.f32 %v5425, 1.442695
  %v6173 = vpow.pop %v6172
  %v6174 = vmul.f32 %v5426, 1.442695
  %v6175 = vpow.pop %v6174
  %v6176 = vmul.f32 %v5427, 1.442695
  %v6177 = vpow.pop %v6176
  %v6178 = vmul.f32 %v5428, 1.442695
  %v6179 = vpow.pop %v6178
  %v6180 = vmul.f32 %v5429, 1.442695
  %v6181 = vpow.pop %v6180
  %v6182 = vmul.f32 %v5430, 1.442695
  %v6183 = vpow.pop %v6182
  %v6184 = vmul.f32 %v5431, 1.442695
  %v6185 = vpow.pop %v6184
  %v6186 = vmul.f32 %v5432, 1.442695
  %v6187 = vpow.pop %v6186
  %v6188 = vmul.f32 %v5433, 1.442695
  %v6189 = vpow.pop %v6188
  %v6190 = vmul.f32 %v5434, 1.442695
  %v6191 = vpow.pop %v6190
  %v6192 = vmul.f32 %v5435, 1.442695
  %v6193 = vpow.pop %v6192
  %v6194 = vmul.f32 %v5436, 1.442695
  %v6195 = vpow.pop %v6194
  %v6196 = vmul.f32 %v5437, 1.442695
  %v6197 = vpow.pop %v6196
  %v6198 = vmul.f32 %v5438, 1.442695
  %v6199 = vpow.pop %v6198
  %v6200 = vmul.f32 %v5439, 1.442695
  %v6201 = vpow.pop %v6200
  %v6202 = vmul.f32 %v5440, 1.442695
  %v6203 = vpow.pop %v6202
  %v6204 = vmul.f32 %v5441, 1.442695
  %v6205 = vpow.pop %v6204
  %v6206 = vmul.f32 %v5442, 1.442695
  %v6207 = vpow.pop %v6206
  %v6208 = vmul.f32 %v5443, 1.442695
  %v6209 = vpow.pop %v6208
  %v6210 = vmul.f32 %v5444, 1.442695
  %v6211 = vpow.pop %v6210
  %v6212 = vmul.f32 %v5445, 1.442695
  %v6213 = vpow.pop %v6212
  %v6214 = vmul.f32 %v5446, 1.442695
  %v6215 = vpow.pop %v6214
  %v6216 = vmul.f32 %v5447, 1.442695
  %v6217 = vpow.pop %v6216
  %v6218 = vmul.f32 %v5448, 1.442695
  %v6219 = vpow.pop %v6218
  %v6220 = vmul.f32 %v5449, 1.442695
  %v6221 = vpow.pop %v6220
  %v6222 = vmul.f32 %v5450, 1.442695
  %v6223 = vpow.pop %v6222
  %v6224 = vmul.f32 %v5451, 1.442695
  %v6225 = vpow.pop %v6224
  %v6226 = vmul.f32 %v5452, 1.442695
  %v6227 = vpow.pop %v6226
  %v6228 = vmul.f32 %v5453, 1.442695
  %v6229 = vpow.pop %v6228
  %v6230 = vmul.f32 %v5454, 1.442695
  %v6231 = vpow.pop %v6230
  %v6232 = vmul.f32 %v5455, 1.442695
  %v6233 = vpow.pop %v6232
  %v6234 = vmul.f32 %v5456, 1.442695
  %v6235 = vpow.pop %v6234
  %v6236 = vmul.f32 %v5457, 1.442695
  %v6237 = vpow.pop %v6236
  %v6238 = vmul.f32 %v5458, 1.442695
  %v6239 = vpow.pop %v6238
  %v6240 = vmul.f32 %v5459, 1.442695
  %v6241 = vpow.pop %v6240
  %v6242 = vmul.f32 %v5460, 1.442695
  %v6243 = vpow.pop %v6242
  %v6244 = vmul.f32 %v5461, 1.442695
  %v6245 = vpow.pop %v6244
  %v6246 = vmul.f32 %v5462, 1.442695
  %v6247 = vpow.pop %v6246
  %v6248 = vmul.f32 %v5463, 1.442695
  %v6249 = vpow.pop %v6248
  %v6250 = vmul.f32 %v5464, 1.442695
  %v6251 = vpow.pop %v6250
  %v6252 = vmul.f32 %v5465, 1.442695
  %v6253 = vpow.pop %v6252
  %v6254 = vmul.f32 %v5466, 1.442695
  %v6255 = vpow.pop %v6254
  %v6256 = vmul.f32 %v5467, 1.442695
  %v6257 = vpow.pop %v6256
  %v6258 = vmul.f32 %v5468, 1.442695
  %v6259 = vpow.pop %v6258
  %v6260 = vmul.f32 %v5469, 1.442695
  %v6261 = vpow.pop %v6260
  %v6262 = vmul.f32 %v5470, 1.442695
  %v6263 = vpow.pop %v6262
  %v6264 = vmul.f32 %v5471, 1.442695
  %v6265 = vpow.pop %v6264
  %v6266 = vmul.f32 %v5472, 1.442695
  %v6267 = vpow.pop %v6266
  %v6268 = vmul.f32 %v5473, 1.442695
  %v6269 = vpow.pop %v6268
  %v6270 = vmul.f32 %v5474, 1.442695
  %v6271 = vpow.pop %v6270
  %v6272 = vmul.f32 %v5475, 1.442695
  %v6273 = vpow.pop %v6272
  %v6274 = vmul.f32 %v5476, 1.442695
  %v6275 = vpow.pop %v6274
  %v6276 = vmul.f32 %v5477, 1.442695
  %v6277 = vpow.pop %v6276
  %v6278 = vmul.f32 %v5478, 1.442695
  %v6279 = vpow.pop %v6278
  %v6280 = vmul.f32 %v5479, 1.442695
  %v6281 = vpow.pop %v6280
  %v6282 = vmul.f32 %v5480, 1.442695
  %v6283 = vpow.pop %v6282
  %v6284 = vmul.f32 %v5481, 1.442695
  %v6285 = vpow.pop %v6284
  %v6286 = vmul.f32 %v5482, 1.442695
  %v6287 = vpow.pop %v6286
  %v6288 = vmul.f32 %v5483, 1.442695
  %v6289 = vpow.pop %v6288
  %v6290 = vmul.f32 %v5484, 1.442695
  %v6291 = vpow.pop %v6290
  %v6292 = vmul.f32 %v5485, 1.442695
  %v6293 = vpow.pop %v6292
  %v6294 = vmul.f32 %v5486, 1.442695
  %v6295 = vpow.pop %v6294
  %v6296 = vmul.f32 %v5487, 1.442695
  %v6297 = vpow.pop %v6296
  %v6298 = vmul.f32 %v5488, 1.442695
  %v6299 = vpow.pop %v6298
  %v6300 = vmul.f32 %v5489, 1.442695
  %v6301 = vpow.pop %v6300
  %v6302 = vmul.f32 %v5490, 1.442695
  %v6303 = vpow.pop %v6302
  %v6304 = vmul.f32 %v5491, 1.442695
  %v6305 = vpow.pop %v6304
  %v6306 = vmul.f32 %v5492, 1.442695
  %v6307 = vpow.pop %v6306
  %v6308 = vmul.f32 %v5493, 1.442695
  %v6309 = vpow.pop %v6308
  %v6310 = vmul.f32 %v5494, 1.442695
  %v6311 = vpow.pop %v6310
  %v6312 = vmul.f32 %v5495, 1.442695
  %v6313 = vpow.pop %v6312
  %v6314 = vmul.f32 %v5496, 1.442695
  %v6315 = vpow.pop %v6314
  %v6316 = vmul.f32 %v5497, 1.442695
  %v6317 = vpow.pop %v6316
  %v6318 = vmul.f32 %v5498, 1.442695
  %v6319 = vpow.pop %v6318
  %v6320 = vmul.f32 %v5499, 1.442695
  %v6321 = vpow.pop %v6320
  %v6322 = vmul.f32 %v5500, 1.442695
  %v6323 = vpow.pop %v6322
  %v6324 = vmul.f32 %v5501, 1.442695
  %v6325 = vpow.pop %v6324
  %v6326 = vmul.f32 %v5502, 1.442695
  %v6327 = vpow.pop %v6326
  %v6328 = vmul.f32 %v5503, 1.442695
  %v6329 = vpow.pop %v6328
  %v6330 = vmul.f32 %v5504, 1.442695
  %v6331 = vpow.pop %v6330
  %v6332 = vmul.f32 %v5505, 1.442695
  %v6333 = vpow.pop %v6332
  %v6334 = vmul.f32 %v5506, 1.442695
  %v6335 = vpow.pop %v6334
  %v6336 = vmul.f32 %v5507, 1.442695
  %v6337 = vpow.pop %v6336
  %v6338 = vmul.f32 %v5508, 1.442695
  %v6339 = vpow.pop %v6338
  %v6340 = vmul.f32 %v5509, 1.442695
  %v6341 = vpow.pop %v6340
  %v6342 = vmul.f32 %v5510, 1.442695
  %v6343 = vpow.pop %v6342
  %v6344 = vmul.f32 %v5511, 1.442695
  %v6345 = vpow.pop %v6344
  %v6346 = vmul.f32 %v5512, 1.442695
  %v6347 = vpow.pop %v6346
  %v6348 = vmul.f32 %v5513, 1.442695
  %v6349 = vpow.pop %v6348
  %v6350 = vmul.f32 %v5514, 1.442695
  %v6351 = vpow.pop %v6350
  %v6352 = vmul.f32 %v5515, 1.442695
  %v6353 = vpow.pop %v6352
  %v6354 = vmul.f32 %v5516, 1.442695
  %v6355 = vpow.pop %v6354
  %v6356 = vmul.f32 %v5517, 1.442695
  %v6357 = vpow.pop %v6356
  %v6358 = vmul.f32 %v5518, 1.442695
  %v6359 = vpow.pop %v6358
  %v6360 = vmul.f32 %v5519, 1.442695
  %v6361 = vpow.pop %v6360
  %v6362 = vmul.f32 %v5520, 1.442695
  %v6363 = vpow.pop %v6362
  %v6364 = vmul.f32 %v5521, 1.442695
  %v6365 = vpow.pop %v6364
  %v6366 = vmul.f32 %v5522, 1.442695
  %v6367 = vpow.pop %v6366
  %v6368 = vmul.f32 %v5523, 1.442695
  %v6369 = vpow.pop %v6368
  %v6370 = vmul.f32 %v5524, 1.442695
  %v6371 = vpow.pop %v6370
  %v6372 = vmul.f32 %v5525, 1.442695
  %v6373 = vpow.pop %v6372
  %v6374 = vmul.f32 %v5526, 1.442695
  %v6375 = vpow.pop %v6374
  %v6376 = vmul.f32 %v5527, 1.442695
  %v6377 = vpow.pop %v6376
  %v6378 = vmul.f32 %v5528, 1.442695
  %v6379 = vpow.pop %v6378
  %v6380 = vmul.f32 %v5529, 1.442695
  %v6381 = vpow.pop %v6380
  %v6382 = vmul.f32 %v5530, 1.442695
  %v6383 = vpow.pop %v6382
  %v6384 = vmul.f32 %v5531, 1.442695
  %v6385 = vpow.pop %v6384
  %v6386 = vmul.f32 %v5532, 1.442695
  %v6387 = vpow.pop %v6386
  %v6388 = vmul.f32 %v5533, 1.442695
  %v6389 = vpow.pop %v6388
  %v6390 = vmul.f32 %v5534, 1.442695
  %v6391 = vpow.pop %v6390
  %v6392 = vmul.f32 %v5535, 1.442695
  %v6393 = vpow.pop %v6392
  %v6394 = vmul.f32 %v5536, 1.442695
  %v6395 = vpow.pop %v6394
  %v6396 = vmul.f32 %v5537, 1.442695
  %v6397 = vpow.pop %v6396
  %v6398 = vmul.f32 %v5538, 1.442695
  %v6399 = vpow.pop %v6398
  %v6400 = vmul.f32 %v5539, 1.442695
  %v6401 = vpow.pop %v6400
  %v6402 = vmul.f32 %v5540, 1.442695
  %v6403 = vpow.pop %v6402
  %v6404 = vmul.f32 %v5541, 1.442695
  %v6405 = vpow.pop %v6404
  %v6406 = vmul.f32 %v5542, 1.442695
  %v6407 = vpow.pop %v6406
  %v6408 = vmul.f32 %v5543, 1.442695
  %v6409 = vpow.pop %v6408
  %v6410 = vmul.f32 %v5544, 1.442695
  %v6411 = vpow.pop %v6410
  %v6412 = vmul.f32 %v5545, 1.442695
  %v6413 = vpow.pop %v6412
  %v6414 = vmul.f32 %v5546, 1.442695
  %v6415 = vpow.pop %v6414
  %v6416 = vmul.f32 %v5547, 1.442695
  %v6417 = vpow.pop %v6416
  %v6418 = vmul.f32 %v5548, 1.442695
  %v6419 = vpow.pop %v6418
  %v6420 = vmul.f32 %v5549, 1.442695
  %v6421 = vpow.pop %v6420
  %v6422 = vmul.f32 %v5550, 1.442695
  %v6423 = vpow.pop %v6422
  %v6424 = vmul.f32 %v5551, 1.442695
  %v6425 = vpow.pop %v6424
  %v6426 = vmul.f32 %v5552, 1.442695
  %v6427 = vpow.pop %v6426
  %v6428 = vmul.f32 %v5553, 1.442695
  %v6429 = vpow.pop %v6428
  %v6430 = vmul.f32 %v5554, 1.442695
  %v6431 = vpow.pop %v6430
  %v6432 = vmul.f32 %v5555, 1.442695
  %v6433 = vpow.pop %v6432
  %v6434 = vmul.f32 %v5556, 1.442695
  %v6435 = vpow.pop %v6434
  %v6436 = vmul.f32 %v5557, 1.442695
  %v6437 = vpow.pop %v6436
  %v6438 = vmul.f32 %v5558, 1.442695
  %v6439 = vpow.pop %v6438
  %v6440 = vmul.f32 %v5559, 1.442695
  %v6441 = vpow.pop %v6440
  %v6442 = vmul.f32 %v5560, 1.442695
  %v6443 = vpow.pop %v6442
  %v6444 = vmul.f32 %v5561, 1.442695
  %v6445 = vpow.pop %v6444
  %v6446 = vmul.f32 %v5562, 1.442695
  %v6447 = vpow.pop %v6446
  %v6448 = vmul.f32 %v5563, 1.442695
  %v6449 = vpow.pop %v6448
  %v6450 = vmul.f32 %v5564, 1.442695
  %v6451 = vpow.pop %v6450
  %v6452 = vmul.f32 %v5565, 1.442695
  %v6453 = vpow.pop %v6452
  %v6454 = vmul.f32 %v5566, 1.442695
  %v6455 = vpow.pop %v6454
  %v6456 = vmul.f32 %v5567, 1.442695
  %v6457 = vpow.pop %v6456
  %v6458 = vmul.f32 %v5568, 1.442695
  %v6459 = vpow.pop %v6458
  %v6460 = vmul.f32 %v5569, 1.442695
  %v6461 = vpow.pop %v6460
  %v6462 = vmul.f32 %v5570, 1.442695
  %v6463 = vpow.pop %v6462
  %v6464 = vmul.f32 %v5571, 1.442695
  %v6465 = vpow.pop %v6464
  %v6466 = vmul.f32 %v5572, 1.442695
  %v6467 = vpow.pop %v6466
  %v6468 = vmul.f32 %v5573, 1.442695
  %v6469 = vpow.pop %v6468
  %v6470 = vmul.f32 %v5574, 1.442695
  %v6471 = vpow.pop %v6470
  %v6472 = vmul.f32 %v5575, 1.442695
  %v6473 = vpow.pop %v6472
  %v6474 = vmul.f32 %v5576, 1.442695
  %v6475 = vpow.pop %v6474
  %v6476 = vmul.f32 %v5577, 1.442695
  %v6477 = vpow.pop %v6476
  %v6478 = vmul.f32 %v5578, 1.442695
  %v6479 = vpow.pop %v6478
  %v6480 = vmul.f32 %v5579, 1.442695
  %v6481 = vpow.pop %v6480
  %v6482 = vmul.f32 %v5580, 1.442695
  %v6483 = vpow.pop %v6482
  %v6484 = vmul.f32 %v5581, 1.442695
  %v6485 = vpow.pop %v6484
  %v6486 = vmul.f32 %v5582, 1.442695
  %v6487 = vpow.pop %v6486
  %v6488 = vmul.f32 %v5583, 1.442695
  %v6489 = vpow.pop %v6488
  %v6490 = vmul.f32 %v5584, 1.442695
  %v6491 = vpow.pop %v6490
  %v6492 = vmul.f32 %v5585, 1.442695
  %v6493 = vpow.pop %v6492
  %v6494 = vmul.f32 %v5586, 1.442695
  %v6495 = vpow.pop %v6494
  %v6496 = vmul.f32 %v5587, 1.442695
  %v6497 = vpow.pop %v6496
  %v6498 = vmul.f32 %v5588, 1.442695
  %v6499 = vpow.pop %v6498
  %v6500 = vmul.f32 %v5589, 1.442695
  %v6501 = vpow.pop %v6500
  %v6502 = vmul.f32 %v5590, 1.442695
  %v6503 = vpow.pop %v6502
  %v6504 = vmul.f32 %v5591, 1.442695
  %v6505 = vpow.pop %v6504
  %v6506 = vmul.f32 %v5592, 1.442695
  %v6507 = vpow.pop %v6506
  %v6508 = vmul.f32 %v5593, 1.442695
  %v6509 = vpow.pop %v6508
  %v6510 = vmul.f32 %v5594, 1.442695
  %v6511 = vpow.pop %v6510
  %v6512 = vmul.f32 %v5595, 1.442695
  %v6513 = vpow.pop %v6512
  %v6514 = vmul.f32 %v5596, 1.442695
  %v6515 = vpow.pop %v6514
  %v6516 = vmul.f32 %v5597, 1.442695
  %v6517 = vpow.pop %v6516
  %v6518 = vmul.f32 %v5598, 1.442695
  %v6519 = vpow.pop %v6518
  %v6520 = vmul.f32 %v5599, 1.442695
  %v6521 = vpow.pop %v6520
  %v6522 = vmul.f32 %v5600, 1.442695
  %v6523 = vpow.pop %v6522
  %v6524 = vmul.f32 %v5601, 1.442695
  %v6525 = vpow.pop %v6524
  %v6526 = vmul.f32 %v5602, 1.442695
  %v6527 = vpow.pop %v6526
  %v6528 = vmul.f32 %v5603, 1.442695
  %v6529 = vpow.pop %v6528
  %v6530 = vmul.f32 %v5604, 1.442695
  %v6531 = vpow.pop %v6530
  %v6532 = vmul.f32 %v5605, 1.442695
  %v6533 = vpow.pop %v6532
  %v6534 = vmul.f32 %v5606, 1.442695
  %v6535 = vpow.pop %v6534
  %v6536 = vmul.f32 %v5607, 1.442695
  %v6537 = vpow.pop %v6536
  %v6538 = vmul.f32 %v5608, 1.442695
  %v6539 = vpow.pop %v6538
  %v6540 = vmul.f32 %v5609, 1.442695
  %v6541 = vpow.pop %v6540
  %v6542 = vmul.f32 %v5610, 1.442695
  %v6543 = vpow.pop %v6542
  %v6544 = vmul.f32 %v5611, 1.442695
  %v6545 = vpow.pop %v6544
  %v6546 = vmul.f32 %v5612, 1.442695
  %v6547 = vpow.pop %v6546
  %v6548 = vmul.f32 %v5613, 1.442695
  %v6549 = vpow.pop %v6548
  %v6550 = vmul.f32 %v5614, 1.442695
  %v6551 = vpow.pop %v6550
  %v6552 = vmul.f32 %v5615, 1.442695
  %v6553 = vpow.pop %v6552
  %v6554 = vmul.f32 %v5616, 1.442695
  %v6555 = vpow.pop %v6554
  %v6556 = vmul.f32 %v5617, 1.442695
  %v6557 = vpow.pop %v6556
  %v6558 = vmul.f32 %v5618, 1.442695
  %v6559 = vpow.pop %v6558
  %v6560 = vmul.f32 %v5619, 1.442695
  %v6561 = vpow.pop %v6560
  %v6562 = vmul.f32 %v5620, 1.442695
  %v6563 = vpow.pop %v6562
  %v6564 = vmul.f32 %v5621, 1.442695
  %v6565 = vpow.pop %v6564
  %v6566 = vmul.f32 %v5622, 1.442695
  %v6567 = vpow.pop %v6566
  %v6568 = vmul.f32 %v5623, 1.442695
  %v6569 = vpow.pop %v6568
  %v6570 = vmul.f32 %v5624, 1.442695
  %v6571 = vpow.pop %v6570
  %v6572 = vmul.f32 %v5625, 1.442695
  %v6573 = vpow.pop %v6572
  %v6574 = vmul.f32 %v5626, 1.442695
  %v6575 = vpow.pop %v6574
  %v6576 = vmul.f32 %v5627, 1.442695
  %v6577 = vpow.pop %v6576
  %v6578 = vmul.f32 %v5628, 1.442695
  %v6579 = vpow.pop %v6578
  %v6580 = vmul.f32 %v5629, 1.442695
  %v6581 = vpow.pop %v6580
  %v6582 = vmul.f32 %v5630, 1.442695
  %v6583 = vpow.pop %v6582
  %v6584 = vmul.f32 %v5631, 1.442695
  %v6585 = vpow.pop %v6584
  %v6586 = vmul.f32 %v5632, 1.442695
  %v6587 = vpow.pop %v6586
  %v6588 = vmul.f32 %v5633, 1.442695
  %v6589 = vpow.pop %v6588
  %v6590 = vmul.f32 %v5634, 1.442695
  %v6591 = vpow.pop %v6590
  %v6592 = vmul.f32 %v5635, 1.442695
  %v6593 = vpow.pop %v6592
  %v6594 = vmul.f32 %v5636, 1.442695
  %v6595 = vpow.pop %v6594
  %v6596 = vmul.f32 %v5637, 1.442695
  %v6597 = vpow.pop %v6596
  %v6598 = vmul.f32 %v5638, 1.442695
  %v6599 = vpow.pop %v6598
  %v6600 = vmul.f32 %v5639, 1.442695
  %v6601 = vpow.pop %v6600
  %v6602 = vmul.f32 %v5640, 1.442695
  %v6603 = vpow.pop %v6602
  %v6604 = vmul.f32 %v5641, 1.442695
  %v6605 = vpow.pop %v6604
  %v6606 = vmul.f32 %v5642, 1.442695
  %v6607 = vpow.pop %v6606
  %v6608 = vmul.f32 %v5643, 1.442695
  %v6609 = vpow.pop %v6608
  %v6610 = vmul.f32 %v5644, 1.442695
  %v6611 = vpow.pop %v6610
  %v6612 = vmul.f32 %v5645, 1.442695
  %v6613 = vpow.pop %v6612
  %v6614 = vmul.f32 %v5646, 1.442695
  %v6615 = vpow.pop %v6614
  %v6616 = vmul.f32 %v5647, 1.442695
  %v6617 = vpow.pop %v6616
  %v6618 = vmul.f32 %v5648, 1.442695
  %v6619 = vpow.pop %v6618
  %v6620 = vmul.f32 %v5649, 1.442695
  %v6621 = vpow.pop %v6620
  %v6622 = vmul.f32 %v5650, 1.442695
  %v6623 = vpow.pop %v6622
  %v6624 = vmul.f32 %v5651, 1.442695
  %v6625 = vpow.pop %v6624
  %v6626 = vmul.f32 %v5652, 1.442695
  %v6627 = vpow.pop %v6626
  %v6628 = vmul.f32 %v5653, 1.442695
  %v6629 = vpow.pop %v6628
  %v6630 = vmul.f32 %v5654, 1.442695
  %v6631 = vpow.pop %v6630
  %v6632 = vmul.f32 %v5655, 1.442695
  %v6633 = vpow.pop %v6632
  %v6634 = vmul.f32 %v5656, 1.442695
  %v6635 = vpow.pop %v6634
  %v6636 = vmul.f32 %v5657, 1.442695
  %v6637 = vpow.pop %v6636
  %v6638 = vadd.f32 %v5659, 1.0
  %v6639 = vadd.f32 %v5661, 1.0
  %v6640 = vadd.f32 %v5663, 1.0
  %v6641 = vadd.f32 %v5665, 1.0
  %v6642 = vadd.f32 %v5667, 1.0
  %v6643 = vadd.f32 %v5669, 1.0
  %v6644 = vadd.f32 %v5671, 1.0
  %v6645 = vadd.f32 %v5673, 1.0
  %v6646 = vadd.f32 %v5675, 1.0
  %v6647 = vadd.f32 %v5677, 1.0
  %v6648 = vadd.f32 %v5679, 1.0
  %v6649 = vadd.f32 %v5681, 1.0
  %v6650 = vadd.f32 %v5683, 1.0
  %v6651 = vadd.f32 %v5685, 1.0
  %v6652 = vadd.f32 %v5687, 1.0
  %v6653 = vadd.f32 %v5689, 1.0
  %v6654 = vadd.f32 %v5691, 1.0
  %v6655 = vadd.f32 %v5693, 1.0
  %v6656 = vadd.f32 %v5695, 1.0
  %v6657 = vadd.f32 %v5697, 1.0
  %v6658 = vadd.f32 %v5699, 1.0
  %v6659 = vadd.f32 %v5701, 1.0
  %v6660 = vadd.f32 %v5703, 1.0
  %v6661 = vadd.f32 %v5705, 1.0
  %v6662 = vadd.f32 %v5707, 1.0
  %v6663 = vadd.f32 %v5709, 1.0
  %v6664 = vadd.f32 %v5711, 1.0
  %v6665 = vadd.f32 %v5713, 1.0
  %v6666 = vadd.f32 %v5715, 1.0
  %v6667 = vadd.f32 %v5717, 1.0
  %v6668 = vadd.f32 %v5719, 1.0
  %v6669 = vadd.f32 %v5721, 1.0
  %v6670 = vadd.f32 %v5723, 1.0
  %v6671 = vadd.f32 %v5725, 1.0
  %v6672 = vadd.f32 %v5727, 1.0
  %v6673 = vadd.f32 %v5729, 1.0
  %v6674 = vadd.f32 %v5731, 1.0
  %v6675 = vadd.f32 %v5733, 1.0
  %v6676 = vadd.f32 %v5735, 1.0
  %v6677 = vadd.f32 %v5737, 1.0
  %v6678 = vadd.f32 %v5739, 1.0
  %v6679 = vadd.f32 %v5741, 1.0
  %v6680 = vadd.f32 %v5743, 1.0
  %v6681 = vadd.f32 %v5745, 1.0
  %v6682 = vadd.f32 %v5747, 1.0
  %v6683 = vadd.f32 %v5749, 1.0
  %v6684 = vadd.f32 %v5751, 1.0
  %v6685 = vadd.f32 %v5753, 1.0
  %v6686 = vadd.f32 %v5755, 1.0
  %v6687 = vadd.f32 %v5757, 1.0
  %v6688 = vadd.f32 %v5759, 1.0
  %v6689 = vadd.f32 %v5761, 1.0
  %v6690 = vadd.f32 %v5763, 1.0
  %v6691 = vadd.f32 %v5765, 1.0
  %v6692 = vadd.f32 %v5767, 1.0
  %v6693 = vadd.f32 %v5769, 1.0
  %v6694 = vadd.f32 %v5771, 1.0
  %v6695 = vadd.f32 %v5773, 1.0
  %v6696 = vadd.f32 %v5775, 1.0
  %v6697 = vadd.f32 %v5777, 1.0
  %v6698 = vadd.f32 %v5779, 1.0
  %v6699 = vadd.f32 %v5781, 1.0
  %v6700 = vadd.f32 %v5783, 1.0
  %v6701 = vadd.f32 %v5785, 1.0
  %v6702 = vadd.f32 %v5787, 1.0
  %v6703 = vadd.f32 %v5789, 1.0
  %v6704 = vadd.f32 %v5791, 1.0
  %v6705 = vadd.f32 %v5793, 1.0
  %v6706 = vadd.f32 %v5795, 1.0
  %v6707 = vadd.f32 %v5797, 1.0
  %v6708 = vadd.f32 %v5799, 1.0
  %v6709 = vadd.f32 %v5801, 1.0
  %v6710 = vadd.f32 %v5803, 1.0
  %v6711 = vadd.f32 %v5805, 1.0
  %v6712 = vadd.f32 %v5807, 1.0
  %v6713 = vadd.f32 %v5809, 1.0
  %v6714 = vadd.f32 %v5811, 1.0
  %v6715 = vadd.f32 %v5813, 1.0
  %v6716 = vadd.f32 %v5815, 1.0
  %v6717 = vadd.f32 %v5817, 1.0
  %v6718 = vadd.f32 %v5819, 1.0
  %v6719 = vadd.f32 %v5821, 1.0
  %v6720 = vadd.f32 %v5823, 1.0
  %v6721 = vadd.f32 %v5825, 1.0
  %v6722 = vadd.f32 %v5827, 1.0
  %v6723 = vadd.f32 %v5829, 1.0
  %v6724 = vadd.f32 %v5831, 1.0
  %v6725 = vadd.f32 %v5833, 1.0
  %v6726 = vadd.f32 %v5835, 1.0
  %v6727 = vadd.f32 %v5837, 1.0
  %v6728 = vadd.f32 %v5839, 1.0
  %v6729 = vadd.f32 %v5841, 1.0
  %v6730 = vadd.f32 %v5843, 1.0
  %v6731 = vadd.f32 %v5845, 1.0
  %v6732 = vadd.f32 %v5847, 1.0
  %v6733 = vadd.f32 %v5849, 1.0
  %v6734 = vadd.f32 %v5851, 1.0
  %v6735 = vadd.f32 %v5853, 1.0
  %v6736 = vadd.f32 %v5855, 1.0
  %v6737 = vadd.f32 %v5857, 1.0
  %v6738 = vadd.f32 %v5859, 1.0
  %v6739 = vadd.f32 %v5861, 1.0
  %v6740 = vadd.f32 %v5863, 1.0
  %v6741 = vadd.f32 %v5865, 1.0
  %v6742 = vadd.f32 %v5867, 1.0
  %v6743 = vadd.f32 %v5869, 1.0
  %v6744 = vadd.f32 %v5871, 1.0
  %v6745 = vadd.f32 %v5873, 1.0
  %v6746 = vadd.f32 %v5875, 1.0
  %v6747 = vadd.f32 %v5877, 1.0
  %v6748 = vadd.f32 %v5879, 1.0
  %v6749 = vadd.f32 %v5881, 1.0
  %v6750 = vadd.f32 %v5883, 1.0
  %v6751 = vadd.f32 %v5885, 1.0
  %v6752 = vadd.f32 %v5887, 1.0
  %v6753 = vadd.f32 %v5889, 1.0
  %v6754 = vadd.f32 %v5891, 1.0
  %v6755 = vadd.f32 %v5893, 1.0
  %v6756 = vadd.f32 %v5895, 1.0
  %v6757 = vadd.f32 %v5897, 1.0
  %v6758 = vadd.f32 %v5899, 1.0
  %v6759 = vadd.f32 %v5901, 1.0
  %v6760 = vadd.f32 %v5903, 1.0
  %v6761 = vadd.f32 %v5905, 1.0
  %v6762 = vadd.f32 %v5907, 1.0
  %v6763 = vadd.f32 %v5909, 1.0
  %v6764 = vadd.f32 %v5911, 1.0
  %v6765 = vadd.f32 %v5913, 1.0
  %v6766 = vadd.f32 %v5915, 1.0
  %v6767 = vadd.f32 %v5917, 1.0
  %v6768 = vadd.f32 %v5919, 1.0
  %v6769 = vadd.f32 %v5921, 1.0
  %v6770 = vadd.f32 %v5923, 1.0
  %v6771 = vadd.f32 %v5925, 1.0
  %v6772 = vadd.f32 %v5927, 1.0
  %v6773 = vadd.f32 %v5929, 1.0
  %v6774 = vadd.f32 %v5931, 1.0
  %v6775 = vadd.f32 %v5933, 1.0
  %v6776 = vadd.f32 %v5935, 1.0
  %v6777 = vadd.f32 %v5937, 1.0
  %v6778 = vadd.f32 %v5939, 1.0
  %v6779 = vadd.f32 %v5941, 1.0
  %v6780 = vadd.f32 %v5943, 1.0
  %v6781 = vadd.f32 %v5945, 1.0
  %v6782 = vadd.f32 %v5947, 1.0
  %v6783 = vadd.f32 %v5949, 1.0
  %v6784 = vadd.f32 %v5951, 1.0
  %v6785 = vadd.f32 %v5953, 1.0
  %v6786 = vadd.f32 %v5955, 1.0
  %v6787 = vadd.f32 %v5957, 1.0
  %v6788 = vadd.f32 %v5959, 1.0
  %v6789 = vadd.f32 %v5961, 1.0
  %v6790 = vadd.f32 %v5963, 1.0
  %v6791 = vadd.f32 %v5965, 1.0
  %v6792 = vadd.f32 %v5967, 1.0
  %v6793 = vadd.f32 %v5969, 1.0
  %v6794 = vadd.f32 %v5971, 1.0
  %v6795 = vadd.f32 %v5973, 1.0
  %v6796 = vadd.f32 %v5975, 1.0
  %v6797 = vadd.f32 %v5977, 1.0
  %v6798 = vadd.f32 %v5979, 1.0
  %v6799 = vadd.f32 %v5981, 1.0
  %v6800 = vadd.f32 %v5983, 1.0
  %v6801 = vadd.f32 %v5985, 1.0
  %v6802 = vadd.f32 %v5987, 1.0
  %v6803 = vadd.f32 %v5989, 1.0
  %v6804 = vadd.f32 %v5991, 1.0
  %v6805 = vadd.f32 %v5993, 1.0
  %v6806 = vadd.f32 %v5995, 1.0
  %v6807 = vadd.f32 %v5997, 1.0
  %v6808 = vadd.f32 %v5999, 1.0
  %v6809 = vadd.f32 %v6001, 1.0
  %v6810 = vadd.f32 %v6003, 1.0
  %v6811 = vadd.f32 %v6005, 1.0
  %v6812 = vadd.f32 %v6007, 1.0
  %v6813 = vadd.f32 %v6009, 1.0
  %v6814 = vadd.f32 %v6011, 1.0
  %v6815 = vadd.f32 %v6013, 1.0
  %v6816 = vadd.f32 %v6015, 1.0
  %v6817 = vadd.f32 %v6017, 1.0
  %v6818 = vadd.f32 %v6019, 1.0
  %v6819 = vadd.f32 %v6021, 1.0
  %v6820 = vadd.f32 %v6023, 1.0
  %v6821 = vadd.f32 %v6025, 1.0
  %v6822 = vadd.f32 %v6027, 1.0
  %v6823 = vadd.f32 %v6029, 1.0
  %v6824 = vadd.f32 %v6031, 1.0
  %v6825 = vadd.f32 %v6033, 1.0
  %v6826 = vadd.f32 %v6035, 1.0
  %v6827 = vadd.f32 %v6037, 1.0
  %v6828 = vadd.f32 %v6039, 1.0
  %v6829 = vadd.f32 %v6041, 1.0
  %v6830 = vadd.f32 %v6043, 1.0
  %v6831 = vadd.f32 %v6045, 1.0
  %v6832 = vadd.f32 %v6047, 1.0
  %v6833 = vadd.f32 %v6049, 1.0
  %v6834 = vadd.f32 %v6051, 1.0
  %v6835 = vadd.f32 %v6053, 1.0
  %v6836 = vadd.f32 %v6055, 1.0
  %v6837 = vadd.f32 %v6057, 1.0
  %v6838 = vadd.f32 %v6059, 1.0
  %v6839 = vadd.f32 %v6061, 1.0
  %v6840 = vadd.f32 %v6063, 1.0
  %v6841 = vadd.f32 %v6065, 1.0
  %v6842 = vadd.f32 %v6067, 1.0
  %v6843 = vadd.f32 %v6069, 1.0
  %v6844 = vadd.f32 %v6071, 1.0
  %v6845 = vadd.f32 %v6073, 1.0
  %v6846 = vadd.f32 %v6075, 1.0
  %v6847 = vadd.f32 %v6077, 1.0
  %v6848 = vadd.f32 %v6079, 1.0
  %v6849 = vadd.f32 %v6081, 1.0
  %v6850 = vadd.f32 %v6083, 1.0
  %v6851 = vadd.f32 %v6085, 1.0
  %v6852 = vadd.f32 %v6087, 1.0
  %v6853 = vadd.f32 %v6089, 1.0
  %v6854 = vadd.f32 %v6091, 1.0
  %v6855 = vadd.f32 %v6093, 1.0
  %v6856 = vadd.f32 %v6095, 1.0
  %v6857 = vadd.f32 %v6097, 1.0
  %v6858 = vadd.f32 %v6099, 1.0
  %v6859 = vadd.f32 %v6101, 1.0
  %v6860 = vadd.f32 %v6103, 1.0
  %v6861 = vadd.f32 %v6105, 1.0
  %v6862 = vadd.f32 %v6107, 1.0
  %v6863 = vadd.f32 %v6109, 1.0
  %v6864 = vadd.f32 %v6111, 1.0
  %v6865 = vadd.f32 %v6113, 1.0
  %v6866 = vadd.f32 %v6115, 1.0
  %v6867 = vadd.f32 %v6117, 1.0
  %v6868 = vadd.f32 %v6119, 1.0
  %v6869 = vadd.f32 %v6121, 1.0
  %v6870 = vadd.f32 %v6123, 1.0
  %v6871 = vadd.f32 %v6125, 1.0
  %v6872 = vadd.f32 %v6127, 1.0
  %v6873 = vadd.f32 %v6129, 1.0
  %v6874 = vadd.f32 %v6131, 1.0
  %v6875 = vadd.f32 %v6133, 1.0
  %v6876 = vadd.f32 %v6135, 1.0
  %v6877 = vadd.f32 %v6137, 1.0
  %v6878 = vadd.f32 %v6139, 1.0
  %v6879 = vadd.f32 %v6141, 1.0
  %v6880 = vadd.f32 %v6143, 1.0
  %v6881 = vadd.f32 %v6145, 1.0
  %v6882 = vadd.f32 %v6147, 1.0
  %v6883 = vadd.f32 %v6149, 1.0
  %v6884 = vadd.f32 %v6151, 1.0
  %v6885 = vadd.f32 %v6153, 1.0
  %v6886 = vadd.f32 %v6155, 1.0
  %v6887 = vadd.f32 %v6157, 1.0
  %v6888 = vadd.f32 %v6159, 1.0
  %v6889 = vadd.f32 %v6161, 1.0
  %v6890 = vadd.f32 %v6163, 1.0
  %v6891 = vadd.f32 %v6165, 1.0
  %v6892 = vadd.f32 %v6167, 1.0
  %v6893 = vadd.f32 %v6169, 1.0
  %v6894 = vadd.f32 %v6171, 1.0
  %v6895 = vadd.f32 %v6173, 1.0
  %v6896 = vadd.f32 %v6175, 1.0
  %v6897 = vadd.f32 %v6177, 1.0
  %v6898 = vadd.f32 %v6179, 1.0
  %v6899 = vadd.f32 %v6181, 1.0
  %v6900 = vadd.f32 %v6183, 1.0
  %v6901 = vadd.f32 %v6185, 1.0
  %v6902 = vadd.f32 %v6187, 1.0
  %v6903 = vadd.f32 %v6189, 1.0
  %v6904 = vadd.f32 %v6191, 1.0
  %v6905 = vadd.f32 %v6193, 1.0
  %v6906 = vadd.f32 %v6195, 1.0
  %v6907 = vadd.f32 %v6197, 1.0
  %v6908 = vadd.f32 %v6199, 1.0
  %v6909 = vadd.f32 %v6201, 1.0
  %v6910 = vadd.f32 %v6203, 1.0
  %v6911 = vadd.f32 %v6205, 1.0
  %v6912 = vadd.f32 %v6207, 1.0
  %v6913 = vadd.f32 %v6209, 1.0
  %v6914 = vadd.f32 %v6211, 1.0
  %v6915 = vadd.f32 %v6213, 1.0
  %v6916 = vadd.f32 %v6215, 1.0
  %v6917 = vadd.f32 %v6217, 1.0
  %v6918 = vadd.f32 %v6219, 1.0
  %v6919 = vadd.f32 %v6221, 1.0
  %v6920 = vadd.f32 %v6223, 1.0
  %v6921 = vadd.f32 %v6225, 1.0
  %v6922 = vadd.f32 %v6227, 1.0
  %v6923 = vadd.f32 %v6229, 1.0
  %v6924 = vadd.f32 %v6231, 1.0
  %v6925 = vadd.f32 %v6233, 1.0
  %v6926 = vadd.f32 %v6235, 1.0
  %v6927 = vadd.f32 %v6237, 1.0
  %v6928 = vadd.f32 %v6239, 1.0
  %v6929 = vadd.f32 %v6241, 1.0
  %v6930 = vadd.f32 %v6243, 1.0
  %v6931 = vadd.f32 %v6245, 1.0
  %v6932 = vadd.f32 %v6247, 1.0
  %v6933 = vadd.f32 %v6249, 1.0
  %v6934 = vadd.f32 %v6251, 1.0
  %v6935 = vadd.f32 %v6253, 1.0
  %v6936 = vadd.f32 %v6255, 1.0
  %v6937 = vadd.f32 %v6257, 1.0
  %v6938 = vadd.f32 %v6259, 1.0
  %v6939 = vadd.f32 %v6261, 1.0
  %v6940 = vadd.f32 %v6263, 1.0
  %v6941 = vadd.f32 %v6265, 1.0
  %v6942 = vadd.f32 %v6267, 1.0
  %v6943 = vadd.f32 %v6269, 1.0
  %v6944 = vadd.f32 %v6271, 1.0
  %v6945 = vadd.f32 %v6273, 1.0
  %v6946 = vadd.f32 %v6275, 1.0
  %v6947 = vadd.f32 %v6277, 1.0
  %v6948 = vadd.f32 %v6279, 1.0
  %v6949 = vadd.f32 %v6281, 1.0
  %v6950 = vadd.f32 %v6283, 1.0
  %v6951 = vadd.f32 %v6285, 1.0
  %v6952 = vadd.f32 %v6287, 1.0
  %v6953 = vadd.f32 %v6289, 1.0
  %v6954 = vadd.f32 %v6291, 1.0
  %v6955 = vadd.f32 %v6293, 1.0
  %v6956 = vadd.f32 %v6295, 1.0
  %v6957 = vadd.f32 %v6297, 1.0
  %v6958 = vadd.f32 %v6299, 1.0
  %v6959 = vadd.f32 %v6301, 1.0
  %v6960 = vadd.f32 %v6303, 1.0
  %v6961 = vadd.f32 %v6305, 1.0
  %v6962 = vadd.f32 %v6307, 1.0
  %v6963 = vadd.f32 %v6309, 1.0
  %v6964 = vadd.f32 %v6311, 1.0
  %v6965 = vadd.f32 %v6313, 1.0
  %v6966 = vadd.f32 %v6315, 1.0
  %v6967 = vadd.f32 %v6317, 1.0
  %v6968 = vadd.f32 %v6319, 1.0
  %v6969 = vadd.f32 %v6321, 1.0
  %v6970 = vadd.f32 %v6323, 1.0
  %v6971 = vadd.f32 %v6325, 1.0
  %v6972 = vadd.f32 %v6327, 1.0
  %v6973 = vadd.f32 %v6329, 1.0
  %v6974 = vadd.f32 %v6331, 1.0
  %v6975 = vadd.f32 %v6333, 1.0
  %v6976 = vadd.f32 %v6335, 1.0
  %v6977 = vadd.f32 %v6337, 1.0
  %v6978 = vadd.f32 %v6339, 1.0
  %v6979 = vadd.f32 %v6341, 1.0
  %v6980 = vadd.f32 %v6343, 1.0
  %v6981 = vadd.f32 %v6345, 1.0
  %v6982 = vadd.f32 %v6347, 1.0
  %v6983 = vadd.f32 %v6349, 1.0
  %v6984 = vadd.f32 %v6351, 1.0
  %v6985 = vadd.f32 %v6353, 1.0
  %v6986 = vadd.f32 %v6355, 1.0
  %v6987 = vadd.f32 %v6357, 1.0
  %v6988 = vadd.f32 %v6359, 1.0
  %v6989 = vadd.f32 %v6361, 1.0
  %v6990 = vadd.f32 %v6363, 1.0
  %v6991 = vadd.f32 %v6365, 1.0
  %v6992 = vadd.f32 %v6367, 1.0
  %v6993 = vadd.f32 %v6369, 1.0
  %v6994 = vadd.f32 %v6371, 1.0
  %v6995 = vadd.f32 %v6373, 1.0
  %v6996 = vadd.f32 %v6375, 1.0
  %v6997 = vadd.f32 %v6377, 1.0
  %v6998 = vadd.f32 %v6379, 1.0
  %v6999 = vadd.f32 %v6381, 1.0
  %v7000 = vadd.f32 %v6383, 1.0
  %v7001 = vadd.f32 %v6385, 1.0
  %v7002 = vadd.f32 %v6387, 1.0
  %v7003 = vadd.f32 %v6389, 1.0
  %v7004 = vadd.f32 %v6391, 1.0
  %v7005 = vadd.f32 %v6393, 1.0
  %v7006 = vadd.f32 %v6395, 1.0
  %v7007 = vadd.f32 %v6397, 1.0
  %v7008 = vadd.f32 %v6399, 1.0
  %v7009 = vadd.f32 %v6401, 1.0
  %v7010 = vadd.f32 %v6403, 1.0
  %v7011 = vadd.f32 %v6405, 1.0
  %v7012 = vadd.f32 %v6407, 1.0
  %v7013 = vadd.f32 %v6409, 1.0
  %v7014 = vadd.f32 %v6411, 1.0
  %v7015 = vadd.f32 %v6413, 1.0
  %v7016 = vadd.f32 %v6415, 1.0
  %v7017 = vadd.f32 %v6417, 1.0
  %v7018 = vadd.f32 %v6419, 1.0
  %v7019 = vadd.f32 %v6421, 1.0
  %v7020 = vadd.f32 %v6423, 1.0
  %v7021 = vadd.f32 %v6425, 1.0
  %v7022 = vadd.f32 %v6427, 1.0
  %v7023 = vadd.f32 %v6429, 1.0
  %v7024 = vadd.f32 %v6431, 1.0
  %v7025 = vadd.f32 %v6433, 1.0
  %v7026 = vadd.f32 %v6435, 1.0
  %v7027 = vadd.f32 %v6437, 1.0
  %v7028 = vadd.f32 %v6439, 1.0
  %v7029 = vadd.f32 %v6441, 1.0
  %v7030 = vadd.f32 %v6443, 1.0
  %v7031 = vadd.f32 %v6445, 1.0
  %v7032 = vadd.f32 %v6447, 1.0
  %v7033 = vadd.f32 %v6449, 1.0
  %v7034 = vadd.f32 %v6451, 1.0
  %v7035 = vadd.f32 %v6453, 1.0
  %v7036 = vadd.f32 %v6455, 1.0
  %v7037 = vadd.f32 %v6457, 1.0
  %v7038 = vadd.f32 %v6459, 1.0
  %v7039 = vadd.f32 %v6461, 1.0
  %v7040 = vadd.f32 %v6463, 1.0
  %v7041 = vadd.f32 %v6465, 1.0
  %v7042 = vadd.f32 %v6467, 1.0
  %v7043 = vadd.f32 %v6469, 1.0
  %v7044 = vadd.f32 %v6471, 1.0
  %v7045 = vadd.f32 %v6473, 1.0
  %v7046 = vadd.f32 %v6475, 1.0
  %v7047 = vadd.f32 %v6477, 1.0
  %v7048 = vadd.f32 %v6479, 1.0
  %v7049 = vadd.f32 %v6481, 1.0
  %v7050 = vadd.f32 %v6483, 1.0
  %v7051 = vadd.f32 %v6485, 1.0
  %v7052 = vadd.f32 %v6487, 1.0
  %v7053 = vadd.f32 %v6489, 1.0
  %v7054 = vadd.f32 %v6491, 1.0
  %v7055 = vadd.f32 %v6493, 1.0
  %v7056 = vadd.f32 %v6495, 1.0
  %v7057 = vadd.f32 %v6497, 1.0
  %v7058 = vadd.f32 %v6499, 1.0
  %v7059 = vadd.f32 %v6501, 1.0
  %v7060 = vadd.f32 %v6503, 1.0
  %v7061 = vadd.f32 %v6505, 1.0
  %v7062 = vadd.f32 %v6507, 1.0
  %v7063 = vadd.f32 %v6509, 1.0
  %v7064 = vadd.f32 %v6511, 1.0
  %v7065 = vadd.f32 %v6513, 1.0
  %v7066 = vadd.f32 %v6515, 1.0
  %v7067 = vadd.f32 %v6517, 1.0
  %v7068 = vadd.f32 %v6519, 1.0
  %v7069 = vadd.f32 %v6521, 1.0
  %v7070 = vadd.f32 %v6523, 1.0
  %v7071 = vadd.f32 %v6525, 1.0
  %v7072 = vadd.f32 %v6527, 1.0
  %v7073 = vadd.f32 %v6529, 1.0
  %v7074 = vadd.f32 %v6531, 1.0
  %v7075 = vadd.f32 %v6533, 1.0
  %v7076 = vadd.f32 %v6535, 1.0
  %v7077 = vadd.f32 %v6537, 1.0
  %v7078 = vadd.f32 %v6539, 1.0
  %v7079 = vadd.f32 %v6541, 1.0
  %v7080 = vadd.f32 %v6543, 1.0
  %v7081 = vadd.f32 %v6545, 1.0
  %v7082 = vadd.f32 %v6547, 1.0
  %v7083 = vadd.f32 %v6549, 1.0
  %v7084 = vadd.f32 %v6551, 1.0
  %v7085 = vadd.f32 %v6553, 1.0
  %v7086 = vadd.f32 %v6555, 1.0
  %v7087 = vadd.f32 %v6557, 1.0
  %v7088 = vadd.f32 %v6559, 1.0
  %v7089 = vadd.f32 %v6561, 1.0
  %v7090 = vadd.f32 %v6563, 1.0
  %v7091 = vadd.f32 %v6565, 1.0
  %v7092 = vadd.f32 %v6567, 1.0
  %v7093 = vadd.f32 %v6569, 1.0
  %v7094 = vadd.f32 %v6571, 1.0
  %v7095 = vadd.f32 %v6573, 1.0
  %v7096 = vadd.f32 %v6575, 1.0
  %v7097 = vadd.f32 %v6577, 1.0
  %v7098 = vadd.f32 %v6579, 1.0
  %v7099 = vadd.f32 %v6581, 1.0
  %v7100 = vadd.f32 %v6583, 1.0
  %v7101 = vadd.f32 %v6585, 1.0
  %v7102 = vadd.f32 %v6587, 1.0
  %v7103 = vadd.f32 %v6589, 1.0
  %v7104 = vadd.f32 %v6591, 1.0
  %v7105 = vadd.f32 %v6593, 1.0
  %v7106 = vadd.f32 %v6595, 1.0
  %v7107 = vadd.f32 %v6597, 1.0
  %v7108 = vadd.f32 %v6599, 1.0
  %v7109 = vadd.f32 %v6601, 1.0
  %v7110 = vadd.f32 %v6603, 1.0
  %v7111 = vadd.f32 %v6605, 1.0
  %v7112 = vadd.f32 %v6607, 1.0
  %v7113 = vadd.f32 %v6609, 1.0
  %v7114 = vadd.f32 %v6611, 1.0
  %v7115 = vadd.f32 %v6613, 1.0
  %v7116 = vadd.f32 %v6615, 1.0
  %v7117 = vadd.f32 %v6617, 1.0
  %v7118 = vadd.f32 %v6619, 1.0
  %v7119 = vadd.f32 %v6621, 1.0
  %v7120 = vadd.f32 %v6623, 1.0
  %v7121 = vadd.f32 %v6625, 1.0
  %v7122 = vadd.f32 %v6627, 1.0
  %v7123 = vadd.f32 %v6629, 1.0
  %v7124 = vadd.f32 %v6631, 1.0
  %v7125 = vadd.f32 %v6633, 1.0
  %v7126 = vadd.f32 %v6635, 1.0
  %v7127 = vadd.f32 %v6637, 1.0
  %v7128 = vrcp.pop %v6638
  %v7129 = vrcp.pop %v6639
  %v7130 = vrcp.pop %v6640
  %v7131 = vrcp.pop %v6641
  %v7132 = vrcp.pop %v6642
  %v7133 = vrcp.pop %v6643
  %v7134 = vrcp.pop %v6644
  %v7135 = vrcp.pop %v6645
  %v7136 = vrcp.pop %v6646
  %v7137 = vrcp.pop %v6647
  %v7138 = vrcp.pop %v6648
  %v7139 = vrcp.pop %v6649
  %v7140 = vrcp.pop %v6650
  %v7141 = vrcp.pop %v6651
  %v7142 = vrcp.pop %v6652
  %v7143 = vrcp.pop %v6653
  %v7144 = vrcp.pop %v6654
  %v7145 = vrcp.pop %v6655
  %v7146 = vrcp.pop %v6656
  %v7147 = vrcp.pop %v6657
  %v7148 = vrcp.pop %v6658
  %v7149 = vrcp.pop %v6659
  %v7150 = vrcp.pop %v6660
  %v7151 = vrcp.pop %v6661
  %v7152 = vrcp.pop %v6662
  %v7153 = vrcp.pop %v6663
  %v7154 = vrcp.pop %v6664
  %v7155 = vrcp.pop %v6665
  %v7156 = vrcp.pop %v6666
  %v7157 = vrcp.pop %v6667
  %v7158 = vrcp.pop %v6668
  %v7159 = vrcp.pop %v6669
  %v7160 = vrcp.pop %v6670
  %v7161 = vrcp.pop %v6671
  %v7162 = vrcp.pop %v6672
  %v7163 = vrcp.pop %v6673
  %v7164 = vrcp.pop %v6674
  %v7165 = vrcp.pop %v6675
  %v7166 = vrcp.pop %v6676
  %v7167 = vrcp.pop %v6677
  %v7168 = vrcp.pop %v6678
  %v7169 = vrcp.pop %v6679
  %v7170 = vrcp.pop %v6680
  %v7171 = vrcp.pop %v6681
  %v7172 = vrcp.pop %v6682
  %v7173 = vrcp.pop %v6683
  %v7174 = vrcp.pop %v6684
  %v7175 = vrcp.pop %v6685
  %v7176 = vrcp.pop %v6686
  %v7177 = vrcp.pop %v6687
  %v7178 = vrcp.pop %v6688
  %v7179 = vrcp.pop %v6689
  %v7180 = vrcp.pop %v6690
  %v7181 = vrcp.pop %v6691
  %v7182 = vrcp.pop %v6692
  %v7183 = vrcp.pop %v6693
  %v7184 = vrcp.pop %v6694
  %v7185 = vrcp.pop %v6695
  %v7186 = vrcp.pop %v6696
  %v7187 = vrcp.pop %v6697
  %v7188 = vrcp.pop %v6698
  %v7189 = vrcp.pop %v6699
  %v7190 = vrcp.pop %v6700
  %v7191 = vrcp.pop %v6701
  %v7192 = vrcp.pop %v6702
  %v7193 = vrcp.pop %v6703
  %v7194 = vrcp.pop %v6704
  %v7195 = vrcp.pop %v6705
  %v7196 = vrcp.pop %v6706
  %v7197 = vrcp.pop %v6707
  %v7198 = vrcp.pop %v6708
  %v7199 = vrcp.pop %v6709
  %v7200 = vrcp.pop %v6710
  %v7201 = vrcp.pop %v6711
  %v7202 = vrcp.pop %v6712
  %v7203 = vrcp.pop %v6713
  %v7204 = vrcp.pop %v6714
  %v7205 = vrcp.pop %v6715
  %v7206 = vrcp.pop %v6716
  %v7207 = vrcp.pop %v6717
  %v7208 = vrcp.pop %v6718
  %v7209 = vrcp.pop %v6719
  %v7210 = vrcp.pop %v6720
  %v7211 = vrcp.pop %v6721
  %v7212 = vrcp.pop %v6722
  %v7213 = vrcp.pop %v6723
  %v7214 = vrcp.pop %v6724
  %v7215 = vrcp.pop %v6725
  %v7216 = vrcp.pop %v6726
  %v7217 = vrcp.pop %v6727
  %v7218 = vrcp.pop %v6728
  %v7219 = vrcp.pop %v6729
  %v7220 = vrcp.pop %v6730
  %v7221 = vrcp.pop %v6731
  %v7222 = vrcp.pop %v6732
  %v7223 = vrcp.pop %v6733
  %v7224 = vrcp.pop %v6734
  %v7225 = vrcp.pop %v6735
  %v7226 = vrcp.pop %v6736
  %v7227 = vrcp.pop %v6737
  %v7228 = vrcp.pop %v6738
  %v7229 = vrcp.pop %v6739
  %v7230 = vrcp.pop %v6740
  %v7231 = vrcp.pop %v6741
  %v7232 = vrcp.pop %v6742
  %v7233 = vrcp.pop %v6743
  %v7234 = vrcp.pop %v6744
  %v7235 = vrcp.pop %v6745
  %v7236 = vrcp.pop %v6746
  %v7237 = vrcp.pop %v6747
  %v7238 = vrcp.pop %v6748
  %v7239 = vrcp.pop %v6749
  %v7240 = vrcp.pop %v6750
  %v7241 = vrcp.pop %v6751
  %v7242 = vrcp.pop %v6752
  %v7243 = vrcp.pop %v6753
  %v7244 = vrcp.pop %v6754
  %v7245 = vrcp.pop %v6755
  %v7246 = vrcp.pop %v6756
  %v7247 = vrcp.pop %v6757
  %v7248 = vrcp.pop %v6758
  %v7249 = vrcp.pop %v6759
  %v7250 = vrcp.pop %v6760
  %v7251 = vrcp.pop %v6761
  %v7252 = vrcp.pop %v6762
  %v7253 = vrcp.pop %v6763
  %v7254 = vrcp.pop %v6764
  %v7255 = vrcp.pop %v6765
  %v7256 = vrcp.pop %v6766
  %v7257 = vrcp.pop %v6767
  %v7258 = vrcp.pop %v6768
  %v7259 = vrcp.pop %v6769
  %v7260 = vrcp.pop %v6770
  %v7261 = vrcp.pop %v6771
  %v7262 = vrcp.pop %v6772
  %v7263 = vrcp.pop %v6773
  %v7264 = vrcp.pop %v6774
  %v7265 = vrcp.pop %v6775
  %v7266 = vrcp.pop %v6776
  %v7267 = vrcp.pop %v6777
  %v7268 = vrcp.pop %v6778
  %v7269 = vrcp.pop %v6779
  %v7270 = vrcp.pop %v6780
  %v7271 = vrcp.pop %v6781
  %v7272 = vrcp.pop %v6782
  %v7273 = vrcp.pop %v6783
  %v7274 = vrcp.pop %v6784
  %v7275 = vrcp.pop %v6785
  %v7276 = vrcp.pop %v6786
  %v7277 = vrcp.pop %v6787
  %v7278 = vrcp.pop %v6788
  %v7279 = vrcp.pop %v6789
  %v7280 = vrcp.pop %v6790
  %v7281 = vrcp.pop %v6791
  %v7282 = vrcp.pop %v6792
  %v7283 = vrcp.pop %v6793
  %v7284 = vrcp.pop %v6794
  %v7285 = vrcp.pop %v6795
  %v7286 = vrcp.pop %v6796
  %v7287 = vrcp.pop %v6797
  %v7288 = vrcp.pop %v6798
  %v7289 = vrcp.pop %v6799
  %v7290 = vrcp.pop %v6800
  %v7291 = vrcp.pop %v6801
  %v7292 = vrcp.pop %v6802
  %v7293 = vrcp.pop %v6803
  %v7294 = vrcp.pop %v6804
  %v7295 = vrcp.pop %v6805
  %v7296 = vrcp.pop %v6806
  %v7297 = vrcp.pop %v6807
  %v7298 = vrcp.pop %v6808
  %v7299 = vrcp.pop %v6809
  %v7300 = vrcp.pop %v6810
  %v7301 = vrcp.pop %v6811
  %v7302 = vrcp.pop %v6812
  %v7303 = vrcp.pop %v6813
  %v7304 = vrcp.pop %v6814
  %v7305 = vrcp.pop %v6815
  %v7306 = vrcp.pop %v6816
  %v7307 = vrcp.pop %v6817
  %v7308 = vrcp.pop %v6818
  %v7309 = vrcp.pop %v6819
  %v7310 = vrcp.pop %v6820
  %v7311 = vrcp.pop %v6821
  %v7312 = vrcp.pop %v6822
  %v7313 = vrcp.pop %v6823
  %v7314 = vrcp.pop %v6824
  %v7315 = vrcp.pop %v6825
  %v7316 = vrcp.pop %v6826
  %v7317 = vrcp.pop %v6827
  %v7318 = vrcp.pop %v6828
  %v7319 = vrcp.pop %v6829
  %v7320 = vrcp.pop %v6830
  %v7321 = vrcp.pop %v6831
  %v7322 = vrcp.pop %v6832
  %v7323 = vrcp.pop %v6833
  %v7324 = vrcp.pop %v6834
  %v7325 = vrcp.pop %v6835
  %v7326 = vrcp.pop %v6836
  %v7327 = vrcp.pop %v6837
  %v7328 = vrcp.pop %v6838
  %v7329 = vrcp.pop %v6839
  %v7330 = vrcp.pop %v6840
  %v7331 = vrcp.pop %v6841
  %v7332 = vrcp.pop %v6842
  %v7333 = vrcp.pop %v6843
  %v7334 = vrcp.pop %v6844
  %v7335 = vrcp.pop %v6845
  %v7336 = vrcp.pop %v6846
  %v7337 = vrcp.pop %v6847
  %v7338 = vrcp.pop %v6848
  %v7339 = vrcp.pop %v6849
  %v7340 = vrcp.pop %v6850
  %v7341 = vrcp.pop %v6851
  %v7342 = vrcp.pop %v6852
  %v7343 = vrcp.pop %v6853
  %v7344 = vrcp.pop %v6854
  %v7345 = vrcp.pop %v6855
  %v7346 = vrcp.pop %v6856
  %v7347 = vrcp.pop %v6857
  %v7348 = vrcp.pop %v6858
  %v7349 = vrcp.pop %v6859
  %v7350 = vrcp.pop %v6860
  %v7351 = vrcp.pop %v6861
  %v7352 = vrcp.pop %v6862
  %v7353 = vrcp.pop %v6863
  %v7354 = vrcp.pop %v6864
  %v7355 = vrcp.pop %v6865
  %v7356 = vrcp.pop %v6866
  %v7357 = vrcp.pop %v6867
  %v7358 = vrcp.pop %v6868
  %v7359 = vrcp.pop %v6869
  %v7360 = vrcp.pop %v6870
  %v7361 = vrcp.pop %v6871
  %v7362 = vrcp.pop %v6872
  %v7363 = vrcp.pop %v6873
  %v7364 = vrcp.pop %v6874
  %v7365 = vrcp.pop %v6875
  %v7366 = vrcp.pop %v6876
  %v7367 = vrcp.pop %v6877
  %v7368 = vrcp.pop %v6878
  %v7369 = vrcp.pop %v6879
  %v7370 = vrcp.pop %v6880
  %v7371 = vrcp.pop %v6881
  %v7372 = vrcp.pop %v6882
  %v7373 = vrcp.pop %v6883
  %v7374 = vrcp.pop %v6884
  %v7375 = vrcp.pop %v6885
  %v7376 = vrcp.pop %v6886
  %v7377 = vrcp.pop %v6887
  %v7378 = vrcp.pop %v6888
  %v7379 = vrcp.pop %v6889
  %v7380 = vrcp.pop %v6890
  %v7381 = vrcp.pop %v6891
  %v7382 = vrcp.pop %v6892
  %v7383 = vrcp.pop %v6893
  %v7384 = vrcp.pop %v6894
  %v7385 = vrcp.pop %v6895
  %v7386 = vrcp.pop %v6896
  %v7387 = vrcp.pop %v6897
  %v7388 = vrcp.pop %v6898
  %v7389 = vrcp.pop %v6899
  %v7390 = vrcp.pop %v6900
  %v7391 = vrcp.pop %v6901
  %v7392 = vrcp.pop %v6902
  %v7393 = vrcp.pop %v6903
  %v7394 = vrcp.pop %v6904
  %v7395 = vrcp.pop %v6905
  %v7396 = vrcp.pop %v6906
  %v7397 = vrcp.pop %v6907
  %v7398 = vrcp.pop %v6908
  %v7399 = vrcp.pop %v6909
  %v7400 = vrcp.pop %v6910
  %v7401 = vrcp.pop %v6911
  %v7402 = vrcp.pop %v6912
  %v7403 = vrcp.pop %v6913
  %v7404 = vrcp.pop %v6914
  %v7405 = vrcp.pop %v6915
  %v7406 = vrcp.pop %v6916
  %v7407 = vrcp.pop %v6917
  %v7408 = vrcp.pop %v6918
  %v7409 = vrcp.pop %v6919
  %v7410 = vrcp.pop %v6920
  %v7411 = vrcp.pop %v6921
  %v7412 = vrcp.pop %v6922
  %v7413 = vrcp.pop %v6923
  %v7414 = vrcp.pop %v6924
  %v7415 = vrcp.pop %v6925
  %v7416 = vrcp.pop %v6926
  %v7417 = vrcp.pop %v6927
  %v7418 = vrcp.pop %v6928
  %v7419 = vrcp.pop %v6929
  %v7420 = vrcp.pop %v6930
  %v7421 = vrcp.pop %v6931
  %v7422 = vrcp.pop %v6932
  %v7423 = vrcp.pop %v6933
  %v7424 = vrcp.pop %v6934
  %v7425 = vrcp.pop %v6935
  %v7426 = vrcp.pop %v6936
  %v7427 = vrcp.pop %v6937
  %v7428 = vrcp.pop %v6938
  %v7429 = vrcp.pop %v6939
  %v7430 = vrcp.pop %v6940
  %v7431 = vrcp.pop %v6941
  %v7432 = vrcp.pop %v6942
  %v7433 = vrcp.pop %v6943
  %v7434 = vrcp.pop %v6944
  %v7435 = vrcp.pop %v6945
  %v7436 = vrcp.pop %v6946
  %v7437 = vrcp.pop %v6947
  %v7438 = vrcp.pop %v6948
  %v7439 = vrcp.pop %v6949
  %v7440 = vrcp.pop %v6950
  %v7441 = vrcp.pop %v6951
  %v7442 = vrcp.pop %v6952
  %v7443 = vrcp.pop %v6953
  %v7444 = vrcp.pop %v6954
  %v7445 = vrcp.pop %v6955
  %v7446 = vrcp.pop %v6956
  %v7447 = vrcp.pop %v6957
  %v7448 = vrcp.pop %v6958
  %v7449 = vrcp.pop %v6959
  %v7450 = vrcp.pop %v6960
  %v7451 = vrcp.pop %v6961
  %v7452 = vrcp.pop %v6962
  %v7453 = vrcp.pop %v6963
  %v7454 = vrcp.pop %v6964
  %v7455 = vrcp.pop %v6965
  %v7456 = vrcp.pop %v6966
  %v7457 = vrcp.pop %v6967
  %v7458 = vrcp.pop %v6968
  %v7459 = vrcp.pop %v6969
  %v7460 = vrcp.pop %v6970
  %v7461 = vrcp.pop %v6971
  %v7462 = vrcp.pop %v6972
  %v7463 = vrcp.pop %v6973
  %v7464 = vrcp.pop %v6974
  %v7465 = vrcp.pop %v6975
  %v7466 = vrcp.pop %v6976
  %v7467 = vrcp.pop %v6977
  %v7468 = vrcp.pop %v6978
  %v7469 = vrcp.pop %v6979
  %v7470 = vrcp.pop %v6980
  %v7471 = vrcp.pop %v6981
  %v7472 = vrcp.pop %v6982
  %v7473 = vrcp.pop %v6983
  %v7474 = vrcp.pop %v6984
  %v7475 = vrcp.pop %v6985
  %v7476 = vrcp.pop %v6986
  %v7477 = vrcp.pop %v6987
  %v7478 = vrcp.pop %v6988
  %v7479 = vrcp.pop %v6989
  %v7480 = vrcp.pop %v6990
  %v7481 = vrcp.pop %v6991
  %v7482 = vrcp.pop %v6992
  %v7483 = vrcp.pop %v6993
  %v7484 = vrcp.pop %v6994
  %v7485 = vrcp.pop %v6995
  %v7486 = vrcp.pop %v6996
  %v7487 = vrcp.pop %v6997
  %v7488 = vrcp.pop %v6998
  %v7489 = vrcp.pop %v6999
  %v7490 = vrcp.pop %v7000
  %v7491 = vrcp.pop %v7001
  %v7492 = vrcp.pop %v7002
  %v7493 = vrcp.pop %v7003
  %v7494 = vrcp.pop %v7004
  %v7495 = vrcp.pop %v7005
  %v7496 = vrcp.pop %v7006
  %v7497 = vrcp.pop %v7007
  %v7498 = vrcp.pop %v7008
  %v7499 = vrcp.pop %v7009
  %v7500 = vrcp.pop %v7010
  %v7501 = vrcp.pop %v7011
  %v7502 = vrcp.pop %v7012
  %v7503 = vrcp.pop %v7013
  %v7504 = vrcp.pop %v7014
  %v7505 = vrcp.pop %v7015
  %v7506 = vrcp.pop %v7016
  %v7507 = vrcp.pop %v7017
  %v7508 = vrcp.pop %v7018
  %v7509 = vrcp.pop %v7019
  %v7510 = vrcp.pop %v7020
  %v7511 = vrcp.pop %v7021
  %v7512 = vrcp.pop %v7022
  %v7513 = vrcp.pop %v7023
  %v7514 = vrcp.pop %v7024
  %v7515 = vrcp.pop %v7025
  %v7516 = vrcp.pop %v7026
  %v7517 = vrcp.pop %v7027
  %v7518 = vrcp.pop %v7028
  %v7519 = vrcp.pop %v7029
  %v7520 = vrcp.pop %v7030
  %v7521 = vrcp.pop %v7031
  %v7522 = vrcp.pop %v7032
  %v7523 = vrcp.pop %v7033
  %v7524 = vrcp.pop %v7034
  %v7525 = vrcp.pop %v7035
  %v7526 = vrcp.pop %v7036
  %v7527 = vrcp.pop %v7037
  %v7528 = vrcp.pop %v7038
  %v7529 = vrcp.pop %v7039
  %v7530 = vrcp.pop %v7040
  %v7531 = vrcp.pop %v7041
  %v7532 = vrcp.pop %v7042
  %v7533 = vrcp.pop %v7043
  %v7534 = vrcp.pop %v7044
  %v7535 = vrcp.pop %v7045
  %v7536 = vrcp.pop %v7046
  %v7537 = vrcp.pop %v7047
  %v7538 = vrcp.pop %v7048
  %v7539 = vrcp.pop %v7049
  %v7540 = vrcp.pop %v7050
  %v7541 = vrcp.pop %v7051
  %v7542 = vrcp.pop %v7052
  %v7543 = vrcp.pop %v7053
  %v7544 = vrcp.pop %v7054
  %v7545 = vrcp.pop %v7055
  %v7546 = vrcp.pop %v7056
  %v7547 = vrcp.pop %v7057
  %v7548 = vrcp.pop %v7058
  %v7549 = vrcp.pop %v7059
  %v7550 = vrcp.pop %v7060
  %v7551 = vrcp.pop %v7061
  %v7552 = vrcp.pop %v7062
  %v7553 = vrcp.pop %v7063
  %v7554 = vrcp.pop %v7064
  %v7555 = vrcp.pop %v7065
  %v7556 = vrcp.pop %v7066
  %v7557 = vrcp.pop %v7067
  %v7558 = vrcp.pop %v7068
  %v7559 = vrcp.pop %v7069
  %v7560 = vrcp.pop %v7070
  %v7561 = vrcp.pop %v7071
  %v7562 = vrcp.pop %v7072
  %v7563 = vrcp.pop %v7073
  %v7564 = vrcp.pop %v7074
  %v7565 = vrcp.pop %v7075
  %v7566 = vrcp.pop %v7076
  %v7567 = vrcp.pop %v7077
  %v7568 = vrcp.pop %v7078
  %v7569 = vrcp.pop %v7079
  %v7570 = vrcp.pop %v7080
  %v7571 = vrcp.pop %v7081
  %v7572 = vrcp.pop %v7082
  %v7573 = vrcp.pop %v7083
  %v7574 = vrcp.pop %v7084
  %v7575 = vrcp.pop %v7085
  %v7576 = vrcp.pop %v7086
  %v7577 = vrcp.pop %v7087
  %v7578 = vrcp.pop %v7088
  %v7579 = vrcp.pop %v7089
  %v7580 = vrcp.pop %v7090
  %v7581 = vrcp.pop %v7091
  %v7582 = vrcp.pop %v7092
  %v7583 = vrcp.pop %v7093
  %v7584 = vrcp.pop %v7094
  %v7585 = vrcp.pop %v7095
  %v7586 = vrcp.pop %v7096
  %v7587 = vrcp.pop %v7097
  %v7588 = vrcp.pop %v7098
  %v7589 = vrcp.pop %v7099
  %v7590 = vrcp.pop %v7100
  %v7591 = vrcp.pop %v7101
  %v7592 = vrcp.pop %v7102
  %v7593 = vrcp.pop %v7103
  %v7594 = vrcp.pop %v7104
  %v7595 = vrcp.pop %v7105
  %v7596 = vrcp.pop %v7106
  %v7597 = vrcp.pop %v7107
  %v7598 = vrcp.pop %v7108
  %v7599 = vrcp.pop %v7109
  %v7600 = vrcp.pop %v7110
  %v7601 = vrcp.pop %v7111
  %v7602 = vrcp.pop %v7112
  %v7603 = vrcp.pop %v7113
  %v7604 = vrcp.pop %v7114
  %v7605 = vrcp.pop %v7115
  %v7606 = vrcp.pop %v7116
  %v7607 = vrcp.pop %v7117
  %v7608 = vrcp.pop %v7118
  %v7609 = vrcp.pop %v7119
  %v7610 = vrcp.pop %v7120
  %v7611 = vrcp.pop %v7121
  %v7612 = vrcp.pop %v7122
  %v7613 = vrcp.pop %v7123
  %v7614 = vrcp.pop %v7124
  %v7615 = vrcp.pop %v7125
  %v7616 = vrcp.pop %v7126
  %v7617 = vrcp.pop %v7127
  %v7618 = vmul.f32 %v3798, %v7128
  %v7619 = vmul.f32 %v3800, %v7129
  %v7620 = vmul.f32 %v4079, %v7130
  %v7621 = vmul.f32 %v4081, %v7131
  %v7622 = vmul.f32 %v4360, %v7132
  %v7623 = vmul.f32 %v4362, %v7133
  %v7624 = vmul.f32 %v4641, %v7134
  %v7625 = vmul.f32 %v4643, %v7135
  %v7626 = vmul.f32 %v4922, %v7136
  %v7627 = vmul.f32 %v4924, %v7137
  %v7628 = vmul.f32 %v3802, %v7138
  %v7629 = vmul.f32 %v3804, %v7139
  %v7630 = vmul.f32 %v4083, %v7140
  %v7631 = vmul.f32 %v4085, %v7141
  %v7632 = vmul.f32 %v4364, %v7142
  %v7633 = vmul.f32 %v4366, %v7143
  %v7634 = vmul.f32 %v4645, %v7144
  %v7635 = vmul.f32 %v4647, %v7145
  %v7636 = vmul.f32 %v4926, %v7146
  %v7637 = vmul.f32 %v4928, %v7147
  %v7638 = vmul.f32 %v3808, %v7148
  %v7639 = vmul.f32 %v3810, %v7149
  %v7640 = vmul.f32 %v4089, %v7150
  %v7641 = vmul.f32 %v4091, %v7151
  %v7642 = vmul.f32 %v4370, %v7152
  %v7643 = vmul.f32 %v4372, %v7153
  %v7644 = vmul.f32 %v4651, %v7154
  %v7645 = vmul.f32 %v4653, %v7155
  %v7646 = vmul.f32 %v4932, %v7156
  %v7647 = vmul.f32 %v4934, %v7157
  %v7648 = vmul.f32 %v3812, %v7158
  %v7649 = vmul.f32 %v3814, %v7159
  %v7650 = vmul.f32 %v4093, %v7160
  %v7651 = vmul.f32 %v4095, %v7161
  %v7652 = vmul.f32 %v4374, %v7162
  %v7653 = vmul.f32 %v4376, %v7163
  %v7654 = vmul.f32 %v4655, %v7164
  %v7655 = vmul.f32 %v4657, %v7165
  %v7656 = vmul.f32 %v4936, %v7166
  %v7657 = vmul.f32 %v4938, %v7167
  %v7658 = vmul.f32 %v3818, %v7168
  %v7659 = vmul.f32 %v3820, %v7169
  %v7660 = vmul.f32 %v4099, %v7170
  %v7661 = vmul.f32 %v4101, %v7171
  %v7662 = vmul.f32 %v4380, %v7172
  %v7663 = vmul.f32 %v4382, %v7173
  %v7664 = vmul.f32 %v4661, %v7174
  %v7665 = vmul.f32 %v4663, %v7175
  %v7666 = vmul.f32 %v4942, %v7176
  %v7667 = vmul.f32 %v4944, %v7177
  %v7668 = vmul.f32 %v3822, %v7178
  %v7669 = vmul.f32 %v3824, %v7179
  %v7670 = vmul.f32 %v4103, %v7180
  %v7671 = vmul.f32 %v4105, %v7181
  %v7672 = vmul.f32 %v4384, %v7182
  %v7673 = vmul.f32 %v4386, %v7183
  %v7674 = vmul.f32 %v4665, %v7184
  %v7675 = vmul.f32 %v4667, %v7185
  %v7676 = vmul.f32 %v4946, %v7186
  %v7677 = vmul.f32 %v4948, %v7187
  %v7678 = vmul.f32 %v3828, %v7188
  %v7679 = vmul.f32 %v3830, %v7189
  %v7680 = vmul.f32 %v4109, %v7190
  %v7681 = vmul.f32 %v4111, %v7191
  %v7682 = vmul.f32 %v4390, %v7192
  %v7683 = vmul.f32 %v4392, %v7193
  %v7684 = vmul.f32 %v4671, %v7194
  %v7685 = vmul.f32 %v4673, %v7195
  %v7686 = vmul.f32 %v4952, %v7196
  %v7687 = vmul.f32 %v4954, %v7197
  %v7688 = vmul.f32 %v3832, %v7198
  %v7689 = vmul.f32 %v3834, %v7199
  %v7690 = vmul.f32 %v4113, %v7200
  %v7691 = vmul.f32 %v4115, %v7201
  %v7692 = vmul.f32 %v4394, %v7202
  %v7693 = vmul.f32 %v4396, %v7203
  %v7694 = vmul.f32 %v4675, %v7204
  %v7695 = vmul.f32 %v4677, %v7205
  %v7696 = vmul.f32 %v4956, %v7206
  %v7697 = vmul.f32 %v4958, %v7207
  %v7698 = vmul.f32 %v3838, %v7208
  %v7699 = vmul.f32 %v3840, %v7209
  %v7700 = vmul.f32 %v4119, %v7210
  %v7701 = vmul.f32 %v4121, %v7211
  %v7702 = vmul.f32 %v4400, %v7212
  %v7703 = vmul.f32 %v4402, %v7213
  %v7704 = vmul.f32 %v4681, %v7214
  %v7705 = vmul.f32 %v4683, %v7215
  %v7706 = vmul.f32 %v4962, %v7216
  %v7707 = vmul.f32 %v4964, %v7217
  %v7708 = vmul.f32 %v3842, %v7218
  %v7709 = vmul.f32 %v3844, %v7219
  %v7710 = vmul.f32 %v4123, %v7220
  %v7711 = vmul.f32 %v4125, %v7221
  %v7712 = vmul.f32 %v4404, %v7222
  %v7713 = vmul.f32 %v4406, %v7223
  %v7714 = vmul.f32 %v4685, %v7224
  %v7715 = vmul.f32 %v4687, %v7225
  %v7716 = vmul.f32 %v4966, %v7226
  %v7717 = vmul.f32 %v4968, %v7227
  %v7718 = vmul.f32 %v3848, %v7228
  %v7719 = vmul.f32 %v3850, %v7229
  %v7720 = vmul.f32 %v4129, %v7230
  %v7721 = vmul.f32 %v4131, %v7231
  %v7722 = vmul.f32 %v4410, %v7232
  %v7723 = vmul.f32 %v4412, %v7233
  %v7724 = vmul.f32 %v4691, %v7234
  %v7725 = vmul.f32 %v4693, %v7235
  %v7726 = vmul.f32 %v4972, %v7236
  %v7727 = vmul.f32 %v4974, %v7237
  %v7728 = vmul.f32 %v3852, %v7238
  %v7729 = vmul.f32 %v3854, %v7239
  %v7730 = vmul.f32 %v4133, %v7240
  %v7731 = vmul.f32 %v4135, %v7241
  %v7732 = vmul.f32 %v4414, %v7242
  %v7733 = vmul.f32 %v4416, %v7243
  %v7734 = vmul.f32 %v4695, %v7244
  %v7735 = vmul.f32 %v4697, %v7245
  %v7736 = vmul.f32 %v4976, %v7246
  %v7737 = vmul.f32 %v4978, %v7247
  %v7738 = vmul.f32 %v3858, %v7248
  %v7739 = vmul.f32 %v3860, %v7249
  %v7740 = vmul.f32 %v4139, %v7250
  %v7741 = vmul.f32 %v4141, %v7251
  %v7742 = vmul.f32 %v4420, %v7252
  %v7743 = vmul.f32 %v4422, %v7253
  %v7744 = vmul.f32 %v4701, %v7254
  %v7745 = vmul.f32 %v4703, %v7255
  %v7746 = vmul.f32 %v4982, %v7256
  %v7747 = vmul.f32 %v4984, %v7257
  %v7748 = vmul.f32 %v3862, %v7258
  %v7749 = vmul.f32 %v3864, %v7259
  %v7750 = vmul.f32 %v4143, %v7260
  %v7751 = vmul.f32 %v4145, %v7261
  %v7752 = vmul.f32 %v4424, %v7262
  %v7753 = vmul.f32 %v4426, %v7263
  %v7754 = vmul.f32 %v4705, %v7264
  %v7755 = vmul.f32 %v4707, %v7265
  %v7756 = vmul.f32 %v4986, %v7266
  %v7757 = vmul.f32 %v4988, %v7267
  %v7758 = vmul.f32 %v3868, %v7268
  %v7759 = vmul.f32 %v3870, %v7269
  %v7760 = vmul.f32 %v4149, %v7270
  %v7761 = vmul.f32 %v4151, %v7271
  %v7762 = vmul.f32 %v4430, %v7272
  %v7763 = vmul.f32 %v4432, %v7273
  %v7764 = vmul.f32 %v4711, %v7274
  %v7765 = vmul.f32 %v4713, %v7275
  %v7766 = vmul.f32 %v4992, %v7276
  %v7767 = vmul.f32 %v4994, %v7277
  %v7768 = vmul.f32 %v3872, %v7278
  %v7769 = vmul.f32 %v3874, %v7279
  %v7770 = vmul.f32 %v4153, %v7280
  %v7771 = vmul.f32 %v4155, %v7281
  %v7772 = vmul.f32 %v4434, %v7282
  %v7773 = vmul.f32 %v4436, %v7283
  %v7774 = vmul.f32 %v4715, %v7284
  %v7775 = vmul.f32 %v4717, %v7285
  %v7776 = vmul.f32 %v4996, %v7286
  %v7777 = vmul.f32 %v4998, %v7287
  %v7778 = vmul.f32 %v3878, %v7288
  %v7779 = vmul.f32 %v3880, %v7289
  %v7780 = vmul.f32 %v4159, %v7290
  %v7781 = vmul.f32 %v4161, %v7291
  %v7782 = vmul.f32 %v4440, %v7292
  %v7783 = vmul.f32 %v4442, %v7293
  %v7784 = vmul.f32 %v4721, %v7294
  %v7785 = vmul.f32 %v4723, %v7295
  %v7786 = vmul.f32 %v5002, %v7296
  %v7787 = vmul.f32 %v5004, %v7297
  %v7788 = vmul.f32 %v3882, %v7298
  %v7789 = vmul.f32 %v3884, %v7299
  %v7790 = vmul.f32 %v4163, %v7300
  %v7791 = vmul.f32 %v4165, %v7301
  %v7792 = vmul.f32 %v4444, %v7302
  %v7793 = vmul.f32 %v4446, %v7303
  %v7794 = vmul.f32 %v4725, %v7304
  %v7795 = vmul.f32 %v4727, %v7305
  %v7796 = vmul.f32 %v5006, %v7306
  %v7797 = vmul.f32 %v5008, %v7307
  %v7798 = vmul.f32 %v3888, %v7308
  %v7799 = vmul.f32 %v3890, %v7309
  %v7800 = vmul.f32 %v4169, %v7310
  %v7801 = vmul.f32 %v4171, %v7311
  %v7802 = vmul.f32 %v4450, %v7312
  %v7803 = vmul.f32 %v4452, %v7313
  %v7804 = vmul.f32 %v4731, %v7314
  %v7805 = vmul.f32 %v4733, %v7315
  %v7806 = vmul.f32 %v5012, %v7316
  %v7807 = vmul.f32 %v5014, %v7317
  %v7808 = vmul.f32 %v3892, %v7318
  %v7809 = vmul.f32 %v3894, %v7319
  %v7810 = vmul.f32 %v4173, %v7320
  %v7811 = vmul.f32 %v4175, %v7321
  %v7812 = vmul.f32 %v4454, %v7322
  %v7813 = vmul.f32 %v4456, %v7323
  %v7814 = vmul.f32 %v4735, %v7324
  %v7815 = vmul.f32 %v4737, %v7325
  %v7816 = vmul.f32 %v5016, %v7326
  %v7817 = vmul.f32 %v5018, %v7327
  %v7818 = vmul.f32 %v3898, %v7328
  %v7819 = vmul.f32 %v3900, %v7329
  %v7820 = vmul.f32 %v4179, %v7330
  %v7821 = vmul.f32 %v4181, %v7331
  %v7822 = vmul.f32 %v4460, %v7332
  %v7823 = vmul.f32 %v4462, %v7333
  %v7824 = vmul.f32 %v4741, %v7334
  %v7825 = vmul.f32 %v4743, %v7335
  %v7826 = vmul.f32 %v5022, %v7336
  %v7827 = vmul.f32 %v5024, %v7337
  %v7828 = vmul.f32 %v3902, %v7338
  %v7829 = vmul.f32 %v3904, %v7339
  %v7830 = vmul.f32 %v4183, %v7340
  %v7831 = vmul.f32 %v4185, %v7341
  %v7832 = vmul.f32 %v4464, %v7342
  %v7833 = vmul.f32 %v4466, %v7343
  %v7834 = vmul.f32 %v4745, %v7344
  %v7835 = vmul.f32 %v4747, %v7345
  %v7836 = vmul.f32 %v5026, %v7346
  %v7837 = vmul.f32 %v5028, %v7347
  %v7838 = vmul.f32 %v3908, %v7348
  %v7839 = vmul.f32 %v3910, %v7349
  %v7840 = vmul.f32 %v4189, %v7350
  %v7841 = vmul.f32 %v4191, %v7351
  %v7842 = vmul.f32 %v4470, %v7352
  %v7843 = vmul.f32 %v4472, %v7353
  %v7844 = vmul.f32 %v4751, %v7354
  %v7845 = vmul.f32 %v4753, %v7355
  %v7846 = vmul.f32 %v5032, %v7356
  %v7847 = vmul.f32 %v5034, %v7357
  %v7848 = vmul.f32 %v3912, %v7358
  %v7849 = vmul.f32 %v3914, %v7359
  %v7850 = vmul.f32 %v4193, %v7360
  %v7851 = vmul.f32 %v4195, %v7361
  %v7852 = vmul.f32 %v4474, %v7362
  %v7853 = vmul.f32 %v4476, %v7363
  %v7854 = vmul.f32 %v4755, %v7364
  %v7855 = vmul.f32 %v4757, %v7365
  %v7856 = vmul.f32 %v5036, %v7366
  %v7857 = vmul.f32 %v5038, %v7367
  %v7858 = vmul.f32 %v3918, %v7368
  %v7859 = vmul.f32 %v3920, %v7369
  %v7860 = vmul.f32 %v4199, %v7370
  %v7861 = vmul.f32 %v4201, %v7371
  %v7862 = vmul.f32 %v4480, %v7372
  %v7863 = vmul.f32 %v4482, %v7373
  %v7864 = vmul.f32 %v4761, %v7374
  %v7865 = vmul.f32 %v4763, %v7375
  %v7866 = vmul.f32 %v5042, %v7376
  %v7867 = vmul.f32 %v5044, %v7377
  %v7868 = vmul.f32 %v3922, %v7378
  %v7869 = vmul.f32 %v3924, %v7379
  %v7870 = vmul.f32 %v4203, %v7380
  %v7871 = vmul.f32 %v4205, %v7381
  %v7872 = vmul.f32 %v4484, %v7382
  %v7873 = vmul.f32 %v4486, %v7383
  %v7874 = vmul.f32 %v4765, %v7384
  %v7875 = vmul.f32 %v4767, %v7385
  %v7876 = vmul.f32 %v5046, %v7386
  %v7877 = vmul.f32 %v5048, %v7387
  %v7878 = vmul.f32 %v3928, %v7388
  %v7879 = vmul.f32 %v3930, %v7389
  %v7880 = vmul.f32 %v4209, %v7390
  %v7881 = vmul.f32 %v4211, %v7391
  %v7882 = vmul.f32 %v4490, %v7392
  %v7883 = vmul.f32 %v4492, %v7393
  %v7884 = vmul.f32 %v4771, %v7394
  %v7885 = vmul.f32 %v4773, %v7395
  %v7886 = vmul.f32 %v5052, %v7396
  %v7887 = vmul.f32 %v5054, %v7397
  %v7888 = vmul.f32 %v3932, %v7398
  %v7889 = vmul.f32 %v3934, %v7399
  %v7890 = vmul.f32 %v4213, %v7400
  %v7891 = vmul.f32 %v4215, %v7401
  %v7892 = vmul.f32 %v4494, %v7402
  %v7893 = vmul.f32 %v4496, %v7403
  %v7894 = vmul.f32 %v4775, %v7404
  %v7895 = vmul.f32 %v4777, %v7405
  %v7896 = vmul.f32 %v5056, %v7406
  %v7897 = vmul.f32 %v5058, %v7407
  %v7898 = vmul.f32 %v3938, %v7408
  %v7899 = vmul.f32 %v3940, %v7409
  %v7900 = vmul.f32 %v4219, %v7410
  %v7901 = vmul.f32 %v4221, %v7411
  %v7902 = vmul.f32 %v4500, %v7412
  %v7903 = vmul.f32 %v4502, %v7413
  %v7904 = vmul.f32 %v4781, %v7414
  %v7905 = vmul.f32 %v4783, %v7415
  %v7906 = vmul.f32 %v5062, %v7416
  %v7907 = vmul.f32 %v5064, %v7417
  %v7908 = vmul.f32 %v3942, %v7418
  %v7909 = vmul.f32 %v3944, %v7419
  %v7910 = vmul.f32 %v4223, %v7420
  %v7911 = vmul.f32 %v4225, %v7421
  %v7912 = vmul.f32 %v4504, %v7422
  %v7913 = vmul.f32 %v4506, %v7423
  %v7914 = vmul.f32 %v4785, %v7424
  %v7915 = vmul.f32 %v4787, %v7425
  %v7916 = vmul.f32 %v5066, %v7426
  %v7917 = vmul.f32 %v5068, %v7427
  %v7918 = vmul.f32 %v3948, %v7428
  %v7919 = vmul.f32 %v3950, %v7429
  %v7920 = vmul.f32 %v4229, %v7430
  %v7921 = vmul.f32 %v4231, %v7431
  %v7922 = vmul.f32 %v4510, %v7432
  %v7923 = vmul.f32 %v4512, %v7433
  %v7924 = vmul.f32 %v4791, %v7434
  %v7925 = vmul.f32 %v4793, %v7435
  %v7926 = vmul.f32 %v5072, %v7436
  %v7927 = vmul.f32 %v5074, %v7437
  %v7928 = vmul.f32 %v3952, %v7438
  %v7929 = vmul.f32 %v3954, %v7439
  %v7930 = vmul.f32 %v4233, %v7440
  %v7931 = vmul.f32 %v4235, %v7441
  %v7932 = vmul.f32 %v4514, %v7442
  %v7933 = vmul.f32 %v4516, %v7443
  %v7934 = vmul.f32 %v4795, %v7444
  %v7935 = vmul.f32 %v4797, %v7445
  %v7936 = vmul.f32 %v5076, %v7446
  %v7937 = vmul.f32 %v5078, %v7447
  %v7938 = vmul.f32 %v3958, %v7448
  %v7939 = vmul.f32 %v3960, %v7449
  %v7940 = vmul.f32 %v4239, %v7450
  %v7941 = vmul.f32 %v4241, %v7451
  %v7942 = vmul.f32 %v4520, %v7452
  %v7943 = vmul.f32 %v4522, %v7453
  %v7944 = vmul.f32 %v4801, %v7454
  %v7945 = vmul.f32 %v4803, %v7455
  %v7946 = vmul.f32 %v5082, %v7456
  %v7947 = vmul.f32 %v5084, %v7457
  %v7948 = vmul.f32 %v3962, %v7458
  %v7949 = vmul.f32 %v3964, %v7459
  %v7950 = vmul.f32 %v4243, %v7460
  %v7951 = vmul.f32 %v4245, %v7461
  %v7952 = vmul.f32 %v4524, %v7462
  %v7953 = vmul.f32 %v4526, %v7463
  %v7954 = vmul.f32 %v4805, %v7464
  %v7955 = vmul.f32 %v4807, %v7465
  %v7956 = vmul.f32 %v5086, %v7466
  %v7957 = vmul.f32 %v5088, %v7467
  %v7958 = vmul.f32 %v3968, %v7468
  %v7959 = vmul.f32 %v3970, %v7469
  %v7960 = vmul.f32 %v4249, %v7470
  %v7961 = vmul.f32 %v4251, %v7471
  %v7962 = vmul.f32 %v4530, %v7472
  %v7963 = vmul.f32 %v4532, %v7473
  %v7964 = vmul.f32 %v4811, %v7474
  %v7965 = vmul.f32 %v4813, %v7475
  %v7966 = vmul.f32 %v5092, %v7476
  %v7967 = vmul.f32 %v5094, %v7477
  %v7968 = vmul.f32 %v3972, %v7478
  %v7969 = vmul.f32 %v3974, %v7479
  %v7970 = vmul.f32 %v4253, %v7480
  %v7971 = vmul.f32 %v4255, %v7481
  %v7972 = vmul.f32 %v4534, %v7482
  %v7973 = vmul.f32 %v4536, %v7483
  %v7974 = vmul.f32 %v4815, %v7484
  %v7975 = vmul.f32 %v4817, %v7485
  %v7976 = vmul.f32 %v5096, %v7486
  %v7977 = vmul.f32 %v5098, %v7487
  %v7978 = vmul.f32 %v3978, %v7488
  %v7979 = vmul.f32 %v3980, %v7489
  %v7980 = vmul.f32 %v4259, %v7490
  %v7981 = vmul.f32 %v4261, %v7491
  %v7982 = vmul.f32 %v4540, %v7492
  %v7983 = vmul.f32 %v4542, %v7493
  %v7984 = vmul.f32 %v4821, %v7494
  %v7985 = vmul.f32 %v4823, %v7495
  %v7986 = vmul.f32 %v5102, %v7496
  %v7987 = vmul.f32 %v5104, %v7497
  %v7988 = vmul.f32 %v3982, %v7498
  %v7989 = vmul.f32 %v3984, %v7499
  %v7990 = vmul.f32 %v4263, %v7500
  %v7991 = vmul.f32 %v4265, %v7501
  %v7992 = vmul.f32 %v4544, %v7502
  %v7993 = vmul.f32 %v4546, %v7503
  %v7994 = vmul.f32 %v4825, %v7504
  %v7995 = vmul.f32 %v4827, %v7505
  %v7996 = vmul.f32 %v5106, %v7506
  %v7997 = vmul.f32 %v5108, %v7507
  %v7998 = vmul.f32 %v3988, %v7508
  %v7999 = vmul.f32 %v3990, %v7509
  %v8000 = vmul.f32 %v4269, %v7510
  %v8001 = vmul.f32 %v4271, %v7511
  %v8002 = vmul.f32 %v4550, %v7512
  %v8003 = vmul.f32 %v4552, %v7513
  %v8004 = vmul.f32 %v4831, %v7514
  %v8005 = vmul.f32 %v4833, %v7515
  %v8006 = vmul.f32 %v5112, %v7516
  %v8007 = vmul.f32 %v5114, %v7517
  %v8008 = vmul.f32 %v3992, %v7518
  %v8009 = vmul.f32 %v3994, %v7519
  %v8010 = vmul.f32 %v4273, %v7520
  %v8011 = vmul.f32 %v4275, %v7521
  %v8012 = vmul.f32 %v4554, %v7522
  %v8013 = vmul.f32 %v4556, %v7523
  %v8014 = vmul.f32 %v4835, %v7524
  %v8015 = vmul.f32 %v4837, %v7525
  %v8016 = vmul.f32 %v5116, %v7526
  %v8017 = vmul.f32 %v5118, %v7527
  %v8018 = vmul.f32 %v3998, %v7528
  %v8019 = vmul.f32 %v4000, %v7529
  %v8020 = vmul.f32 %v4279, %v7530
  %v8021 = vmul.f32 %v4281, %v7531
  %v8022 = vmul.f32 %v4560, %v7532
  %v8023 = vmul.f32 %v4562, %v7533
  %v8024 = vmul.f32 %v4841, %v7534
  %v8025 = vmul.f32 %v4843, %v7535
  %v8026 = vmul.f32 %v5122, %v7536
  %v8027 = vmul.f32 %v5124, %v7537
  %v8028 = vmul.f32 %v4002, %v7538
  %v8029 = vmul.f32 %v4004, %v7539
  %v8030 = vmul.f32 %v4283, %v7540
  %v8031 = vmul.f32 %v4285, %v7541
  %v8032 = vmul.f32 %v4564, %v7542
  %v8033 = vmul.f32 %v4566, %v7543
  %v8034 = vmul.f32 %v4845, %v7544
  %v8035 = vmul.f32 %v4847, %v7545
  %v8036 = vmul.f32 %v5126, %v7546
  %v8037 = vmul.f32 %v5128, %v7547
  %v8038 = vmul.f32 %v4008, %v7548
  %v8039 = vmul.f32 %v4010, %v7549
  %v8040 = vmul.f32 %v4289, %v7550
  %v8041 = vmul.f32 %v4291, %v7551
  %v8042 = vmul.f32 %v4570, %v7552
  %v8043 = vmul.f32 %v4572, %v7553
  %v8044 = vmul.f32 %v4851, %v7554
  %v8045 = vmul.f32 %v4853, %v7555
  %v8046 = vmul.f32 %v5132, %v7556
  %v8047 = vmul.f32 %v5134, %v7557
  %v8048 = vmul.f32 %v4012, %v7558
  %v8049 = vmul.f32 %v4014, %v7559
  %v8050 = vmul.f32 %v4293, %v7560
  %v8051 = vmul.f32 %v4295, %v7561
  %v8052 = vmul.f32 %v4574, %v7562
  %v8053 = vmul.f32 %v4576, %v7563
  %v8054 = vmul.f32 %v4855, %v7564
  %v8055 = vmul.f32 %v4857, %v7565
  %v8056 = vmul.f32 %v5136, %v7566
  %v8057 = vmul.f32 %v5138, %v7567
  %v8058 = vmul.f32 %v4018, %v7568
  %v8059 = vmul.f32 %v4020, %v7569
  %v8060 = vmul.f32 %v4299, %v7570
  %v8061 = vmul.f32 %v4301, %v7571
  %v8062 = vmul.f32 %v4580, %v7572
  %v8063 = vmul.f32 %v4582, %v7573
  %v8064 = vmul.f32 %v4861, %v7574
  %v8065 = vmul.f32 %v4863, %v7575
  %v8066 = vmul.f32 %v5142, %v7576
  %v8067 = vmul.f32 %v5144, %v7577
  %v8068 = vmul.f32 %v4022, %v7578
  %v8069 = vmul.f32 %v4024, %v7579
  %v8070 = vmul.f32 %v4303, %v7580
  %v8071 = vmul.f32 %v4305, %v7581
  %v8072 = vmul.f32 %v4584, %v7582
  %v8073 = vmul.f32 %v4586, %v7583
  %v8074 = vmul.f32 %v4865, %v7584
  %v8075 = vmul.f32 %v4867, %v7585
  %v8076 = vmul.f32 %v5146, %v7586
  %v8077 = vmul.f32 %v5148, %v7587
  %v8078 = vmul.f32 %v4028, %v7588
  %v8079 = vmul.f32 %v4030, %v7589
  %v8080 = vmul.f32 %v4309, %v7590
  %v8081 = vmul.f32 %v4311, %v7591
  %v8082 = vmul.f32 %v4590, %v7592
  %v8083 = vmul.f32 %v4592, %v7593
  %v8084 = vmul.f32 %v4871, %v7594
  %v8085 = vmul.f32 %v4873, %v7595
  %v8086 = vmul.f32 %v5152, %v7596
  %v8087 = vmul.f32 %v5154, %v7597
  %v8088 = vmul.f32 %v4032, %v7598
  %v8089 = vmul.f32 %v4034, %v7599
  %v8090 = vmul.f32 %v4313, %v7600
  %v8091 = vmul.f32 %v4315, %v7601
  %v8092 = vmul.f32 %v4594, %v7602
  %v8093 = vmul.f32 %v4596, %v7603
  %v8094 = vmul.f32 %v4875, %v7604
  %v8095 = vmul.f32 %v4877, %v7605
  %v8096 = vmul.f32 %v5156, %v7606
  %v8097 = vmul.f32 %v5158, %v7607
  %v8098 = vmul.f32 %v4038, %v7608
  %v8099 = vmul.f32 %v4040, %v7609
  %v8100 = vmul.f32 %v4319, %v7610
  %v8101 = vmul.f32 %v4321, %v7611
  %v8102 = vmul.f32 %v4600, %v7612
  %v8103 = vmul.f32 %v4602, %v7613
  %v8104 = vmul.f32 %v4881, %v7614
  %v8105 = vmul.f32 %v4883, %v7615
  %v8106 = vmul.f32 %v5162, %v7616
  %v8107 = vmul.f32 %v5164, %v7617
  %v8108 = vld [vmem:[%s5] sm:$0xff]
  %v8109 = vld [vmem:[%s5 + $0x8] sm:$0xff]
  %v8110 = vld [vmem:[%s5 + $0x10] sm:$0xff]
  %v8111 = vld [vmem:[%s5 + $0x18] sm:$0xff]
  %vm8112 = vcmask 64512
  %v8114 = vsel %vm8112, %v8111, 0
  %8116 = vmatprep.subr.mxu0 %v7619
  %8117 = vmatpush1.msra.mxu0 %v7618
  %8118 = vmatprep.subr.mxu0 %v7629
  %8119 = vmatpush1.msra.mxu0 %v7628
  %8120 = vmatprep.subr.mxu0 %v7639
  %8121 = vmatpush1.msra.mxu0 %v7638
  %8122 = vmatprep.subr.mxu0 %v7649
  %8123 = vmatpush1.msra.mxu0 %v7648
  %8124 = vmatprep.subr.mxu0 %v7659
  %8125 = vmatpush1.msra.mxu0 %v7658
  %8126 = vmatprep.subr.mxu0 %v7669
  %8127 = vmatpush1.msra.mxu0 %v7668
  %8128 = vmatprep.subr.mxu0 %v7679
  %8129 = vmatpush1.msra.mxu0 %v7678
  %8130 = vmatprep.subr.mxu0 %v7689
  %8131 = vmatpush1.msra.mxu0 %v7688
  %8132 = vmatprep.subr.mxu0 %v7699
  %8133 = vmatpush1.msra.mxu0 %v7698
  %8134 = vmatprep.subr.mxu0 %v7709
  %8135 = vmatpush1.msra.mxu0 %v7708
  %8136 = vmatprep.subr.mxu0 %v7719
  %8137 = vmatpush1.msra.mxu0 %v7718
  %8138 = vmatprep.subr.mxu0 %v7729
  %8139 = vmatpush1.msra.mxu0 %v7728
  %8140 = vmatprep.subr.mxu0 %v7739
  %8141 = vmatpush1.msra.mxu0 %v7738
  %8142 = vmatprep.subr.mxu0 %v7749
  %8143 = vmatpush1.msra.mxu0 %v7748
  %8144 = vmatprep.subr.mxu0 %v7759
  %8145 = vmatpush1.msra.mxu0 %v7758
  %8146 = vmatprep.subr.mxu0 %v7769
  %8147 = vmatpush1.msra.mxu0 %v7768
  %8148 = vmatprep.subr.mxu0 %v7779
  %8149 = vmatpush1.msra.mxu0 %v7778
  %8150 = vmatprep.subr.mxu0 %v7789
  %8151 = vmatpush1.msra.mxu0 %v7788
  %8152 = vmatprep.subr.mxu0 %v7799
  %8153 = vmatpush1.msra.mxu0 %v7798
  %8154 = vmatprep.subr.mxu0 %v7809
  %8155 = vmatpush1.msra.mxu0 %v7808
  %8156 = vmatprep.subr.mxu0 %v7819
  %8157 = vmatpush1.msra.mxu0 %v7818
  %8158 = vmatprep.subr.mxu0 %v7829
  %8159 = vmatpush1.msra.mxu0 %v7828
  %8160 = vmatprep.subr.mxu0 %v7839
  %8161 = vmatpush1.msra.mxu0 %v7838
  %8162 = vmatprep.subr.mxu0 %v7849
  %8163 = vmatpush1.msra.mxu0 %v7848
  %8164 = vmatprep.subr.mxu0 %v7859
  %8165 = vmatpush1.msra.mxu0 %v7858
  %8166 = vmatprep.subr.mxu0 %v7869
  %8167 = vmatpush1.msra.mxu0 %v7868
  %8168 = vmatprep.subr.mxu0 %v7879
  %8169 = vmatpush1.msra.mxu0 %v7878
  %8170 = vmatprep.subr.mxu0 %v7889
  %8171 = vmatpush1.msra.mxu0 %v7888
  %8172 = vmatprep.subr.mxu0 %v7899
  %8173 = vmatpush1.msra.mxu0 %v7898
  %8174 = vmatprep.subr.mxu0 %v7909
  %8175 = vmatpush1.msra.mxu0 %v7908
  %8176 = vmatprep.subr.mxu0 %v7919
  %8177 = vmatpush1.msra.mxu0 %v7918
  %8178 = vmatprep.subr.mxu0 %v7929
  %8179 = vmatpush1.msra.mxu0 %v7928
  %8180 = vmatprep.mubr.f32.mxu0 %v8109
  %8181 = vmatmul.mubr.f32.gmra.mrb[0].mxu0 %v8108
  %v8182 = vpop.f32.mrb[0].mxu0
  %v8183 = vadd.f32 0.0, %v8182
  %v8184 = vpop.f32.mrb[0].mxu0
  %v8185 = vadd.f32 0.0, %v8184
  %8186 = vdwg.mxu0
  %8187 = vmatprep.subr.mxu0 %v7939
  %8188 = vmatpush1.msra.mxu0 %v7938
  %8189 = vmatprep.subr.mxu0 %v7949
  %8190 = vmatpush1.msra.mxu0 %v7948
  %8191 = vmatprep.subr.mxu0 %v7959
  %8192 = vmatpush1.msra.mxu0 %v7958
  %8193 = vmatprep.subr.mxu0 %v7969
  %8194 = vmatpush1.msra.mxu0 %v7968
  %8195 = vmatprep.subr.mxu0 %v7979
  %8196 = vmatpush1.msra.mxu0 %v7978
  %8197 = vmatprep.subr.mxu0 %v7989
  %8198 = vmatpush1.msra.mxu0 %v7988
  %8199 = vmatprep.subr.mxu0 %v7999
  %8200 = vmatpush1.msra.mxu0 %v7998
  %8201 = vmatprep.subr.mxu0 %v8009
  %8202 = vmatpush1.msra.mxu0 %v8008
  %8203 = vmatprep.subr.mxu0 %v8019
  %8204 = vmatpush1.msra.mxu0 %v8018
  %8205 = vmatprep.subr.mxu0 %v8029
  %8206 = vmatpush1.msra.mxu0 %v8028
  %8207 = vmatprep.subr.mxu0 %v8039
  %8208 = vmatpush1.msra.mxu0 %v8038
  %8209 = vmatprep.subr.mxu0 %v8049
  %8210 = vmatpush1.msra.mxu0 %v8048
  %8211 = vmatprep.subr.mxu0 %v8059
  %8212 = vmatpush1.msra.mxu0 %v8058
  %8213 = vmatprep.subr.mxu0 %v8069
  %8214 = vmatpush1.msra.mxu0 %v8068
  %8215 = vmatprep.subr.mxu0 %v8079
  %8216 = vmatpush1.msra.mxu0 %v8078
  %8217 = vmatprep.subr.mxu0 %v8089
  %8218 = vmatpush1.msra.mxu0 %v8088
  %8219 = vmatprep.subr.mxu0 %v8099
  %8220 = vmatpush1.msra.mxu0 %v8098
  %8221 = vmatprep.subr.mxu0 0.0
  %8222 = vmatpush1.msra.mxu0 0.0
  %8223 = vmatprep.subr.mxu0 0.0
  %8224 = vmatpush1.msra.mxu0 0.0
  %8225 = vmatprep.subr.mxu0 0.0
  %8226 = vmatpush1.msra.mxu0 0.0
  %8227 = vmatprep.subr.mxu0 0.0
  %8228 = vmatpush1.msra.mxu0 0.0
  %8229 = vmatprep.subr.mxu0 0.0
  %8230 = vmatpush1.msra.mxu0 0.0
  %8231 = vmatprep.subr.mxu0 0.0
  %8232 = vmatpush1.msra.mxu0 0.0
  %8233 = vmatprep.subr.mxu0 0.0
  %8234 = vmatpush1.msra.mxu0 0.0
  %8235 = vmatprep.subr.mxu0 0.0
  %8236 = vmatpush1.msra.mxu0 0.0
  %8237 = vmatprep.subr.mxu0 0.0
  %8238 = vmatpush1.msra.mxu0 0.0
  %8239 = vmatprep.subr.mxu0 0.0
  %8240 = vmatpush1.msra.mxu0 0.0
  %8241 = vmatprep.subr.mxu0 0.0
  %8242 = vmatpush1.msra.mxu0 0.0
  %8243 = vmatprep.subr.mxu0 0.0
  %8244 = vmatpush1.msra.mxu0 0.0
  %8245 = vmatprep.subr.mxu0 0.0
  %8246 = vmatpush1.msra.mxu0 0.0
  %8247 = vmatprep.subr.mxu0 0.0
  %8248 = vmatpush1.msra.mxu0 0.0
  %8249 = vmatprep.subr.mxu0 0.0
  %8250 = vmatpush1.msra.mxu0 0.0
  %8251 = vmatprep.mubr.f32.mxu0 %v8114
  %8252 = vmatmul.mubr.f32.gmra.mrb[0].mxu0 %v8110
  %v8253 = vpop.f32.mrb[0].mxu0
  %v8254 = vadd.f32 %v8183, %v8253
  %v8255 = vpop.f32.mrb[0].mxu0
  %v8256 = vadd.f32 %v8185, %v8255
  %8257 = vdwg.mxu0
  %8258 = vmatprep.subr.mxu0 %v7621
  %8259 = vmatpush1.msra.mxu0 %v7620
  %8260 = vmatprep.subr.mxu0 %v7631
  %8261 = vmatpush1.msra.mxu0 %v7630
  %8262 = vmatprep.subr.mxu0 %v7641
  %8263 = vmatpush1.msra.mxu0 %v7640
  %8264 = vmatprep.subr.mxu0 %v7651
  %8265 = vmatpush1.msra.mxu0 %v7650
  %8266 = vmatprep.subr.mxu0 %v7661
  %8267 = vmatpush1.msra.mxu0 %v7660
  %8268 = vmatprep.subr.mxu0 %v7671
  %8269 = vmatpush1.msra.mxu0 %v7670
  %8270 = vmatprep.subr.mxu0 %v7681
  %8271 = vmatpush1.msra.mxu0 %v7680
  %8272 = vmatprep.subr.mxu0 %v7691
  %8273 = vmatpush1.msra.mxu0 %v7690
  %8274 = vmatprep.subr.mxu0 %v7701
  %8275 = vmatpush1.msra.mxu0 %v7700
  %8276 = vmatprep.subr.mxu0 %v7711
  %8277 = vmatpush1.msra.mxu0 %v7710
  %8278 = vmatprep.subr.mxu0 %v7721
  %8279 = vmatpush1.msra.mxu0 %v7720
  %8280 = vmatprep.subr.mxu0 %v7731
  %8281 = vmatpush1.msra.mxu0 %v7730
  %8282 = vmatprep.subr.mxu0 %v7741
  %8283 = vmatpush1.msra.mxu0 %v7740
  %8284 = vmatprep.subr.mxu0 %v7751
  %8285 = vmatpush1.msra.mxu0 %v7750
  %8286 = vmatprep.subr.mxu0 %v7761
  %8287 = vmatpush1.msra.mxu0 %v7760
  %8288 = vmatprep.subr.mxu0 %v7771
  %8289 = vmatpush1.msra.mxu0 %v7770
  %8290 = vmatprep.subr.mxu0 %v7781
  %8291 = vmatpush1.msra.mxu0 %v7780
  %8292 = vmatprep.subr.mxu0 %v7791
  %8293 = vmatpush1.msra.mxu0 %v7790
  %8294 = vmatprep.subr.mxu0 %v7801
  %8295 = vmatpush1.msra.mxu0 %v7800
  %8296 = vmatprep.subr.mxu0 %v7811
  %8297 = vmatpush1.msra.mxu0 %v7810
  %8298 = vmatprep.subr.mxu0 %v7821
  %8299 = vmatpush1.msra.mxu0 %v7820
  %8300 = vmatprep.subr.mxu0 %v7831
  %8301 = vmatpush1.msra.mxu0 %v7830
  %8302 = vmatprep.subr.mxu0 %v7841
  %8303 = vmatpush1.msra.mxu0 %v7840
  %8304 = vmatprep.subr.mxu0 %v7851
  %8305 = vmatpush1.msra.mxu0 %v7850
  %8306 = vmatprep.subr.mxu0 %v7861
  %8307 = vmatpush1.msra.mxu0 %v7860
  %8308 = vmatprep.subr.mxu0 %v7871
  %8309 = vmatpush1.msra.mxu0 %v7870
  %8310 = vmatprep.subr.mxu0 %v7881
  %8311 = vmatpush1.msra.mxu0 %v7880
  %8312 = vmatprep.subr.mxu0 %v7891
  %8313 = vmatpush1.msra.mxu0 %v7890
  %8314 = vmatprep.subr.mxu0 %v7901
  %8315 = vmatpush1.msra.mxu0 %v7900
  %8316 = vmatprep.subr.mxu0 %v7911
  %8317 = vmatpush1.msra.mxu0 %v7910
  %8318 = vmatprep.subr.mxu0 %v7921
  %8319 = vmatpush1.msra.mxu0 %v7920
  %8320 = vmatprep.subr.mxu0 %v7931
  %8321 = vmatpush1.msra.mxu0 %v7930
  %8322 = vmatprep.mubr.f32.mxu0 %v8109
  %8323 = vmatmul.mubr.f32.gmra.mrb[0].mxu0 %v8108
  %v8324 = vpop.f32.mrb[0].mxu0
  %v8325 = vadd.f32 0.0, %v8324
  %v8326 = vpop.f32.mrb[0].mxu0
  %v8327 = vadd.f32 0.0, %v8326
  %8328 = vdwg.mxu0
  %8329 = vmatprep.subr.mxu0 %v7941
  %8330 = vmatpush1.msra.mxu0 %v7940
  %8331 = vmatprep.subr.mxu0 %v7951
  %8332 = vmatpush1.msra.mxu0 %v7950
  %8333 = vmatprep.subr.mxu0 %v7961
  %8334 = vmatpush1.msra.mxu0 %v7960
  %8335 = vmatprep.subr.mxu0 %v7971
  %8336 = vmatpush1.msra.mxu0 %v7970
  %8337 = vmatprep.subr.mxu0 %v7981
  %8338 = vmatpush1.msra.mxu0 %v7980
  %8339 = vmatprep.subr.mxu0 %v7991
  %8340 = vmatpush1.msra.mxu0 %v7990
  %8341 = vmatprep.subr.mxu0 %v8001
  %8342 = vmatpush1.msra.mxu0 %v8000
  %8343 = vmatprep.subr.mxu0 %v8011
  %8344 = vmatpush1.msra.mxu0 %v8010
  %8345 = vmatprep.subr.mxu0 %v8021
  %8346 = vmatpush1.msra.mxu0 %v8020
  %8347 = vmatprep.subr.mxu0 %v8031
  %8348 = vmatpush1.msra.mxu0 %v8030
  %8349 = vmatprep.subr.mxu0 %v8041
  %8350 = vmatpush1.msra.mxu0 %v8040
  %8351 = vmatprep.subr.mxu0 %v8051
  %8352 = vmatpush1.msra.mxu0 %v8050
  %8353 = vmatprep.subr.mxu0 %v8061
  %8354 = vmatpush1.msra.mxu0 %v8060
  %8355 = vmatprep.subr.mxu0 %v8071
  %8356 = vmatpush1.msra.mxu0 %v8070
  %8357 = vmatprep.subr.mxu0 %v8081
  %8358 = vmatpush1.msra.mxu0 %v8080
  %8359 = vmatprep.subr.mxu0 %v8091
  %8360 = vmatpush1.msra.mxu0 %v8090
  %8361 = vmatprep.subr.mxu0 %v8101
  %8362 = vmatpush1.msra.mxu0 %v8100
  %8363 = vmatprep.subr.mxu0 0.0
  %8364 = vmatpush1.msra.mxu0 0.0
  %8365 = vmatprep.subr.mxu0 0.0
  %8366 = vmatpush1.msra.mxu0 0.0
  %8367 = vmatprep.subr.mxu0 0.0
  %8368 = vmatpush1.msra.mxu0 0.0
  %8369 = vmatprep.subr.mxu0 0.0
  %8370 = vmatpush1.msra.mxu0 0.0
  %8371 = vmatprep.subr.mxu0 0.0
  %8372 = vmatpush1.msra.mxu0 0.0
  %8373 = vmatprep.subr.mxu0 0.0
  %8374 = vmatpush1.msra.mxu0 0.0
  %8375 = vmatprep.subr.mxu0 0.0
  %8376 = vmatpush1.msra.mxu0 0.0
  %8377 = vmatprep.subr.mxu0 0.0
  %8378 = vmatpush1.msra.mxu0 0.0
  %8379 = vmatprep.subr.mxu0 0.0
  %8380 = vmatpush1.msra.mxu0 0.0
  %8381 = vmatprep.subr.mxu0 0.0
  %8382 = vmatpush1.msra.mxu0 0.0
  %8383 = vmatprep.subr.mxu0 0.0
  %8384 = vmatpush1.msra.mxu0 0.0
  %8385 = vmatprep.subr.mxu0 0.0
  %8386 = vmatpush1.msra.mxu0 0.0
  %8387 = vmatprep.subr.mxu0 0.0
  %8388 = vmatpush1.msra.mxu0 0.0
  %8389 = vmatprep.subr.mxu0 0.0
  %8390 = vmatpush1.msra.mxu0 0.0
  %8391 = vmatprep.subr.mxu0 0.0
  %8392 = vmatpush1.msra.mxu0 0.0
  %8393 = vmatprep.mubr.f32.mxu0 %v8114
  %8394 = vmatmul.mubr.f32.gmra.mrb[0].mxu0 %v8110
  %v8395 = vpop.f32.mrb[0].mxu0
  %v8396 = vadd.f32 %v8325, %v8395
  %v8397 = vpop.f32.mrb[0].mxu0
  %v8398 = vadd.f32 %v8327, %v8397
  %8399 = vdwg.mxu0
  %8400 = vmatprep.subr.mxu0 %v7623
  %8401 = vmatpush1.msra.mxu0 %v7622
  %8402 = vmatprep.subr.mxu0 %v7633
  %8403 = vmatpush1.msra.mxu0 %v7632
  %8404 = vmatprep.subr.mxu0 %v7643
  %8405 = vmatpush1.msra.mxu0 %v7642
  %8406 = vmatprep.subr.mxu0 %v7653
  %8407 = vmatpush1.msra.mxu0 %v7652
  %8408 = vmatprep.subr.mxu0 %v7663
  %8409 = vmatpush1.msra.mxu0 %v7662
  %8410 = vmatprep.subr.mxu0 %v7673
  %8411 = vmatpush1.msra.mxu0 %v7672
  %8412 = vmatprep.subr.mxu0 %v7683
  %8413 = vmatpush1.msra.mxu0 %v7682
  %8414 = vmatprep.subr.mxu0 %v7693
  %8415 = vmatpush1.msra.mxu0 %v7692
  %8416 = vmatprep.subr.mxu0 %v7703
  %8417 = vmatpush1.msra.mxu0 %v7702
  %8418 = vmatprep.subr.mxu0 %v7713
  %8419 = vmatpush1.msra.mxu0 %v7712
  %8420 = vmatprep.subr.mxu0 %v7723
  %8421 = vmatpush1.msra.mxu0 %v7722
  %8422 = vmatprep.subr.mxu0 %v7733
  %8423 = vmatpush1.msra.mxu0 %v7732
  %8424 = vmatprep.subr.mxu0 %v7743
  %8425 = vmatpush1.msra.mxu0 %v7742
  %8426 = vmatprep.subr.mxu0 %v7753
  %8427 = vmatpush1.msra.mxu0 %v7752
  %8428 = vmatprep.subr.mxu0 %v7763
  %8429 = vmatpush1.msra.mxu0 %v7762
  %8430 = vmatprep.subr.mxu0 %v7773
  %8431 = vmatpush1.msra.mxu0 %v7772
  %8432 = vmatprep.subr.mxu0 %v7783
  %8433 = vmatpush1.msra.mxu0 %v7782
  %8434 = vmatprep.subr.mxu0 %v7793
  %8435 = vmatpush1.msra.mxu0 %v7792
  %8436 = vmatprep.subr.mxu0 %v7803
  %8437 = vmatpush1.msra.mxu0 %v7802
  %8438 = vmatprep.subr.mxu0 %v7813
  %8439 = vmatpush1.msra.mxu0 %v7812
  %8440 = vmatprep.subr.mxu0 %v7823
  %8441 = vmatpush1.msra.mxu0 %v7822
  %8442 = vmatprep.subr.mxu0 %v7833
  %8443 = vmatpush1.msra.mxu0 %v7832
  %8444 = vmatprep.subr.mxu0 %v7843
  %8445 = vmatpush1.msra.mxu0 %v7842
  %8446 = vmatprep.subr.mxu0 %v7853
  %8447 = vmatpush1.msra.mxu0 %v7852
  %8448 = vmatprep.subr.mxu0 %v7863
  %8449 = vmatpush1.msra.mxu0 %v7862
  %8450 = vmatprep.subr.mxu0 %v7873
  %8451 = vmatpush1.msra.mxu0 %v7872
  %8452 = vmatprep.subr.mxu0 %v7883
  %8453 = vmatpush1.msra.mxu0 %v7882
  %8454 = vmatprep.subr.mxu0 %v7893
  %8455 = vmatpush1.msra.mxu0 %v7892
  %8456 = vmatprep.subr.mxu0 %v7903
  %8457 = vmatpush1.msra.mxu0 %v7902
  %8458 = vmatprep.subr.mxu0 %v7913
  %8459 = vmatpush1.msra.mxu0 %v7912
  %8460 = vmatprep.subr.mxu0 %v7923
  %8461 = vmatpush1.msra.mxu0 %v7922
  %8462 = vmatprep.subr.mxu0 %v7933
  %8463 = vmatpush1.msra.mxu0 %v7932
  %8464 = vmatprep.mubr.f32.mxu0 %v8109
  %8465 = vmatmul.mubr.f32.gmra.mrb[0].mxu0 %v8108
  %v8466 = vpop.f32.mrb[0].mxu0
  %v8467 = vadd.f32 0.0, %v8466
  %v8468 = vpop.f32.mrb[0].mxu0
  %v8469 = vadd.f32 0.0, %v8468
  %8470 = vdwg.mxu0
  %8471 = vmatprep.subr.mxu0 %v7943
  %8472 = vmatpush1.msra.mxu0 %v7942
  %8473 = vmatprep.subr.mxu0 %v7953
  %8474 = vmatpush1.msra.mxu0 %v7952
  %8475 = vmatprep.subr.mxu0 %v7963
  %8476 = vmatpush1.msra.mxu0 %v7962
  %8477 = vmatprep.subr.mxu0 %v7973
  %8478 = vmatpush1.msra.mxu0 %v7972
  %8479 = vmatprep.subr.mxu0 %v7983
  %8480 = vmatpush1.msra.mxu0 %v7982
  %8481 = vmatprep.subr.mxu0 %v7993
  %8482 = vmatpush1.msra.mxu0 %v7992
  %8483 = vmatprep.subr.mxu0 %v8003
  %8484 = vmatpush1.msra.mxu0 %v8002
  %8485 = vmatprep.subr.mxu0 %v8013
  %8486 = vmatpush1.msra.mxu0 %v8012
  %8487 = vmatprep.subr.mxu0 %v8023
  %8488 = vmatpush1.msra.mxu0 %v8022
  %8489 = vmatprep.subr.mxu0 %v8033
  %8490 = vmatpush1.msra.mxu0 %v8032
  %8491 = vmatprep.subr.mxu0 %v8043
  %8492 = vmatpush1.msra.mxu0 %v8042
  %8493 = vmatprep.subr.mxu0 %v8053
  %8494 = vmatpush1.msra.mxu0 %v8052
  %8495 = vmatprep.subr.mxu0 %v8063
  %8496 = vmatpush1.msra.mxu0 %v8062
  %8497 = vmatprep.subr.mxu0 %v8073
  %8498 = vmatpush1.msra.mxu0 %v8072
  %8499 = vmatprep.subr.mxu0 %v8083
  %8500 = vmatpush1.msra.mxu0 %v8082
  %8501 = vmatprep.subr.mxu0 %v8093
  %8502 = vmatpush1.msra.mxu0 %v8092
  %8503 = vmatprep.subr.mxu0 %v8103
  %8504 = vmatpush1.msra.mxu0 %v8102
  %8505 = vmatprep.subr.mxu0 0.0
  %8506 = vmatpush1.msra.mxu0 0.0
  %8507 = vmatprep.subr.mxu0 0.0
  %8508 = vmatpush1.msra.mxu0 0.0
  %8509 = vmatprep.subr.mxu0 0.0
  %8510 = vmatpush1.msra.mxu0 0.0
  %8511 = vmatprep.subr.mxu0 0.0
  %8512 = vmatpush1.msra.mxu0 0.0
  %8513 = vmatprep.subr.mxu0 0.0
  %8514 = vmatpush1.msra.mxu0 0.0
  %8515 = vmatprep.subr.mxu0 0.0
  %8516 = vmatpush1.msra.mxu0 0.0
  %8517 = vmatprep.subr.mxu0 0.0
  %8518 = vmatpush1.msra.mxu0 0.0
  %8519 = vmatprep.subr.mxu0 0.0
  %8520 = vmatpush1.msra.mxu0 0.0
  %8521 = vmatprep.subr.mxu0 0.0
  %8522 = vmatpush1.msra.mxu0 0.0
  %8523 = vmatprep.subr.mxu0 0.0
  %8524 = vmatpush1.msra.mxu0 0.0
  %8525 = vmatprep.subr.mxu0 0.0
  %8526 = vmatpush1.msra.mxu0 0.0
  %8527 = vmatprep.subr.mxu0 0.0
  %8528 = vmatpush1.msra.mxu0 0.0
  %8529 = vmatprep.subr.mxu0 0.0
  %8530 = vmatpush1.msra.mxu0 0.0
  %8531 = vmatprep.subr.mxu0 0.0
  %8532 = vmatpush1.msra.mxu0 0.0
  %8533 = vmatprep.subr.mxu0 0.0
  %8534 = vmatpush1.msra.mxu0 0.0
  %8535 = vmatprep.mubr.f32.mxu0 %v8114
  %8536 = vmatmul.mubr.f32.gmra.mrb[0].mxu0 %v8110
  %v8537 = vpop.f32.mrb[0].mxu0
  %v8538 = vadd.f32 %v8467, %v8537
  %v8539 = vpop.f32.mrb[0].mxu0
  %v8540 = vadd.f32 %v8469, %v8539
  %8541 = vdwg.mxu0
  %8542 = vmatprep.subr.mxu0 %v7625
  %8543 = vmatpush1.msra.mxu0 %v7624
  %8544 = vmatprep.subr.mxu0 %v7635
  %8545 = vmatpush1.msra.mxu0 %v7634
  %8546 = vmatprep.subr.mxu0 %v7645
  %8547 = vmatpush1.msra.mxu0 %v7644
  %8548 = vmatprep.subr.mxu0 %v7655
  %8549 = vmatpush1.msra.mxu0 %v7654
  %8550 = vmatprep.subr.mxu0 %v7665
  %8551 = vmatpush1.msra.mxu0 %v7664
  %8552 = vmatprep.subr.mxu0 %v7675
  %8553 = vmatpush1.msra.mxu0 %v7674
  %8554 = vmatprep.subr.mxu0 %v7685
  %8555 = vmatpush1.msra.mxu0 %v7684
  %8556 = vmatprep.subr.mxu0 %v7695
  %8557 = vmatpush1.msra.mxu0 %v7694
  %8558 = vmatprep.subr.mxu0 %v7705
  %8559 = vmatpush1.msra.mxu0 %v7704
  %8560 = vmatprep.subr.mxu0 %v7715
  %8561 = vmatpush1.msra.mxu0 %v7714
  %8562 = vmatprep.subr.mxu0 %v7725
  %8563 = vmatpush1.msra.mxu0 %v7724
  %8564 = vmatprep.subr.mxu0 %v7735
  %8565 = vmatpush1.msra.mxu0 %v7734
  %8566 = vmatprep.subr.mxu0 %v7745
  %8567 = vmatpush1.msra.mxu0 %v7744
  %8568 = vmatprep.subr.mxu0 %v7755
  %8569 = vmatpush1.msra.mxu0 %v7754
  %8570 = vmatprep.subr.mxu0 %v7765
  %8571 = vmatpush1.msra.mxu0 %v7764
  %8572 = vmatprep.subr.mxu0 %v7775
  %8573 = vmatpush1.msra.mxu0 %v7774
  %8574 = vmatprep.subr.mxu0 %v7785
  %8575 = vmatpush1.msra.mxu0 %v7784
  %8576 = vmatprep.subr.mxu0 %v7795
  %8577 = vmatpush1.msra.mxu0 %v7794
  %8578 = vmatprep.subr.mxu0 %v7805
  %8579 = vmatpush1.msra.mxu0 %v7804
  %8580 = vmatprep.subr.mxu0 %v7815
  %8581 = vmatpush1.msra.mxu0 %v7814
  %8582 = vmatprep.subr.mxu0 %v7825
  %8583 = vmatpush1.msra.mxu0 %v7824
  %8584 = vmatprep.subr.mxu0 %v7835
  %8585 = vmatpush1.msra.mxu0 %v7834
  %8586 = vmatprep.subr.mxu0 %v7845
  %8587 = vmatpush1.msra.mxu0 %v7844
  %8588 = vmatprep.subr.mxu0 %v7855
  %8589 = vmatpush1.msra.mxu0 %v7854
  %8590 = vmatprep.subr.mxu0 %v7865
  %8591 = vmatpush1.msra.mxu0 %v7864
  %8592 = vmatprep.subr.mxu0 %v7875
  %8593 = vmatpush1.msra.mxu0 %v7874
  %8594 = vmatprep.subr.mxu0 %v7885
  %8595 = vmatpush1.msra.mxu0 %v7884
  %8596 = vmatprep.subr.mxu0 %v7895
  %8597 = vmatpush1.msra.mxu0 %v7894
  %8598 = vmatprep.subr.mxu0 %v7905
  %8599 = vmatpush1.msra.mxu0 %v7904
  %8600 = vmatprep.subr.mxu0 %v7915
  %8601 = vmatpush1.msra.mxu0 %v7914
  %8602 = vmatprep.subr.mxu0 %v7925
  %8603 = vmatpush1.msra.mxu0 %v7924
  %8604 = vmatprep.subr.mxu0 %v7935
  %8605 = vmatpush1.msra.mxu0 %v7934
  %8606 = vmatprep.mubr.f32.mxu0 %v8109
  %8607 = vmatmul.mubr.f32.gmra.mrb[0].mxu0 %v8108
  %v8608 = vpop.f32.mrb[0].mxu0
  %v8609 = vadd.f32 0.0, %v8608
  %v8610 = vpop.f32.mrb[0].mxu0
  %v8611 = vadd.f32 0.0, %v8610
  %8612 = vdwg.mxu0
  %8613 = vmatprep.subr.mxu0 %v7945
  %8614 = vmatpush1.msra.mxu0 %v7944
  %8615 = vmatprep.subr.mxu0 %v7955
  %8616 = vmatpush1.msra.mxu0 %v7954
  %8617 = vmatprep.subr.mxu0 %v7965
  %8618 = vmatpush1.msra.mxu0 %v7964
  %8619 = vmatprep.subr.mxu0 %v7975
  %8620 = vmatpush1.msra.mxu0 %v7974
  %8621 = vmatprep.subr.mxu0 %v7985
  %8622 = vmatpush1.msra.mxu0 %v7984
  %8623 = vmatprep.subr.mxu0 %v7995
  %8624 = vmatpush1.msra.mxu0 %v7994
  %8625 = vmatprep.subr.mxu0 %v8005
  %8626 = vmatpush1.msra.mxu0 %v8004
  %8627 = vmatprep.subr.mxu0 %v8015
  %8628 = vmatpush1.msra.mxu0 %v8014
  %8629 = vmatprep.subr.mxu0 %v8025
  %8630 = vmatpush1.msra.mxu0 %v8024
  %8631 = vmatprep.subr.mxu0 %v8035
  %8632 = vmatpush1.msra.mxu0 %v8034
  %8633 = vmatprep.subr.mxu0 %v8045
  %8634 = vmatpush1.msra.mxu0 %v8044
  %8635 = vmatprep.subr.mxu0 %v8055
  %8636 = vmatpush1.msra.mxu0 %v8054
  %8637 = vmatprep.subr.mxu0 %v8065
  %8638 = vmatpush1.msra.mxu0 %v8064
  %8639 = vmatprep.subr.mxu0 %v8075
  %8640 = vmatpush1.msra.mxu0 %v8074
  %8641 = vmatprep.subr.mxu0 %v8085
  %8642 = vmatpush1.msra.mxu0 %v8084
  %8643 = vmatprep.subr.mxu0 %v8095
  %8644 = vmatpush1.msra.mxu0 %v8094
  %8645 = vmatprep.subr.mxu0 %v8105
  %8646 = vmatpush1.msra.mxu0 %v8104
  %8647 = vmatprep.subr.mxu0 0.0
  %8648 = vmatpush1.msra.mxu0 0.0
  %8649 = vmatprep.subr.mxu0 0.0
  %8650 = vmatpush1.msra.mxu0 0.0
  %8651 = vmatprep.subr.mxu0 0.0
  %8652 = vmatpush1.msra.mxu0 0.0
  %8653 = vmatprep.subr.mxu0 0.0
  %8654 = vmatpush1.msra.mxu0 0.0
  %8655 = vmatprep.subr.mxu0 0.0
  %8656 = vmatpush1.msra.mxu0 0.0
  %8657 = vmatprep.subr.mxu0 0.0
  %8658 = vmatpush1.msra.mxu0 0.0
  %8659 = vmatprep.subr.mxu0 0.0
  %8660 = vmatpush1.msra.mxu0 0.0
  %8661 = vmatprep.subr.mxu0 0.0
  %8662 = vmatpush1.msra.mxu0 0.0
  %8663 = vmatprep.subr.mxu0 0.0
  %8664 = vmatpush1.msra.mxu0 0.0
  %8665 = vmatprep.subr.mxu0 0.0
  %8666 = vmatpush1.msra.mxu0 0.0
  %8667 = vmatprep.subr.mxu0 0.0
  %8668 = vmatpush1.msra.mxu0 0.0
  %8669 = vmatprep.subr.mxu0 0.0
  %8670 = vmatpush1.msra.mxu0 0.0
  %8671 = vmatprep.subr.mxu0 0.0
  %8672 = vmatpush1.msra.mxu0 0.0
  %8673 = vmatprep.subr.mxu0 0.0
  %8674 = vmatpush1.msra.mxu0 0.0
  %8675 = vmatprep.subr.mxu0 0.0
  %8676 = vmatpush1.msra.mxu0 0.0
  %8677 = vmatprep.mubr.f32.mxu0 %v8114
  %8678 = vmatmul.mubr.f32.gmra.mrb[0].mxu0 %v8110
  %v8679 = vpop.f32.mrb[0].mxu0
  %v8680 = vadd.f32 %v8609, %v8679
  %v8681 = vpop.f32.mrb[0].mxu0
  %v8682 = vadd.f32 %v8611, %v8681
  %8683 = vdwg.mxu0
  %8684 = vmatprep.subr.mxu0 %v7627
  %8685 = vmatpush1.msra.mxu0 %v7626
  %8686 = vmatprep.subr.mxu0 %v7637
  %8687 = vmatpush1.msra.mxu0 %v7636
  %8688 = vmatprep.subr.mxu0 %v7647
  %8689 = vmatpush1.msra.mxu0 %v7646
  %8690 = vmatprep.subr.mxu0 %v7657
  %8691 = vmatpush1.msra.mxu0 %v7656
  %8692 = vmatprep.subr.mxu0 %v7667
  %8693 = vmatpush1.msra.mxu0 %v7666
  %8694 = vmatprep.subr.mxu0 %v7677
  %8695 = vmatpush1.msra.mxu0 %v7676
  %8696 = vmatprep.subr.mxu0 %v7687
  %8697 = vmatpush1.msra.mxu0 %v7686
  %8698 = vmatprep.subr.mxu0 %v7697
  %8699 = vmatpush1.msra.mxu0 %v7696
  %8700 = vmatprep.subr.mxu0 %v7707
  %8701 = vmatpush1.msra.mxu0 %v7706
  %8702 = vmatprep.subr.mxu0 %v7717
  %8703 = vmatpush1.msra.mxu0 %v7716
  %8704 = vmatprep.subr.mxu0 %v7727
  %8705 = vmatpush1.msra.mxu0 %v7726
  %8706 = vmatprep.subr.mxu0 %v7737
  %8707 = vmatpush1.msra.mxu0 %v7736
  %8708 = vmatprep.subr.mxu0 %v7747
  %8709 = vmatpush1.msra.mxu0 %v7746
  %8710 = vmatprep.subr.mxu0 %v7757
  %8711 = vmatpush1.msra.mxu0 %v7756
  %8712 = vmatprep.subr.mxu0 %v7767
  %8713 = vmatpush1.msra.mxu0 %v7766
  %8714 = vmatprep.subr.mxu0 %v7777
  %8715 = vmatpush1.msra.mxu0 %v7776
  %8716 = vmatprep.subr.mxu0 %v7787
  %8717 = vmatpush1.msra.mxu0 %v7786
  %8718 = vmatprep.subr.mxu0 %v7797
  %8719 = vmatpush1.msra.mxu0 %v7796
  %8720 = vmatprep.subr.mxu0 %v7807
  %8721 = vmatpush1.msra.mxu0 %v7806
  %8722 = vmatprep.subr.mxu0 %v7817
  %8723 = vmatpush1.msra.mxu0 %v7816
  %8724 = vmatprep.subr.mxu0 %v7827
  %8725 = vmatpush1.msra.mxu0 %v7826
  %8726 = vmatprep.subr.mxu0 %v7837
  %8727 = vmatpush1.msra.mxu0 %v7836
  %8728 = vmatprep.subr.mxu0 %v7847
  %8729 = vmatpush1.msra.mxu0 %v7846
  %8730 = vmatprep.subr.mxu0 %v7857
  %8731 = vmatpush1.msra.mxu0 %v7856
  %8732 = vmatprep.subr.mxu0 %v7867
  %8733 = vmatpush1.msra.mxu0 %v7866
  %8734 = vmatprep.subr.mxu0 %v7877
  %8735 = vmatpush1.msra.mxu0 %v7876
  %8736 = vmatprep.subr.mxu0 %v7887
  %8737 = vmatpush1.msra.mxu0 %v7886
  %8738 = vmatprep.subr.mxu0 %v7897
  %8739 = vmatpush1.msra.mxu0 %v7896
  %8740 = vmatprep.subr.mxu0 %v7907
  %8741 = vmatpush1.msra.mxu0 %v7906
  %8742 = vmatprep.subr.mxu0 %v7917
  %8743 = vmatpush1.msra.mxu0 %v7916
  %8744 = vmatprep.subr.mxu0 %v7927
  %8745 = vmatpush1.msra.mxu0 %v7926
  %8746 = vmatprep.subr.mxu0 %v7937
  %8747 = vmatpush1.msra.mxu0 %v7936
  %8748 = vmatprep.mubr.f32.mxu0 %v8109
  %8749 = vmatmul.mubr.f32.gmra.mrb[0].mxu0 %v8108
  %v8750 = vpop.f32.mrb[0].mxu0
  %v8751 = vadd.f32 0.0, %v8750
  %v8752 = vpop.f32.mrb[0].mxu0
  %v8753 = vadd.f32 0.0, %v8752
  %8754 = vdwg.mxu0
  %8755 = vmatprep.subr.mxu0 %v7947
  %8756 = vmatpush1.msra.mxu0 %v7946
  %8757 = vmatprep.subr.mxu0 %v7957
  %8758 = vmatpush1.msra.mxu0 %v7956
  %8759 = vmatprep.subr.mxu0 %v7967
  %8760 = vmatpush1.msra.mxu0 %v7966
  %8761 = vmatprep.subr.mxu0 %v7977
  %8762 = vmatpush1.msra.mxu0 %v7976
  %8763 = vmatprep.subr.mxu0 %v7987
  %8764 = vmatpush1.msra.mxu0 %v7986
  %8765 = vmatprep.subr.mxu0 %v7997
  %8766 = vmatpush1.msra.mxu0 %v7996
  %8767 = vmatprep.subr.mxu0 %v8007
  %8768 = vmatpush1.msra.mxu0 %v8006
  %8769 = vmatprep.subr.mxu0 %v8017
  %8770 = vmatpush1.msra.mxu0 %v8016
  %8771 = vmatprep.subr.mxu0 %v8027
  %8772 = vmatpush1.msra.mxu0 %v8026
  %8773 = vmatprep.subr.mxu0 %v8037
  %8774 = vmatpush1.msra.mxu0 %v8036
  %8775 = vmatprep.subr.mxu0 %v8047
  %8776 = vmatpush1.msra.mxu0 %v8046
  %8777 = vmatprep.subr.mxu0 %v8057
  %8778 = vmatpush1.msra.mxu0 %v8056
  %8779 = vmatprep.subr.mxu0 %v8067
  %8780 = vmatpush1.msra.mxu0 %v8066
  %8781 = vmatprep.subr.mxu0 %v8077
  %8782 = vmatpush1.msra.mxu0 %v8076
  %8783 = vmatprep.subr.mxu0 %v8087
  %8784 = vmatpush1.msra.mxu0 %v8086
  %8785 = vmatprep.subr.mxu0 %v8097
  %8786 = vmatpush1.msra.mxu0 %v8096
  %8787 = vmatprep.subr.mxu0 %v8107
  %8788 = vmatpush1.msra.mxu0 %v8106
  %8789 = vmatprep.subr.mxu0 0.0
  %8790 = vmatpush1.msra.mxu0 0.0
  %8791 = vmatprep.subr.mxu0 0.0
  %8792 = vmatpush1.msra.mxu0 0.0
  %8793 = vmatprep.subr.mxu0 0.0
  %8794 = vmatpush1.msra.mxu0 0.0
  %8795 = vmatprep.subr.mxu0 0.0
  %8796 = vmatpush1.msra.mxu0 0.0
  %8797 = vmatprep.subr.mxu0 0.0
  %8798 = vmatpush1.msra.mxu0 0.0
  %8799 = vmatprep.subr.mxu0 0.0
  %8800 = vmatpush1.msra.mxu0 0.0
  %8801 = vmatprep.subr.mxu0 0.0
  %8802 = vmatpush1.msra.mxu0 0.0
  %8803 = vmatprep.subr.mxu0 0.0
  %8804 = vmatpush1.msra.mxu0 0.0
  %8805 = vmatprep.subr.mxu0 0.0
  %8806 = vmatpush1.msra.mxu0 0.0
  %8807 = vmatprep.subr.mxu0 0.0
  %8808 = vmatpush1.msra.mxu0 0.0
  %8809 = vmatprep.subr.mxu0 0.0
  %8810 = vmatpush1.msra.mxu0 0.0
  %8811 = vmatprep.subr.mxu0 0.0
  %8812 = vmatpush1.msra.mxu0 0.0
  %8813 = vmatprep.subr.mxu0 0.0
  %8814 = vmatpush1.msra.mxu0 0.0
  %8815 = vmatprep.subr.mxu0 0.0
  %8816 = vmatpush1.msra.mxu0 0.0
  %8817 = vmatprep.subr.mxu0 0.0
  %8818 = vmatpush1.msra.mxu0 0.0
  %8819 = vmatprep.mubr.f32.mxu0 %v8114
  %8820 = vmatmul.mubr.f32.gmra.mrb[0].mxu0 %v8110
  %v8821 = vpop.f32.mrb[0].mxu0
  %v8822 = vadd.f32 %v8751, %v8821
  %v8823 = vpop.f32.mrb[0].mxu0
  %v8824 = vadd.f32 %v8753, %v8823
  %8825 = vdwg.mxu0
  %s8826 = smul.u32 4, 160
  %s8827 = smul.u32 %s8826, 3
  %s8828 = sshll.u32 %s8827, 4
  %8829 = dma.done [#allocation4], %s8828
  %v8830 = vpack.c.bf16 %v8254, %v8254
  %v8831 = vpack.c.bf16 %v8256, %v8256
  %v8832 = vpack.c.bf16 %v8396, %v8396
  %v8833 = vpack.c.bf16 %v8398, %v8398
  %v8834 = vpack.c.bf16 %v8538, %v8538
  %v8835 = vpack.c.bf16 %v8540, %v8540
  %v8836 = vpack.c.bf16 %v8680, %v8680
  %v8837 = vpack.c.bf16 %v8682, %v8682
  %v8838 = vpack.c.bf16 %v8822, %v8822
  %v8839 = vpack.c.bf16 %v8824, %v8824
  %v8840 = vld [vmem:[#allocation2] sm:$0xff]
  %v8841 = vld [vmem:[#allocation2 + $0x8] sm:$0xff]
  %v8842 = vld [vmem:[#allocation2 + $0x10] sm:$0xff]
  %v8843 = vld [vmem:[#allocation2 + $0x18] sm:$0xff]
  %v8844 = vld [vmem:[#allocation2 + $0x20] sm:$0xff]
  %v8845 = vld [vmem:[#allocation2 + $0x28] sm:$0xff]
  %v8846 = vld [vmem:[#allocation2 + $0x30] sm:$0xff]
  %v8847 = vld [vmem:[#allocation2 + $0x38] sm:$0xff]
  %v8848 = vld [vmem:[#allocation2 + $0x40] sm:$0xff]
  %v8849 = vld [vmem:[#allocation2 + $0x48] sm:$0xff]
  %v8850 = vld [vmem:[#allocation2 + $0x50] sm:$0xff]
  %v8851 = vld [vmem:[#allocation2 + $0x58] sm:$0xff]
  %v8852 = vld [vmem:[#allocation2 + $0x60] sm:$0xff]
  %v8853 = vld [vmem:[#allocation2 + $0x68] sm:$0xff]
  %v8854 = vld [vmem:[#allocation2 + $0x70] sm:$0xff]
  %v8855 = vld [vmem:[#allocation2 + $0x78] sm:$0xff]
  %v8856 = vld [vmem:[#allocation2 + $0x80] sm:$0xff]
  %v8857 = vld [vmem:[#allocation2 + $0x88] sm:$0xff]
  %v8858 = vld [vmem:[#allocation2 + $0x90] sm:$0xff]
  %v8859 = vld [vmem:[#allocation2 + $0x98] sm:$0xff]
  %v8860 = vld [vmem:[#allocation2 + $0xa0] sm:$0xff]
  %v8861 = vld [vmem:[#allocation2 + $0xa8] sm:$0xff]
  %v8862 = vld [vmem:[#allocation2 + $0xb0] sm:$0xff]
  %v8863 = vld [vmem:[#allocation2 + $0xb8] sm:$0xff]
  %v8864 = vld [vmem:[#allocation2 + $0xc0] sm:$0xff]
  %v8865 = vld [vmem:[#allocation2 + $0xc8] sm:$0xff]
  %v8866 = vld [vmem:[#allocation2 + $0xd0] sm:$0xff]
  %v8867 = vld [vmem:[#allocation2 + $0xd8] sm:$0xff]
  %v8868 = vld [vmem:[#allocation2 + $0xe0] sm:$0xff]
  %v8869 = vld [vmem:[#allocation2 + $0xe8] sm:$0xff]
  %v8870 = vld [vmem:[#allocation2 + $0xf0] sm:$0xff]
  %v8871 = vld [vmem:[#allocation2 + $0xf8] sm:$0xff]
  %v8872 = vld [vmem:[#allocation2 + $0x100] sm:$0xff]
  %v8873 = vld [vmem:[#allocation2 + $0x108] sm:$0xff]
  %v8874 = vld [vmem:[#allocation2 + $0x110] sm:$0xff]
  %v8875 = vld [vmem:[#allocation2 + $0x118] sm:$0xff]
  %v8876 = vld [vmem:[#allocation2 + $0x120] sm:$0xff]
  %v8877 = vld [vmem:[#allocation2 + $0x128] sm:$0xff]
  %v8878 = vld [vmem:[#allocation2 + $0x130] sm:$0xff]
  %v8879 = vld [vmem:[#allocation2 + $0x138] sm:$0xff]
  %v8880 = vld [vmem:[#allocation2 + $0x140] sm:$0xff]
  %v8881 = vld [vmem:[#allocation2 + $0x148] sm:$0xff]
  %v8882 = vld [vmem:[#allocation2 + $0x150] sm:$0xff]
  %v8883 = vld [vmem:[#allocation2 + $0x158] sm:$0xff]
  %v8884 = vld [vmem:[#allocation2 + $0x160] sm:$0xff]
  %v8885 = vld [vmem:[#allocation2 + $0x168] sm:$0xff]
  %v8886 = vld [vmem:[#allocation2 + $0x170] sm:$0xff]
  %v8887 = vld [vmem:[#allocation2 + $0x178] sm:$0xff]
  %v8888 = vld [vmem:[#allocation2 + $0x180] sm:$0xff]
  %v8889 = vld [vmem:[#allocation2 + $0x188] sm:$0xff]
  %v8890 = vld [vmem:[#allocation2 + $0x190] sm:$0xff]
  %v8891 = vld [vmem:[#allocation2 + $0x198] sm:$0xff]
  %v8892 = vld [vmem:[#allocation2 + $0x1a0] sm:$0xff]
  %v8893 = vld [vmem:[#allocation2 + $0x1a8] sm:$0xff]
  %v8894 = vld [vmem:[#allocation2 + $0x1b0] sm:$0xff]
  %v8895 = vld [vmem:[#allocation2 + $0x1b8] sm:$0xff]
  %v8896 = vld [vmem:[#allocation2 + $0x1c0] sm:$0xff]
  %v8897 = vld [vmem:[#allocation2 + $0x1c8] sm:$0xff]
  %v8898 = vld [vmem:[#allocation2 + $0x1d0] sm:$0xff]
  %v8899 = vld [vmem:[#allocation2 + $0x1d8] sm:$0xff]
  %v8900 = vld [vmem:[#allocation2 + $0x1e0] sm:$0xff]
  %v8901 = vld [vmem:[#allocation2 + $0x1e8] sm:$0xff]
  %v8902 = vld [vmem:[#allocation2 + $0x1f0] sm:$0xff]
  %v8903 = vld [vmem:[#allocation2 + $0x1f8] sm:$0xff]
  %v8904 = vld [vmem:[#allocation2 + $0x200] sm:$0xff]
  %v8905 = vld [vmem:[#allocation2 + $0x208] sm:$0xff]
  %v8906 = vld [vmem:[#allocation2 + $0x210] sm:$0xff]
  %v8907 = vld [vmem:[#allocation2 + $0x218] sm:$0xff]
  %v8908 = vld [vmem:[#allocation2 + $0x220] sm:$0xff]
  %v8909 = vld [vmem:[#allocation2 + $0x228] sm:$0xff]
  %v8910 = vld [vmem:[#allocation2 + $0x230] sm:$0xff]
  %v8911 = vld [vmem:[#allocation2 + $0x238] sm:$0xff]
  %v8912 = vld [vmem:[#allocation2 + $0x240] sm:$0xff]
  %v8913 = vld [vmem:[#allocation2 + $0x248] sm:$0xff]
  %v8914 = vld [vmem:[#allocation2 + $0x250] sm:$0xff]
  %v8915 = vld [vmem:[#allocation2 + $0x258] sm:$0xff]
  %v8916 = vld [vmem:[#allocation2 + $0x260] sm:$0xff]
  %v8917 = vld [vmem:[#allocation2 + $0x268] sm:$0xff]
  %v8918 = vld [vmem:[#allocation2 + $0x270] sm:$0xff]
  %v8919 = vld [vmem:[#allocation2 + $0x278] sm:$0xff]
  %v8920 = vld [vmem:[#allocation2 + $0x280] sm:$0xff]
  %v8921 = vld [vmem:[#allocation2 + $0x288] sm:$0xff]
  %v8922 = vld [vmem:[#allocation2 + $0x290] sm:$0xff]
  %v8923 = vld [vmem:[#allocation2 + $0x298] sm:$0xff]
  %v8924 = vld [vmem:[#allocation2 + $0x2a0] sm:$0xff]
  %v8925 = vld [vmem:[#allocation2 + $0x2a8] sm:$0xff]
  %v8926 = vld [vmem:[#allocation2 + $0x2b0] sm:$0xff]
  %v8927 = vld [vmem:[#allocation2 + $0x2b8] sm:$0xff]
  %v8928 = vld [vmem:[#allocation2 + $0x2c0] sm:$0xff]
  %v8929 = vld [vmem:[#allocation2 + $0x2c8] sm:$0xff]
  %v8930 = vld [vmem:[#allocation2 + $0x2d0] sm:$0xff]
  %v8931 = vld [vmem:[#allocation2 + $0x2d8] sm:$0xff]
  %v8932 = vld [vmem:[#allocation2 + $0x2e0] sm:$0xff]
  %v8933 = vld [vmem:[#allocation2 + $0x2e8] sm:$0xff]
  %v8934 = vld [vmem:[#allocation2 + $0x2f0] sm:$0xff]
  %v8935 = vld [vmem:[#allocation2 + $0x2f8] sm:$0xff]
  %v8936 = vld [vmem:[#allocation2 + $0x300] sm:$0xff]
  %v8937 = vld [vmem:[#allocation2 + $0x308] sm:$0xff]
  %v8938 = vld [vmem:[#allocation2 + $0x310] sm:$0xff]
  %v8939 = vld [vmem:[#allocation2 + $0x318] sm:$0xff]
  %v8940 = vld [vmem:[#allocation2 + $0x320] sm:$0xff]
  %v8941 = vld [vmem:[#allocation2 + $0x328] sm:$0xff]
  %v8942 = vld [vmem:[#allocation2 + $0x330] sm:$0xff]
  %v8943 = vld [vmem:[#allocation2 + $0x338] sm:$0xff]
  %v8944 = vld [vmem:[#allocation2 + $0x340] sm:$0xff]
  %v8945 = vld [vmem:[#allocation2 + $0x348] sm:$0xff]
  %v8946 = vld [vmem:[#allocation2 + $0x350] sm:$0xff]
  %v8947 = vld [vmem:[#allocation2 + $0x358] sm:$0xff]
  %v8948 = vld [vmem:[#allocation2 + $0x360] sm:$0xff]
  %v8949 = vld [vmem:[#allocation2 + $0x368] sm:$0xff]
  %v8950 = vld [vmem:[#allocation2 + $0x370] sm:$0xff]
  %v8951 = vld [vmem:[#allocation2 + $0x378] sm:$0xff]
  %v8952 = vld [vmem:[#allocation2 + $0x380] sm:$0xff]
  %v8953 = vld [vmem:[#allocation2 + $0x388] sm:$0xff]
  %v8954 = vld [vmem:[#allocation2 + $0x390] sm:$0xff]
  %v8955 = vld [vmem:[#allocation2 + $0x398] sm:$0xff]
  %v8956 = vld [vmem:[#allocation2 + $0x3a0] sm:$0xff]
  %v8957 = vld [vmem:[#allocation2 + $0x3a8] sm:$0xff]
  %v8958 = vld [vmem:[#allocation2 + $0x3b0] sm:$0xff]
  %v8959 = vld [vmem:[#allocation2 + $0x3b8] sm:$0xff]
  %v8960 = vld [vmem:[#allocation2 + $0x3c0] sm:$0xff]
  %v8961 = vld [vmem:[#allocation2 + $0x3c8] sm:$0xff]
  %v8962 = vld [vmem:[#allocation2 + $0x3d0] sm:$0xff]
  %v8963 = vld [vmem:[#allocation2 + $0x3d8] sm:$0xff]
  %v8964 = vld [vmem:[#allocation2 + $0x3e0] sm:$0xff]
  %v8965 = vld [vmem:[#allocation2 + $0x3e8] sm:$0xff]
  %v8966 = vld [vmem:[#allocation2 + $0x3f0] sm:$0xff]
  %v8967 = vld [vmem:[#allocation2 + $0x3f8] sm:$0xff]
  %v8968 = vld [vmem:[#allocation2 + $0x400] sm:$0xff]
  %v8969 = vld [vmem:[#allocation2 + $0x408] sm:$0xff]
  %v8970 = vld [vmem:[#allocation2 + $0x410] sm:$0xff]
  %v8971 = vld [vmem:[#allocation2 + $0x418] sm:$0xff]
  %v8972 = vld [vmem:[#allocation2 + $0x420] sm:$0xff]
  %v8973 = vld [vmem:[#allocation2 + $0x428] sm:$0xff]
  %v8974 = vld [vmem:[#allocation2 + $0x430] sm:$0xff]
  %v8975 = vld [vmem:[#allocation2 + $0x438] sm:$0xff]
  %v8976 = vld [vmem:[#allocation2 + $0x440] sm:$0xff]
  %v8977 = vld [vmem:[#allocation2 + $0x448] sm:$0xff]
  %v8978 = vld [vmem:[#allocation2 + $0x450] sm:$0xff]
  %v8979 = vld [vmem:[#allocation2 + $0x458] sm:$0xff]
  %v8980 = vld [vmem:[#allocation2 + $0x460] sm:$0xff]
  %v8981 = vld [vmem:[#allocation2 + $0x468] sm:$0xff]
  %v8982 = vld [vmem:[#allocation2 + $0x470] sm:$0xff]
  %v8983 = vld [vmem:[#allocation2 + $0x478] sm:$0xff]
  %v8984 = vld [vmem:[#allocation2 + $0x480] sm:$0xff]
  %v8985 = vld [vmem:[#allocation2 + $0x488] sm:$0xff]
  %v8986 = vld [vmem:[#allocation2 + $0x490] sm:$0xff]
  %v8987 = vld [vmem:[#allocation2 + $0x498] sm:$0xff]
  %v8988 = vld [vmem:[#allocation2 + $0x4a0] sm:$0xff]
  %v8989 = vld [vmem:[#allocation2 + $0x4a8] sm:$0xff]
  %v8990 = vld [vmem:[#allocation2 + $0x4b0] sm:$0xff]
  %v8991 = vld [vmem:[#allocation2 + $0x4b8] sm:$0xff]
  %v8992 = vld [vmem:[#allocation2 + $0x4c0] sm:$0xff]
  %v8993 = vld [vmem:[#allocation2 + $0x4c8] sm:$0xff]
  %v8994 = vld [vmem:[#allocation2 + $0x4d0] sm:$0xff]
  %v8995 = vld [vmem:[#allocation2 + $0x4d8] sm:$0xff]
  %v8996 = vld [vmem:[#allocation2 + $0x4e0] sm:$0xff]
  %v8997 = vld [vmem:[#allocation2 + $0x4e8] sm:$0xff]
  %v8998 = vld [vmem:[#allocation2 + $0x4f0] sm:$0xff]
  %v8999 = vld [vmem:[#allocation2 + $0x4f8] sm:$0xff]
  %v9000 = vld [vmem:[#allocation2 + $0x500] sm:$0xff]
  %v9001 = vld [vmem:[#allocation2 + $0x508] sm:$0xff]
  %v9002 = vld [vmem:[#allocation2 + $0x510] sm:$0xff]
  %v9003 = vld [vmem:[#allocation2 + $0x518] sm:$0xff]
  %v9004 = vld [vmem:[#allocation2 + $0x520] sm:$0xff]
  %v9005 = vld [vmem:[#allocation2 + $0x528] sm:$0xff]
  %v9006 = vld [vmem:[#allocation2 + $0x530] sm:$0xff]
  %v9007 = vld [vmem:[#allocation2 + $0x538] sm:$0xff]
  %v9008 = vld [vmem:[#allocation2 + $0x540] sm:$0xff]
  %v9009 = vld [vmem:[#allocation2 + $0x548] sm:$0xff]
  %v9010 = vld [vmem:[#allocation2 + $0x550] sm:$0xff]
  %v9011 = vld [vmem:[#allocation2 + $0x558] sm:$0xff]
  %v9012 = vld [vmem:[#allocation2 + $0x560] sm:$0xff]
  %v9013 = vld [vmem:[#allocation2 + $0x568] sm:$0xff]
  %v9014 = vld [vmem:[#allocation2 + $0x570] sm:$0xff]
  %v9015 = vld [vmem:[#allocation2 + $0x578] sm:$0xff]
  %v9016 = vld [vmem:[#allocation2 + $0x580] sm:$0xff]
  %v9017 = vld [vmem:[#allocation2 + $0x588] sm:$0xff]
  %v9018 = vld [vmem:[#allocation2 + $0x590] sm:$0xff]
  %v9019 = vld [vmem:[#allocation2 + $0x598] sm:$0xff]
  %v9020 = vld [vmem:[#allocation2 + $0x5a0] sm:$0xff]
  %v9021 = vld [vmem:[#allocation2 + $0x5a8] sm:$0xff]
  %v9022 = vld [vmem:[#allocation2 + $0x5b0] sm:$0xff]
  %v9023 = vld [vmem:[#allocation2 + $0x5b8] sm:$0xff]
  %v9024 = vld [vmem:[#allocation2 + $0x5c0] sm:$0xff]
  %v9025 = vld [vmem:[#allocation2 + $0x5c8] sm:$0xff]
  %v9026 = vld [vmem:[#allocation2 + $0x5d0] sm:$0xff]
  %v9027 = vld [vmem:[#allocation2 + $0x5d8] sm:$0xff]
  %v9028 = vld [vmem:[#allocation2 + $0x5e0] sm:$0xff]
  %v9029 = vld [vmem:[#allocation2 + $0x5e8] sm:$0xff]
  %v9030 = vld [vmem:[#allocation2 + $0x5f0] sm:$0xff]
  %v9031 = vld [vmem:[#allocation2 + $0x5f8] sm:$0xff]
  %v9032 = vld [vmem:[#allocation2 + $0x600] sm:$0xff]
  %v9033 = vld [vmem:[#allocation2 + $0x608] sm:$0xff]
  %v9034 = vld [vmem:[#allocation2 + $0x610] sm:$0xff]
  %v9035 = vld [vmem:[#allocation2 + $0x618] sm:$0xff]
  %v9036 = vld [vmem:[#allocation2 + $0x620] sm:$0xff]
  %v9037 = vld [vmem:[#allocation2 + $0x628] sm:$0xff]
  %v9038 = vld [vmem:[#allocation2 + $0x630] sm:$0xff]
  %v9039 = vld [vmem:[#allocation2 + $0x638] sm:$0xff]
  %v9040 = vld [vmem:[#allocation2 + $0x640] sm:$0xff]
  %v9041 = vld [vmem:[#allocation2 + $0x648] sm:$0xff]
  %v9042 = vld [vmem:[#allocation2 + $0x650] sm:$0xff]
  %v9043 = vld [vmem:[#allocation2 + $0x658] sm:$0xff]
  %v9044 = vld [vmem:[#allocation2 + $0x660] sm:$0xff]
  %v9045 = vld [vmem:[#allocation2 + $0x668] sm:$0xff]
  %v9046 = vld [vmem:[#allocation2 + $0x670] sm:$0xff]
  %v9047 = vld [vmem:[#allocation2 + $0x678] sm:$0xff]
  %v9048 = vld [vmem:[#allocation2 + $0x680] sm:$0xff]
  %v9049 = vld [vmem:[#allocation2 + $0x688] sm:$0xff]
  %v9050 = vld [vmem:[#allocation2 + $0x690] sm:$0xff]
  %v9051 = vld [vmem:[#allocation2 + $0x698] sm:$0xff]
  %v9052 = vld [vmem:[#allocation2 + $0x6a0] sm:$0xff]
  %v9053 = vld [vmem:[#allocation2 + $0x6a8] sm:$0xff]
  %v9054 = vld [vmem:[#allocation2 + $0x6b0] sm:$0xff]
  %v9055 = vld [vmem:[#allocation2 + $0x6b8] sm:$0xff]
  %v9056 = vld [vmem:[#allocation2 + $0x6c0] sm:$0xff]
  %v9057 = vld [vmem:[#allocation2 + $0x6c8] sm:$0xff]
  %v9058 = vld [vmem:[#allocation2 + $0x6d0] sm:$0xff]
  %v9059 = vld [vmem:[#allocation2 + $0x6d8] sm:$0xff]
  %v9060 = vld [vmem:[#allocation2 + $0x6e0] sm:$0xff]
  %v9061 = vld [vmem:[#allocation2 + $0x6e8] sm:$0xff]
  %v9062 = vld [vmem:[#allocation2 + $0x6f0] sm:$0xff]
  %v9063 = vld [vmem:[#allocation2 + $0x6f8] sm:$0xff]
  %v9064 = vld [vmem:[#allocation2 + $0x700] sm:$0xff]
  %v9065 = vld [vmem:[#allocation2 + $0x708] sm:$0xff]
  %v9066 = vld [vmem:[#allocation2 + $0x710] sm:$0xff]
  %v9067 = vld [vmem:[#allocation2 + $0x718] sm:$0xff]
  %v9068 = vld [vmem:[#allocation2 + $0x720] sm:$0xff]
  %v9069 = vld [vmem:[#allocation2 + $0x728] sm:$0xff]
  %v9070 = vld [vmem:[#allocation2 + $0x730] sm:$0xff]
  %v9071 = vld [vmem:[#allocation2 + $0x738] sm:$0xff]
  %v9072 = vld [vmem:[#allocation2 + $0x740] sm:$0xff]
  %v9073 = vld [vmem:[#allocation2 + $0x748] sm:$0xff]
  %v9074 = vld [vmem:[#allocation2 + $0x750] sm:$0xff]
  %v9075 = vld [vmem:[#allocation2 + $0x758] sm:$0xff]
  %v9076 = vld [vmem:[#allocation2 + $0x760] sm:$0xff]
  %v9077 = vld [vmem:[#allocation2 + $0x768] sm:$0xff]
  %v9078 = vld [vmem:[#allocation2 + $0x770] sm:$0xff]
  %v9079 = vld [vmem:[#allocation2 + $0x778] sm:$0xff]
  %v9080 = vld [vmem:[%s6] sm:$0x7]
  %v9082 = vlaneseq
  %v9083 = vshrl.u32 %v9082, 7
  %v9084 = vsub.s32 0, %v9083
  %v9085 = vrot.slane %v9080, %v9084
  %v9086 = vlaneseq
  %v9087 = vshrl.u32 %v9086, 7
  %v9088 = vsub.s32 1, %v9087
  %v9089 = vrot.slane %v9080, %v9088
  %v9090 = vlaneseq
  %v9091 = vshrl.u32 %v9090, 7
  %v9092 = vsub.s32 2, %v9091
  %v9093 = vrot.slane %v9080, %v9092
  %9097 = vmatprep.subr.bf16.mxu0 %v8841
  %9098 = vmatpush1.bf16.msra.mxu0 %v8840
  %9099 = vmatprep.subr.bf16.mxu0 %v8844
  %9100 = vmatpush1.bf16.msra.mxu0 %v8843
  %9101 = vmatprep.subr.bf16.mxu0 %v8847
  %9102 = vmatpush1.bf16.msra.mxu0 %v8846
  %9103 = vmatprep.subr.bf16.mxu0 %v8850
  %9104 = vmatpush1.bf16.msra.mxu0 %v8849
  %9105 = vmatprep.subr.bf16.mxu0 %v8853
  %9106 = vmatpush1.bf16.msra.mxu0 %v8852
  %9107 = vmatprep.subr.bf16.mxu0 %v8856
  %9108 = vmatpush1.bf16.msra.mxu0 %v8855
  %9109 = vmatprep.subr.bf16.mxu0 %v8859
  %9110 = vmatpush1.bf16.msra.mxu0 %v8858
  %9111 = vmatprep.subr.bf16.mxu0 %v8862
  %9112 = vmatpush1.bf16.msra.mxu0 %v8861
  %9113 = vmatprep.subr.bf16.mxu0 %v8865
  %9114 = vmatpush1.bf16.msra.mxu0 %v8864
  %9115 = vmatprep.subr.bf16.mxu0 %v8868
  %9116 = vmatpush1.bf16.msra.mxu0 %v8867
  %9117 = vmatprep.subr.bf16.mxu0 %v8871
  %9118 = vmatpush1.bf16.msra.mxu0 %v8870
  %9119 = vmatprep.subr.bf16.mxu0 %v8874
  %9120 = vmatpush1.bf16.msra.mxu0 %v8873
  %9121 = vmatprep.subr.bf16.mxu0 %v8877
  %9122 = vmatpush1.bf16.msra.mxu0 %v8876
  %9123 = vmatprep.subr.bf16.mxu0 %v8880
  %9124 = vmatpush1.bf16.msra.mxu0 %v8879
  %9125 = vmatprep.subr.bf16.mxu0 %v8883
  %9126 = vmatpush1.bf16.msra.mxu0 %v8882
  %9127 = vmatprep.subr.bf16.mxu0 %v8886
  %9128 = vmatpush1.bf16.msra.mxu0 %v8885
  %9129 = vmatprep.mubr.bf16.mxu0 %v8831
  %9130 = vmatmul.mubr.bf16.gmra.mrb[0].mxu0 %v8830
  %v9131 = vpop.f32.mrb[0].mxu0
  %v9132 = vadd.f32 %v9085, %v9131
  %v9133 = vpop.f32.mrb[0].mxu0
  %v9134 = vadd.f32 %v9089, %v9133
  %v9135 = vpop.f32.mrb[0].mxu0
  %v9136 = vpop.f32.mrb[0].mxu0
  %9137 = vdwg.mxu0
  %9138 = vmatprep.subr.bf16.mxu0 %v8889
  %9139 = vmatpush1.bf16.msra.mxu0 %v8888
  %9140 = vmatprep.subr.bf16.mxu0 %v8892
  %9141 = vmatpush1.bf16.msra.mxu0 %v8891
  %9142 = vmatprep.subr.bf16.mxu0 %v8895
  %9143 = vmatpush1.bf16.msra.mxu0 %v8894
  %9144 = vmatprep.subr.bf16.mxu0 %v8898
  %9145 = vmatpush1.bf16.msra.mxu0 %v8897
  %9146 = vmatprep.subr.bf16.mxu0 %v8901
  %9147 = vmatpush1.bf16.msra.mxu0 %v8900
  %9148 = vmatprep.subr.bf16.mxu0 %v8904
  %9149 = vmatpush1.bf16.msra.mxu0 %v8903
  %9150 = vmatprep.subr.bf16.mxu0 %v8907
  %9151 = vmatpush1.bf16.msra.mxu0 %v8906
  %9152 = vmatprep.subr.bf16.mxu0 %v8910
  %9153 = vmatpush1.bf16.msra.mxu0 %v8909
  %9154 = vmatprep.subr.bf16.mxu0 %v8913
  %9155 = vmatpush1.bf16.msra.mxu0 %v8912
  %9156 = vmatprep.subr.bf16.mxu0 %v8916
  %9157 = vmatpush1.bf16.msra.mxu0 %v8915
  %9158 = vmatprep.subr.bf16.mxu0 %v8919
  %9159 = vmatpush1.bf16.msra.mxu0 %v8918
  %9160 = vmatprep.subr.bf16.mxu0 %v8922
  %9161 = vmatpush1.bf16.msra.mxu0 %v8921
  %9162 = vmatprep.subr.bf16.mxu0 %v8925
  %9163 = vmatpush1.bf16.msra.mxu0 %v8924
  %9164 = vmatprep.subr.bf16.mxu0 %v8928
  %9165 = vmatpush1.bf16.msra.mxu0 %v8927
  %9166 = vmatprep.subr.bf16.mxu0 %v8931
  %9167 = vmatpush1.bf16.msra.mxu0 %v8930
  %9168 = vmatprep.subr.bf16.mxu0 %v8934
  %9169 = vmatpush1.bf16.msra.mxu0 %v8933
  %9170 = vmatprep.mubr.bf16.mxu0 %v8833
  %9171 = vmatmul.mubr.bf16.gmra.mrb[0].mxu0 %v8832
  %v9172 = vpop.f32.mrb[0].mxu0
  %v9173 = vadd.f32 %v9132, %v9172
  %v9174 = vpop.f32.mrb[0].mxu0
  %v9175 = vadd.f32 %v9134, %v9174
  %v9176 = vpop.f32.mrb[0].mxu0
  %v9177 = vpop.f32.mrb[0].mxu0
  %9178 = vdwg.mxu0
  %9179 = vmatprep.subr.bf16.mxu0 %v8937
  %9180 = vmatpush1.bf16.msra.mxu0 %v8936
  %9181 = vmatprep.subr.bf16.mxu0 %v8940
  %9182 = vmatpush1.bf16.msra.mxu0 %v8939
  %9183 = vmatprep.subr.bf16.mxu0 %v8943
  %9184 = vmatpush1.bf16.msra.mxu0 %v8942
  %9185 = vmatprep.subr.bf16.mxu0 %v8946
  %9186 = vmatpush1.bf16.msra.mxu0 %v8945
  %9187 = vmatprep.subr.bf16.mxu0 %v8949
  %9188 = vmatpush1.bf16.msra.mxu0 %v8948
  %9189 = vmatprep.subr.bf16.mxu0 %v8952
  %9190 = vmatpush1.bf16.msra.mxu0 %v8951
  %9191 = vmatprep.subr.bf16.mxu0 %v8955
  %9192 = vmatpush1.bf16.msra.mxu0 %v8954
  %9193 = vmatprep.subr.bf16.mxu0 %v8958
  %9194 = vmatpush1.bf16.msra.mxu0 %v8957
  %9195 = vmatprep.subr.bf16.mxu0 %v8961
  %9196 = vmatpush1.bf16.msra.mxu0 %v8960
  %9197 = vmatprep.subr.bf16.mxu0 %v8964
  %9198 = vmatpush1.bf16.msra.mxu0 %v8963
  %9199 = vmatprep.subr.bf16.mxu0 %v8967
  %9200 = vmatpush1.bf16.msra.mxu0 %v8966
  %9201 = vmatprep.subr.bf16.mxu0 %v8970
  %9202 = vmatpush1.bf16.msra.mxu0 %v8969
  %9203 = vmatprep.subr.bf16.mxu0 %v8973
  %9204 = vmatpush1.bf16.msra.mxu0 %v8972
  %9205 = vmatprep.subr.bf16.mxu0 %v8976
  %9206 = vmatpush1.bf16.msra.mxu0 %v8975
  %9207 = vmatprep.subr.bf16.mxu0 %v8979
  %9208 = vmatpush1.bf16.msra.mxu0 %v8978
  %9209 = vmatprep.subr.bf16.mxu0 %v8982
  %9210 = vmatpush1.bf16.msra.mxu0 %v8981
  %9211 = vmatprep.mubr.bf16.mxu0 %v8835
  %9212 = vmatmul.mubr.bf16.gmra.mrb[0].mxu0 %v8834
  %v9213 = vpop.f32.mrb[0].mxu0
  %v9214 = vadd.f32 %v9173, %v9213
  %v9215 = vpop.f32.mrb[0].mxu0
  %v9216 = vadd.f32 %v9175, %v9215
  %v9217 = vpop.f32.mrb[0].mxu0
  %v9218 = vpop.f32.mrb[0].mxu0
  %9219 = vdwg.mxu0
  %9220 = vmatprep.subr.bf16.mxu0 %v8985
  %9221 = vmatpush1.bf16.msra.mxu0 %v8984
  %9222 = vmatprep.subr.bf16.mxu0 %v8988
  %9223 = vmatpush1.bf16.msra.mxu0 %v8987
  %9224 = vmatprep.subr.bf16.mxu0 %v8991
  %9225 = vmatpush1.bf16.msra.mxu0 %v8990
  %9226 = vmatprep.subr.bf16.mxu0 %v8994
  %9227 = vmatpush1.bf16.msra.mxu0 %v8993
  %9228 = vmatprep.subr.bf16.mxu0 %v8997
  %9229 = vmatpush1.bf16.msra.mxu0 %v8996
  %9230 = vmatprep.subr.bf16.mxu0 %v9000
  %9231 = vmatpush1.bf16.msra.mxu0 %v8999
  %9232 = vmatprep.subr.bf16.mxu0 %v9003
  %9233 = vmatpush1.bf16.msra.mxu0 %v9002
  %9234 = vmatprep.subr.bf16.mxu0 %v9006
  %9235 = vmatpush1.bf16.msra.mxu0 %v9005
  %9236 = vmatprep.subr.bf16.mxu0 %v9009
  %9237 = vmatpush1.bf16.msra.mxu0 %v9008
  %9238 = vmatprep.subr.bf16.mxu0 %v9012
  %9239 = vmatpush1.bf16.msra.mxu0 %v9011
  %9240 = vmatprep.subr.bf16.mxu0 %v9015
  %9241 = vmatpush1.bf16.msra.mxu0 %v9014
  %9242 = vmatprep.subr.bf16.mxu0 %v9018
  %9243 = vmatpush1.bf16.msra.mxu0 %v9017
  %9244 = vmatprep.subr.bf16.mxu0 %v9021
  %9245 = vmatpush1.bf16.msra.mxu0 %v9020
  %9246 = vmatprep.subr.bf16.mxu0 %v9024
  %9247 = vmatpush1.bf16.msra.mxu0 %v9023
  %9248 = vmatprep.subr.bf16.mxu0 %v9027
  %9249 = vmatpush1.bf16.msra.mxu0 %v9026
  %9250 = vmatprep.subr.bf16.mxu0 %v9030
  %9251 = vmatpush1.bf16.msra.mxu0 %v9029
  %9252 = vmatprep.mubr.bf16.mxu0 %v8837
  %9253 = vmatmul.mubr.bf16.gmra.mrb[0].mxu0 %v8836
  %v9254 = vpop.f32.mrb[0].mxu0
  %v9255 = vadd.f32 %v9214, %v9254
  %v9256 = vpop.f32.mrb[0].mxu0
  %v9257 = vadd.f32 %v9216, %v9256
  %v9258 = vpop.f32.mrb[0].mxu0
  %v9259 = vpop.f32.mrb[0].mxu0
  %9260 = vdwg.mxu0
  %9261 = vmatprep.subr.bf16.mxu0 %v9033
  %9262 = vmatpush1.bf16.msra.mxu0 %v9032
  %9263 = vmatprep.subr.bf16.mxu0 %v9036
  %9264 = vmatpush1.bf16.msra.mxu0 %v9035
  %9265 = vmatprep.subr.bf16.mxu0 %v9039
  %9266 = vmatpush1.bf16.msra.mxu0 %v9038
  %9267 = vmatprep.subr.bf16.mxu0 %v9042
  %9268 = vmatpush1.bf16.msra.mxu0 %v9041
  %9269 = vmatprep.subr.bf16.mxu0 %v9045
  %9270 = vmatpush1.bf16.msra.mxu0 %v9044
  %9271 = vmatprep.subr.bf16.mxu0 %v9048
  %9272 = vmatpush1.bf16.msra.mxu0 %v9047
  %9273 = vmatprep.subr.bf16.mxu0 %v9051
  %9274 = vmatpush1.bf16.msra.mxu0 %v9050
  %9275 = vmatprep.subr.bf16.mxu0 %v9054
  %9276 = vmatpush1.bf16.msra.mxu0 %v9053
  %9277 = vmatprep.subr.bf16.mxu0 %v9057
  %9278 = vmatpush1.bf16.msra.mxu0 %v9056
  %9279 = vmatprep.subr.bf16.mxu0 %v9060
  %9280 = vmatpush1.bf16.msra.mxu0 %v9059
  %9281 = vmatprep.subr.bf16.mxu0 %v9063
  %9282 = vmatpush1.bf16.msra.mxu0 %v9062
  %9283 = vmatprep.subr.bf16.mxu0 %v9066
  %9284 = vmatpush1.bf16.msra.mxu0 %v9065
  %9285 = vmatprep.subr.bf16.mxu0 %v9069
  %9286 = vmatpush1.bf16.msra.mxu0 %v9068
  %9287 = vmatprep.subr.bf16.mxu0 %v9072
  %9288 = vmatpush1.bf16.msra.mxu0 %v9071
  %9289 = vmatprep.subr.bf16.mxu0 %v9075
  %9290 = vmatpush1.bf16.msra.mxu0 %v9074
  %9291 = vmatprep.subr.bf16.mxu0 %v9078
  %9292 = vmatpush1.bf16.msra.mxu0 %v9077
  %9293 = vmatprep.mubr.bf16.mxu0 %v8839
  %9294 = vmatmul.mubr.bf16.gmra.mrb[0].mxu0 %v8838
  %v9295 = vpop.f32.mrb[0].mxu0
  %v9296 = vadd.f32 %v9255, %v9295
  %v9297 = vpop.f32.mrb[0].mxu0
  %v9298 = vadd.f32 %v9257, %v9297
  %v9299 = vpop.f32.mrb[0].mxu0
  %v9300 = vpop.f32.mrb[0].mxu0
  %9301 = vdwg.mxu0
  %9302 = vmatprep.subr.bf16.mxu0 0
  %9303 = vmatpush1.bf16.msra.mxu0 %v8842
  %9304 = vmatprep.subr.bf16.mxu0 0
  %9305 = vmatpush1.bf16.msra.mxu0 %v8845
  %9306 = vmatprep.subr.bf16.mxu0 0
  %9307 = vmatpush1.bf16.msra.mxu0 %v8848
  %9308 = vmatprep.subr.bf16.mxu0 0
  %9309 = vmatpush1.bf16.msra.mxu0 %v8851
  %9310 = vmatprep.subr.bf16.mxu0 0
  %9311 = vmatpush1.bf16.msra.mxu0 %v8854
  %9312 = vmatprep.subr.bf16.mxu0 0
  %9313 = vmatpush1.bf16.msra.mxu0 %v8857
  %9314 = vmatprep.subr.bf16.mxu0 0
  %9315 = vmatpush1.bf16.msra.mxu0 %v8860
  %9316 = vmatprep.subr.bf16.mxu0 0
  %9317 = vmatpush1.bf16.msra.mxu0 %v8863
  %9318 = vmatprep.subr.bf16.mxu0 0
  %9319 = vmatpush1.bf16.msra.mxu0 %v8866
  %9320 = vmatprep.subr.bf16.mxu0 0
  %9321 = vmatpush1.bf16.msra.mxu0 %v8869
  %9322 = vmatprep.subr.bf16.mxu0 0
  %9323 = vmatpush1.bf16.msra.mxu0 %v8872
  %9324 = vmatprep.subr.bf16.mxu0 0
  %9325 = vmatpush1.bf16.msra.mxu0 %v8875
  %9326 = vmatprep.subr.bf16.mxu0 0
  %9327 = vmatpush1.bf16.msra.mxu0 %v8878
  %9328 = vmatprep.subr.bf16.mxu0 0
  %9329 = vmatpush1.bf16.msra.mxu0 %v8881
  %9330 = vmatprep.subr.bf16.mxu0 0
  %9331 = vmatpush1.bf16.msra.mxu0 %v8884
  %9332 = vmatprep.subr.bf16.mxu0 0
  %9333 = vmatpush1.bf16.msra.mxu0 %v8887
  %9334 = vmatprep.mubr.bf16.mxu0 %v8831
  %9335 = vmatmul.mubr.bf16.gmra.mrb[0].mxu0 %v8830
  %v9336 = vpop.f32.mrb[0].mxu0
  %v9337 = vadd.f32 %v9093, %v9336
  %v9338 = vpop.f32.mrb[0].mxu0
  %v9339 = vpop.f32.mrb[0].mxu0
  %v9340 = vpop.f32.mrb[0].mxu0
  %9341 = vdwg.mxu0
  %9342 = vmatprep.subr.bf16.mxu0 0
  %9343 = vmatpush1.bf16.msra.mxu0 %v8890
  %9344 = vmatprep.subr.bf16.mxu0 0
  %9345 = vmatpush1.bf16.msra.mxu0 %v8893
  %9346 = vmatprep.subr.bf16.mxu0 0
  %9347 = vmatpush1.bf16.msra.mxu0 %v8896
  %9348 = vmatprep.subr.bf16.mxu0 0
  %9349 = vmatpush1.bf16.msra.mxu0 %v8899
  %9350 = vmatprep.subr.bf16.mxu0 0
  %9351 = vmatpush1.bf16.msra.mxu0 %v8902
  %9352 = vmatprep.subr.bf16.mxu0 0
  %9353 = vmatpush1.bf16.msra.mxu0 %v8905
  %9354 = vmatprep.subr.bf16.mxu0 0
  %9355 = vmatpush1.bf16.msra.mxu0 %v8908
  %9356 = vmatprep.subr.bf16.mxu0 0
  %9357 = vmatpush1.bf16.msra.mxu0 %v8911
  %9358 = vmatprep.subr.bf16.mxu0 0
  %9359 = vmatpush1.bf16.msra.mxu0 %v8914
  %9360 = vmatprep.subr.bf16.mxu0 0
  %9361 = vmatpush1.bf16.msra.mxu0 %v8917
  %9362 = vmatprep.subr.bf16.mxu0 0
  %9363 = vmatpush1.bf16.msra.mxu0 %v8920
  %9364 = vmatprep.subr.bf16.mxu0 0
  %9365 = vmatpush1.bf16.msra.mxu0 %v8923
  %9366 = vmatprep.subr.bf16.mxu0 0
  %9367 = vmatpush1.bf16.msra.mxu0 %v8926
  %9368 = vmatprep.subr.bf16.mxu0 0
  %9369 = vmatpush1.bf16.msra.mxu0 %v8929
  %9370 = vmatprep.subr.bf16.mxu0 0
  %9371 = vmatpush1.bf16.msra.mxu0 %v8932
  %9372 = vmatprep.subr.bf16.mxu0 0
  %9373 = vmatpush1.bf16.msra.mxu0 %v8935
  %9374 = vmatprep.mubr.bf16.mxu0 %v8833
  %9375 = vmatmul.mubr.bf16.gmra.mrb[0].mxu0 %v8832
  %v9376 = vpop.f32.mrb[0].mxu0
  %v9377 = vadd.f32 %v9337, %v9376
  %v9378 = vpop.f32.mrb[0].mxu0
  %v9379 = vpop.f32.mrb[0].mxu0
  %v9380 = vpop.f32.mrb[0].mxu0
  %9381 = vdwg.mxu0
  %9382 = vmatprep.subr.bf16.mxu0 0
  %9383 = vmatpush1.bf16.msra.mxu0 %v8938
  %9384 = vmatprep.subr.bf16.mxu0 0
  %9385 = vmatpush1.bf16.msra.mxu0 %v8941
  %9386 = vmatprep.subr.bf16.mxu0 0
  %9387 = vmatpush1.bf16.msra.mxu0 %v8944
  %9388 = vmatprep.subr.bf16.mxu0 0
  %9389 = vmatpush1.bf16.msra.mxu0 %v8947
  %9390 = vmatprep.subr.bf16.mxu0 0
  %9391 = vmatpush1.bf16.msra.mxu0 %v8950
  %9392 = vmatprep.subr.bf16.mxu0 0
  %9393 = vmatpush1.bf16.msra.mxu0 %v8953
  %9394 = vmatprep.subr.bf16.mxu0 0
  %9395 = vmatpush1.bf16.msra.mxu0 %v8956
  %9396 = vmatprep.subr.bf16.mxu0 0
  %9397 = vmatpush1.bf16.msra.mxu0 %v8959
  %9398 = vmatprep.subr.bf16.mxu0 0
  %9399 = vmatpush1.bf16.msra.mxu0 %v8962
  %9400 = vmatprep.subr.bf16.mxu0 0
  %9401 = vmatpush1.bf16.msra.mxu0 %v8965
  %9402 = vmatprep.subr.bf16.mxu0 0
  %9403 = vmatpush1.bf16.msra.mxu0 %v8968
  %9404 = vmatprep.subr.bf16.mxu0 0
  %9405 = vmatpush1.bf16.msra.mxu0 %v8971
  %9406 = vmatprep.subr.bf16.mxu0 0
  %9407 = vmatpush1.bf16.msra.mxu0 %v8974
  %9408 = vmatprep.subr.bf16.mxu0 0
  %9409 = vmatpush1.bf16.msra.mxu0 %v8977
  %9410 = vmatprep.subr.bf16.mxu0 0
  %9411 = vmatpush1.bf16.msra.mxu0 %v8980
  %9412 = vmatprep.subr.bf16.mxu0 0
  %9413 = vmatpush1.bf16.msra.mxu0 %v8983
  %9414 = vmatprep.mubr.bf16.mxu0 %v8835
  %9415 = vmatmul.mubr.bf16.gmra.mrb[0].mxu0 %v8834
  %v9416 = vpop.f32.mrb[0].mxu0
  %v9417 = vadd.f32 %v9377, %v9416
  %v9418 = vpop.f32.mrb[0].mxu0
  %v9419 = vpop.f32.mrb[0].mxu0
  %v9420 = vpop.f32.mrb[0].mxu0
  %9421 = vdwg.mxu0
  %9422 = vmatprep.subr.bf16.mxu0 0
  %9423 = vmatpush1.bf16.msra.mxu0 %v8986
  %9424 = vmatprep.subr.bf16.mxu0 0
  %9425 = vmatpush1.bf16.msra.mxu0 %v8989
  %9426 = vmatprep.subr.bf16.mxu0 0
  %9427 = vmatpush1.bf16.msra.mxu0 %v8992
  %9428 = vmatprep.subr.bf16.mxu0 0
  %9429 = vmatpush1.bf16.msra.mxu0 %v8995
  %9430 = vmatprep.subr.bf16.mxu0 0
  %9431 = vmatpush1.bf16.msra.mxu0 %v8998
  %9432 = vmatprep.subr.bf16.mxu0 0
  %9433 = vmatpush1.bf16.msra.mxu0 %v9001
  %9434 = vmatprep.subr.bf16.mxu0 0
  %9435 = vmatpush1.bf16.msra.mxu0 %v9004
  %9436 = vmatprep.subr.bf16.mxu0 0
  %9437 = vmatpush1.bf16.msra.mxu0 %v9007
  %9438 = vmatprep.subr.bf16.mxu0 0
  %9439 = vmatpush1.bf16.msra.mxu0 %v9010
  %9440 = vmatprep.subr.bf16.mxu0 0
  %9441 = vmatpush1.bf16.msra.mxu0 %v9013
  %9442 = vmatprep.subr.bf16.mxu0 0
  %9443 = vmatpush1.bf16.msra.mxu0 %v9016
  %9444 = vmatprep.subr.bf16.mxu0 0
  %9445 = vmatpush1.bf16.msra.mxu0 %v9019
  %9446 = vmatprep.subr.bf16.mxu0 0
  %9447 = vmatpush1.bf16.msra.mxu0 %v9022
  %9448 = vmatprep.subr.bf16.mxu0 0
  %9449 = vmatpush1.bf16.msra.mxu0 %v9025
  %9450 = vmatprep.subr.bf16.mxu0 0
  %9451 = vmatpush1.bf16.msra.mxu0 %v9028
  %9452 = vmatprep.subr.bf16.mxu0 0
  %9453 = vmatpush1.bf16.msra.mxu0 %v9031
  %9454 = vmatprep.mubr.bf16.mxu0 %v8837
  %9455 = vmatmul.mubr.bf16.gmra.mrb[0].mxu0 %v8836
  %v9456 = vpop.f32.mrb[0].mxu0
  %v9457 = vadd.f32 %v9417, %v9456
  %v9458 = vpop.f32.mrb[0].mxu0
  %v9459 = vpop.f32.mrb[0].mxu0
  %v9460 = vpop.f32.mrb[0].mxu0
  %9461 = vdwg.mxu0
  %9462 = vmatprep.subr.bf16.mxu0 0
  %9463 = vmatpush1.bf16.msra.mxu0 %v9034
  %9464 = vmatprep.subr.bf16.mxu0 0
  %9465 = vmatpush1.bf16.msra.mxu0 %v9037
  %9466 = vmatprep.subr.bf16.mxu0 0
  %9467 = vmatpush1.bf16.msra.mxu0 %v9040
  %9468 = vmatprep.subr.bf16.mxu0 0
  %9469 = vmatpush1.bf16.msra.mxu0 %v9043
  %9470 = vmatprep.subr.bf16.mxu0 0
  %9471 = vmatpush1.bf16.msra.mxu0 %v9046
  %9472 = vmatprep.subr.bf16.mxu0 0
  %9473 = vmatpush1.bf16.msra.mxu0 %v9049
  %9474 = vmatprep.subr.bf16.mxu0 0
  %9475 = vmatpush1.bf16.msra.mxu0 %v9052
  %9476 = vmatprep.subr.bf16.mxu0 0
  %9477 = vmatpush1.bf16.msra.mxu0 %v9055
  %9478 = vmatprep.subr.bf16.mxu0 0
  %9479 = vmatpush1.bf16.msra.mxu0 %v9058
  %9480 = vmatprep.subr.bf16.mxu0 0
  %9481 = vmatpush1.bf16.msra.mxu0 %v9061
  %9482 = vmatprep.subr.bf16.mxu0 0
  %9483 = vmatpush1.bf16.msra.mxu0 %v9064
  %9484 = vmatprep.subr.bf16.mxu0 0
  %9485 = vmatpush1.bf16.msra.mxu0 %v9067
  %9486 = vmatprep.subr.bf16.mxu0 0
  %9487 = vmatpush1.bf16.msra.mxu0 %v9070
  %9488 = vmatprep.subr.bf16.mxu0 0
  %9489 = vmatpush1.bf16.msra.mxu0 %v9073
  %9490 = vmatprep.subr.bf16.mxu0 0
  %9491 = vmatpush1.bf16.msra.mxu0 %v9076
  %9492 = vmatprep.subr.bf16.mxu0 0
  %9493 = vmatpush1.bf16.msra.mxu0 %v9079
  %9494 = vmatprep.mubr.bf16.mxu0 %v8839
  %9495 = vmatmul.mubr.bf16.gmra.mrb[0].mxu0 %v8838
  %v9496 = vpop.f32.mrb[0].mxu0
  %v9497 = vadd.f32 %v9457, %v9496
  %v9498 = vpop.f32.mrb[0].mxu0
  %v9499 = vpop.f32.mrb[0].mxu0
  %v9500 = vpop.f32.mrb[0].mxu0
  %9501 = vdwg.mxu0
  %v9502 = vld [vmem:[%s7] sm:$0x3]
  %v9503 = vsub.f32 0.0, %v9296
  %v9504 = vmul.f32 %v9503, 1.442695
  %v9505 = vpow.pop %v9504
  %v9506 = vadd.f32 %v9505, 1.0
  %v9507 = vrcp.pop %v9506
  %v9508 = vlaneseq
  %v9509 = vshrl.u32 %v9508, 7
  %v9510 = vsub.s32 0, %v9509
  %v9511 = vrot.slane %v9502, %v9510
  %v9512 = vmul.f32 %v9507, %v9511
  %9514 = vrot.lane.b32.xlu0 %v9512, 64
  %v9515 = vpop.permute.xlu0 %9514
  %v9517 = vadd.f32 %v9296, %v9515
  %v9518 = vtanh.pop %v9517
  %v9519 = vsub.f32 1.0, %v9507
  %9521 = vrot.lane.b32.xlu0 %v9518, 96
  %v9522 = vpop.permute.xlu0 %9521
  %v9524 = vmul.f32 %v9519, %v9522
  %v9525 = vsub.f32 0.0, %v9298
  %v9526 = vmul.f32 %v9525, 1.442695
  %v9527 = vpow.pop %v9526
  %v9528 = vadd.f32 %v9527, 1.0
  %v9529 = vrcp.pop %v9528
  %v9530 = vlaneseq
  %v9531 = vshrl.u32 %v9530, 7
  %v9532 = vsub.s32 1, %v9531
  %v9533 = vrot.slane %v9502, %v9532
  %9535 = vrot.lane.b32.xlu0 %v9533, 96
  %v9536 = vpop.permute.xlu0 %9535
  %v9538 = vmul.f32 %v9507, %v9536
  %9540 = vrot.lane.b32.xlu0 %v9538, 64
  %v9541 = vpop.permute.xlu0 %9540
  %v9543 = vadd.f32 %v9298, %v9541
  %v9544 = vtanh.pop %v9543
  %v9545 = vsub.f32 1.0, %v9529
  %9547 = vrot.lane.b32.xlu0 %v9544, 96
  %v9548 = vpop.permute.xlu0 %9547
  %v9550 = vmul.f32 %v9545, %v9548
  %v9551 = vtanh.pop %v9298
  %v9552 = vsub.f32 0.0, %v9497
  %v9553 = vmul.f32 %v9552, 1.442695
  %v9554 = vpow.pop %v9553
  %v9555 = vadd.f32 %v9554, 1.0
  %v9556 = vrcp.pop %v9555
  %9558 = vrot.lane.b32.xlu0 %v9551, 96
  %v9559 = vpop.permute.xlu0 %9558
  %v9561 = vmul.f32 %v9529, %v9559
  %v9562 = vtanh.pop %v9561
  %9564 = vrot.lane.b32.xlu0 %v9562, 64
  %v9565 = vpop.permute.xlu0 %9564
  %v9567 = vmul.f32 %v9556, %v9565
  %v9568 = vtanh.pop %v9497
  %9570 = vrot.lane.b32.xlu0 %v9568, 96
  %v9571 = vpop.permute.xlu0 %9570
  %v9573 = vmul.f32 %v9556, %v9571
  %v9574 = vtanh.pop %v9573
  %9576 = vrot.lane.b32.xlu0 %v9574, 64
  %v9577 = vpop.permute.xlu0 %9576
  %v9579 = vmul.f32 %v9556, %v9577
  %9581 = vrot.lane.b32.xlu0 %v9524, 96
  %v9582 = vpop.permute.xlu0 %9581
  %9585 = vrot.lane.b32.xlu0 %v9550, 32
  %v9586 = vpop.permute.xlu0 %9585
  %9589 = vrot.lane.b32.xlu0 %v9567, 64
  %v9590 = vpop.permute.xlu0 %9589
  %v9592 = vsel %vm2887, %v9582, %v9586
  %vm9593 = vcmask 523264
  %v9594 = vsel %vm9593, %v9592, %v9590
  %vm9595 = vcmask 785408
  %v9596 = vsel %vm9595, %v9594, %v9579
  %s9597 = smul.u32 4, 16
  %s9598 = smul.u32 %s9597, 10
  %s9599 = sshll.u32 %s9598, 4
  %9600 = dma.done %s2003, %s9599
  %v9601 = vpack.c.bf16 %v9596, %v9596
  %v9602 = vld [vmem:[#allocation3] sm:$0xff]
  %v9603 = vld [vmem:[#allocation3 + $0x8] sm:$0xff]
  %v9604 = vld [vmem:[#allocation3 + $0x10] sm:$0xff]
  %v9605 = vld [vmem:[#allocation3 + $0x18] sm:$0xff]
  %v9606 = vld [vmem:[#allocation3 + $0x20] sm:$0xff]
  %v9607 = vld [vmem:[#allocation3 + $0x28] sm:$0xff]
  %v9608 = vld [vmem:[#allocation3 + $0x30] sm:$0xff]
  %v9609 = vld [vmem:[#allocation3 + $0x38] sm:$0xff]
  %v9610 = vld [vmem:[#allocation3 + $0x40] sm:$0xff]
  %v9611 = vld [vmem:[#allocation3 + $0x48] sm:$0xff]
  %v9612 = vld [vmem:[#allocation3 + $0x50] sm:$0xff]
  %v9613 = vld [vmem:[#allocation3 + $0x58] sm:$0xff]
  %v9614 = vld [vmem:[#allocation3 + $0x60] sm:$0xff]
  %v9615 = vld [vmem:[#allocation3 + $0x68] sm:$0xff]
  %v9616 = vld [vmem:[#allocation3 + $0x70] sm:$0xff]
  %v9617 = vld [vmem:[#allocation3 + $0x78] sm:$0xff]
  %v9618 = vld [vmem:[#allocation3 + $0x80] sm:$0xff]
  %v9619 = vld [vmem:[#allocation3 + $0x88] sm:$0xff]
  %v9620 = vld [vmem:[#allocation3 + $0x90] sm:$0xff]
  %v9621 = vld [vmem:[#allocation3 + $0x98] sm:$0xff]
  %v9622 = vld [vmem:[#allocation3 + $0xa0] sm:$0xff]
  %v9623 = vld [vmem:[#allocation3 + $0xa8] sm:$0xff]
  %v9624 = vld [vmem:[#allocation3 + $0xb0] sm:$0xff]
  %v9625 = vld [vmem:[#allocation3 + $0xb8] sm:$0xff]
  %v9626 = vld [vmem:[#allocation3 + $0xc0] sm:$0xff]
  %v9627 = vld [vmem:[#allocation3 + $0xc8] sm:$0xff]
  %v9628 = vld [vmem:[#allocation3 + $0xd0] sm:$0xff]
  %v9629 = vld [vmem:[#allocation3 + $0xd8] sm:$0xff]
  %v9630 = vld [vmem:[#allocation3 + $0xe0] sm:$0xff]
  %v9631 = vld [vmem:[#allocation3 + $0xe8] sm:$0xff]
  %v9632 = vld [vmem:[#allocation3 + $0xf0] sm:$0xff]
  %v9633 = vld [vmem:[#allocation3 + $0xf8] sm:$0xff]
  %v9634 = vld [vmem:[#allocation3 + $0x100] sm:$0xff]
  %v9635 = vld [vmem:[#allocation3 + $0x108] sm:$0xff]
  %v9636 = vld [vmem:[#allocation3 + $0x110] sm:$0xff]
  %v9637 = vld [vmem:[#allocation3 + $0x118] sm:$0xff]
  %v9638 = vld [vmem:[#allocation3 + $0x120] sm:$0xff]
  %v9639 = vld [vmem:[#allocation3 + $0x128] sm:$0xff]
  %v9640 = vld [vmem:[#allocation3 + $0x130] sm:$0xff]
  %v9641 = vld [vmem:[#allocation3 + $0x138] sm:$0xff]
  %v9642 = vld [vmem:[#allocation3 + $0x140] sm:$0xff]
  %v9643 = vld [vmem:[#allocation3 + $0x148] sm:$0xff]
  %v9644 = vld [vmem:[#allocation3 + $0x150] sm:$0xff]
  %v9645 = vld [vmem:[#allocation3 + $0x158] sm:$0xff]
  %v9646 = vld [vmem:[#allocation3 + $0x160] sm:$0xff]
  %v9647 = vld [vmem:[#allocation3 + $0x168] sm:$0xff]
  %v9648 = vld [vmem:[#allocation3 + $0x170] sm:$0xff]
  %v9649 = vld [vmem:[#allocation3 + $0x178] sm:$0xff]
  %v9650 = vld [vmem:[#allocation3 + $0x180] sm:$0xff]
  %v9651 = vld [vmem:[#allocation3 + $0x188] sm:$0xff]
  %v9652 = vld [vmem:[#allocation3 + $0x190] sm:$0xff]
  %v9653 = vld [vmem:[#allocation3 + $0x198] sm:$0xff]
  %v9654 = vld [vmem:[#allocation3 + $0x1a0] sm:$0xff]
  %v9655 = vld [vmem:[#allocation3 + $0x1a8] sm:$0xff]
  %v9656 = vld [vmem:[#allocation3 + $0x1b0] sm:$0xff]
  %v9657 = vld [vmem:[#allocation3 + $0x1b8] sm:$0xff]
  %v9658 = vld [vmem:[#allocation3 + $0x1c0] sm:$0xff]
  %v9659 = vld [vmem:[#allocation3 + $0x1c8] sm:$0xff]
  %v9660 = vld [vmem:[#allocation3 + $0x1d0] sm:$0xff]
  %v9661 = vld [vmem:[#allocation3 + $0x1d8] sm:$0xff]
  %v9662 = vld [vmem:[#allocation3 + $0x1e0] sm:$0xff]
  %v9663 = vld [vmem:[#allocation3 + $0x1e8] sm:$0xff]
  %v9664 = vld [vmem:[#allocation3 + $0x1f0] sm:$0xff]
  %v9665 = vld [vmem:[#allocation3 + $0x1f8] sm:$0xff]
  %v9666 = vld [vmem:[#allocation3 + $0x200] sm:$0xff]
  %v9667 = vld [vmem:[#allocation3 + $0x208] sm:$0xff]
  %v9668 = vld [vmem:[#allocation3 + $0x210] sm:$0xff]
  %v9669 = vld [vmem:[#allocation3 + $0x218] sm:$0xff]
  %v9670 = vld [vmem:[#allocation3 + $0x220] sm:$0xff]
  %v9671 = vld [vmem:[#allocation3 + $0x228] sm:$0xff]
  %v9672 = vld [vmem:[#allocation3 + $0x230] sm:$0xff]
  %v9673 = vld [vmem:[#allocation3 + $0x238] sm:$0xff]
  %v9674 = vld [vmem:[#allocation3 + $0x240] sm:$0xff]
  %v9675 = vld [vmem:[#allocation3 + $0x248] sm:$0xff]
  %v9676 = vld [vmem:[#allocation3 + $0x250] sm:$0xff]
  %v9677 = vld [vmem:[#allocation3 + $0x258] sm:$0xff]
  %v9678 = vld [vmem:[#allocation3 + $0x260] sm:$0xff]
  %v9679 = vld [vmem:[#allocation3 + $0x268] sm:$0xff]
  %v9680 = vld [vmem:[#allocation3 + $0x270] sm:$0xff]
  %v9681 = vld [vmem:[#allocation3 + $0x278] sm:$0xff]
  %v9682 = vld [vmem:[%s8] sm:$0xff]
  %v9683 = vld [vmem:[%s8 + $0x8] sm:$0x3]
  %v9686 = vlaneseq
  %v9687 = vshrl.u32 %v9686, 7
  %v9688 = vsub.s32 0, %v9687
  %v9689 = vrot.slane %v9682, %v9688
  %v9690 = vlaneseq
  %v9691 = vshrl.u32 %v9690, 7
  %v9692 = vsub.s32 1, %v9691
  %v9693 = vrot.slane %v9682, %v9692
  %v9694 = vlaneseq
  %v9695 = vshrl.u32 %v9694, 7
  %v9696 = vsub.s32 2, %v9695
  %v9697 = vrot.slane %v9682, %v9696
  %v9698 = vlaneseq
  %v9699 = vshrl.u32 %v9698, 7
  %v9700 = vsub.s32 3, %v9699
  %v9701 = vrot.slane %v9682, %v9700
  %v9702 = vlaneseq
  %v9703 = vshrl.u32 %v9702, 7
  %v9704 = vsub.s32 4, %v9703
  %v9705 = vrot.slane %v9682, %v9704
  %v9706 = vlaneseq
  %v9707 = vshrl.u32 %v9706, 7
  %v9708 = vsub.s32 5, %v9707
  %v9709 = vrot.slane %v9682, %v9708
  %v9710 = vlaneseq
  %v9711 = vshrl.u32 %v9710, 7
  %v9712 = vsub.s32 6, %v9711
  %v9713 = vrot.slane %v9682, %v9712
  %v9714 = vlaneseq
  %v9715 = vshrl.u32 %v9714, 7
  %v9716 = vsub.s32 7, %v9715
  %v9717 = vrot.slane %v9682, %v9716
  %v9718 = vlaneseq
  %v9719 = vshrl.u32 %v9718, 7
  %v9720 = vsub.s32 0, %v9719
  %v9721 = vrot.slane %v9683, %v9720
  %v9722 = vlaneseq
  %v9723 = vshrl.u32 %v9722, 7
  %v9724 = vsub.s32 1, %v9723
  %v9725 = vrot.slane %v9683, %v9724
  %9736 = vmatprep.subr.bf16.mxu0 %v9603
  %9737 = vmatpush1.bf16.msra.mxu0 %v9602
  %9738 = vmatprep.subr.bf16.mxu0 %v9613
  %9739 = vmatpush1.bf16.msra.mxu0 %v9612
  %9740 = vmatprep.subr.bf16.mxu0 %v9623
  %9741 = vmatpush1.bf16.msra.mxu0 %v9622
  %9742 = vmatprep.subr.bf16.mxu0 %v9633
  %9743 = vmatpush1.bf16.msra.mxu0 %v9632
  %9744 = vmatprep.subr.bf16.mxu0 %v9643
  %9745 = vmatpush1.bf16.msra.mxu0 %v9642
  %9746 = vmatprep.subr.bf16.mxu0 %v9653
  %9747 = vmatpush1.bf16.msra.mxu0 %v9652
  %9748 = vmatprep.subr.bf16.mxu0 %v9663
  %9749 = vmatpush1.bf16.msra.mxu0 %v9662
  %9750 = vmatprep.subr.bf16.mxu0 %v9673
  %9751 = vmatpush1.bf16.msra.mxu0 %v9672
  %9752 = vmatprep.subr.bf16.mxu0 0
  %9753 = vmatpush1.bf16.msra.mxu0 0
  %9754 = vmatprep.subr.bf16.mxu0 0
  %9755 = vmatpush1.bf16.msra.mxu0 0
  %9756 = vmatprep.subr.bf16.mxu0 0
  %9757 = vmatpush1.bf16.msra.mxu0 0
  %9758 = vmatprep.subr.bf16.mxu0 0
  %9759 = vmatpush1.bf16.msra.mxu0 0
  %9760 = vmatprep.subr.bf16.mxu0 0
  %9761 = vmatpush1.bf16.msra.mxu0 0
  %9762 = vmatprep.subr.bf16.mxu0 0
  %9763 = vmatpush1.bf16.msra.mxu0 0
  %9764 = vmatprep.subr.bf16.mxu0 0
  %9765 = vmatpush1.bf16.msra.mxu0 0
  %9766 = vmatprep.subr.bf16.mxu0 0
  %9767 = vmatpush1.bf16.msra.mxu0 0
  %9768 = vmatprep.mubr.bf16.mxu0 0
  %9769 = vmatmul.mubr.bf16.gmra.mrb[0].mxu0 %v9601
  %v9770 = vpop.f32.mrb[0].mxu0
  %v9771 = vadd.f32 %v9689, %v9770
  %v9772 = vpop.f32.mrb[0].mxu0
  %v9773 = vadd.f32 %v9693, %v9772
  %v9774 = vpop.f32.mrb[0].mxu0
  %v9775 = vpop.f32.mrb[0].mxu0
  %9776 = vdwg.mxu0
  %9777 = vmatprep.subr.bf16.mxu0 %v9605
  %9778 = vmatpush1.bf16.msra.mxu0 %v9604
  %9779 = vmatprep.subr.bf16.mxu0 %v9615
  %9780 = vmatpush1.bf16.msra.mxu0 %v9614
  %9781 = vmatprep.subr.bf16.mxu0 %v9625
  %9782 = vmatpush1.bf16.msra.mxu0 %v9624
  %9783 = vmatprep.subr.bf16.mxu0 %v9635
  %9784 = vmatpush1.bf16.msra.mxu0 %v9634
  %9785 = vmatprep.subr.bf16.mxu0 %v9645
  %9786 = vmatpush1.bf16.msra.mxu0 %v9644
  %9787 = vmatprep.subr.bf16.mxu0 %v9655
  %9788 = vmatpush1.bf16.msra.mxu0 %v9654
  %9789 = vmatprep.subr.bf16.mxu0 %v9665
  %9790 = vmatpush1.bf16.msra.mxu0 %v9664
  %9791 = vmatprep.subr.bf16.mxu0 %v9675
  %9792 = vmatpush1.bf16.msra.mxu0 %v9674
  %9793 = vmatprep.subr.bf16.mxu0 0
  %9794 = vmatpush1.bf16.msra.mxu0 0
  %9795 = vmatprep.subr.bf16.mxu0 0
  %9796 = vmatpush1.bf16.msra.mxu0 0
  %9797 = vmatprep.subr.bf16.mxu0 0
  %9798 = vmatpush1.bf16.msra.mxu0 0
  %9799 = vmatprep.subr.bf16.mxu0 0
  %9800 = vmatpush1.bf16.msra.mxu0 0
  %9801 = vmatprep.subr.bf16.mxu0 0
  %9802 = vmatpush1.bf16.msra.mxu0 0
  %9803 = vmatprep.subr.bf16.mxu0 0
  %9804 = vmatpush1.bf16.msra.mxu0 0
  %9805 = vmatprep.subr.bf16.mxu0 0
  %9806 = vmatpush1.bf16.msra.mxu0 0
  %9807 = vmatprep.subr.bf16.mxu0 0
  %9808 = vmatpush1.bf16.msra.mxu0 0
  %9809 = vmatprep.mubr.bf16.mxu0 0
  %9810 = vmatmul.mubr.bf16.gmra.mrb[0].mxu0 %v9601
  %v9811 = vpop.f32.mrb[0].mxu0
  %v9812 = vadd.f32 %v9697, %v9811
  %v9813 = vpop.f32.mrb[0].mxu0
  %v9814 = vadd.f32 %v9701, %v9813
  %v9815 = vpop.f32.mrb[0].mxu0
  %v9816 = vpop.f32.mrb[0].mxu0
  %9817 = vdwg.mxu0
  %9818 = vmatprep.subr.bf16.mxu0 %v9607
  %9819 = vmatpush1.bf16.msra.mxu0 %v9606
  %9820 = vmatprep.subr.bf16.mxu0 %v9617
  %9821 = vmatpush1.bf16.msra.mxu0 %v9616
  %9822 = vmatprep.subr.bf16.mxu0 %v9627
  %9823 = vmatpush1.bf16.msra.mxu0 %v9626
  %9824 = vmatprep.subr.bf16.mxu0 %v9637
  %9825 = vmatpush1.bf16.msra.mxu0 %v9636
  %9826 = vmatprep.subr.bf16.mxu0 %v9647
  %9827 = vmatpush1.bf16.msra.mxu0 %v9646
  %9828 = vmatprep.subr.bf16.mxu0 %v9657
  %9829 = vmatpush1.bf16.msra.mxu0 %v9656
  %9830 = vmatprep.subr.bf16.mxu0 %v9667
  %9831 = vmatpush1.bf16.msra.mxu0 %v9666
  %9832 = vmatprep.subr.bf16.mxu0 %v9677
  %9833 = vmatpush1.bf16.msra.mxu0 %v9676
  %9834 = vmatprep.subr.bf16.mxu0 0
  %9835 = vmatpush1.bf16.msra.mxu0 0
  %9836 = vmatprep.subr.bf16.mxu0 0
  %9837 = vmatpush1.bf16.msra.mxu0 0
  %9838 = vmatprep.subr.bf16.mxu0 0
  %9839 = vmatpush1.bf16.msra.mxu0 0
  %9840 = vmatprep.subr.bf16.mxu0 0
  %9841 = vmatpush1.bf16.msra.mxu0 0
  %9842 = vmatprep.subr.bf16.mxu0 0
  %9843 = vmatpush1.bf16.msra.mxu0 0
  %9844 = vmatprep.subr.bf16.mxu0 0
  %9845 = vmatpush1.bf16.msra.mxu0 0
  %9846 = vmatprep.subr.bf16.mxu0 0
  %9847 = vmatpush1.bf16.msra.mxu0 0
  %9848 = vmatprep.subr.bf16.mxu0 0
  %9849 = vmatpush1.bf16.msra.mxu0 0
  %9850 = vmatprep.mubr.bf16.mxu0 0
  %9851 = vmatmul.mubr.bf16.gmra.mrb[0].mxu0 %v9601
  %v9852 = vpop.f32.mrb[0].mxu0
  %v9853 = vadd.f32 %v9705, %v9852
  %v9854 = vpop.f32.mrb[0].mxu0
  %v9855 = vadd.f32 %v9709, %v9854
  %v9856 = vpop.f32.mrb[0].mxu0
  %v9857 = vpop.f32.mrb[0].mxu0
  %9858 = vdwg.mxu0
  %9859 = vmatprep.subr.bf16.mxu0 %v9609
  %9860 = vmatpush1.bf16.msra.mxu0 %v9608
  %9861 = vmatprep.subr.bf16.mxu0 %v9619
  %9862 = vmatpush1.bf16.msra.mxu0 %v9618
  %9863 = vmatprep.subr.bf16.mxu0 %v9629
  %9864 = vmatpush1.bf16.msra.mxu0 %v9628
  %9865 = vmatprep.subr.bf16.mxu0 %v9639
  %9866 = vmatpush1.bf16.msra.mxu0 %v9638
  %9867 = vmatprep.subr.bf16.mxu0 %v9649
  %9868 = vmatpush1.bf16.msra.mxu0 %v9648
  %9869 = vmatprep.subr.bf16.mxu0 %v9659
  %9870 = vmatpush1.bf16.msra.mxu0 %v9658
  %9871 = vmatprep.subr.bf16.mxu0 %v9669
  %9872 = vmatpush1.bf16.msra.mxu0 %v9668
  %9873 = vmatprep.subr.bf16.mxu0 %v9679
  %9874 = vmatpush1.bf16.msra.mxu0 %v9678
  %9875 = vmatprep.subr.bf16.mxu0 0
  %9876 = vmatpush1.bf16.msra.mxu0 0
  %9877 = vmatprep.subr.bf16.mxu0 0
  %9878 = vmatpush1.bf16.msra.mxu0 0
  %9879 = vmatprep.subr.bf16.mxu0 0
  %9880 = vmatpush1.bf16.msra.mxu0 0
  %9881 = vmatprep.subr.bf16.mxu0 0
  %9882 = vmatpush1.bf16.msra.mxu0 0
  %9883 = vmatprep.subr.bf16.mxu0 0
  %9884 = vmatpush1.bf16.msra.mxu0 0
  %9885 = vmatprep.subr.bf16.mxu0 0
  %9886 = vmatpush1.bf16.msra.mxu0 0
  %9887 = vmatprep.subr.bf16.mxu0 0
  %9888 = vmatpush1.bf16.msra.mxu0 0
  %9889 = vmatprep.subr.bf16.mxu0 0
  %9890 = vmatpush1.bf16.msra.mxu0 0
  %9891 = vmatprep.mubr.bf16.mxu0 0
  %9892 = vmatmul.mubr.bf16.gmra.mrb[0].mxu0 %v9601
  %v9893 = vpop.f32.mrb[0].mxu0
  %v9894 = vadd.f32 %v9713, %v9893
  %v9895 = vpop.f32.mrb[0].mxu0
  %v9896 = vadd.f32 %v9717, %v9895
  %v9897 = vpop.f32.mrb[0].mxu0
  %v9898 = vpop.f32.mrb[0].mxu0
  %9899 = vdwg.mxu0
  %9900 = vmatprep.subr.bf16.mxu0 %v9611
  %9901 = vmatpush1.bf16.msra.mxu0 %v9610
  %9902 = vmatprep.subr.bf16.mxu0 %v9621
  %9903 = vmatpush1.bf16.msra.mxu0 %v9620
  %9904 = vmatprep.subr.bf16.mxu0 %v9631
  %9905 = vmatpush1.bf16.msra.mxu0 %v9630
  %9906 = vmatprep.subr.bf16.mxu0 %v9641
  %9907 = vmatpush1.bf16.msra.mxu0 %v9640
  %9908 = vmatprep.subr.bf16.mxu0 %v9651
  %9909 = vmatpush1.bf16.msra.mxu0 %v9650
  %9910 = vmatprep.subr.bf16.mxu0 %v9661
  %9911 = vmatpush1.bf16.msra.mxu0 %v9660
  %9912 = vmatprep.subr.bf16.mxu0 %v9671
  %9913 = vmatpush1.bf16.msra.mxu0 %v9670
  %9914 = vmatprep.subr.bf16.mxu0 %v9681
  %9915 = vmatpush1.bf16.msra.mxu0 %v9680
  %9916 = vmatprep.subr.bf16.mxu0 0
  %9917 = vmatpush1.bf16.msra.mxu0 0
  %9918 = vmatprep.subr.bf16.mxu0 0
  %9919 = vmatpush1.bf16.msra.mxu0 0
  %9920 = vmatprep.subr.bf16.mxu0 0
  %9921 = vmatpush1.bf16.msra.mxu0 0
  %9922 = vmatprep.subr.bf16.mxu0 0
  %9923 = vmatpush1.bf16.msra.mxu0 0
  %9924 = vmatprep.subr.bf16.mxu0 0
  %9925 = vmatpush1.bf16.msra.mxu0 0
  %9926 = vmatprep.subr.bf16.mxu0 0
  %9927 = vmatpush1.bf16.msra.mxu0 0
  %9928 = vmatprep.subr.bf16.mxu0 0
  %9929 = vmatpush1.bf16.msra.mxu0 0
  %9930 = vmatprep.subr.bf16.mxu0 0
  %9931 = vmatpush1.bf16.msra.mxu0 0
  %9932 = vmatprep.mubr.bf16.mxu0 0
  %9933 = vmatmul.mubr.bf16.gmra.mrb[0].mxu0 %v9601
  %v9934 = vpop.f32.mrb[0].mxu0
  %v9935 = vadd.f32 %v9721, %v9934
  %v9936 = vpop.f32.mrb[0].mxu0
  %v9937 = vadd.f32 %v9725, %v9936
  %v9938 = vpop.f32.mrb[0].mxu0
  %v9939 = vpop.f32.mrb[0].mxu0
  %9940 = vdwg.mxu0
  %9941 = vmax.xlane.f32.xlu0 %v9771
  %v9942 = vpop.xlane.xlu0 %9941
  %v9943 = vsub.f32 %v9771, %v9942
  %v9944 = vmul.f32 %v9943, 1.442695
  %v9945 = vpow.pop %v9944
  %9946 = vadd.xlane.f32.xlu0 %v9945
  %v9947 = vpop.xlane.xlu0 %9946
  %v9948 = vrcp.pop %v9947
  %v9949 = vmul.f32 %v9945, %v9948
  %9950 = vst [vmem:[%s11] sm:$0xff] %v9949
  %9951 = vmax.xlane.f32.xlu0 %v9773
  %v9952 = vpop.xlane.xlu0 %9951
  %v9953 = vsub.f32 %v9773, %v9952
  %v9954 = vmul.f32 %v9953, 1.442695
  %v9955 = vpow.pop %v9954
  %9956 = vadd.xlane.f32.xlu0 %v9955
  %v9957 = vpop.xlane.xlu0 %9956
  %v9958 = vrcp.pop %v9957
  %v9959 = vmul.f32 %v9955, %v9958
  %s9960 = scalar_lea.vmem %s11, 8
  %9961 = vst [vmem:[%s9960] sm:$0xff] %v9959
  %9962 = vmax.xlane.f32.xlu0 %v9812
  %v9963 = vpop.xlane.xlu0 %9962
  %v9964 = vsub.f32 %v9812, %v9963
  %v9965 = vmul.f32 %v9964, 1.442695
  %v9966 = vpow.pop %v9965
  %9967 = vadd.xlane.f32.xlu0 %v9966
  %v9968 = vpop.xlane.xlu0 %9967
  %v9969 = vrcp.pop %v9968
  %v9970 = vmul.f32 %v9966, %v9969
  %s9971 = scalar_lea.vmem %s11, 16
  %9972 = vst [vmem:[%s9971] sm:$0xff] %v9970
  %9973 = vmax.xlane.f32.xlu0 %v9814
  %v9974 = vpop.xlane.xlu0 %9973
  %v9975 = vsub.f32 %v9814, %v9974
  %v9976 = vmul.f32 %v9975, 1.442695
  %v9977 = vpow.pop %v9976
  %9978 = vadd.xlane.f32.xlu0 %v9977
  %v9979 = vpop.xlane.xlu0 %9978
  %v9980 = vrcp.pop %v9979
  %v9981 = vmul.f32 %v9977, %v9980
  %s9982 = scalar_lea.vmem %s11, 24
  %9983 = vst [vmem:[%s9982] sm:$0xff] %v9981
  %9984 = vmax.xlane.f32.xlu0 %v9853
  %v9985 = vpop.xlane.xlu0 %9984
  %v9986 = vsub.f32 %v9853, %v9985
  %v9987 = vmul.f32 %v9986, 1.442695
  %v9988 = vpow.pop %v9987
  %9989 = vadd.xlane.f32.xlu0 %v9988
  %v9990 = vpop.xlane.xlu0 %9989
  %v9991 = vrcp.pop %v9990
  %v9992 = vmul.f32 %v9988, %v9991
  %s9993 = scalar_lea.vmem %s11, 32
  %9994 = vst [vmem:[%s9993] sm:$0xff] %v9992
  %9995 = vmax.xlane.f32.xlu0 %v9855
  %v9996 = vpop.xlane.xlu0 %9995
  %v9997 = vsub.f32 %v9855, %v9996
  %v9998 = vmul.f32 %v9997, 1.442695
  %v9999 = vpow.pop %v9998
  %10000 = vadd.xlane.f32.xlu0 %v9999
  %v10001 = vpop.xlane.xlu0 %10000
  %v10002 = vrcp.pop %v10001
  %v10003 = vmul.f32 %v9999, %v10002
  %s10004 = scalar_lea.vmem %s11, 40
  %10005 = vst [vmem:[%s10004] sm:$0xff] %v10003
  %10006 = vmax.xlane.f32.xlu0 %v9894
  %v10007 = vpop.xlane.xlu0 %10006
  %v10008 = vsub.f32 %v9894, %v10007
  %v10009 = vmul.f32 %v10008, 1.442695
  %v10010 = vpow.pop %v10009
  %10011 = vadd.xlane.f32.xlu0 %v10010
  %v10012 = vpop.xlane.xlu0 %10011
  %v10013 = vrcp.pop %v10012
  %v10014 = vmul.f32 %v10010, %v10013
  %s10015 = scalar_lea.vmem %s11, 48
  %10016 = vst [vmem:[%s10015] sm:$0xff] %v10014
  %10017 = vmax.xlane.f32.xlu0 %v9896
  %v10018 = vpop.xlane.xlu0 %10017
  %v10019 = vsub.f32 %v9896, %v10018
  %v10020 = vmul.f32 %v10019, 1.442695
  %v10021 = vpow.pop %v10020
  %10022 = vadd.xlane.f32.xlu0 %v10021
  %v10023 = vpop.xlane.xlu0 %10022
  %v10024 = vrcp.pop %v10023
  %v10025 = vmul.f32 %v10021, %v10024
  %s10026 = scalar_lea.vmem %s11, 56
  %10027 = vst [vmem:[%s10026] sm:$0xff] %v10025
  %10028 = vmax.xlane.f32.xlu0 %v9935
  %v10029 = vpop.xlane.xlu0 %10028
  %v10030 = vsub.f32 %v9935, %v10029
  %v10031 = vmul.f32 %v10030, 1.442695
  %v10032 = vpow.pop %v10031
  %10033 = vadd.xlane.f32.xlu0 %v10032
  %v10034 = vpop.xlane.xlu0 %10033
  %v10035 = vrcp.pop %v10034
  %v10036 = vmul.f32 %v10032, %v10035
  %s10037 = scalar_lea.vmem %s11, 64
  %10038 = vst [vmem:[%s10037] sm:$0xff] %v10036
  %10039 = vmax.xlane.f32.xlu0 %v9937
  %v10040 = vpop.xlane.xlu0 %10039
  %v10041 = vsub.f32 %v9937, %v10040
  %v10042 = vmul.f32 %v10041, 1.442695
  %v10043 = vpow.pop %v10042
  %10044 = vadd.xlane.f32.xlu0 %v10043
  %v10045 = vpop.xlane.xlu0 %10044
  %v10046 = vrcp.pop %v10045
  %v10047 = vmul.f32 %v10043, %v10046
  %s10048 = scalar_lea.vmem %s11, 72
  %10049 = vst [vmem:[%s10048] sm:$0xff] %v10047
  // Predicated region
  $region112: #{crnn_forward.1} parent=0 // pred_check
    _
  $region113: #{crnn_forward.1} parent=0 // pred_check_branch
    %10051 = sbr.rel (0) target = $region115
  $region114: #{crnn_forward.1} parent=0 // pred_region
    _
  $region115: #{crnn_forward.1} parent=0 // pred_fallthru
    _
  // Predicated region
  $region116: #{crnn_forward.1} parent=0 // pred_check
    _
  $region117: #{crnn_forward.1} parent=0 // pred_check_branch
    %10053 = sbr.rel (0) target = $region119
  $region118: #{crnn_forward.1} parent=0 // pred_region
    _
  $region119: #{crnn_forward.1} parent=0 // pred_fallthru
    _
  %10054 = vsyncmov [#allocation4]
  %s10055 = vpop.sfrf %10054
  %p10056 = scmp.eq.s32.totalorder %s10055, 0
  %p10057 = pneg %p10056
  %10059 = shalt.err (%p10057)
  %s10060 = scalar_lea.sflag [#allocation4], 1
  %10061 = vsyncmov %s10060
  %s10062 = vpop.sfrf %10061
  %p10063 = scmp.eq.s32.totalorder %s10062, 0
  %p10064 = pneg %p10063
  %10066 = shalt.err (%p10064)

</llo_original>
